<compile_context>
chip_gen: v6e
topology: v6e:2x2x1
jax: 0.10.0
libtpu: 0.0.40
codegen_flags: <defaults>
</compile_context>

<pallas_src>
import functools

import jax
import jax.numpy as jnp
from jax.experimental import pallas as pl
from jax.experimental.pallas import tpu as pltpu


# ----------------------------------------------------------------------------
# Pallas kernels
# ----------------------------------------------------------------------------
def _conv_s1_bias_act_kernel(x_ref, w_ref, b_ref, o_ref, *, apply_relu):
    """Fused stride-1 KxK 'valid' conv (+bias, +optional ReLU) for one row tile.

    x_ref: (1, H_in, W_in, Cin)  full pre-padded image of one batch element
                                 (same block across the row-tile axis -> one DMA)
    w_ref: (KH, KW, Cin, Cout)   HWIO weights (VMEM resident across the grid)
    b_ref: (1, Cout)             bias, f32
    o_ref: (1, TH, W_out, Cout)  one tile of TH output rows
    """
    TH, W_out, Cout = o_ref.shape[1], o_ref.shape[2], o_ref.shape[3]
    KH, KW, Cin = w_ref.shape[0], w_ref.shape[1], w_ref.shape[2]
    r0 = pl.program_id(1) * TH            # first output row of this tile
    bias = b_ref[...]                      # (1, Cout) f32

    if W_out % 8 == 0:
        # Big-M path: fold (TH, W_out) into a single matmul M dimension.
        # W_out is sublane (8) aligned, so the collapse is layout-trivial.
        acc = jnp.zeros((TH * W_out, Cout), jnp.float32)
        for ky in range(KH):
            for kx in range(KW):
                patch = x_ref[0, pl.ds(r0 + ky, TH), pl.ds(kx, W_out), :]
                lhs = patch.reshape(TH * W_out, Cin).astype(jnp.bfloat16)
                acc = acc + jnp.dot(lhs, w_ref[ky, kx].astype(jnp.bfloat16),
                                    preferred_element_type=jnp.float32)
        acc = acc + bias
        if apply_relu:
            acc = jnp.maximum(acc, 0.0)
        o_ref[0, :, :, :] = acc.reshape(TH, W_out, Cout).astype(o_ref.dtype)
    else:
        # Tiny spatial sizes (deep layers): per-row matmuls, negligible work.
        def row_body(t, carry):
            acc = jnp.zeros((W_out, Cout), jnp.float32)
            for ky in range(KH):
                for kx in range(KW):
                    patch = x_ref[0, r0 + t + ky, pl.ds(kx, W_out), :]
                    acc = acc + jnp.dot(patch.astype(jnp.bfloat16),
                                        w_ref[ky, kx].astype(jnp.bfloat16),
                                        preferred_element_type=jnp.float32)
            acc = acc + bias
            if apply_relu:
                acc = jnp.maximum(acc, 0.0)
            o_ref[0, t, :, :] = acc.astype(o_ref.dtype)
            return carry

        jax.lax.fori_loop(0, TH, row_body, 0)


def _gap_linear_kernel(x_ref, w_ref, b_ref, o_ref):
    """Fused AdaptiveAvgPool2d(1) + 1x1 conv (linear) for one batch element.

    x_ref: (1, H, W, C);  w_ref: (C, S);  b_ref: (1, S);  o_ref: (1, S)
    """
    H, W = x_ref.shape[1], x_ref.shape[2]
    x = x_ref[0, :, :, :].astype(jnp.float32)        # (H, W, C)
    s = jnp.sum(x, axis=0)                           # (W, C)
    s = jnp.sum(s, axis=0, keepdims=True)            # (1, C)
    mean = s * (1.0 / float(H * W))
    out = jnp.dot(mean, w_ref[...],
                  preferred_element_type=jnp.float32) + b_ref[...]
    o_ref[...] = out.astype(o_ref.dtype)


# ----------------------------------------------------------------------------
# Wrappers (BlockSpec / grid plumbing)
# ----------------------------------------------------------------------------
def _pick_row_tile(h_out, w_out, target_m=128, max_rows=8):
    """Largest divisor of h_out such that TH*W_out stays near target_m."""
    cap = max(1, min(max_rows, target_m // max(1, w_out)))
    th = 1
    for t in range(1, cap + 1):
        if h_out % t == 0:
            th = t
    return th


def conv2d_s1_bias_act(x, w, b, *, apply_relu=True):
    """x: (N, H_in, W_in, Cin) f32, already padded; stride-1 'valid' conv."""
    N, H_in, W_in, Cin = x.shape
    KH, KW, _, Cout = w.shape
    H_out, W_out = H_in - KH + 1, W_in - KW + 1
    TH = _pick_row_tile(H_out, W_out)
    b2 = b.reshape(1, Cout).astype(jnp.float32)
    kernel = functools.partial(_conv_s1_bias_act_kernel, apply_relu=apply_relu)
    return pl.pallas_call(
        kernel,
        out_shape=jax.ShapeDtypeStruct((N, H_out, W_out, Cout), jnp.float32),
        grid=(N, H_out // TH),
        in_specs=[
            # Input block is constant across the row-tile axis -> DMA'd once
            # per batch element and kept VMEM-resident.
            pl.BlockSpec((1, H_in, W_in, Cin), lambda n, h: (n, 0, 0, 0)),
            # Weights / bias: constant index -> no refetch per tile.
            pl.BlockSpec((KH, KW, Cin, Cout), lambda n, h: (0, 0, 0, 0)),
            pl.BlockSpec((1, Cout), lambda n, h: (0, 0)),
        ],
        out_specs=pl.BlockSpec((1, TH, W_out, Cout), lambda n, h: (n, h, 0, 0)),
        compiler_params=pltpu.CompilerParams(
            dimension_semantics=("parallel", "parallel")),
    )(x, w, b2)


def global_avgpool_linear(x, w, b):
    """x: (N, H, W, C) -> (N, S): global mean over H,W then x @ w + b (fused)."""
    N, H, W, C = x.shape
    S = w.shape[1]
    b2 = b.reshape(1, S).astype(jnp.float32)
    return pl.pallas_call(
        _gap_linear_kernel,
        out_shape=jax.ShapeDtypeStruct((N, S), jnp.float32),
        grid=(N,),
        in_specs=[
            pl.BlockSpec((1, H, W, C), lambda n: (n, 0, 0, 0)),
            pl.BlockSpec((C, S), lambda n: (0, 0)),
            pl.BlockSpec((1, S), lambda n: (0, 0)),
        ],
        out_specs=pl.BlockSpec((1, S), lambda n: (n, 0)),
        compiler_params=pltpu.CompilerParams(dimension_semantics=("parallel",)),
    )(x, w, b2)


# ----------------------------------------------------------------------------
# Stride-2 4x4 conv  ==  stride-1 2x2 conv over space-to-depth(2) input
# ----------------------------------------------------------------------------
def space_to_depth2(x):
    """(N, H, W, C) with even H, W  ->  (N, H//2, W//2, 4*C)."""
    N, H, W, C = x.shape
    x = x.reshape(N, H // 2, 2, W // 2, 2, C)
    x = jnp.transpose(x, (0, 1, 3, 2, 4, 5))      # (N, hh, ww, dy, dx, C)
    return x.reshape(N, H // 2, W // 2, 4 * C)


def space_to_depth2_weights(w):
    """(4, 4, Cin, Cout) -> (2, 2, 4*Cin, Cout), matching space_to_depth2."""
    KH, KW, Cin, Cout = w.shape
    assert KH == 4 and KW == 4
    w = w.reshape(2, 2, 2, 2, Cin, Cout)          # (a, dy, b, dx, Cin, Cout)
    w = jnp.transpose(w, (0, 2, 1, 3, 4, 5))      # (a, b, dy, dx, Cin, Cout)
    return w.reshape(2, 2, 4 * Cin, Cout)


# ----------------------------------------------------------------------------
# StyleEncoder definition (deterministic synthetic parameters)
# ----------------------------------------------------------------------------
def build_style_encoder_cfg(n_downsample, input_dim, dim):
    cfg = [dict(name="conv_in", cin=input_dim, cout=dim, k=7, stride=1, pad=3)]
    d = dim
    for i in range(2):
        cfg.append(dict(name=f"down{i}", cin=d, cout=2 * d, k=4, stride=2, pad=1))
        d *= 2
    for i in range(n_downsample - 2):
        cfg.append(dict(name=f"keep{i}", cin=d, cout=d, k=4, stride=2, pad=1))
    return cfg, d                                 # d == output_dim


def init_params(key, cfg, output_dim, style_dim):
    params = {}
    for layer in cfg:
        key, kw, kb = jax.random.split(key, 3)
        k, cin, cout = layer["k"], layer["cin"], layer["cout"]
        fan_in = k * k * cin
        w = jax.random.normal(kw, (k, k, cin, cout), jnp.float32) * (2.0 / fan_in) ** 0.5
        b = jax.random.normal(kb, (cout,), jnp.float32) * 0.01
        params[layer["name"]] = (w, b)
    key, kw, kb = jax.random.split(key, 3)
    w_fc = jax.random.normal(kw, (output_dim, style_dim), jnp.float32) * (1.0 / output_dim) ** 0.5
    b_fc = jax.random.normal(kb, (style_dim,), jnp.float32) * 0.01
    params["fc"] = (w_fc, b_fc)
    return params


def style_encoder_forward(params, cfg, x_nchw):
    """Mirrors StyleEncoder.forward. Input NCHW; output NCHW (N, style_dim, 1, 1)."""
    h = jnp.transpose(x_nchw, (0, 2, 3, 1)).astype(jnp.float32)   # -> NHWC
    for layer in cfg:
        w, b = params[layer["name"]]
        p = layer["pad"]
        hp = jnp.pad(h, ((0, 0), (p, p), (p, p), (0, 0)))          # zero pad
        if layer["stride"] == 1:
            h = conv2d_s1_bias_act(hp, w, b, apply_relu=True)
        else:                                                      # k=4, s=2, p=1
            y = space_to_depth2(hp)
            w2 = space_to_depth2_weights(w)
            h = conv2d_s1_bias_act(y, w2, b, apply_relu=True)
    w_fc, b_fc = params["fc"]
    out = global_avgpool_linear(h, w_fc, b_fc)                     # (N, S)
    return out[:, :, None, None]                                   # (N, S, 1, 1)


# ----------------------------------------------------------------------------
# Pure-JAX reference (same bf16-input / f32-accumulate math, for checking)
# ----------------------------------------------------------------------------
def style_encoder_reference(params, cfg, x_nchw):
    h = jnp.transpose(x_nchw, (0, 2, 3, 1)).astype(jnp.float32)
    for layer in cfg:
        w, b = params[layer["name"]]
        p, s = layer["pad"], layer["stride"]
        y = jax.lax.conv_general_dilated(
            h.astype(jnp.bfloat16), w.astype(jnp.bfloat16),
            window_strides=(s, s), padding=((p, p), (p, p)),
            dimension_numbers=("NHWC", "HWIO", "NHWC"),
            preferred_element_type=jnp.float32)
        h = jnp.maximum(y + b, 0.0)
    w_fc, b_fc = params["fc"]
    m = jnp.mean(h, axis=(1, 2))                                   # (N, C)
    out = m @ w_fc + b_fc                                          # (N, S)
    return out[:, :, None, None]


if __name__ == "__main__":
    N_DOWNSAMPLE, INPUT_DIM, DIM, STYLE_DIM = 3, 3, 16, 8
    cfg, output_dim = build_style_encoder_cfg(N_DOWNSAMPLE, INPUT_DIM, DIM)

    key = jax.random.PRNGKey(0)
    pkey, xkey = jax.random.split(key)
    params = init_params(pkey, cfg, output_dim, STYLE_DIM)

    # Small deterministic NCHW input, like the PyTorch module expects.
    x = jax.random.normal(xkey, (2, 3, 16, 16), jnp.float32)

    out = style_encoder_forward(params, cfg, x)
    out = jax.block_until_ready(out)
    assert out.shape == (2, STYLE_DIM, 1, 1), out.shape

    ref = jax.block_until_ready(style_encoder_reference(params, cfg, x))
    if not jnp.allclose(out, ref, rtol=2e-2, atol=2e-2):
        raise AssertionError(
            f"output mismatch: max abs err = {jnp.max(jnp.abs(out - ref))}")

    print("KERNEL_OK")
</pallas_src>

<mosaic_0001>
module attributes {stable_mosaic.version = 11 : i64} {
  func.func @_conv_s1_bias_act_kernel(%arg0: i32, %arg1: i32, %arg2: memref<1x22x22x3xf32, #tpu.memory_space<vmem>>, %arg3: memref<7x7x3x16xf32, #tpu.memory_space<vmem>>, %arg4: memref<1x16xf32, #tpu.memory_space<vmem>>, %arg5: memref<1x8x16x16xf32, #tpu.memory_space<vmem>>) attributes {dimension_semantics = [#tpu.dimension_semantics<parallel>, #tpu.dimension_semantics<parallel>], iteration_bounds = array<i64: 2, 2>, scalar_prefetch = 0 : i64, scratch_operands = 0 : i64, tpu.core_type = #tpu.core_type<tc>, window_params = [{transform_indices = @transform_0, window_bounds = array<i64: 1, 22, 22, 3>}, {pipeline_mode = #tpu.pipeline_mode<synchronous>, transform_indices = @transform_1, window_bounds = array<i64: 7, 7, 3, 16>}, {pipeline_mode = #tpu.pipeline_mode<synchronous>, transform_indices = @transform_2, window_bounds = array<i64: 1, 16>}, {transform_indices = @transform_3, window_bounds = array<i64: 1, 8, 16, 16>}]} {
    %c8_i32 = arith.constant 8 : i32
    %0 = arith.muli %arg1, %c8_i32 : i32
    %c0 = arith.constant 0 : index
    %c0_0 = arith.constant 0 : index
    %1 = vector.load %arg4[%c0, %c0_0] : memref<1x16xf32, #tpu.memory_space<vmem>>, vector<1x16xf32>
    %cst = arith.constant 0.000000e+00 : f32
    %2 = vector.broadcast %cst : f32 to vector<128x16xf32>
    %c0_i32 = arith.constant 0 : i32
    %3 = arith.addi %0, %c0_i32 : i32
    %c0_1 = arith.constant 0 : index
    %4 = arith.index_cast %3 : i32 to index
    %c0_2 = arith.constant 0 : index
    %c0_3 = arith.constant 0 : index
    %5 = vector.load %arg2[%c0_1, %4, %c0_2, %c0_3] : memref<1x22x22x3xf32, #tpu.memory_space<vmem>>, vector<1x8x16x3xf32>
    %6 = vector.shape_cast %5 : vector<1x8x16x3xf32> to vector<8x16x3xf32>
    %7 = vector.shape_cast %6 : vector<8x16x3xf32> to vector<128x3xf32>
    %8 = arith.truncf %7 : vector<128x3xf32> to vector<128x3xbf16>
    %c0_4 = arith.constant 0 : index
    %c0_5 = arith.constant 0 : index
    %c0_6 = arith.constant 0 : index
    %c0_7 = arith.constant 0 : index
    %9 = vector.load %arg3[%c0_4, %c0_5, %c0_6, %c0_7] : memref<7x7x3x16xf32, #tpu.memory_space<vmem>>, vector<1x1x3x16xf32>
    %10 = vector.shape_cast %9 : vector<1x1x3x16xf32> to vector<3x16xf32>
    %11 = arith.truncf %10 : vector<3x16xf32> to vector<3x16xbf16>
    %cst_8 = arith.constant dense<0.000000e+00> : vector<128x16xf32>
    %12 = tpu.matmul %8, %11, %cst_8 {dimension_numbers = #tpu.dot_dimension_numbers<[1], [0], [0], [1], [0, 0, 1, 1], [], []>} : vector<128x3xbf16>, vector<3x16xbf16>, vector<128x16xf32> -> vector<128x16xf32>
    %13 = arith.addf %2, %12 : vector<128x16xf32>
    %c0_i32_9 = arith.constant 0 : i32
    %14 = arith.addi %0, %c0_i32_9 : i32
    %c0_10 = arith.constant 0 : index
    %15 = arith.index_cast %14 : i32 to index
    %c1 = arith.constant 1 : index
    %c0_11 = arith.constant 0 : index
    %16 = vector.load %arg2[%c0_10, %15, %c1, %c0_11] : memref<1x22x22x3xf32, #tpu.memory_space<vmem>>, vector<1x8x16x3xf32>
    %17 = vector.shape_cast %16 : vector<1x8x16x3xf32> to vector<8x16x3xf32>
    %18 = vector.shape_cast %17 : vector<8x16x3xf32> to vector<128x3xf32>
    %19 = arith.truncf %18 : vector<128x3xf32> to vector<128x3xbf16>
    %c0_12 = arith.constant 0 : index
    %c1_13 = arith.constant 1 : index
    %c0_14 = arith.constant 0 : index
    %c0_15 = arith.constant 0 : index
    %20 = vector.load %arg3[%c0_12, %c1_13, %c0_14, %c0_15] : memref<7x7x3x16xf32, #tpu.memory_space<vmem>>, vector<1x1x3x16xf32>
    %21 = vector.shape_cast %20 : vector<1x1x3x16xf32> to vector<3x16xf32>
    %22 = arith.truncf %21 : vector<3x16xf32> to vector<3x16xbf16>
    %cst_16 = arith.constant dense<0.000000e+00> : vector<128x16xf32>
    %23 = tpu.matmul %19, %22, %cst_16 {dimension_numbers = #tpu.dot_dimension_numbers<[1], [0], [0], [1], [0, 0, 1, 1], [], []>} : vector<128x3xbf16>, vector<3x16xbf16>, vector<128x16xf32> -> vector<128x16xf32>
    %24 = arith.addf %13, %23 : vector<128x16xf32>
    %c0_i32_17 = arith.constant 0 : i32
    %25 = arith.addi %0, %c0_i32_17 : i32
    %c0_18 = arith.constant 0 : index
    %26 = arith.index_cast %25 : i32 to index
    %c2 = arith.constant 2 : index
    %c0_19 = arith.constant 0 : index
    %27 = vector.load %arg2[%c0_18, %26, %c2, %c0_19] : memref<1x22x22x3xf32, #tpu.memory_space<vmem>>, vector<1x8x16x3xf32>
    %28 = vector.shape_cast %27 : vector<1x8x16x3xf32> to vector<8x16x3xf32>
    %29 = vector.shape_cast %28 : vector<8x16x3xf32> to vector<128x3xf32>
    %30 = arith.truncf %29 : vector<128x3xf32> to vector<128x3xbf16>
    %c0_20 = arith.constant 0 : index
    %c2_21 = arith.constant 2 : index
    %c0_22 = arith.constant 0 : index
    %c0_23 = arith.constant 0 : index
    %31 = vector.load %arg3[%c0_20, %c2_21, %c0_22, %c0_23] : memref<7x7x3x16xf32, #tpu.memory_space<vmem>>, vector<1x1x3x16xf32>
    %32 = vector.shape_cast %31 : vector<1x1x3x16xf32> to vector<3x16xf32>
    %33 = arith.truncf %32 : vector<3x16xf32> to vector<3x16xbf16>
    %cst_24 = arith.constant dense<0.000000e+00> : vector<128x16xf32>
    %34 = tpu.matmul %30, %33, %cst_24 {dimension_numbers = #tpu.dot_dimension_numbers<[1], [0], [0], [1], [0, 0, 1, 1], [], []>} : vector<128x3xbf16>, vector<3x16xbf16>, vector<128x16xf32> -> vector<128x16xf32>
    %35 = arith.addf %24, %34 : vector<128x16xf32>
    %c0_i32_25 = arith.constant 0 : i32
    %36 = arith.addi %0, %c0_i32_25 : i32
    %c0_26 = arith.constant 0 : index
    %37 = arith.index_cast %36 : i32 to index
    %c3 = arith.constant 3 : index
    %c0_27 = arith.constant 0 : index
    %38 = vector.load %arg2[%c0_26, %37, %c3, %c0_27] : memref<1x22x22x3xf32, #tpu.memory_space<vmem>>, vector<1x8x16x3xf32>
    %39 = vector.shape_cast %38 : vector<1x8x16x3xf32> to vector<8x16x3xf32>
    %40 = vector.shape_cast %39 : vector<8x16x3xf32> to vector<128x3xf32>
    %41 = arith.truncf %40 : vector<128x3xf32> to vector<128x3xbf16>
    %c0_28 = arith.constant 0 : index
    %c3_29 = arith.constant 3 : index
    %c0_30 = arith.constant 0 : index
    %c0_31 = arith.constant 0 : index
    %42 = vector.load %arg3[%c0_28, %c3_29, %c0_30, %c0_31] : memref<7x7x3x16xf32, #tpu.memory_space<vmem>>, vector<1x1x3x16xf32>
    %43 = vector.shape_cast %42 : vector<1x1x3x16xf32> to vector<3x16xf32>
    %44 = arith.truncf %43 : vector<3x16xf32> to vector<3x16xbf16>
    %cst_32 = arith.constant dense<0.000000e+00> : vector<128x16xf32>
    %45 = tpu.matmul %41, %44, %cst_32 {dimension_numbers = #tpu.dot_dimension_numbers<[1], [0], [0], [1], [0, 0, 1, 1], [], []>} : vector<128x3xbf16>, vector<3x16xbf16>, vector<128x16xf32> -> vector<128x16xf32>
    %46 = arith.addf %35, %45 : vector<128x16xf32>
    %c0_i32_33 = arith.constant 0 : i32
    %47 = arith.addi %0, %c0_i32_33 : i32
    %c0_34 = arith.constant 0 : index
    %48 = arith.index_cast %47 : i32 to index
    %c4 = arith.constant 4 : index
    %c0_35 = arith.constant 0 : index
    %49 = vector.load %arg2[%c0_34, %48, %c4, %c0_35] : memref<1x22x22x3xf32, #tpu.memory_space<vmem>>, vector<1x8x16x3xf32>
    %50 = vector.shape_cast %49 : vector<1x8x16x3xf32> to vector<8x16x3xf32>
    %51 = vector.shape_cast %50 : vector<8x16x3xf32> to vector<128x3xf32>
    %52 = arith.truncf %51 : vector<128x3xf32> to vector<128x3xbf16>
    %c0_36 = arith.constant 0 : index
    %c4_37 = arith.constant 4 : index
    %c0_38 = arith.constant 0 : index
    %c0_39 = arith.constant 0 : index
    %53 = vector.load %arg3[%c0_36, %c4_37, %c0_38, %c0_39] : memref<7x7x3x16xf32, #tpu.memory_space<vmem>>, vector<1x1x3x16xf32>
    %54 = vector.shape_cast %53 : vector<1x1x3x16xf32> to vector<3x16xf32>
    %55 = arith.truncf %54 : vector<3x16xf32> to vector<3x16xbf16>
    %cst_40 = arith.constant dense<0.000000e+00> : vector<128x16xf32>
    %56 = tpu.matmul %52, %55, %cst_40 {dimension_numbers = #tpu.dot_dimension_numbers<[1], [0], [0], [1], [0, 0, 1, 1], [], []>} : vector<128x3xbf16>, vector<3x16xbf16>, vector<128x16xf32> -> vector<128x16xf32>
    %57 = arith.addf %46, %56 : vector<128x16xf32>
    %c0_i32_41 = arith.constant 0 : i32
    %58 = arith.addi %0, %c0_i32_41 : i32
    %c0_42 = arith.constant 0 : index
    %59 = arith.index_cast %58 : i32 to index
    %c5 = arith.constant 5 : index
    %c0_43 = arith.constant 0 : index
    %60 = vector.load %arg2[%c0_42, %59, %c5, %c0_43] : memref<1x22x22x3xf32, #tpu.memory_space<vmem>>, vector<1x8x16x3xf32>
    %61 = vector.shape_cast %60 : vector<1x8x16x3xf32> to vector<8x16x3xf32>
    %62 = vector.shape_cast %61 : vector<8x16x3xf32> to vector<128x3xf32>
    %63 = arith.truncf %62 : vector<128x3xf32> to vector<128x3xbf16>
    %c0_44 = arith.constant 0 : index
    %c5_45 = arith.constant 5 : index
    %c0_46 = arith.constant 0 : index
    %c0_47 = arith.constant 0 : index
    %64 = vector.load %arg3[%c0_44, %c5_45, %c0_46, %c0_47] : memref<7x7x3x16xf32, #tpu.memory_space<vmem>>, vector<1x1x3x16xf32>
    %65 = vector.shape_cast %64 : vector<1x1x3x16xf32> to vector<3x16xf32>
    %66 = arith.truncf %65 : vector<3x16xf32> to vector<3x16xbf16>
    %cst_48 = arith.constant dense<0.000000e+00> : vector<128x16xf32>
    %67 = tpu.matmul %63, %66, %cst_48 {dimension_numbers = #tpu.dot_dimension_numbers<[1], [0], [0], [1], [0, 0, 1, 1], [], []>} : vector<128x3xbf16>, vector<3x16xbf16>, vector<128x16xf32> -> vector<128x16xf32>
    %68 = arith.addf %57, %67 : vector<128x16xf32>
    %c0_i32_49 = arith.constant 0 : i32
    %69 = arith.addi %0, %c0_i32_49 : i32
    %c0_50 = arith.constant 0 : index
    %70 = arith.index_cast %69 : i32 to index
    %c6 = arith.constant 6 : index
    %c0_51 = arith.constant 0 : index
    %71 = vector.load %arg2[%c0_50, %70, %c6, %c0_51] : memref<1x22x22x3xf32, #tpu.memory_space<vmem>>, vector<1x8x16x3xf32>
    %72 = vector.shape_cast %71 : vector<1x8x16x3xf32> to vector<8x16x3xf32>
    %73 = vector.shape_cast %72 : vector<8x16x3xf32> to vector<128x3xf32>
    %74 = arith.truncf %73 : vector<128x3xf32> to vector<128x3xbf16>
    %c0_52 = arith.constant 0 : index
    %c6_53 = arith.constant 6 : index
    %c0_54 = arith.constant 0 : index
    %c0_55 = arith.constant 0 : index
    %75 = vector.load %arg3[%c0_52, %c6_53, %c0_54, %c0_55] : memref<7x7x3x16xf32, #tpu.memory_space<vmem>>, vector<1x1x3x16xf32>
    %76 = vector.shape_cast %75 : vector<1x1x3x16xf32> to vector<3x16xf32>
    %77 = arith.truncf %76 : vector<3x16xf32> to vector<3x16xbf16>
    %cst_56 = arith.constant dense<0.000000e+00> : vector<128x16xf32>
    %78 = tpu.matmul %74, %77, %cst_56 {dimension_numbers = #tpu.dot_dimension_numbers<[1], [0], [0], [1], [0, 0, 1, 1], [], []>} : vector<128x3xbf16>, vector<3x16xbf16>, vector<128x16xf32> -> vector<128x16xf32>
    %79 = arith.addf %68, %78 : vector<128x16xf32>
    %c1_i32 = arith.constant 1 : i32
    %80 = arith.addi %0, %c1_i32 : i32
    %c0_57 = arith.constant 0 : index
    %81 = arith.index_cast %80 : i32 to index
    %c0_58 = arith.constant 0 : index
    %c0_59 = arith.constant 0 : index
    %82 = vector.load %arg2[%c0_57, %81, %c0_58, %c0_59] : memref<1x22x22x3xf32, #tpu.memory_space<vmem>>, vector<1x8x16x3xf32>
    %83 = vector.shape_cast %82 : vector<1x8x16x3xf32> to vector<8x16x3xf32>
    %84 = vector.shape_cast %83 : vector<8x16x3xf32> to vector<128x3xf32>
    %85 = arith.truncf %84 : vector<128x3xf32> to vector<128x3xbf16>
    %c1_60 = arith.constant 1 : index
    %c0_61 = arith.constant 0 : index
    %c0_62 = arith.constant 0 : index
    %c0_63 = arith.constant 0 : index
    %86 = vector.load %arg3[%c1_60, %c0_61, %c0_62, %c0_63] : memref<7x7x3x16xf32, #tpu.memory_space<vmem>>, vector<1x1x3x16xf32>
    %87 = vector.shape_cast %86 : vector<1x1x3x16xf32> to vector<3x16xf32>
    %88 = arith.truncf %87 : vector<3x16xf32> to vector<3x16xbf16>
    %cst_64 = arith.constant dense<0.000000e+00> : vector<128x16xf32>
    %89 = tpu.matmul %85, %88, %cst_64 {dimension_numbers = #tpu.dot_dimension_numbers<[1], [0], [0], [1], [0, 0, 1, 1], [], []>} : vector<128x3xbf16>, vector<3x16xbf16>, vector<128x16xf32> -> vector<128x16xf32>
    %90 = arith.addf %79, %89 : vector<128x16xf32>
    %c1_i32_65 = arith.constant 1 : i32
    %91 = arith.addi %0, %c1_i32_65 : i32
    %c0_66 = arith.constant 0 : index
    %92 = arith.index_cast %91 : i32 to index
    %c1_67 = arith.constant 1 : index
    %c0_68 = arith.constant 0 : index
    %93 = vector.load %arg2[%c0_66, %92, %c1_67, %c0_68] : memref<1x22x22x3xf32, #tpu.memory_space<vmem>>, vector<1x8x16x3xf32>
    %94 = vector.shape_cast %93 : vector<1x8x16x3xf32> to vector<8x16x3xf32>
    %95 = vector.shape_cast %94 : vector<8x16x3xf32> to vector<128x3xf32>
    %96 = arith.truncf %95 : vector<128x3xf32> to vector<128x3xbf16>
    %c1_69 = arith.constant 1 : index
    %c1_70 = arith.constant 1 : index
    %c0_71 = arith.constant 0 : index
    %c0_72 = arith.constant 0 : index
    %97 = vector.load %arg3[%c1_69, %c1_70, %c0_71, %c0_72] : memref<7x7x3x16xf32, #tpu.memory_space<vmem>>, vector<1x1x3x16xf32>
    %98 = vector.shape_cast %97 : vector<1x1x3x16xf32> to vector<3x16xf32>
    %99 = arith.truncf %98 : vector<3x16xf32> to vector<3x16xbf16>
    %cst_73 = arith.constant dense<0.000000e+00> : vector<128x16xf32>
    %100 = tpu.matmul %96, %99, %cst_73 {dimension_numbers = #tpu.dot_dimension_numbers<[1], [0], [0], [1], [0, 0, 1, 1], [], []>} : vector<128x3xbf16>, vector<3x16xbf16>, vector<128x16xf32> -> vector<128x16xf32>
    %101 = arith.addf %90, %100 : vector<128x16xf32>
    %c1_i32_74 = arith.constant 1 : i32
    %102 = arith.addi %0, %c1_i32_74 : i32
    %c0_75 = arith.constant 0 : index
    %103 = arith.index_cast %102 : i32 to index
    %c2_76 = arith.constant 2 : index
    %c0_77 = arith.constant 0 : index
    %104 = vector.load %arg2[%c0_75, %103, %c2_76, %c0_77] : memref<1x22x22x3xf32, #tpu.memory_space<vmem>>, vector<1x8x16x3xf32>
    %105 = vector.shape_cast %104 : vector<1x8x16x3xf32> to vector<8x16x3xf32>
    %106 = vector.shape_cast %105 : vector<8x16x3xf32> to vector<128x3xf32>
    %107 = arith.truncf %106 : vector<128x3xf32> to vector<128x3xbf16>
    %c1_78 = arith.constant 1 : index
    %c2_79 = arith.constant 2 : index
    %c0_80 = arith.constant 0 : index
    %c0_81 = arith.constant 0 : index
    %108 = vector.load %arg3[%c1_78, %c2_79, %c0_80, %c0_81] : memref<7x7x3x16xf32, #tpu.memory_space<vmem>>, vector<1x1x3x16xf32>
    %109 = vector.shape_cast %108 : vector<1x1x3x16xf32> to vector<3x16xf32>
    %110 = arith.truncf %109 : vector<3x16xf32> to vector<3x16xbf16>
    %cst_82 = arith.constant dense<0.000000e+00> : vector<128x16xf32>
    %111 = tpu.matmul %107, %110, %cst_82 {dimension_numbers = #tpu.dot_dimension_numbers<[1], [0], [0], [1], [0, 0, 1, 1], [], []>} : vector<128x3xbf16>, vector<3x16xbf16>, vector<128x16xf32> -> vector<128x16xf32>
    %112 = arith.addf %101, %111 : vector<128x16xf32>
    %c1_i32_83 = arith.constant 1 : i32
    %113 = arith.addi %0, %c1_i32_83 : i32
    %c0_84 = arith.constant 0 : index
    %114 = arith.index_cast %113 : i32 to index
    %c3_85 = arith.constant 3 : index
    %c0_86 = arith.constant 0 : index
    %115 = vector.load %arg2[%c0_84, %114, %c3_85, %c0_86] : memref<1x22x22x3xf32, #tpu.memory_space<vmem>>, vector<1x8x16x3xf32>
    %116 = vector.shape_cast %115 : vector<1x8x16x3xf32> to vector<8x16x3xf32>
    %117 = vector.shape_cast %116 : vector<8x16x3xf32> to vector<128x3xf32>
    %118 = arith.truncf %117 : vector<128x3xf32> to vector<128x3xbf16>
    %c1_87 = arith.constant 1 : index
    %c3_88 = arith.constant 3 : index
    %c0_89 = arith.constant 0 : index
    %c0_90 = arith.constant 0 : index
    %119 = vector.load %arg3[%c1_87, %c3_88, %c0_89, %c0_90] : memref<7x7x3x16xf32, #tpu.memory_space<vmem>>, vector<1x1x3x16xf32>
    %120 = vector.shape_cast %119 : vector<1x1x3x16xf32> to vector<3x16xf32>
    %121 = arith.truncf %120 : vector<3x16xf32> to vector<3x16xbf16>
    %cst_91 = arith.constant dense<0.000000e+00> : vector<128x16xf32>
    %122 = tpu.matmul %118, %121, %cst_91 {dimension_numbers = #tpu.dot_dimension_numbers<[1], [0], [0], [1], [0, 0, 1, 1], [], []>} : vector<128x3xbf16>, vector<3x16xbf16>, vector<128x16xf32> -> vector<128x16xf32>
    %123 = arith.addf %112, %122 : vector<128x16xf32>
    %c1_i32_92 = arith.constant 1 : i32
    %124 = arith.addi %0, %c1_i32_92 : i32
    %c0_93 = arith.constant 0 : index
    %125 = arith.index_cast %124 : i32 to index
    %c4_94 = arith.constant 4 : index
    %c0_95 = arith.constant 0 : index
    %126 = vector.load %arg2[%c0_93, %125, %c4_94, %c0_95] : memref<1x22x22x3xf32, #tpu.memory_space<vmem>>, vector<1x8x16x3xf32>
    %127 = vector.shape_cast %126 : vector<1x8x16x3xf32> to vector<8x16x3xf32>
    %128 = vector.shape_cast %127 : vector<8x16x3xf32> to vector<128x3xf32>
    %129 = arith.truncf %128 : vector<128x3xf32> to vector<128x3xbf16>
    %c1_96 = arith.constant 1 : index
    %c4_97 = arith.constant 4 : index
    %c0_98 = arith.constant 0 : index
    %c0_99 = arith.constant 0 : index
    %130 = vector.load %arg3[%c1_96, %c4_97, %c0_98, %c0_99] : memref<7x7x3x16xf32, #tpu.memory_space<vmem>>, vector<1x1x3x16xf32>
    %131 = vector.shape_cast %130 : vector<1x1x3x16xf32> to vector<3x16xf32>
    %132 = arith.truncf %131 : vector<3x16xf32> to vector<3x16xbf16>
    %cst_100 = arith.constant dense<0.000000e+00> : vector<128x16xf32>
    %133 = tpu.matmul %129, %132, %cst_100 {dimension_numbers = #tpu.dot_dimension_numbers<[1], [0], [0], [1], [0, 0, 1, 1], [], []>} : vector<128x3xbf16>, vector<3x16xbf16>, vector<128x16xf32> -> vector<128x16xf32>
    %134 = arith.addf %123, %133 : vector<128x16xf32>
    %c1_i32_101 = arith.constant 1 : i32
    %135 = arith.addi %0, %c1_i32_101 : i32
    %c0_102 = arith.constant 0 : index
    %136 = arith.index_cast %135 : i32 to index
    %c5_103 = arith.constant 5 : index
    %c0_104 = arith.constant 0 : index
    %137 = vector.load %arg2[%c0_102, %136, %c5_103, %c0_104] : memref<1x22x22x3xf32, #tpu.memory_space<vmem>>, vector<1x8x16x3xf32>
    %138 = vector.shape_cast %137 : vector<1x8x16x3xf32> to vector<8x16x3xf32>
    %139 = vector.shape_cast %138 : vector<8x16x3xf32> to vector<128x3xf32>
    %140 = arith.truncf %139 : vector<128x3xf32> to vector<128x3xbf16>
    %c1_105 = arith.constant 1 : index
    %c5_106 = arith.constant 5 : index
    %c0_107 = arith.constant 0 : index
    %c0_108 = arith.constant 0 : index
    %141 = vector.load %arg3[%c1_105, %c5_106, %c0_107, %c0_108] : memref<7x7x3x16xf32, #tpu.memory_space<vmem>>, vector<1x1x3x16xf32>
    %142 = vector.shape_cast %141 : vector<1x1x3x16xf32> to vector<3x16xf32>
    %143 = arith.truncf %142 : vector<3x16xf32> to vector<3x16xbf16>
    %cst_109 = arith.constant dense<0.000000e+00> : vector<128x16xf32>
    %144 = tpu.matmul %140, %143, %cst_109 {dimension_numbers = #tpu.dot_dimension_numbers<[1], [0], [0], [1], [0, 0, 1, 1], [], []>} : vector<128x3xbf16>, vector<3x16xbf16>, vector<128x16xf32> -> vector<128x16xf32>
    %145 = arith.addf %134, %144 : vector<128x16xf32>
    %c1_i32_110 = arith.constant 1 : i32
    %146 = arith.addi %0, %c1_i32_110 : i32
    %c0_111 = arith.constant 0 : index
    %147 = arith.index_cast %146 : i32 to index
    %c6_112 = arith.constant 6 : index
    %c0_113 = arith.constant 0 : index
    %148 = vector.load %arg2[%c0_111, %147, %c6_112, %c0_113] : memref<1x22x22x3xf32, #tpu.memory_space<vmem>>, vector<1x8x16x3xf32>
    %149 = vector.shape_cast %148 : vector<1x8x16x3xf32> to vector<8x16x3xf32>
    %150 = vector.shape_cast %149 : vector<8x16x3xf32> to vector<128x3xf32>
    %151 = arith.truncf %150 : vector<128x3xf32> to vector<128x3xbf16>
    %c1_114 = arith.constant 1 : index
    %c6_115 = arith.constant 6 : index
    %c0_116 = arith.constant 0 : index
    %c0_117 = arith.constant 0 : index
    %152 = vector.load %arg3[%c1_114, %c6_115, %c0_116, %c0_117] : memref<7x7x3x16xf32, #tpu.memory_space<vmem>>, vector<1x1x3x16xf32>
    %153 = vector.shape_cast %152 : vector<1x1x3x16xf32> to vector<3x16xf32>
    %154 = arith.truncf %153 : vector<3x16xf32> to vector<3x16xbf16>
    %cst_118 = arith.constant dense<0.000000e+00> : vector<128x16xf32>
    %155 = tpu.matmul %151, %154, %cst_118 {dimension_numbers = #tpu.dot_dimension_numbers<[1], [0], [0], [1], [0, 0, 1, 1], [], []>} : vector<128x3xbf16>, vector<3x16xbf16>, vector<128x16xf32> -> vector<128x16xf32>
    %156 = arith.addf %145, %155 : vector<128x16xf32>
    %c2_i32 = arith.constant 2 : i32
    %157 = arith.addi %0, %c2_i32 : i32
    %c0_119 = arith.constant 0 : index
    %158 = arith.index_cast %157 : i32 to index
    %c0_120 = arith.constant 0 : index
    %c0_121 = arith.constant 0 : index
    %159 = vector.load %arg2[%c0_119, %158, %c0_120, %c0_121] : memref<1x22x22x3xf32, #tpu.memory_space<vmem>>, vector<1x8x16x3xf32>
    %160 = vector.shape_cast %159 : vector<1x8x16x3xf32> to vector<8x16x3xf32>
    %161 = vector.shape_cast %160 : vector<8x16x3xf32> to vector<128x3xf32>
    %162 = arith.truncf %161 : vector<128x3xf32> to vector<128x3xbf16>
    %c2_122 = arith.constant 2 : index
    %c0_123 = arith.constant 0 : index
    %c0_124 = arith.constant 0 : index
    %c0_125 = arith.constant 0 : index
    %163 = vector.load %arg3[%c2_122, %c0_123, %c0_124, %c0_125] : memref<7x7x3x16xf32, #tpu.memory_space<vmem>>, vector<1x1x3x16xf32>
    %164 = vector.shape_cast %163 : vector<1x1x3x16xf32> to vector<3x16xf32>
    %165 = arith.truncf %164 : vector<3x16xf32> to vector<3x16xbf16>
    %cst_126 = arith.constant dense<0.000000e+00> : vector<128x16xf32>
    %166 = tpu.matmul %162, %165, %cst_126 {dimension_numbers = #tpu.dot_dimension_numbers<[1], [0], [0], [1], [0, 0, 1, 1], [], []>} : vector<128x3xbf16>, vector<3x16xbf16>, vector<128x16xf32> -> vector<128x16xf32>
    %167 = arith.addf %156, %166 : vector<128x16xf32>
    %c2_i32_127 = arith.constant 2 : i32
    %168 = arith.addi %0, %c2_i32_127 : i32
    %c0_128 = arith.constant 0 : index
    %169 = arith.index_cast %168 : i32 to index
    %c1_129 = arith.constant 1 : index
    %c0_130 = arith.constant 0 : index
    %170 = vector.load %arg2[%c0_128, %169, %c1_129, %c0_130] : memref<1x22x22x3xf32, #tpu.memory_space<vmem>>, vector<1x8x16x3xf32>
    %171 = vector.shape_cast %170 : vector<1x8x16x3xf32> to vector<8x16x3xf32>
    %172 = vector.shape_cast %171 : vector<8x16x3xf32> to vector<128x3xf32>
    %173 = arith.truncf %172 : vector<128x3xf32> to vector<128x3xbf16>
    %c2_131 = arith.constant 2 : index
    %c1_132 = arith.constant 1 : index
    %c0_133 = arith.constant 0 : index
    %c0_134 = arith.constant 0 : index
    %174 = vector.load %arg3[%c2_131, %c1_132, %c0_133, %c0_134] : memref<7x7x3x16xf32, #tpu.memory_space<vmem>>, vector<1x1x3x16xf32>
    %175 = vector.shape_cast %174 : vector<1x1x3x16xf32> to vector<3x16xf32>
    %176 = arith.truncf %175 : vector<3x16xf32> to vector<3x16xbf16>
    %cst_135 = arith.constant dense<0.000000e+00> : vector<128x16xf32>
    %177 = tpu.matmul %173, %176, %cst_135 {dimension_numbers = #tpu.dot_dimension_numbers<[1], [0], [0], [1], [0, 0, 1, 1], [], []>} : vector<128x3xbf16>, vector<3x16xbf16>, vector<128x16xf32> -> vector<128x16xf32>
    %178 = arith.addf %167, %177 : vector<128x16xf32>
    %c2_i32_136 = arith.constant 2 : i32
    %179 = arith.addi %0, %c2_i32_136 : i32
    %c0_137 = arith.constant 0 : index
    %180 = arith.index_cast %179 : i32 to index
    %c2_138 = arith.constant 2 : index
    %c0_139 = arith.constant 0 : index
    %181 = vector.load %arg2[%c0_137, %180, %c2_138, %c0_139] : memref<1x22x22x3xf32, #tpu.memory_space<vmem>>, vector<1x8x16x3xf32>
    %182 = vector.shape_cast %181 : vector<1x8x16x3xf32> to vector<8x16x3xf32>
    %183 = vector.shape_cast %182 : vector<8x16x3xf32> to vector<128x3xf32>
    %184 = arith.truncf %183 : vector<128x3xf32> to vector<128x3xbf16>
    %c2_140 = arith.constant 2 : index
    %c2_141 = arith.constant 2 : index
    %c0_142 = arith.constant 0 : index
    %c0_143 = arith.constant 0 : index
    %185 = vector.load %arg3[%c2_140, %c2_141, %c0_142, %c0_143] : memref<7x7x3x16xf32, #tpu.memory_space<vmem>>, vector<1x1x3x16xf32>
    %186 = vector.shape_cast %185 : vector<1x1x3x16xf32> to vector<3x16xf32>
    %187 = arith.truncf %186 : vector<3x16xf32> to vector<3x16xbf16>
    %cst_144 = arith.constant dense<0.000000e+00> : vector<128x16xf32>
    %188 = tpu.matmul %184, %187, %cst_144 {dimension_numbers = #tpu.dot_dimension_numbers<[1], [0], [0], [1], [0, 0, 1, 1], [], []>} : vector<128x3xbf16>, vector<3x16xbf16>, vector<128x16xf32> -> vector<128x16xf32>
    %189 = arith.addf %178, %188 : vector<128x16xf32>
    %c2_i32_145 = arith.constant 2 : i32
    %190 = arith.addi %0, %c2_i32_145 : i32
    %c0_146 = arith.constant 0 : index
    %191 = arith.index_cast %190 : i32 to index
    %c3_147 = arith.constant 3 : index
    %c0_148 = arith.constant 0 : index
    %192 = vector.load %arg2[%c0_146, %191, %c3_147, %c0_148] : memref<1x22x22x3xf32, #tpu.memory_space<vmem>>, vector<1x8x16x3xf32>
    %193 = vector.shape_cast %192 : vector<1x8x16x3xf32> to vector<8x16x3xf32>
    %194 = vector.shape_cast %193 : vector<8x16x3xf32> to vector<128x3xf32>
    %195 = arith.truncf %194 : vector<128x3xf32> to vector<128x3xbf16>
    %c2_149 = arith.constant 2 : index
    %c3_150 = arith.constant 3 : index
    %c0_151 = arith.constant 0 : index
    %c0_152 = arith.constant 0 : index
    %196 = vector.load %arg3[%c2_149, %c3_150, %c0_151, %c0_152] : memref<7x7x3x16xf32, #tpu.memory_space<vmem>>, vector<1x1x3x16xf32>
    %197 = vector.shape_cast %196 : vector<1x1x3x16xf32> to vector<3x16xf32>
    %198 = arith.truncf %197 : vector<3x16xf32> to vector<3x16xbf16>
    %cst_153 = arith.constant dense<0.000000e+00> : vector<128x16xf32>
    %199 = tpu.matmul %195, %198, %cst_153 {dimension_numbers = #tpu.dot_dimension_numbers<[1], [0], [0], [1], [0, 0, 1, 1], [], []>} : vector<128x3xbf16>, vector<3x16xbf16>, vector<128x16xf32> -> vector<128x16xf32>
    %200 = arith.addf %189, %199 : vector<128x16xf32>
    %c2_i32_154 = arith.constant 2 : i32
    %201 = arith.addi %0, %c2_i32_154 : i32
    %c0_155 = arith.constant 0 : index
    %202 = arith.index_cast %201 : i32 to index
    %c4_156 = arith.constant 4 : index
    %c0_157 = arith.constant 0 : index
    %203 = vector.load %arg2[%c0_155, %202, %c4_156, %c0_157] : memref<1x22x22x3xf32, #tpu.memory_space<vmem>>, vector<1x8x16x3xf32>
    %204 = vector.shape_cast %203 : vector<1x8x16x3xf32> to vector<8x16x3xf32>
    %205 = vector.shape_cast %204 : vector<8x16x3xf32> to vector<128x3xf32>
    %206 = arith.truncf %205 : vector<128x3xf32> to vector<128x3xbf16>
    %c2_158 = arith.constant 2 : index
    %c4_159 = arith.constant 4 : index
    %c0_160 = arith.constant 0 : index
    %c0_161 = arith.constant 0 : index
    %207 = vector.load %arg3[%c2_158, %c4_159, %c0_160, %c0_161] : memref<7x7x3x16xf32, #tpu.memory_space<vmem>>, vector<1x1x3x16xf32>
    %208 = vector.shape_cast %207 : vector<1x1x3x16xf32> to vector<3x16xf32>
    %209 = arith.truncf %208 : vector<3x16xf32> to vector<3x16xbf16>
    %cst_162 = arith.constant dense<0.000000e+00> : vector<128x16xf32>
    %210 = tpu.matmul %206, %209, %cst_162 {dimension_numbers = #tpu.dot_dimension_numbers<[1], [0], [0], [1], [0, 0, 1, 1], [], []>} : vector<128x3xbf16>, vector<3x16xbf16>, vector<128x16xf32> -> vector<128x16xf32>
    %211 = arith.addf %200, %210 : vector<128x16xf32>
    %c2_i32_163 = arith.constant 2 : i32
    %212 = arith.addi %0, %c2_i32_163 : i32
    %c0_164 = arith.constant 0 : index
    %213 = arith.index_cast %212 : i32 to index
    %c5_165 = arith.constant 5 : index
    %c0_166 = arith.constant 0 : index
    %214 = vector.load %arg2[%c0_164, %213, %c5_165, %c0_166] : memref<1x22x22x3xf32, #tpu.memory_space<vmem>>, vector<1x8x16x3xf32>
    %215 = vector.shape_cast %214 : vector<1x8x16x3xf32> to vector<8x16x3xf32>
    %216 = vector.shape_cast %215 : vector<8x16x3xf32> to vector<128x3xf32>
    %217 = arith.truncf %216 : vector<128x3xf32> to vector<128x3xbf16>
    %c2_167 = arith.constant 2 : index
    %c5_168 = arith.constant 5 : index
    %c0_169 = arith.constant 0 : index
    %c0_170 = arith.constant 0 : index
    %218 = vector.load %arg3[%c2_167, %c5_168, %c0_169, %c0_170] : memref<7x7x3x16xf32, #tpu.memory_space<vmem>>, vector<1x1x3x16xf32>
    %219 = vector.shape_cast %218 : vector<1x1x3x16xf32> to vector<3x16xf32>
    %220 = arith.truncf %219 : vector<3x16xf32> to vector<3x16xbf16>
    %cst_171 = arith.constant dense<0.000000e+00> : vector<128x16xf32>
    %221 = tpu.matmul %217, %220, %cst_171 {dimension_numbers = #tpu.dot_dimension_numbers<[1], [0], [0], [1], [0, 0, 1, 1], [], []>} : vector<128x3xbf16>, vector<3x16xbf16>, vector<128x16xf32> -> vector<128x16xf32>
    %222 = arith.addf %211, %221 : vector<128x16xf32>
    %c2_i32_172 = arith.constant 2 : i32
    %223 = arith.addi %0, %c2_i32_172 : i32
    %c0_173 = arith.constant 0 : index
    %224 = arith.index_cast %223 : i32 to index
    %c6_174 = arith.constant 6 : index
    %c0_175 = arith.constant 0 : index
    %225 = vector.load %arg2[%c0_173, %224, %c6_174, %c0_175] : memref<1x22x22x3xf32, #tpu.memory_space<vmem>>, vector<1x8x16x3xf32>
    %226 = vector.shape_cast %225 : vector<1x8x16x3xf32> to vector<8x16x3xf32>
    %227 = vector.shape_cast %226 : vector<8x16x3xf32> to vector<128x3xf32>
    %228 = arith.truncf %227 : vector<128x3xf32> to vector<128x3xbf16>
    %c2_176 = arith.constant 2 : index
    %c6_177 = arith.constant 6 : index
    %c0_178 = arith.constant 0 : index
    %c0_179 = arith.constant 0 : index
    %229 = vector.load %arg3[%c2_176, %c6_177, %c0_178, %c0_179] : memref<7x7x3x16xf32, #tpu.memory_space<vmem>>, vector<1x1x3x16xf32>
    %230 = vector.shape_cast %229 : vector<1x1x3x16xf32> to vector<3x16xf32>
    %231 = arith.truncf %230 : vector<3x16xf32> to vector<3x16xbf16>
    %cst_180 = arith.constant dense<0.000000e+00> : vector<128x16xf32>
    %232 = tpu.matmul %228, %231, %cst_180 {dimension_numbers = #tpu.dot_dimension_numbers<[1], [0], [0], [1], [0, 0, 1, 1], [], []>} : vector<128x3xbf16>, vector<3x16xbf16>, vector<128x16xf32> -> vector<128x16xf32>
    %233 = arith.addf %222, %232 : vector<128x16xf32>
    %c3_i32 = arith.constant 3 : i32
    %234 = arith.addi %0, %c3_i32 : i32
    %c0_181 = arith.constant 0 : index
    %235 = arith.index_cast %234 : i32 to index
    %c0_182 = arith.constant 0 : index
    %c0_183 = arith.constant 0 : index
    %236 = vector.load %arg2[%c0_181, %235, %c0_182, %c0_183] : memref<1x22x22x3xf32, #tpu.memory_space<vmem>>, vector<1x8x16x3xf32>
    %237 = vector.shape_cast %236 : vector<1x8x16x3xf32> to vector<8x16x3xf32>
    %238 = vector.shape_cast %237 : vector<8x16x3xf32> to vector<128x3xf32>
    %239 = arith.truncf %238 : vector<128x3xf32> to vector<128x3xbf16>
    %c3_184 = arith.constant 3 : index
    %c0_185 = arith.constant 0 : index
    %c0_186 = arith.constant 0 : index
    %c0_187 = arith.constant 0 : index
    %240 = vector.load %arg3[%c3_184, %c0_185, %c0_186, %c0_187] : memref<7x7x3x16xf32, #tpu.memory_space<vmem>>, vector<1x1x3x16xf32>
    %241 = vector.shape_cast %240 : vector<1x1x3x16xf32> to vector<3x16xf32>
    %242 = arith.truncf %241 : vector<3x16xf32> to vector<3x16xbf16>
    %cst_188 = arith.constant dense<0.000000e+00> : vector<128x16xf32>
    %243 = tpu.matmul %239, %242, %cst_188 {dimension_numbers = #tpu.dot_dimension_numbers<[1], [0], [0], [1], [0, 0, 1, 1], [], []>} : vector<128x3xbf16>, vector<3x16xbf16>, vector<128x16xf32> -> vector<128x16xf32>
    %244 = arith.addf %233, %243 : vector<128x16xf32>
    %c3_i32_189 = arith.constant 3 : i32
    %245 = arith.addi %0, %c3_i32_189 : i32
    %c0_190 = arith.constant 0 : index
    %246 = arith.index_cast %245 : i32 to index
    %c1_191 = arith.constant 1 : index
    %c0_192 = arith.constant 0 : index
    %247 = vector.load %arg2[%c0_190, %246, %c1_191, %c0_192] : memref<1x22x22x3xf32, #tpu.memory_space<vmem>>, vector<1x8x16x3xf32>
    %248 = vector.shape_cast %247 : vector<1x8x16x3xf32> to vector<8x16x3xf32>
    %249 = vector.shape_cast %248 : vector<8x16x3xf32> to vector<128x3xf32>
    %250 = arith.truncf %249 : vector<128x3xf32> to vector<128x3xbf16>
    %c3_193 = arith.constant 3 : index
    %c1_194 = arith.constant 1 : index
    %c0_195 = arith.constant 0 : index
    %c0_196 = arith.constant 0 : index
    %251 = vector.load %arg3[%c3_193, %c1_194, %c0_195, %c0_196] : memref<7x7x3x16xf32, #tpu.memory_space<vmem>>, vector<1x1x3x16xf32>
    %252 = vector.shape_cast %251 : vector<1x1x3x16xf32> to vector<3x16xf32>
    %253 = arith.truncf %252 : vector<3x16xf32> to vector<3x16xbf16>
    %cst_197 = arith.constant dense<0.000000e+00> : vector<128x16xf32>
    %254 = tpu.matmul %250, %253, %cst_197 {dimension_numbers = #tpu.dot_dimension_numbers<[1], [0], [0], [1], [0, 0, 1, 1], [], []>} : vector<128x3xbf16>, vector<3x16xbf16>, vector<128x16xf32> -> vector<128x16xf32>
    %255 = arith.addf %244, %254 : vector<128x16xf32>
    %c3_i32_198 = arith.constant 3 : i32
    %256 = arith.addi %0, %c3_i32_198 : i32
    %c0_199 = arith.constant 0 : index
    %257 = arith.index_cast %256 : i32 to index
    %c2_200 = arith.constant 2 : index
    %c0_201 = arith.constant 0 : index
    %258 = vector.load %arg2[%c0_199, %257, %c2_200, %c0_201] : memref<1x22x22x3xf32, #tpu.memory_space<vmem>>, vector<1x8x16x3xf32>
    %259 = vector.shape_cast %258 : vector<1x8x16x3xf32> to vector<8x16x3xf32>
    %260 = vector.shape_cast %259 : vector<8x16x3xf32> to vector<128x3xf32>
    %261 = arith.truncf %260 : vector<128x3xf32> to vector<128x3xbf16>
    %c3_202 = arith.constant 3 : index
    %c2_203 = arith.constant 2 : index
    %c0_204 = arith.constant 0 : index
    %c0_205 = arith.constant 0 : index
    %262 = vector.load %arg3[%c3_202, %c2_203, %c0_204, %c0_205] : memref<7x7x3x16xf32, #tpu.memory_space<vmem>>, vector<1x1x3x16xf32>
    %263 = vector.shape_cast %262 : vector<1x1x3x16xf32> to vector<3x16xf32>
    %264 = arith.truncf %263 : vector<3x16xf32> to vector<3x16xbf16>
    %cst_206 = arith.constant dense<0.000000e+00> : vector<128x16xf32>
    %265 = tpu.matmul %261, %264, %cst_206 {dimension_numbers = #tpu.dot_dimension_numbers<[1], [0], [0], [1], [0, 0, 1, 1], [], []>} : vector<128x3xbf16>, vector<3x16xbf16>, vector<128x16xf32> -> vector<128x16xf32>
    %266 = arith.addf %255, %265 : vector<128x16xf32>
    %c3_i32_207 = arith.constant 3 : i32
    %267 = arith.addi %0, %c3_i32_207 : i32
    %c0_208 = arith.constant 0 : index
    %268 = arith.index_cast %267 : i32 to index
    %c3_209 = arith.constant 3 : index
    %c0_210 = arith.constant 0 : index
    %269 = vector.load %arg2[%c0_208, %268, %c3_209, %c0_210] : memref<1x22x22x3xf32, #tpu.memory_space<vmem>>, vector<1x8x16x3xf32>
    %270 = vector.shape_cast %269 : vector<1x8x16x3xf32> to vector<8x16x3xf32>
    %271 = vector.shape_cast %270 : vector<8x16x3xf32> to vector<128x3xf32>
    %272 = arith.truncf %271 : vector<128x3xf32> to vector<128x3xbf16>
    %c3_211 = arith.constant 3 : index
    %c3_212 = arith.constant 3 : index
    %c0_213 = arith.constant 0 : index
    %c0_214 = arith.constant 0 : index
    %273 = vector.load %arg3[%c3_211, %c3_212, %c0_213, %c0_214] : memref<7x7x3x16xf32, #tpu.memory_space<vmem>>, vector<1x1x3x16xf32>
    %274 = vector.shape_cast %273 : vector<1x1x3x16xf32> to vector<3x16xf32>
    %275 = arith.truncf %274 : vector<3x16xf32> to vector<3x16xbf16>
    %cst_215 = arith.constant dense<0.000000e+00> : vector<128x16xf32>
    %276 = tpu.matmul %272, %275, %cst_215 {dimension_numbers = #tpu.dot_dimension_numbers<[1], [0], [0], [1], [0, 0, 1, 1], [], []>} : vector<128x3xbf16>, vector<3x16xbf16>, vector<128x16xf32> -> vector<128x16xf32>
    %277 = arith.addf %266, %276 : vector<128x16xf32>
    %c3_i32_216 = arith.constant 3 : i32
    %278 = arith.addi %0, %c3_i32_216 : i32
    %c0_217 = arith.constant 0 : index
    %279 = arith.index_cast %278 : i32 to index
    %c4_218 = arith.constant 4 : index
    %c0_219 = arith.constant 0 : index
    %280 = vector.load %arg2[%c0_217, %279, %c4_218, %c0_219] : memref<1x22x22x3xf32, #tpu.memory_space<vmem>>, vector<1x8x16x3xf32>
    %281 = vector.shape_cast %280 : vector<1x8x16x3xf32> to vector<8x16x3xf32>
    %282 = vector.shape_cast %281 : vector<8x16x3xf32> to vector<128x3xf32>
    %283 = arith.truncf %282 : vector<128x3xf32> to vector<128x3xbf16>
    %c3_220 = arith.constant 3 : index
    %c4_221 = arith.constant 4 : index
    %c0_222 = arith.constant 0 : index
    %c0_223 = arith.constant 0 : index
    %284 = vector.load %arg3[%c3_220, %c4_221, %c0_222, %c0_223] : memref<7x7x3x16xf32, #tpu.memory_space<vmem>>, vector<1x1x3x16xf32>
    %285 = vector.shape_cast %284 : vector<1x1x3x16xf32> to vector<3x16xf32>
    %286 = arith.truncf %285 : vector<3x16xf32> to vector<3x16xbf16>
    %cst_224 = arith.constant dense<0.000000e+00> : vector<128x16xf32>
    %287 = tpu.matmul %283, %286, %cst_224 {dimension_numbers = #tpu.dot_dimension_numbers<[1], [0], [0], [1], [0, 0, 1, 1], [], []>} : vector<128x3xbf16>, vector<3x16xbf16>, vector<128x16xf32> -> vector<128x16xf32>
    %288 = arith.addf %277, %287 : vector<128x16xf32>
    %c3_i32_225 = arith.constant 3 : i32
    %289 = arith.addi %0, %c3_i32_225 : i32
    %c0_226 = arith.constant 0 : index
    %290 = arith.index_cast %289 : i32 to index
    %c5_227 = arith.constant 5 : index
    %c0_228 = arith.constant 0 : index
    %291 = vector.load %arg2[%c0_226, %290, %c5_227, %c0_228] : memref<1x22x22x3xf32, #tpu.memory_space<vmem>>, vector<1x8x16x3xf32>
    %292 = vector.shape_cast %291 : vector<1x8x16x3xf32> to vector<8x16x3xf32>
    %293 = vector.shape_cast %292 : vector<8x16x3xf32> to vector<128x3xf32>
    %294 = arith.truncf %293 : vector<128x3xf32> to vector<128x3xbf16>
    %c3_229 = arith.constant 3 : index
    %c5_230 = arith.constant 5 : index
    %c0_231 = arith.constant 0 : index
    %c0_232 = arith.constant 0 : index
    %295 = vector.load %arg3[%c3_229, %c5_230, %c0_231, %c0_232] : memref<7x7x3x16xf32, #tpu.memory_space<vmem>>, vector<1x1x3x16xf32>
    %296 = vector.shape_cast %295 : vector<1x1x3x16xf32> to vector<3x16xf32>
    %297 = arith.truncf %296 : vector<3x16xf32> to vector<3x16xbf16>
    %cst_233 = arith.constant dense<0.000000e+00> : vector<128x16xf32>
    %298 = tpu.matmul %294, %297, %cst_233 {dimension_numbers = #tpu.dot_dimension_numbers<[1], [0], [0], [1], [0, 0, 1, 1], [], []>} : vector<128x3xbf16>, vector<3x16xbf16>, vector<128x16xf32> -> vector<128x16xf32>
    %299 = arith.addf %288, %298 : vector<128x16xf32>
    %c3_i32_234 = arith.constant 3 : i32
    %300 = arith.addi %0, %c3_i32_234 : i32
    %c0_235 = arith.constant 0 : index
    %301 = arith.index_cast %300 : i32 to index
    %c6_236 = arith.constant 6 : index
    %c0_237 = arith.constant 0 : index
    %302 = vector.load %arg2[%c0_235, %301, %c6_236, %c0_237] : memref<1x22x22x3xf32, #tpu.memory_space<vmem>>, vector<1x8x16x3xf32>
    %303 = vector.shape_cast %302 : vector<1x8x16x3xf32> to vector<8x16x3xf32>
    %304 = vector.shape_cast %303 : vector<8x16x3xf32> to vector<128x3xf32>
    %305 = arith.truncf %304 : vector<128x3xf32> to vector<128x3xbf16>
    %c3_238 = arith.constant 3 : index
    %c6_239 = arith.constant 6 : index
    %c0_240 = arith.constant 0 : index
    %c0_241 = arith.constant 0 : index
    %306 = vector.load %arg3[%c3_238, %c6_239, %c0_240, %c0_241] : memref<7x7x3x16xf32, #tpu.memory_space<vmem>>, vector<1x1x3x16xf32>
    %307 = vector.shape_cast %306 : vector<1x1x3x16xf32> to vector<3x16xf32>
    %308 = arith.truncf %307 : vector<3x16xf32> to vector<3x16xbf16>
    %cst_242 = arith.constant dense<0.000000e+00> : vector<128x16xf32>
    %309 = tpu.matmul %305, %308, %cst_242 {dimension_numbers = #tpu.dot_dimension_numbers<[1], [0], [0], [1], [0, 0, 1, 1], [], []>} : vector<128x3xbf16>, vector<3x16xbf16>, vector<128x16xf32> -> vector<128x16xf32>
    %310 = arith.addf %299, %309 : vector<128x16xf32>
    %c4_i32 = arith.constant 4 : i32
    %311 = arith.addi %0, %c4_i32 : i32
    %c0_243 = arith.constant 0 : index
    %312 = arith.index_cast %311 : i32 to index
    %c0_244 = arith.constant 0 : index
    %c0_245 = arith.constant 0 : index
    %313 = vector.load %arg2[%c0_243, %312, %c0_244, %c0_245] : memref<1x22x22x3xf32, #tpu.memory_space<vmem>>, vector<1x8x16x3xf32>
    %314 = vector.shape_cast %313 : vector<1x8x16x3xf32> to vector<8x16x3xf32>
    %315 = vector.shape_cast %314 : vector<8x16x3xf32> to vector<128x3xf32>
    %316 = arith.truncf %315 : vector<128x3xf32> to vector<128x3xbf16>
    %c4_246 = arith.constant 4 : index
    %c0_247 = arith.constant 0 : index
    %c0_248 = arith.constant 0 : index
    %c0_249 = arith.constant 0 : index
    %317 = vector.load %arg3[%c4_246, %c0_247, %c0_248, %c0_249] : memref<7x7x3x16xf32, #tpu.memory_space<vmem>>, vector<1x1x3x16xf32>
    %318 = vector.shape_cast %317 : vector<1x1x3x16xf32> to vector<3x16xf32>
    %319 = arith.truncf %318 : vector<3x16xf32> to vector<3x16xbf16>
    %cst_250 = arith.constant dense<0.000000e+00> : vector<128x16xf32>
    %320 = tpu.matmul %316, %319, %cst_250 {dimension_numbers = #tpu.dot_dimension_numbers<[1], [0], [0], [1], [0, 0, 1, 1], [], []>} : vector<128x3xbf16>, vector<3x16xbf16>, vector<128x16xf32> -> vector<128x16xf32>
    %321 = arith.addf %310, %320 : vector<128x16xf32>
    %c4_i32_251 = arith.constant 4 : i32
    %322 = arith.addi %0, %c4_i32_251 : i32
    %c0_252 = arith.constant 0 : index
    %323 = arith.index_cast %322 : i32 to index
    %c1_253 = arith.constant 1 : index
    %c0_254 = arith.constant 0 : index
    %324 = vector.load %arg2[%c0_252, %323, %c1_253, %c0_254] : memref<1x22x22x3xf32, #tpu.memory_space<vmem>>, vector<1x8x16x3xf32>
    %325 = vector.shape_cast %324 : vector<1x8x16x3xf32> to vector<8x16x3xf32>
    %326 = vector.shape_cast %325 : vector<8x16x3xf32> to vector<128x3xf32>
    %327 = arith.truncf %326 : vector<128x3xf32> to vector<128x3xbf16>
    %c4_255 = arith.constant 4 : index
    %c1_256 = arith.constant 1 : index
    %c0_257 = arith.constant 0 : index
    %c0_258 = arith.constant 0 : index
    %328 = vector.load %arg3[%c4_255, %c1_256, %c0_257, %c0_258] : memref<7x7x3x16xf32, #tpu.memory_space<vmem>>, vector<1x1x3x16xf32>
    %329 = vector.shape_cast %328 : vector<1x1x3x16xf32> to vector<3x16xf32>
    %330 = arith.truncf %329 : vector<3x16xf32> to vector<3x16xbf16>
    %cst_259 = arith.constant dense<0.000000e+00> : vector<128x16xf32>
    %331 = tpu.matmul %327, %330, %cst_259 {dimension_numbers = #tpu.dot_dimension_numbers<[1], [0], [0], [1], [0, 0, 1, 1], [], []>} : vector<128x3xbf16>, vector<3x16xbf16>, vector<128x16xf32> -> vector<128x16xf32>
    %332 = arith.addf %321, %331 : vector<128x16xf32>
    %c4_i32_260 = arith.constant 4 : i32
    %333 = arith.addi %0, %c4_i32_260 : i32
    %c0_261 = arith.constant 0 : index
    %334 = arith.index_cast %333 : i32 to index
    %c2_262 = arith.constant 2 : index
    %c0_263 = arith.constant 0 : index
    %335 = vector.load %arg2[%c0_261, %334, %c2_262, %c0_263] : memref<1x22x22x3xf32, #tpu.memory_space<vmem>>, vector<1x8x16x3xf32>
    %336 = vector.shape_cast %335 : vector<1x8x16x3xf32> to vector<8x16x3xf32>
    %337 = vector.shape_cast %336 : vector<8x16x3xf32> to vector<128x3xf32>
    %338 = arith.truncf %337 : vector<128x3xf32> to vector<128x3xbf16>
    %c4_264 = arith.constant 4 : index
    %c2_265 = arith.constant 2 : index
    %c0_266 = arith.constant 0 : index
    %c0_267 = arith.constant 0 : index
    %339 = vector.load %arg3[%c4_264, %c2_265, %c0_266, %c0_267] : memref<7x7x3x16xf32, #tpu.memory_space<vmem>>, vector<1x1x3x16xf32>
    %340 = vector.shape_cast %339 : vector<1x1x3x16xf32> to vector<3x16xf32>
    %341 = arith.truncf %340 : vector<3x16xf32> to vector<3x16xbf16>
    %cst_268 = arith.constant dense<0.000000e+00> : vector<128x16xf32>
    %342 = tpu.matmul %338, %341, %cst_268 {dimension_numbers = #tpu.dot_dimension_numbers<[1], [0], [0], [1], [0, 0, 1, 1], [], []>} : vector<128x3xbf16>, vector<3x16xbf16>, vector<128x16xf32> -> vector<128x16xf32>
    %343 = arith.addf %332, %342 : vector<128x16xf32>
    %c4_i32_269 = arith.constant 4 : i32
    %344 = arith.addi %0, %c4_i32_269 : i32
    %c0_270 = arith.constant 0 : index
    %345 = arith.index_cast %344 : i32 to index
    %c3_271 = arith.constant 3 : index
    %c0_272 = arith.constant 0 : index
    %346 = vector.load %arg2[%c0_270, %345, %c3_271, %c0_272] : memref<1x22x22x3xf32, #tpu.memory_space<vmem>>, vector<1x8x16x3xf32>
    %347 = vector.shape_cast %346 : vector<1x8x16x3xf32> to vector<8x16x3xf32>
    %348 = vector.shape_cast %347 : vector<8x16x3xf32> to vector<128x3xf32>
    %349 = arith.truncf %348 : vector<128x3xf32> to vector<128x3xbf16>
    %c4_273 = arith.constant 4 : index
    %c3_274 = arith.constant 3 : index
    %c0_275 = arith.constant 0 : index
    %c0_276 = arith.constant 0 : index
    %350 = vector.load %arg3[%c4_273, %c3_274, %c0_275, %c0_276] : memref<7x7x3x16xf32, #tpu.memory_space<vmem>>, vector<1x1x3x16xf32>
    %351 = vector.shape_cast %350 : vector<1x1x3x16xf32> to vector<3x16xf32>
    %352 = arith.truncf %351 : vector<3x16xf32> to vector<3x16xbf16>
    %cst_277 = arith.constant dense<0.000000e+00> : vector<128x16xf32>
    %353 = tpu.matmul %349, %352, %cst_277 {dimension_numbers = #tpu.dot_dimension_numbers<[1], [0], [0], [1], [0, 0, 1, 1], [], []>} : vector<128x3xbf16>, vector<3x16xbf16>, vector<128x16xf32> -> vector<128x16xf32>
    %354 = arith.addf %343, %353 : vector<128x16xf32>
    %c4_i32_278 = arith.constant 4 : i32
    %355 = arith.addi %0, %c4_i32_278 : i32
    %c0_279 = arith.constant 0 : index
    %356 = arith.index_cast %355 : i32 to index
    %c4_280 = arith.constant 4 : index
    %c0_281 = arith.constant 0 : index
    %357 = vector.load %arg2[%c0_279, %356, %c4_280, %c0_281] : memref<1x22x22x3xf32, #tpu.memory_space<vmem>>, vector<1x8x16x3xf32>
    %358 = vector.shape_cast %357 : vector<1x8x16x3xf32> to vector<8x16x3xf32>
    %359 = vector.shape_cast %358 : vector<8x16x3xf32> to vector<128x3xf32>
    %360 = arith.truncf %359 : vector<128x3xf32> to vector<128x3xbf16>
    %c4_282 = arith.constant 4 : index
    %c4_283 = arith.constant 4 : index
    %c0_284 = arith.constant 0 : index
    %c0_285 = arith.constant 0 : index
    %361 = vector.load %arg3[%c4_282, %c4_283, %c0_284, %c0_285] : memref<7x7x3x16xf32, #tpu.memory_space<vmem>>, vector<1x1x3x16xf32>
    %362 = vector.shape_cast %361 : vector<1x1x3x16xf32> to vector<3x16xf32>
    %363 = arith.truncf %362 : vector<3x16xf32> to vector<3x16xbf16>
    %cst_286 = arith.constant dense<0.000000e+00> : vector<128x16xf32>
    %364 = tpu.matmul %360, %363, %cst_286 {dimension_numbers = #tpu.dot_dimension_numbers<[1], [0], [0], [1], [0, 0, 1, 1], [], []>} : vector<128x3xbf16>, vector<3x16xbf16>, vector<128x16xf32> -> vector<128x16xf32>
    %365 = arith.addf %354, %364 : vector<128x16xf32>
    %c4_i32_287 = arith.constant 4 : i32
    %366 = arith.addi %0, %c4_i32_287 : i32
    %c0_288 = arith.constant 0 : index
    %367 = arith.index_cast %366 : i32 to index
    %c5_289 = arith.constant 5 : index
    %c0_290 = arith.constant 0 : index
    %368 = vector.load %arg2[%c0_288, %367, %c5_289, %c0_290] : memref<1x22x22x3xf32, #tpu.memory_space<vmem>>, vector<1x8x16x3xf32>
    %369 = vector.shape_cast %368 : vector<1x8x16x3xf32> to vector<8x16x3xf32>
    %370 = vector.shape_cast %369 : vector<8x16x3xf32> to vector<128x3xf32>
    %371 = arith.truncf %370 : vector<128x3xf32> to vector<128x3xbf16>
    %c4_291 = arith.constant 4 : index
    %c5_292 = arith.constant 5 : index
    %c0_293 = arith.constant 0 : index
    %c0_294 = arith.constant 0 : index
    %372 = vector.load %arg3[%c4_291, %c5_292, %c0_293, %c0_294] : memref<7x7x3x16xf32, #tpu.memory_space<vmem>>, vector<1x1x3x16xf32>
    %373 = vector.shape_cast %372 : vector<1x1x3x16xf32> to vector<3x16xf32>
    %374 = arith.truncf %373 : vector<3x16xf32> to vector<3x16xbf16>
    %cst_295 = arith.constant dense<0.000000e+00> : vector<128x16xf32>
    %375 = tpu.matmul %371, %374, %cst_295 {dimension_numbers = #tpu.dot_dimension_numbers<[1], [0], [0], [1], [0, 0, 1, 1], [], []>} : vector<128x3xbf16>, vector<3x16xbf16>, vector<128x16xf32> -> vector<128x16xf32>
    %376 = arith.addf %365, %375 : vector<128x16xf32>
    %c4_i32_296 = arith.constant 4 : i32
    %377 = arith.addi %0, %c4_i32_296 : i32
    %c0_297 = arith.constant 0 : index
    %378 = arith.index_cast %377 : i32 to index
    %c6_298 = arith.constant 6 : index
    %c0_299 = arith.constant 0 : index
    %379 = vector.load %arg2[%c0_297, %378, %c6_298, %c0_299] : memref<1x22x22x3xf32, #tpu.memory_space<vmem>>, vector<1x8x16x3xf32>
    %380 = vector.shape_cast %379 : vector<1x8x16x3xf32> to vector<8x16x3xf32>
    %381 = vector.shape_cast %380 : vector<8x16x3xf32> to vector<128x3xf32>
    %382 = arith.truncf %381 : vector<128x3xf32> to vector<128x3xbf16>
    %c4_300 = arith.constant 4 : index
    %c6_301 = arith.constant 6 : index
    %c0_302 = arith.constant 0 : index
    %c0_303 = arith.constant 0 : index
    %383 = vector.load %arg3[%c4_300, %c6_301, %c0_302, %c0_303] : memref<7x7x3x16xf32, #tpu.memory_space<vmem>>, vector<1x1x3x16xf32>
    %384 = vector.shape_cast %383 : vector<1x1x3x16xf32> to vector<3x16xf32>
    %385 = arith.truncf %384 : vector<3x16xf32> to vector<3x16xbf16>
    %cst_304 = arith.constant dense<0.000000e+00> : vector<128x16xf32>
    %386 = tpu.matmul %382, %385, %cst_304 {dimension_numbers = #tpu.dot_dimension_numbers<[1], [0], [0], [1], [0, 0, 1, 1], [], []>} : vector<128x3xbf16>, vector<3x16xbf16>, vector<128x16xf32> -> vector<128x16xf32>
    %387 = arith.addf %376, %386 : vector<128x16xf32>
    %c5_i32 = arith.constant 5 : i32
    %388 = arith.addi %0, %c5_i32 : i32
    %c0_305 = arith.constant 0 : index
    %389 = arith.index_cast %388 : i32 to index
    %c0_306 = arith.constant 0 : index
    %c0_307 = arith.constant 0 : index
    %390 = vector.load %arg2[%c0_305, %389, %c0_306, %c0_307] : memref<1x22x22x3xf32, #tpu.memory_space<vmem>>, vector<1x8x16x3xf32>
    %391 = vector.shape_cast %390 : vector<1x8x16x3xf32> to vector<8x16x3xf32>
    %392 = vector.shape_cast %391 : vector<8x16x3xf32> to vector<128x3xf32>
    %393 = arith.truncf %392 : vector<128x3xf32> to vector<128x3xbf16>
    %c5_308 = arith.constant 5 : index
    %c0_309 = arith.constant 0 : index
    %c0_310 = arith.constant 0 : index
    %c0_311 = arith.constant 0 : index
    %394 = vector.load %arg3[%c5_308, %c0_309, %c0_310, %c0_311] : memref<7x7x3x16xf32, #tpu.memory_space<vmem>>, vector<1x1x3x16xf32>
    %395 = vector.shape_cast %394 : vector<1x1x3x16xf32> to vector<3x16xf32>
    %396 = arith.truncf %395 : vector<3x16xf32> to vector<3x16xbf16>
    %cst_312 = arith.constant dense<0.000000e+00> : vector<128x16xf32>
    %397 = tpu.matmul %393, %396, %cst_312 {dimension_numbers = #tpu.dot_dimension_numbers<[1], [0], [0], [1], [0, 0, 1, 1], [], []>} : vector<128x3xbf16>, vector<3x16xbf16>, vector<128x16xf32> -> vector<128x16xf32>
    %398 = arith.addf %387, %397 : vector<128x16xf32>
    %c5_i32_313 = arith.constant 5 : i32
    %399 = arith.addi %0, %c5_i32_313 : i32
    %c0_314 = arith.constant 0 : index
    %400 = arith.index_cast %399 : i32 to index
    %c1_315 = arith.constant 1 : index
    %c0_316 = arith.constant 0 : index
    %401 = vector.load %arg2[%c0_314, %400, %c1_315, %c0_316] : memref<1x22x22x3xf32, #tpu.memory_space<vmem>>, vector<1x8x16x3xf32>
    %402 = vector.shape_cast %401 : vector<1x8x16x3xf32> to vector<8x16x3xf32>
    %403 = vector.shape_cast %402 : vector<8x16x3xf32> to vector<128x3xf32>
    %404 = arith.truncf %403 : vector<128x3xf32> to vector<128x3xbf16>
    %c5_317 = arith.constant 5 : index
    %c1_318 = arith.constant 1 : index
    %c0_319 = arith.constant 0 : index
    %c0_320 = arith.constant 0 : index
    %405 = vector.load %arg3[%c5_317, %c1_318, %c0_319, %c0_320] : memref<7x7x3x16xf32, #tpu.memory_space<vmem>>, vector<1x1x3x16xf32>
    %406 = vector.shape_cast %405 : vector<1x1x3x16xf32> to vector<3x16xf32>
    %407 = arith.truncf %406 : vector<3x16xf32> to vector<3x16xbf16>
    %cst_321 = arith.constant dense<0.000000e+00> : vector<128x16xf32>
    %408 = tpu.matmul %404, %407, %cst_321 {dimension_numbers = #tpu.dot_dimension_numbers<[1], [0], [0], [1], [0, 0, 1, 1], [], []>} : vector<128x3xbf16>, vector<3x16xbf16>, vector<128x16xf32> -> vector<128x16xf32>
    %409 = arith.addf %398, %408 : vector<128x16xf32>
    %c5_i32_322 = arith.constant 5 : i32
    %410 = arith.addi %0, %c5_i32_322 : i32
    %c0_323 = arith.constant 0 : index
    %411 = arith.index_cast %410 : i32 to index
    %c2_324 = arith.constant 2 : index
    %c0_325 = arith.constant 0 : index
    %412 = vector.load %arg2[%c0_323, %411, %c2_324, %c0_325] : memref<1x22x22x3xf32, #tpu.memory_space<vmem>>, vector<1x8x16x3xf32>
    %413 = vector.shape_cast %412 : vector<1x8x16x3xf32> to vector<8x16x3xf32>
    %414 = vector.shape_cast %413 : vector<8x16x3xf32> to vector<128x3xf32>
    %415 = arith.truncf %414 : vector<128x3xf32> to vector<128x3xbf16>
    %c5_326 = arith.constant 5 : index
    %c2_327 = arith.constant 2 : index
    %c0_328 = arith.constant 0 : index
    %c0_329 = arith.constant 0 : index
    %416 = vector.load %arg3[%c5_326, %c2_327, %c0_328, %c0_329] : memref<7x7x3x16xf32, #tpu.memory_space<vmem>>, vector<1x1x3x16xf32>
    %417 = vector.shape_cast %416 : vector<1x1x3x16xf32> to vector<3x16xf32>
    %418 = arith.truncf %417 : vector<3x16xf32> to vector<3x16xbf16>
    %cst_330 = arith.constant dense<0.000000e+00> : vector<128x16xf32>
    %419 = tpu.matmul %415, %418, %cst_330 {dimension_numbers = #tpu.dot_dimension_numbers<[1], [0], [0], [1], [0, 0, 1, 1], [], []>} : vector<128x3xbf16>, vector<3x16xbf16>, vector<128x16xf32> -> vector<128x16xf32>
    %420 = arith.addf %409, %419 : vector<128x16xf32>
    %c5_i32_331 = arith.constant 5 : i32
    %421 = arith.addi %0, %c5_i32_331 : i32
    %c0_332 = arith.constant 0 : index
    %422 = arith.index_cast %421 : i32 to index
    %c3_333 = arith.constant 3 : index
    %c0_334 = arith.constant 0 : index
    %423 = vector.load %arg2[%c0_332, %422, %c3_333, %c0_334] : memref<1x22x22x3xf32, #tpu.memory_space<vmem>>, vector<1x8x16x3xf32>
    %424 = vector.shape_cast %423 : vector<1x8x16x3xf32> to vector<8x16x3xf32>
    %425 = vector.shape_cast %424 : vector<8x16x3xf32> to vector<128x3xf32>
    %426 = arith.truncf %425 : vector<128x3xf32> to vector<128x3xbf16>
    %c5_335 = arith.constant 5 : index
    %c3_336 = arith.constant 3 : index
    %c0_337 = arith.constant 0 : index
    %c0_338 = arith.constant 0 : index
    %427 = vector.load %arg3[%c5_335, %c3_336, %c0_337, %c0_338] : memref<7x7x3x16xf32, #tpu.memory_space<vmem>>, vector<1x1x3x16xf32>
    %428 = vector.shape_cast %427 : vector<1x1x3x16xf32> to vector<3x16xf32>
    %429 = arith.truncf %428 : vector<3x16xf32> to vector<3x16xbf16>
    %cst_339 = arith.constant dense<0.000000e+00> : vector<128x16xf32>
    %430 = tpu.matmul %426, %429, %cst_339 {dimension_numbers = #tpu.dot_dimension_numbers<[1], [0], [0], [1], [0, 0, 1, 1], [], []>} : vector<128x3xbf16>, vector<3x16xbf16>, vector<128x16xf32> -> vector<128x16xf32>
    %431 = arith.addf %420, %430 : vector<128x16xf32>
    %c5_i32_340 = arith.constant 5 : i32
    %432 = arith.addi %0, %c5_i32_340 : i32
    %c0_341 = arith.constant 0 : index
    %433 = arith.index_cast %432 : i32 to index
    %c4_342 = arith.constant 4 : index
    %c0_343 = arith.constant 0 : index
    %434 = vector.load %arg2[%c0_341, %433, %c4_342, %c0_343] : memref<1x22x22x3xf32, #tpu.memory_space<vmem>>, vector<1x8x16x3xf32>
    %435 = vector.shape_cast %434 : vector<1x8x16x3xf32> to vector<8x16x3xf32>
    %436 = vector.shape_cast %435 : vector<8x16x3xf32> to vector<128x3xf32>
    %437 = arith.truncf %436 : vector<128x3xf32> to vector<128x3xbf16>
    %c5_344 = arith.constant 5 : index
    %c4_345 = arith.constant 4 : index
    %c0_346 = arith.constant 0 : index
    %c0_347 = arith.constant 0 : index
    %438 = vector.load %arg3[%c5_344, %c4_345, %c0_346, %c0_347] : memref<7x7x3x16xf32, #tpu.memory_space<vmem>>, vector<1x1x3x16xf32>
    %439 = vector.shape_cast %438 : vector<1x1x3x16xf32> to vector<3x16xf32>
    %440 = arith.truncf %439 : vector<3x16xf32> to vector<3x16xbf16>
    %cst_348 = arith.constant dense<0.000000e+00> : vector<128x16xf32>
    %441 = tpu.matmul %437, %440, %cst_348 {dimension_numbers = #tpu.dot_dimension_numbers<[1], [0], [0], [1], [0, 0, 1, 1], [], []>} : vector<128x3xbf16>, vector<3x16xbf16>, vector<128x16xf32> -> vector<128x16xf32>
    %442 = arith.addf %431, %441 : vector<128x16xf32>
    %c5_i32_349 = arith.constant 5 : i32
    %443 = arith.addi %0, %c5_i32_349 : i32
    %c0_350 = arith.constant 0 : index
    %444 = arith.index_cast %443 : i32 to index
    %c5_351 = arith.constant 5 : index
    %c0_352 = arith.constant 0 : index
    %445 = vector.load %arg2[%c0_350, %444, %c5_351, %c0_352] : memref<1x22x22x3xf32, #tpu.memory_space<vmem>>, vector<1x8x16x3xf32>
    %446 = vector.shape_cast %445 : vector<1x8x16x3xf32> to vector<8x16x3xf32>
    %447 = vector.shape_cast %446 : vector<8x16x3xf32> to vector<128x3xf32>
    %448 = arith.truncf %447 : vector<128x3xf32> to vector<128x3xbf16>
    %c5_353 = arith.constant 5 : index
    %c5_354 = arith.constant 5 : index
    %c0_355 = arith.constant 0 : index
    %c0_356 = arith.constant 0 : index
    %449 = vector.load %arg3[%c5_353, %c5_354, %c0_355, %c0_356] : memref<7x7x3x16xf32, #tpu.memory_space<vmem>>, vector<1x1x3x16xf32>
    %450 = vector.shape_cast %449 : vector<1x1x3x16xf32> to vector<3x16xf32>
    %451 = arith.truncf %450 : vector<3x16xf32> to vector<3x16xbf16>
    %cst_357 = arith.constant dense<0.000000e+00> : vector<128x16xf32>
    %452 = tpu.matmul %448, %451, %cst_357 {dimension_numbers = #tpu.dot_dimension_numbers<[1], [0], [0], [1], [0, 0, 1, 1], [], []>} : vector<128x3xbf16>, vector<3x16xbf16>, vector<128x16xf32> -> vector<128x16xf32>
    %453 = arith.addf %442, %452 : vector<128x16xf32>
    %c5_i32_358 = arith.constant 5 : i32
    %454 = arith.addi %0, %c5_i32_358 : i32
    %c0_359 = arith.constant 0 : index
    %455 = arith.index_cast %454 : i32 to index
    %c6_360 = arith.constant 6 : index
    %c0_361 = arith.constant 0 : index
    %456 = vector.load %arg2[%c0_359, %455, %c6_360, %c0_361] : memref<1x22x22x3xf32, #tpu.memory_space<vmem>>, vector<1x8x16x3xf32>
    %457 = vector.shape_cast %456 : vector<1x8x16x3xf32> to vector<8x16x3xf32>
    %458 = vector.shape_cast %457 : vector<8x16x3xf32> to vector<128x3xf32>
    %459 = arith.truncf %458 : vector<128x3xf32> to vector<128x3xbf16>
    %c5_362 = arith.constant 5 : index
    %c6_363 = arith.constant 6 : index
    %c0_364 = arith.constant 0 : index
    %c0_365 = arith.constant 0 : index
    %460 = vector.load %arg3[%c5_362, %c6_363, %c0_364, %c0_365] : memref<7x7x3x16xf32, #tpu.memory_space<vmem>>, vector<1x1x3x16xf32>
    %461 = vector.shape_cast %460 : vector<1x1x3x16xf32> to vector<3x16xf32>
    %462 = arith.truncf %461 : vector<3x16xf32> to vector<3x16xbf16>
    %cst_366 = arith.constant dense<0.000000e+00> : vector<128x16xf32>
    %463 = tpu.matmul %459, %462, %cst_366 {dimension_numbers = #tpu.dot_dimension_numbers<[1], [0], [0], [1], [0, 0, 1, 1], [], []>} : vector<128x3xbf16>, vector<3x16xbf16>, vector<128x16xf32> -> vector<128x16xf32>
    %464 = arith.addf %453, %463 : vector<128x16xf32>
    %c6_i32 = arith.constant 6 : i32
    %465 = arith.addi %0, %c6_i32 : i32
    %c0_367 = arith.constant 0 : index
    %466 = arith.index_cast %465 : i32 to index
    %c0_368 = arith.constant 0 : index
    %c0_369 = arith.constant 0 : index
    %467 = vector.load %arg2[%c0_367, %466, %c0_368, %c0_369] : memref<1x22x22x3xf32, #tpu.memory_space<vmem>>, vector<1x8x16x3xf32>
    %468 = vector.shape_cast %467 : vector<1x8x16x3xf32> to vector<8x16x3xf32>
    %469 = vector.shape_cast %468 : vector<8x16x3xf32> to vector<128x3xf32>
    %470 = arith.truncf %469 : vector<128x3xf32> to vector<128x3xbf16>
    %c6_370 = arith.constant 6 : index
    %c0_371 = arith.constant 0 : index
    %c0_372 = arith.constant 0 : index
    %c0_373 = arith.constant 0 : index
    %471 = vector.load %arg3[%c6_370, %c0_371, %c0_372, %c0_373] : memref<7x7x3x16xf32, #tpu.memory_space<vmem>>, vector<1x1x3x16xf32>
    %472 = vector.shape_cast %471 : vector<1x1x3x16xf32> to vector<3x16xf32>
    %473 = arith.truncf %472 : vector<3x16xf32> to vector<3x16xbf16>
    %cst_374 = arith.constant dense<0.000000e+00> : vector<128x16xf32>
    %474 = tpu.matmul %470, %473, %cst_374 {dimension_numbers = #tpu.dot_dimension_numbers<[1], [0], [0], [1], [0, 0, 1, 1], [], []>} : vector<128x3xbf16>, vector<3x16xbf16>, vector<128x16xf32> -> vector<128x16xf32>
    %475 = arith.addf %464, %474 : vector<128x16xf32>
    %c6_i32_375 = arith.constant 6 : i32
    %476 = arith.addi %0, %c6_i32_375 : i32
    %c0_376 = arith.constant 0 : index
    %477 = arith.index_cast %476 : i32 to index
    %c1_377 = arith.constant 1 : index
    %c0_378 = arith.constant 0 : index
    %478 = vector.load %arg2[%c0_376, %477, %c1_377, %c0_378] : memref<1x22x22x3xf32, #tpu.memory_space<vmem>>, vector<1x8x16x3xf32>
    %479 = vector.shape_cast %478 : vector<1x8x16x3xf32> to vector<8x16x3xf32>
    %480 = vector.shape_cast %479 : vector<8x16x3xf32> to vector<128x3xf32>
    %481 = arith.truncf %480 : vector<128x3xf32> to vector<128x3xbf16>
    %c6_379 = arith.constant 6 : index
    %c1_380 = arith.constant 1 : index
    %c0_381 = arith.constant 0 : index
    %c0_382 = arith.constant 0 : index
    %482 = vector.load %arg3[%c6_379, %c1_380, %c0_381, %c0_382] : memref<7x7x3x16xf32, #tpu.memory_space<vmem>>, vector<1x1x3x16xf32>
    %483 = vector.shape_cast %482 : vector<1x1x3x16xf32> to vector<3x16xf32>
    %484 = arith.truncf %483 : vector<3x16xf32> to vector<3x16xbf16>
    %cst_383 = arith.constant dense<0.000000e+00> : vector<128x16xf32>
    %485 = tpu.matmul %481, %484, %cst_383 {dimension_numbers = #tpu.dot_dimension_numbers<[1], [0], [0], [1], [0, 0, 1, 1], [], []>} : vector<128x3xbf16>, vector<3x16xbf16>, vector<128x16xf32> -> vector<128x16xf32>
    %486 = arith.addf %475, %485 : vector<128x16xf32>
    %c6_i32_384 = arith.constant 6 : i32
    %487 = arith.addi %0, %c6_i32_384 : i32
    %c0_385 = arith.constant 0 : index
    %488 = arith.index_cast %487 : i32 to index
    %c2_386 = arith.constant 2 : index
    %c0_387 = arith.constant 0 : index
    %489 = vector.load %arg2[%c0_385, %488, %c2_386, %c0_387] : memref<1x22x22x3xf32, #tpu.memory_space<vmem>>, vector<1x8x16x3xf32>
    %490 = vector.shape_cast %489 : vector<1x8x16x3xf32> to vector<8x16x3xf32>
    %491 = vector.shape_cast %490 : vector<8x16x3xf32> to vector<128x3xf32>
    %492 = arith.truncf %491 : vector<128x3xf32> to vector<128x3xbf16>
    %c6_388 = arith.constant 6 : index
    %c2_389 = arith.constant 2 : index
    %c0_390 = arith.constant 0 : index
    %c0_391 = arith.constant 0 : index
    %493 = vector.load %arg3[%c6_388, %c2_389, %c0_390, %c0_391] : memref<7x7x3x16xf32, #tpu.memory_space<vmem>>, vector<1x1x3x16xf32>
    %494 = vector.shape_cast %493 : vector<1x1x3x16xf32> to vector<3x16xf32>
    %495 = arith.truncf %494 : vector<3x16xf32> to vector<3x16xbf16>
    %cst_392 = arith.constant dense<0.000000e+00> : vector<128x16xf32>
    %496 = tpu.matmul %492, %495, %cst_392 {dimension_numbers = #tpu.dot_dimension_numbers<[1], [0], [0], [1], [0, 0, 1, 1], [], []>} : vector<128x3xbf16>, vector<3x16xbf16>, vector<128x16xf32> -> vector<128x16xf32>
    %497 = arith.addf %486, %496 : vector<128x16xf32>
    %c6_i32_393 = arith.constant 6 : i32
    %498 = arith.addi %0, %c6_i32_393 : i32
    %c0_394 = arith.constant 0 : index
    %499 = arith.index_cast %498 : i32 to index
    %c3_395 = arith.constant 3 : index
    %c0_396 = arith.constant 0 : index
    %500 = vector.load %arg2[%c0_394, %499, %c3_395, %c0_396] : memref<1x22x22x3xf32, #tpu.memory_space<vmem>>, vector<1x8x16x3xf32>
    %501 = vector.shape_cast %500 : vector<1x8x16x3xf32> to vector<8x16x3xf32>
    %502 = vector.shape_cast %501 : vector<8x16x3xf32> to vector<128x3xf32>
    %503 = arith.truncf %502 : vector<128x3xf32> to vector<128x3xbf16>
    %c6_397 = arith.constant 6 : index
    %c3_398 = arith.constant 3 : index
    %c0_399 = arith.constant 0 : index
    %c0_400 = arith.constant 0 : index
    %504 = vector.load %arg3[%c6_397, %c3_398, %c0_399, %c0_400] : memref<7x7x3x16xf32, #tpu.memory_space<vmem>>, vector<1x1x3x16xf32>
    %505 = vector.shape_cast %504 : vector<1x1x3x16xf32> to vector<3x16xf32>
    %506 = arith.truncf %505 : vector<3x16xf32> to vector<3x16xbf16>
    %cst_401 = arith.constant dense<0.000000e+00> : vector<128x16xf32>
    %507 = tpu.matmul %503, %506, %cst_401 {dimension_numbers = #tpu.dot_dimension_numbers<[1], [0], [0], [1], [0, 0, 1, 1], [], []>} : vector<128x3xbf16>, vector<3x16xbf16>, vector<128x16xf32> -> vector<128x16xf32>
    %508 = arith.addf %497, %507 : vector<128x16xf32>
    %c6_i32_402 = arith.constant 6 : i32
    %509 = arith.addi %0, %c6_i32_402 : i32
    %c0_403 = arith.constant 0 : index
    %510 = arith.index_cast %509 : i32 to index
    %c4_404 = arith.constant 4 : index
    %c0_405 = arith.constant 0 : index
    %511 = vector.load %arg2[%c0_403, %510, %c4_404, %c0_405] : memref<1x22x22x3xf32, #tpu.memory_space<vmem>>, vector<1x8x16x3xf32>
    %512 = vector.shape_cast %511 : vector<1x8x16x3xf32> to vector<8x16x3xf32>
    %513 = vector.shape_cast %512 : vector<8x16x3xf32> to vector<128x3xf32>
    %514 = arith.truncf %513 : vector<128x3xf32> to vector<128x3xbf16>
    %c6_406 = arith.constant 6 : index
    %c4_407 = arith.constant 4 : index
    %c0_408 = arith.constant 0 : index
    %c0_409 = arith.constant 0 : index
    %515 = vector.load %arg3[%c6_406, %c4_407, %c0_408, %c0_409] : memref<7x7x3x16xf32, #tpu.memory_space<vmem>>, vector<1x1x3x16xf32>
    %516 = vector.shape_cast %515 : vector<1x1x3x16xf32> to vector<3x16xf32>
    %517 = arith.truncf %516 : vector<3x16xf32> to vector<3x16xbf16>
    %cst_410 = arith.constant dense<0.000000e+00> : vector<128x16xf32>
    %518 = tpu.matmul %514, %517, %cst_410 {dimension_numbers = #tpu.dot_dimension_numbers<[1], [0], [0], [1], [0, 0, 1, 1], [], []>} : vector<128x3xbf16>, vector<3x16xbf16>, vector<128x16xf32> -> vector<128x16xf32>
    %519 = arith.addf %508, %518 : vector<128x16xf32>
    %c6_i32_411 = arith.constant 6 : i32
    %520 = arith.addi %0, %c6_i32_411 : i32
    %c0_412 = arith.constant 0 : index
    %521 = arith.index_cast %520 : i32 to index
    %c5_413 = arith.constant 5 : index
    %c0_414 = arith.constant 0 : index
    %522 = vector.load %arg2[%c0_412, %521, %c5_413, %c0_414] : memref<1x22x22x3xf32, #tpu.memory_space<vmem>>, vector<1x8x16x3xf32>
    %523 = vector.shape_cast %522 : vector<1x8x16x3xf32> to vector<8x16x3xf32>
    %524 = vector.shape_cast %523 : vector<8x16x3xf32> to vector<128x3xf32>
    %525 = arith.truncf %524 : vector<128x3xf32> to vector<128x3xbf16>
    %c6_415 = arith.constant 6 : index
    %c5_416 = arith.constant 5 : index
    %c0_417 = arith.constant 0 : index
    %c0_418 = arith.constant 0 : index
    %526 = vector.load %arg3[%c6_415, %c5_416, %c0_417, %c0_418] : memref<7x7x3x16xf32, #tpu.memory_space<vmem>>, vector<1x1x3x16xf32>
    %527 = vector.shape_cast %526 : vector<1x1x3x16xf32> to vector<3x16xf32>
    %528 = arith.truncf %527 : vector<3x16xf32> to vector<3x16xbf16>
    %cst_419 = arith.constant dense<0.000000e+00> : vector<128x16xf32>
    %529 = tpu.matmul %525, %528, %cst_419 {dimension_numbers = #tpu.dot_dimension_numbers<[1], [0], [0], [1], [0, 0, 1, 1], [], []>} : vector<128x3xbf16>, vector<3x16xbf16>, vector<128x16xf32> -> vector<128x16xf32>
    %530 = arith.addf %519, %529 : vector<128x16xf32>
    %c6_i32_420 = arith.constant 6 : i32
    %531 = arith.addi %0, %c6_i32_420 : i32
    %c0_421 = arith.constant 0 : index
    %532 = arith.index_cast %531 : i32 to index
    %c6_422 = arith.constant 6 : index
    %c0_423 = arith.constant 0 : index
    %533 = vector.load %arg2[%c0_421, %532, %c6_422, %c0_423] : memref<1x22x22x3xf32, #tpu.memory_space<vmem>>, vector<1x8x16x3xf32>
    %534 = vector.shape_cast %533 : vector<1x8x16x3xf32> to vector<8x16x3xf32>
    %535 = vector.shape_cast %534 : vector<8x16x3xf32> to vector<128x3xf32>
    %536 = arith.truncf %535 : vector<128x3xf32> to vector<128x3xbf16>
    %c6_424 = arith.constant 6 : index
    %c6_425 = arith.constant 6 : index
    %c0_426 = arith.constant 0 : index
    %c0_427 = arith.constant 0 : index
    %537 = vector.load %arg3[%c6_424, %c6_425, %c0_426, %c0_427] : memref<7x7x3x16xf32, #tpu.memory_space<vmem>>, vector<1x1x3x16xf32>
    %538 = vector.shape_cast %537 : vector<1x1x3x16xf32> to vector<3x16xf32>
    %539 = arith.truncf %538 : vector<3x16xf32> to vector<3x16xbf16>
    %cst_428 = arith.constant dense<0.000000e+00> : vector<128x16xf32>
    %540 = tpu.matmul %536, %539, %cst_428 {dimension_numbers = #tpu.dot_dimension_numbers<[1], [0], [0], [1], [0, 0, 1, 1], [], []>} : vector<128x3xbf16>, vector<3x16xbf16>, vector<128x16xf32> -> vector<128x16xf32>
    %541 = arith.addf %530, %540 : vector<128x16xf32>
    %542 = vector.broadcast %1 : vector<1x16xf32> to vector<128x16xf32>
    %543 = arith.addf %541, %542 : vector<128x16xf32>
    %cst_429 = arith.constant 0.000000e+00 : f32
    %544 = vector.broadcast %cst_429 : f32 to vector<128x16xf32>
    %545 = arith.maximumf %543, %544 : vector<128x16xf32>
    %546 = vector.shape_cast %545 : vector<128x16xf32> to vector<8x16x16xf32>
    %c0_430 = arith.constant 0 : index
    %c0_431 = arith.constant 0 : index
    %c0_432 = arith.constant 0 : index
    %c0_433 = arith.constant 0 : index
    %547 = vector.load %arg5[%c0_430, %c0_431, %c0_432, %c0_433] : memref<1x8x16x16xf32, #tpu.memory_space<vmem>>, vector<1x8x16x16xf32>
    %548 = vector.shape_cast %547 : vector<1x8x16x16xf32> to vector<8x16x16xf32>
    %549 = vector.shape_cast %546 : vector<8x16x16xf32> to vector<1x8x16x16xf32>
    tpu.vector_store %arg5[%c0_430, %c0_431, %c0_432, %c0_433], %549 {strides = array<i32>} : memref<1x8x16x16xf32, #tpu.memory_space<vmem>>, vector<1x8x16x16xf32>,
    return
  }
  func.func @transform_0(%arg0: i32, %arg1: i32) -> (i32, i32, i32, i32) {
    %c0_i32 = arith.constant 0 : i32
    %c0_i32_0 = arith.constant 0 : i32
    %c0_i32_1 = arith.constant 0 : i32
    %c0_i32_2 = arith.constant 0 : i32
    return %arg0, %c0_i32, %c0_i32_0, %c0_i32_1 : i32, i32, i32, i32
  }
  func.func @transform_1(%arg0: i32, %arg1: i32) -> (i32, i32, i32, i32) {
    %c0_i32 = arith.constant 0 : i32
    %c0_i32_0 = arith.constant 0 : i32
    %c0_i32_1 = arith.constant 0 : i32
    %c0_i32_2 = arith.constant 0 : i32
    %c0_i32_3 = arith.constant 0 : i32
    return %c0_i32, %c0_i32_0, %c0_i32_1, %c0_i32_2 : i32, i32, i32, i32
  }
  func.func @transform_2(%arg0: i32, %arg1: i32) -> (i32, i32) {
    %c0_i32 = arith.constant 0 : i32
    %c0_i32_0 = arith.constant 0 : i32
    %c0_i32_1 = arith.constant 0 : i32
    return %c0_i32, %c0_i32_0 : i32, i32
  }
  func.func @transform_3(%arg0: i32, %arg1: i32) -> (i32, i32, i32, i32) {
    %c0_i32 = arith.constant 0 : i32
    %c0_i32_0 = arith.constant 0 : i32
    %c0_i32_1 = arith.constant 0 : i32
    return %arg0, %arg1, %c0_i32, %c0_i32_0 : i32, i32, i32, i32
  }
}

</mosaic_0001>

<llo_original>
// kernel: tpu_custom_call.1
$region0: #{tpu_custom_call.1}
  #allocation0 [shape = 'u32[]', space=smem, size = 0x4, offset = 0x4, fixed_abs, tag = 'smem constant byte address 0x4 - core index']
  #allocation1 [shape = 'u32[144,128]{1,0:T(1,128)}', space=vmem, size = 0x12000, scoped, tag = 'internal scratch']
  %s0 = inlined_call_operand.vmem [shape: f32[2,22,22,3], index: 0, kind: input, shape index: {}]
  %s1 = inlined_call_operand.vmem [shape: f32[7,7,3,16], index: 1, kind: input, shape index: {}]
  %s2 = inlined_call_operand.vmem [shape: f32[1,16], index: 2, kind: input, shape index: {}]
  %s3 = inlined_call_operand.hbm [shape: f32[2,16,16,16], index: 3, kind: output, shape index: {}]
  %s4 = sld [smem:[#allocation0]]
  $region45: #{tpu_custom_call.1} parent=0
    _
  %s6 = ssub.s32 1, %s4
  %s7 = scalar_select 0, %s6, %s4
  $region1: #{tpu_custom_call.1} parent=0
    #allocation2 [shape = 'u8[131072]{0}', space=vmem, size = 0x20000, scoped, tag = 'output window, operand 0']
    #allocation3 [shape = 's32[2]{0}', space=sflag, size = 0x8, scoped, tag = 'scoped memory for tpu_custom_call.1']
    %8 = vsyncpa [#allocation3], 0
    %s9 = scalar_lea.sflag [#allocation3], 1
    %10 = vsyncpa %s9, 0
    loop: start=0, step=1, limit=6
    $region2: #{tpu_custom_call.1} parent=1 // loop_pre_header
      _
    $region3: #{tpu_custom_call.1} parent=1 // loop_header
      %s12 = sphi 0, %s16
      %p13 = scmp.ge.s32.totalorder %s12, 6
      %s19 = sphi 0, %s31
      %s20 = sphi 0, %s27
      %s21 = sphi 0, %s19
      %s22 = sphi 0, %s20
      %s23 = sphi 0, %s21
      %s24 = sphi 0, %s22
      %s34 = sphi 0, %s36
      %s37 = sphi 0, %s34
      %s38 = sphi 0, %s37
      %s54 = sphi 0, %s38
      %s58 = sphi 0, %s58
      %s60 = sphi 0, %s58
      %s61 = sphi 0, %s60
      %s75 = sphi 0, %s61
      %s79 = sphi 0, %s79
      %s81 = sphi 0, %s79
      %s82 = sphi 0, %s81
      %s96 = sphi 0, %s82
      %s104 = sphi 0, %s106
      %s107 = sphi 0, %s104
      %s108 = sphi 0, %s107
      %s124 = sphi 0, %s108
    $region4: #{tpu_custom_call.1} parent=1 // loop_header_branch
      %15 = sbr.rel (%p13) target = $region8
    $region5: #{tpu_custom_call.1} parent=1 // loop_body
      %s17 = ssub.s32 %s12, 1
      %s18 = ssub.s32 %s12, 2
      %s25 = sadd.s32 1, %s20
      %p26 = scmp.ge.s32.totalorder %s25, 2
      %s27 = scalar_select %p26, 0, %s25
      %s28 = sadd.s32 1, %s19
      %s29 = scalar_select %p26, %s28, %s19
      %p30 = scmp.ge.s32.totalorder %s29, 2
      %s31 = scalar_select %p30, 0, %s29
      %s32 = ssub.s32 %s19, %s31
      %p33 = scmp.eq.s32.totalorder %s32, 0
      %s35 = sadd.s32 %s34, 1
      %s36 = scalar_select %p33, %s34, %s35
      %p39 = pneg %p33
      %p40 = scmp.eq.s32.totalorder %s12, 3
      %p41 = por %p39, %p40
      %p42 = scmp.ne.s32.totalorder %s34, %s37
      %p43 = scmp.eq.s32.totalorder %s12, 0
      %p44 = por %p42, %p43
      %p45 = scmp.ne.s32.totalorder %s34, %s37
      %p46 = scmp.eq.s32.totalorder %s17, 3
      %p47 = por %p45, %p46
      %p48 = scmp.ne.s32.totalorder %s37, %s38
      %p49 = scmp.eq.s32.totalorder %s17, 0
      %p50 = por %p48, %p49
      %p51 = scmp.ne.s32.totalorder %s37, %s38
      %p52 = scmp.eq.s32.totalorder %s18, 3
      %p53 = por %p51, %p52
      %p55 = scmp.ne.s32.totalorder %s38, %s54
      %p56 = scmp.eq.s32.totalorder %s18, 0
      %p57 = por %p55, %p56
      %s59 = sadd.s32 %s58, 1
      %p62 = scmp.eq.s32.totalorder %s12, 3
      %p63 = scmp.ne.s32.totalorder %s58, %s60
      %p64 = scmp.eq.s32.totalorder %s12, 0
      %p65 = por %p63, %p64
      %p66 = scmp.ne.s32.totalorder %s58, %s60
      %p67 = scmp.eq.s32.totalorder %s17, 3
      %p68 = por %p66, %p67
      %p69 = scmp.ne.s32.totalorder %s60, %s61
      %p70 = scmp.eq.s32.totalorder %s17, 0
      %p71 = por %p69, %p70
      %p72 = scmp.ne.s32.totalorder %s60, %s61
      %p73 = scmp.eq.s32.totalorder %s18, 3
      %p74 = por %p72, %p73
      %p76 = scmp.ne.s32.totalorder %s61, %s75
      %p77 = scmp.eq.s32.totalorder %s18, 0
      %p78 = por %p76, %p77
      %s80 = sadd.s32 %s79, 1
      %p83 = scmp.eq.s32.totalorder %s12, 3
      %p84 = scmp.ne.s32.totalorder %s79, %s81
      %p85 = scmp.eq.s32.totalorder %s12, 0
      %p86 = por %p84, %p85
      %p87 = scmp.ne.s32.totalorder %s79, %s81
      %p88 = scmp.eq.s32.totalorder %s17, 3
      %p89 = por %p87, %p88
      %p90 = scmp.ne.s32.totalorder %s81, %s82
      %p91 = scmp.eq.s32.totalorder %s17, 0
      %p92 = por %p90, %p91
      %p93 = scmp.ne.s32.totalorder %s81, %s82
      %p94 = scmp.eq.s32.totalorder %s18, 3
      %p95 = por %p93, %p94
      %p97 = scmp.ne.s32.totalorder %s82, %s96
      %p98 = scmp.eq.s32.totalorder %s18, 0
      %p99 = por %p97, %p98
      %s100 = ssub.s32 %s19, %s31
      %s101 = ssub.s32 %s20, %s27
      %s102 = sor.u32 %s100, %s101
      %p103 = scmp.eq.s32.totalorder %s102, 0
      %s105 = sadd.s32 %s104, 1
      %s106 = scalar_select %p103, %s104, %s105
      %p109 = pneg %p103
      %p110 = scmp.eq.s32.totalorder %s12, 3
      %p111 = por %p109, %p110
      %p112 = scmp.ne.s32.totalorder %s104, %s107
      %p113 = scmp.eq.s32.totalorder %s12, 0
      %p114 = por %p112, %p113
      %p115 = scmp.ne.s32.totalorder %s104, %s107
      %p116 = scmp.eq.s32.totalorder %s17, 3
      %p117 = por %p115, %p116
      %p118 = scmp.ne.s32.totalorder %s107, %s108
      %p119 = scmp.eq.s32.totalorder %s17, 0
      %p120 = por %p118, %p119
      %p121 = scmp.ne.s32.totalorder %s107, %s108
      %p122 = scmp.eq.s32.totalorder %s18, 3
      %p123 = por %p121, %p122
      %p125 = scmp.ne.s32.totalorder %s108, %s124
      %p126 = scmp.eq.s32.totalorder %s18, 0
      %p127 = por %p125, %p126
      %p128 = scmp.le.s32.totalorder 1, %s12
      %p129 = scmp.lt.s32.totalorder %s12, 5
      %p130 = pnand %p128, %p129
      %p131 = pneg %p130
      // Predicated region
      $region9: #{tpu_custom_call.1} parent=5 // pred_check
        _
      $region10: #{tpu_custom_call.1} parent=5 // pred_check_branch
        %133 = sbr.rel (%p130) target = $region12
      $region11: #{tpu_custom_call.1} parent=5 // pred_region
        %s134 = ssub.s32 %s12, 1
        // Predicated region
        $region13: #{tpu_custom_call.1} parent=11 // pred_check
          %p135 = pneg %p71
        $region14: #{tpu_custom_call.1} parent=11 // pred_check_branch
          %137 = sbr.rel (%p135) target = $region16
        $region15: #{tpu_custom_call.1} parent=11 // pred_region
          _
        $region16: #{tpu_custom_call.1} parent=11 // pred_fallthru
          _
        // Predicated region
        $region17: #{tpu_custom_call.1} parent=11 // pred_check
          %p138 = pneg %p92
        $region18: #{tpu_custom_call.1} parent=11 // pred_check_branch
          %140 = sbr.rel (%p138) target = $region20
        $region19: #{tpu_custom_call.1} parent=11 // pred_region
          _
        $region20: #{tpu_custom_call.1} parent=11 // pred_fallthru
          _
      $region12: #{tpu_custom_call.1} parent=5 // pred_fallthru
        _
      %p141 = scmp.lt.s32.totalorder %s12, 4
      // Predicated region
      $region21: #{tpu_custom_call.1} parent=5 // pred_check
        %p142 = pneg %p141
      $region22: #{tpu_custom_call.1} parent=5 // pred_check_branch
        %144 = sbr.rel (%p142) target = $region24
      $region23: #{tpu_custom_call.1} parent=5 // pred_region
        // Predicated region
        $region25: #{tpu_custom_call.1} parent=23 // pred_check
          %p145 = pneg %p44
        $region26: #{tpu_custom_call.1} parent=23 // pred_check_branch
          %147 = sbr.rel (%p145) target = $region28
        $region27: #{tpu_custom_call.1} parent=23 // pred_region
          %p148 = scmp.lt.s32.totalorder %s19, 1
          %s149 = scalar_select %p148, %s19, 1
          %s150 = smul.addr %s149, 66
          %s151 = smul.addr %s150, 8
          %s152 = scalar_lea.vmem %s0, %s151
        $region28: #{tpu_custom_call.1} parent=23 // pred_fallthru
          _
      $region24: #{tpu_custom_call.1} parent=5 // pred_fallthru
        _
      %p153 = scmp.le.s32.totalorder 1, %s12
      %p154 = scmp.lt.s32.totalorder %s12, 5
      %p155 = pnand %p153, %p154
      %p156 = pneg %p155
      // Predicated region
      $region29: #{tpu_custom_call.1} parent=5 // pred_check
        _
      $region30: #{tpu_custom_call.1} parent=5 // pred_check_branch
        %158 = sbr.rel (%p155) target = $region32
      $region31: #{tpu_custom_call.1} parent=5 // pred_region
        %s159 = ssub.s32 %s12, 1
        %p160 = scmp.lt.s32.totalorder %s21, 1
        %s161 = scalar_select %p160, %s21, 1
        %s162 = smul.addr %s161, 66
        %s163 = smul.addr %s162, 8
        %s164 = scalar_lea.vmem %s0, %s163
        %p165 = pneg %p50
        %p166 = pneg %p47
        %p167 = pneg %p71
        %p168 = pneg %p68
        %p169 = pneg %p92
        %p170 = pneg %p89
        %p171 = pneg %p120
        %p172 = pneg %p117
        %s173 = sand.u32 %s107, 1
        %s174 = scalar_lea.sflag [#allocation3], %s173
        %s175 = sand.u32 %s107, 1
        %s176 = smul.addr %s175, 128
        %s177 = scalar_lea.vmem [#allocation2], %s176
        %p178 = scmp.lt.s32.totalorder %s21, 1
        %s179 = scalar_select %p178, %s21, 1
        %s180 = smul.addr %s179, 66
        %s181 = smul.addr %s180, 8
        %s182 = scalar_lea.vmem %s0, %s181
        %s183 = smul.u32 8, %s22
        %s185 = smul.u32 %s22, 8
        %v186 = vld [vmem:[%s2] sm:$0x1]
        %s187 = smul.u32 %s185, 24
        %s188 = scalar_lea.vmem %s182, %s187
        %v189 = vld [vmem:[%s188] sm:$0xff]
        %v190 = vld [vmem:[%s188 + $0x8] sm:$0xff]
        %v191 = vld [vmem:[%s188 + $0x18] sm:$0xff]
        %v192 = vld [vmem:[%s188 + $0x20] sm:$0xff]
        %v193 = vld [vmem:[%s188 + $0x30] sm:$0xff]
        %v194 = vld [vmem:[%s188 + $0x38] sm:$0xff]
        %v195 = vld [vmem:[%s188 + $0x48] sm:$0xff]
        %v196 = vld [vmem:[%s188 + $0x50] sm:$0xff]
        %v197 = vld [vmem:[%s188 + $0x60] sm:$0xff]
        %v198 = vld [vmem:[%s188 + $0x68] sm:$0xff]
        %v199 = vld [vmem:[%s188 + $0x78] sm:$0xff]
        %v200 = vld [vmem:[%s188 + $0x80] sm:$0xff]
        %v201 = vld [vmem:[%s188 + $0x90] sm:$0xff]
        %v202 = vld [vmem:[%s188 + $0x98] sm:$0xff]
        %v203 = vld [vmem:[%s188 + $0xa8] sm:$0xff]
        %v204 = vld [vmem:[%s188 + $0xb0] sm:$0xff]
        %v205 = vpack.c.bf16 %v190, %v189
        %v206 = vpack.c.bf16 %v192, %v191
        %v207 = vpack.c.bf16 %v194, %v193
        %v208 = vpack.c.bf16 %v196, %v195
        %v209 = vpack.c.bf16 %v198, %v197
        %v210 = vpack.c.bf16 %v200, %v199
        %v211 = vpack.c.bf16 %v202, %v201
        %v212 = vpack.c.bf16 %v204, %v203
        %v213 = vld [vmem:[%s1] sm:$0x7]
        %v214 = vpack.c.bf16 %v213, %v213
        %v215 = vld [vmem:[%s188 + $0x1] sm:$0xff]
        %v216 = vld [vmem:[%s188 + $0x9] sm:$0xff]
        %v217 = vld [vmem:[%s188 + $0x19] sm:$0xff]
        %v218 = vld [vmem:[%s188 + $0x21] sm:$0xff]
        %v219 = vld [vmem:[%s188 + $0x31] sm:$0xff]
        %v220 = vld [vmem:[%s188 + $0x39] sm:$0xff]
        %v221 = vld [vmem:[%s188 + $0x49] sm:$0xff]
        %v222 = vld [vmem:[%s188 + $0x51] sm:$0xff]
        %v223 = vld [vmem:[%s188 + $0x61] sm:$0xff]
        %v224 = vld [vmem:[%s188 + $0x69] sm:$0xff]
        %v225 = vld [vmem:[%s188 + $0x79] sm:$0xff]
        %v226 = vld [vmem:[%s188 + $0x81] sm:$0xff]
        %v227 = vld [vmem:[%s188 + $0x91] sm:$0xff]
        %v228 = vld [vmem:[%s188 + $0x99] sm:$0xff]
        %v229 = vld [vmem:[%s188 + $0xa9] sm:$0xff]
        %v230 = vld [vmem:[%s188 + $0xb1] sm:$0xff]
        %v231 = vpack.c.bf16 %v216, %v215
        %v232 = vpack.c.bf16 %v218, %v217
        %v233 = vpack.c.bf16 %v220, %v219
        %v234 = vpack.c.bf16 %v222, %v221
        %v235 = vpack.c.bf16 %v224, %v223
        %v236 = vpack.c.bf16 %v226, %v225
        %v237 = vpack.c.bf16 %v228, %v227
        %v238 = vpack.c.bf16 %v230, %v229
        %s239 = scalar_lea.vmem %s1, 4
        %v240 = vld [vmem:[%s239] sm:$0x7]
        %v241 = vpack.c.bf16 %v240, %v240
        %vm242 = vcmask 23552
        %v244 = vsel %vm242, %v231, 0
        %v247 = vsel %vm242, %v232, 0
        %v250 = vsel %vm242, %v233, 0
        %v253 = vsel %vm242, %v234, 0
        %v256 = vsel %vm242, %v235, 0
        %v259 = vsel %vm242, %v236, 0
        %v262 = vsel %vm242, %v237, 0
        %v265 = vsel %vm242, %v238, 0
        %vm267 = vcmask 1040384
        %vm268 = vcmask 1041408
        %v269 = vsel %vm267, 4294967295, 65535
        %v270 = vsel %vm268, %v269, 0
        %v272 = vand.u32 %v241, %v270
        %274 = vmatprep.subr.bf16.mxu0 0
        %275 = vmatpush1.bf16.msra.mxu0 0
        %276 = vmatprep.subr.bf16.mxu0 0
        %277 = vmatpush1.bf16.msra.mxu0 0
        %278 = vmatprep.subr.bf16.mxu0 0
        %279 = vmatpush1.bf16.msra.mxu0 0
        %280 = vmatprep.subr.bf16.mxu0 0
        %281 = vmatpush1.bf16.msra.mxu0 0
        %282 = vmatprep.subr.bf16.mxu0 0
        %283 = vmatpush1.bf16.msra.mxu0 0
        %284 = vmatprep.subr.bf16.mxu0 0
        %285 = vmatpush1.bf16.msra.mxu0 0
        %286 = vmatprep.subr.bf16.mxu0 0
        %287 = vmatpush1.bf16.msra.mxu0 0
        %288 = vmatprep.subr.bf16.mxu0 0
        %289 = vmatpush1.bf16.msra.mxu0 %v272
        %290 = vmatprep.subr.bf16.mxu0 0
        %291 = vmatpush2.bf16.msra.mxu0 0
        %292 = vmatprep.subr.bf16.mxu0 0
        %293 = vmatpush2.bf16.msra.mxu0 0
        %294 = vmatprep.subr.bf16.mxu0 0
        %295 = vmatpush2.bf16.msra.mxu0 0
        %296 = vmatprep.subr.bf16.mxu0 0
        %297 = vmatpush2.bf16.msra.mxu0 0
        %298 = vmatprep.subr.bf16.mxu0 0
        %299 = vmatpush2.bf16.msra.mxu0 0
        %300 = vmatprep.subr.bf16.mxu0 0
        %301 = vmatpush2.bf16.msra.mxu0 0
        %302 = vmatprep.subr.bf16.mxu0 0
        %303 = vmatpush2.bf16.msra.mxu0 0
        %304 = vmatprep.subr.bf16.mxu0 0
        %305 = vmatpush2.bf16.msra.mxu0 0
        %306 = vmatprep.mubr.bf16.mxu0 0
        %307 = vmatmul.mubr.bf16.gmra.mxu0 %v244
        %v308 = vpop.f32.mrf.mxu0
        %v309 = vadd.f32 0.0, %v308
        %v310 = vpop.f32.mrf.mxu0
        %v311 = vpop.f32.mrf.mxu0
        %v312 = vadd.f32 0.0, %v311
        %v313 = vpop.f32.mrf.mxu0
        %314 = vmatprep.mubr.bf16.mxu0 0
        %315 = vmatmul.mubr.bf16.gmra.mxu0 %v247
        %v316 = vpop.f32.mrf.mxu0
        %v317 = vadd.f32 0.0, %v316
        %v318 = vpop.f32.mrf.mxu0
        %v319 = vpop.f32.mrf.mxu0
        %v320 = vadd.f32 0.0, %v319
        %v321 = vpop.f32.mrf.mxu0
        %322 = vmatprep.mubr.bf16.mxu0 0
        %323 = vmatmul.mubr.bf16.gmra.mxu0 %v250
        %v324 = vpop.f32.mrf.mxu0
        %v325 = vadd.f32 0.0, %v324
        %v326 = vpop.f32.mrf.mxu0
        %v327 = vpop.f32.mrf.mxu0
        %v328 = vadd.f32 0.0, %v327
        %v329 = vpop.f32.mrf.mxu0
        %330 = vmatprep.mubr.bf16.mxu0 0
        %331 = vmatmul.mubr.bf16.gmra.mxu0 %v253
        %v332 = vpop.f32.mrf.mxu0
        %v333 = vadd.f32 0.0, %v332
        %v334 = vpop.f32.mrf.mxu0
        %v335 = vpop.f32.mrf.mxu0
        %v336 = vadd.f32 0.0, %v335
        %v337 = vpop.f32.mrf.mxu0
        %338 = vmatprep.mubr.bf16.mxu0 0
        %339 = vmatmul.mubr.bf16.gmra.mxu0 %v256
        %v340 = vpop.f32.mrf.mxu0
        %v341 = vadd.f32 0.0, %v340
        %v342 = vpop.f32.mrf.mxu0
        %v343 = vpop.f32.mrf.mxu0
        %v344 = vadd.f32 0.0, %v343
        %v345 = vpop.f32.mrf.mxu0
        %346 = vmatprep.mubr.bf16.mxu0 0
        %347 = vmatmul.mubr.bf16.gmra.mxu0 %v259
        %v348 = vpop.f32.mrf.mxu0
        %v349 = vadd.f32 0.0, %v348
        %v350 = vpop.f32.mrf.mxu0
        %v351 = vpop.f32.mrf.mxu0
        %v352 = vadd.f32 0.0, %v351
        %v353 = vpop.f32.mrf.mxu0
        %354 = vmatprep.mubr.bf16.mxu0 0
        %355 = vmatmul.mubr.bf16.gmra.mxu0 %v262
        %v356 = vpop.f32.mrf.mxu0
        %v357 = vadd.f32 0.0, %v356
        %v358 = vpop.f32.mrf.mxu0
        %v359 = vpop.f32.mrf.mxu0
        %v360 = vadd.f32 0.0, %v359
        %v361 = vpop.f32.mrf.mxu0
        %362 = vmatprep.mubr.bf16.mxu0 0
        %363 = vmatmul.mubr.bf16.gmra.mxu0 %v265
        %v364 = vpop.f32.mrf.mxu0
        %v365 = vadd.f32 0.0, %v364
        %v366 = vpop.f32.mrf.mxu0
        %v367 = vpop.f32.mrf.mxu0
        %v368 = vadd.f32 0.0, %v367
        %v369 = vpop.f32.mrf.mxu0
        %370 = vdwg.mxu0
        %v372 = vsel %vm242, %v205, 0
        %v375 = vsel %vm242, %v206, 0
        %v378 = vsel %vm242, %v207, 0
        %v381 = vsel %vm242, %v208, 0
        %v384 = vsel %vm242, %v209, 0
        %v387 = vsel %vm242, %v210, 0
        %v390 = vsel %vm242, %v211, 0
        %v393 = vsel %vm242, %v212, 0
        %v396 = vand.u32 %v214, %v270
        %398 = vmatprep.subr.bf16.mxu0 0
        %399 = vmatpush1.bf16.msra.mxu0 0
        %400 = vmatprep.subr.bf16.mxu0 0
        %401 = vmatpush1.bf16.msra.mxu0 0
        %402 = vmatprep.subr.bf16.mxu0 0
        %403 = vmatpush1.bf16.msra.mxu0 0
        %404 = vmatprep.subr.bf16.mxu0 0
        %405 = vmatpush1.bf16.msra.mxu0 0
        %406 = vmatprep.subr.bf16.mxu0 0
        %407 = vmatpush1.bf16.msra.mxu0 0
        %408 = vmatprep.subr.bf16.mxu0 0
        %409 = vmatpush1.bf16.msra.mxu0 0
        %410 = vmatprep.subr.bf16.mxu0 0
        %411 = vmatpush1.bf16.msra.mxu0 0
        %412 = vmatprep.subr.bf16.mxu0 0
        %413 = vmatpush1.bf16.msra.mxu0 %v396
        %414 = vmatprep.subr.bf16.mxu0 0
        %415 = vmatpush2.bf16.msra.mxu0 0
        %416 = vmatprep.subr.bf16.mxu0 0
        %417 = vmatpush2.bf16.msra.mxu0 0
        %418 = vmatprep.subr.bf16.mxu0 0
        %419 = vmatpush2.bf16.msra.mxu0 0
        %420 = vmatprep.subr.bf16.mxu0 0
        %421 = vmatpush2.bf16.msra.mxu0 0
        %422 = vmatprep.subr.bf16.mxu0 0
        %423 = vmatpush2.bf16.msra.mxu0 0
        %424 = vmatprep.subr.bf16.mxu0 0
        %425 = vmatpush2.bf16.msra.mxu0 0
        %426 = vmatprep.subr.bf16.mxu0 0
        %427 = vmatpush2.bf16.msra.mxu0 0
        %428 = vmatprep.subr.bf16.mxu0 0
        %429 = vmatpush2.bf16.msra.mxu0 0
        %430 = vmatprep.mubr.bf16.mxu0 0
        %431 = vmatmul.mubr.bf16.gmra.mxu0 %v372
        %v432 = vpop.f32.mrf.mxu0
        %v433 = vadd.f32 %v309, %v432
        %v434 = vpop.f32.mrf.mxu0
        %v435 = vpop.f32.mrf.mxu0
        %v436 = vadd.f32 %v312, %v435
        %v437 = vpop.f32.mrf.mxu0
        %438 = vmatprep.mubr.bf16.mxu0 0
        %439 = vmatmul.mubr.bf16.gmra.mxu0 %v375
        %v440 = vpop.f32.mrf.mxu0
        %v441 = vadd.f32 %v317, %v440
        %v442 = vpop.f32.mrf.mxu0
        %v443 = vpop.f32.mrf.mxu0
        %v444 = vadd.f32 %v320, %v443
        %v445 = vpop.f32.mrf.mxu0
        %446 = vmatprep.mubr.bf16.mxu0 0
        %447 = vmatmul.mubr.bf16.gmra.mxu0 %v378
        %v448 = vpop.f32.mrf.mxu0
        %v449 = vadd.f32 %v325, %v448
        %v450 = vpop.f32.mrf.mxu0
        %v451 = vpop.f32.mrf.mxu0
        %v452 = vadd.f32 %v328, %v451
        %v453 = vpop.f32.mrf.mxu0
        %454 = vmatprep.mubr.bf16.mxu0 0
        %455 = vmatmul.mubr.bf16.gmra.mxu0 %v381
        %v456 = vpop.f32.mrf.mxu0
        %v457 = vadd.f32 %v333, %v456
        %v458 = vpop.f32.mrf.mxu0
        %v459 = vpop.f32.mrf.mxu0
        %v460 = vadd.f32 %v336, %v459
        %v461 = vpop.f32.mrf.mxu0
        %462 = vmatprep.mubr.bf16.mxu0 0
        %463 = vmatmul.mubr.bf16.gmra.mxu0 %v384
        %v464 = vpop.f32.mrf.mxu0
        %v465 = vadd.f32 %v341, %v464
        %v466 = vpop.f32.mrf.mxu0
        %v467 = vpop.f32.mrf.mxu0
        %v468 = vadd.f32 %v344, %v467
        %v469 = vpop.f32.mrf.mxu0
        %470 = vmatprep.mubr.bf16.mxu0 0
        %471 = vmatmul.mubr.bf16.gmra.mxu0 %v387
        %v472 = vpop.f32.mrf.mxu0
        %v473 = vadd.f32 %v349, %v472
        %v474 = vpop.f32.mrf.mxu0
        %v475 = vpop.f32.mrf.mxu0
        %v476 = vadd.f32 %v352, %v475
        %v477 = vpop.f32.mrf.mxu0
        %478 = vmatprep.mubr.bf16.mxu0 0
        %479 = vmatmul.mubr.bf16.gmra.mxu0 %v390
        %v480 = vpop.f32.mrf.mxu0
        %v481 = vadd.f32 %v357, %v480
        %v482 = vpop.f32.mrf.mxu0
        %v483 = vpop.f32.mrf.mxu0
        %v484 = vadd.f32 %v360, %v483
        %v485 = vpop.f32.mrf.mxu0
        %486 = vmatprep.mubr.bf16.mxu0 0
        %487 = vmatmul.mubr.bf16.gmra.mxu0 %v393
        %v488 = vpop.f32.mrf.mxu0
        %v489 = vadd.f32 %v365, %v488
        %v490 = vpop.f32.mrf.mxu0
        %v491 = vpop.f32.mrf.mxu0
        %v492 = vadd.f32 %v368, %v491
        %v493 = vpop.f32.mrf.mxu0
        %494 = vdwg.mxu0
        %v495 = vld [vmem:[%s188 + $0x2] sm:$0xff]
        %v496 = vld [vmem:[%s188 + $0xa] sm:$0xff]
        %v497 = vld [vmem:[%s188 + $0x1a] sm:$0xff]
        %v498 = vld [vmem:[%s188 + $0x22] sm:$0xff]
        %v499 = vld [vmem:[%s188 + $0x32] sm:$0xff]
        %v500 = vld [vmem:[%s188 + $0x3a] sm:$0xff]
        %v501 = vld [vmem:[%s188 + $0x4a] sm:$0xff]
        %v502 = vld [vmem:[%s188 + $0x52] sm:$0xff]
        %v503 = vld [vmem:[%s188 + $0x62] sm:$0xff]
        %v504 = vld [vmem:[%s188 + $0x6a] sm:$0xff]
        %v505 = vld [vmem:[%s188 + $0x7a] sm:$0xff]
        %v506 = vld [vmem:[%s188 + $0x82] sm:$0xff]
        %v507 = vld [vmem:[%s188 + $0x92] sm:$0xff]
        %v508 = vld [vmem:[%s188 + $0x9a] sm:$0xff]
        %v509 = vld [vmem:[%s188 + $0xaa] sm:$0xff]
        %v510 = vld [vmem:[%s188 + $0xb2] sm:$0xff]
        %v511 = vpack.c.bf16 %v496, %v495
        %v512 = vpack.c.bf16 %v498, %v497
        %v513 = vpack.c.bf16 %v500, %v499
        %v514 = vpack.c.bf16 %v502, %v501
        %v515 = vpack.c.bf16 %v504, %v503
        %v516 = vpack.c.bf16 %v506, %v505
        %v517 = vpack.c.bf16 %v508, %v507
        %v518 = vpack.c.bf16 %v510, %v509
        %s519 = scalar_lea.vmem %s1, 8
        %v520 = vld [vmem:[%s519] sm:$0x7]
        %v521 = vpack.c.bf16 %v520, %v520
        %v523 = vsel %vm242, %v511, 0
        %v526 = vsel %vm242, %v512, 0
        %v529 = vsel %vm242, %v513, 0
        %v532 = vsel %vm242, %v514, 0
        %v535 = vsel %vm242, %v515, 0
        %v538 = vsel %vm242, %v516, 0
        %v541 = vsel %vm242, %v517, 0
        %v544 = vsel %vm242, %v518, 0
        %v547 = vand.u32 %v521, %v270
        %549 = vmatprep.subr.bf16.mxu0 0
        %550 = vmatpush1.bf16.msra.mxu0 0
        %551 = vmatprep.subr.bf16.mxu0 0
        %552 = vmatpush1.bf16.msra.mxu0 0
        %553 = vmatprep.subr.bf16.mxu0 0
        %554 = vmatpush1.bf16.msra.mxu0 0
        %555 = vmatprep.subr.bf16.mxu0 0
        %556 = vmatpush1.bf16.msra.mxu0 0
        %557 = vmatprep.subr.bf16.mxu0 0
        %558 = vmatpush1.bf16.msra.mxu0 0
        %559 = vmatprep.subr.bf16.mxu0 0
        %560 = vmatpush1.bf16.msra.mxu0 0
        %561 = vmatprep.subr.bf16.mxu0 0
        %562 = vmatpush1.bf16.msra.mxu0 0
        %563 = vmatprep.subr.bf16.mxu0 0
        %564 = vmatpush1.bf16.msra.mxu0 %v547
        %565 = vmatprep.subr.bf16.mxu0 0
        %566 = vmatpush2.bf16.msra.mxu0 0
        %567 = vmatprep.subr.bf16.mxu0 0
        %568 = vmatpush2.bf16.msra.mxu0 0
        %569 = vmatprep.subr.bf16.mxu0 0
        %570 = vmatpush2.bf16.msra.mxu0 0
        %571 = vmatprep.subr.bf16.mxu0 0
        %572 = vmatpush2.bf16.msra.mxu0 0
        %573 = vmatprep.subr.bf16.mxu0 0
        %574 = vmatpush2.bf16.msra.mxu0 0
        %575 = vmatprep.subr.bf16.mxu0 0
        %576 = vmatpush2.bf16.msra.mxu0 0
        %577 = vmatprep.subr.bf16.mxu0 0
        %578 = vmatpush2.bf16.msra.mxu0 0
        %579 = vmatprep.subr.bf16.mxu0 0
        %580 = vmatpush2.bf16.msra.mxu0 0
        %581 = vmatprep.mubr.bf16.mxu0 0
        %582 = vmatmul.mubr.bf16.gmra.mxu0 %v523
        %v583 = vpop.f32.mrf.mxu0
        %v584 = vadd.f32 0.0, %v583
        %v585 = vpop.f32.mrf.mxu0
        %v586 = vpop.f32.mrf.mxu0
        %v587 = vadd.f32 0.0, %v586
        %v588 = vpop.f32.mrf.mxu0
        %589 = vmatprep.mubr.bf16.mxu0 0
        %590 = vmatmul.mubr.bf16.gmra.mxu0 %v526
        %v591 = vpop.f32.mrf.mxu0
        %v592 = vadd.f32 0.0, %v591
        %v593 = vpop.f32.mrf.mxu0
        %v594 = vpop.f32.mrf.mxu0
        %v595 = vadd.f32 0.0, %v594
        %v596 = vpop.f32.mrf.mxu0
        %597 = vmatprep.mubr.bf16.mxu0 0
        %598 = vmatmul.mubr.bf16.gmra.mxu0 %v529
        %v599 = vpop.f32.mrf.mxu0
        %v600 = vadd.f32 0.0, %v599
        %v601 = vpop.f32.mrf.mxu0
        %v602 = vpop.f32.mrf.mxu0
        %v603 = vadd.f32 0.0, %v602
        %v604 = vpop.f32.mrf.mxu0
        %605 = vmatprep.mubr.bf16.mxu0 0
        %606 = vmatmul.mubr.bf16.gmra.mxu0 %v532
        %v607 = vpop.f32.mrf.mxu0
        %v608 = vadd.f32 0.0, %v607
        %v609 = vpop.f32.mrf.mxu0
        %v610 = vpop.f32.mrf.mxu0
        %v611 = vadd.f32 0.0, %v610
        %v612 = vpop.f32.mrf.mxu0
        %613 = vmatprep.mubr.bf16.mxu0 0
        %614 = vmatmul.mubr.bf16.gmra.mxu0 %v535
        %v615 = vpop.f32.mrf.mxu0
        %v616 = vadd.f32 0.0, %v615
        %v617 = vpop.f32.mrf.mxu0
        %v618 = vpop.f32.mrf.mxu0
        %v619 = vadd.f32 0.0, %v618
        %v620 = vpop.f32.mrf.mxu0
        %621 = vmatprep.mubr.bf16.mxu0 0
        %622 = vmatmul.mubr.bf16.gmra.mxu0 %v538
        %v623 = vpop.f32.mrf.mxu0
        %v624 = vadd.f32 0.0, %v623
        %v625 = vpop.f32.mrf.mxu0
        %v626 = vpop.f32.mrf.mxu0
        %v627 = vadd.f32 0.0, %v626
        %v628 = vpop.f32.mrf.mxu0
        %629 = vmatprep.mubr.bf16.mxu0 0
        %630 = vmatmul.mubr.bf16.gmra.mxu0 %v541
        %v631 = vpop.f32.mrf.mxu0
        %v632 = vadd.f32 0.0, %v631
        %v633 = vpop.f32.mrf.mxu0
        %v634 = vpop.f32.mrf.mxu0
        %v635 = vadd.f32 0.0, %v634
        %v636 = vpop.f32.mrf.mxu0
        %637 = vmatprep.mubr.bf16.mxu0 0
        %638 = vmatmul.mubr.bf16.gmra.mxu0 %v544
        %v639 = vpop.f32.mrf.mxu0
        %v640 = vadd.f32 0.0, %v639
        %v641 = vpop.f32.mrf.mxu0
        %v642 = vpop.f32.mrf.mxu0
        %v643 = vadd.f32 0.0, %v642
        %v644 = vpop.f32.mrf.mxu0
        %645 = vdwg.mxu0
        %v646 = vadd.f32 %v433, %v584
        %v647 = vadd.f32 %v436, %v587
        %v648 = vadd.f32 %v441, %v592
        %v649 = vadd.f32 %v444, %v595
        %v650 = vadd.f32 %v449, %v600
        %v651 = vadd.f32 %v452, %v603
        %v652 = vadd.f32 %v457, %v608
        %v653 = vadd.f32 %v460, %v611
        %v654 = vadd.f32 %v465, %v616
        %v655 = vadd.f32 %v468, %v619
        %v656 = vadd.f32 %v473, %v624
        %v657 = vadd.f32 %v476, %v627
        %v658 = vadd.f32 %v481, %v632
        %v659 = vadd.f32 %v484, %v635
        %v660 = vadd.f32 %v489, %v640
        %v661 = vadd.f32 %v492, %v643
        %v662 = vld [vmem:[%s188 + $0x3] sm:$0xff]
        %v663 = vld [vmem:[%s188 + $0xb] sm:$0xff]
        %v664 = vld [vmem:[%s188 + $0x1b] sm:$0xff]
        %v665 = vld [vmem:[%s188 + $0x23] sm:$0xff]
        %v666 = vld [vmem:[%s188 + $0x33] sm:$0xff]
        %v667 = vld [vmem:[%s188 + $0x3b] sm:$0xff]
        %v668 = vld [vmem:[%s188 + $0x4b] sm:$0xff]
        %v669 = vld [vmem:[%s188 + $0x53] sm:$0xff]
        %v670 = vld [vmem:[%s188 + $0x63] sm:$0xff]
        %v671 = vld [vmem:[%s188 + $0x6b] sm:$0xff]
        %v672 = vld [vmem:[%s188 + $0x7b] sm:$0xff]
        %v673 = vld [vmem:[%s188 + $0x83] sm:$0xff]
        %v674 = vld [vmem:[%s188 + $0x93] sm:$0xff]
        %v675 = vld [vmem:[%s188 + $0x9b] sm:$0xff]
        %v676 = vld [vmem:[%s188 + $0xab] sm:$0xff]
        %v677 = vld [vmem:[%s188 + $0xb3] sm:$0xff]
        %v678 = vpack.c.bf16 %v663, %v662
        %v679 = vpack.c.bf16 %v665, %v664
        %v680 = vpack.c.bf16 %v667, %v666
        %v681 = vpack.c.bf16 %v669, %v668
        %v682 = vpack.c.bf16 %v671, %v670
        %v683 = vpack.c.bf16 %v673, %v672
        %v684 = vpack.c.bf16 %v675, %v674
        %v685 = vpack.c.bf16 %v677, %v676
        %s686 = scalar_lea.vmem %s1, 12
        %v687 = vld [vmem:[%s686] sm:$0x7]
        %v688 = vpack.c.bf16 %v687, %v687
        %v690 = vsel %vm242, %v678, 0
        %v693 = vsel %vm242, %v679, 0
        %v696 = vsel %vm242, %v680, 0
        %v699 = vsel %vm242, %v681, 0
        %v702 = vsel %vm242, %v682, 0
        %v705 = vsel %vm242, %v683, 0
        %v708 = vsel %vm242, %v684, 0
        %v711 = vsel %vm242, %v685, 0
        %v714 = vand.u32 %v688, %v270
        %716 = vmatprep.subr.bf16.mxu0 0
        %717 = vmatpush1.bf16.msra.mxu0 0
        %718 = vmatprep.subr.bf16.mxu0 0
        %719 = vmatpush1.bf16.msra.mxu0 0
        %720 = vmatprep.subr.bf16.mxu0 0
        %721 = vmatpush1.bf16.msra.mxu0 0
        %722 = vmatprep.subr.bf16.mxu0 0
        %723 = vmatpush1.bf16.msra.mxu0 0
        %724 = vmatprep.subr.bf16.mxu0 0
        %725 = vmatpush1.bf16.msra.mxu0 0
        %726 = vmatprep.subr.bf16.mxu0 0
        %727 = vmatpush1.bf16.msra.mxu0 0
        %728 = vmatprep.subr.bf16.mxu0 0
        %729 = vmatpush1.bf16.msra.mxu0 0
        %730 = vmatprep.subr.bf16.mxu0 0
        %731 = vmatpush1.bf16.msra.mxu0 %v714
        %732 = vmatprep.subr.bf16.mxu0 0
        %733 = vmatpush2.bf16.msra.mxu0 0
        %734 = vmatprep.subr.bf16.mxu0 0
        %735 = vmatpush2.bf16.msra.mxu0 0
        %736 = vmatprep.subr.bf16.mxu0 0
        %737 = vmatpush2.bf16.msra.mxu0 0
        %738 = vmatprep.subr.bf16.mxu0 0
        %739 = vmatpush2.bf16.msra.mxu0 0
        %740 = vmatprep.subr.bf16.mxu0 0
        %741 = vmatpush2.bf16.msra.mxu0 0
        %742 = vmatprep.subr.bf16.mxu0 0
        %743 = vmatpush2.bf16.msra.mxu0 0
        %744 = vmatprep.subr.bf16.mxu0 0
        %745 = vmatpush2.bf16.msra.mxu0 0
        %746 = vmatprep.subr.bf16.mxu0 0
        %747 = vmatpush2.bf16.msra.mxu0 0
        %748 = vmatprep.mubr.bf16.mxu0 0
        %749 = vmatmul.mubr.bf16.gmra.mxu0 %v690
        %v750 = vpop.f32.mrf.mxu0
        %v751 = vadd.f32 0.0, %v750
        %v752 = vpop.f32.mrf.mxu0
        %v753 = vpop.f32.mrf.mxu0
        %v754 = vadd.f32 0.0, %v753
        %v755 = vpop.f32.mrf.mxu0
        %756 = vmatprep.mubr.bf16.mxu0 0
        %757 = vmatmul.mubr.bf16.gmra.mxu0 %v693
        %v758 = vpop.f32.mrf.mxu0
        %v759 = vadd.f32 0.0, %v758
        %v760 = vpop.f32.mrf.mxu0
        %v761 = vpop.f32.mrf.mxu0
        %v762 = vadd.f32 0.0, %v761
        %v763 = vpop.f32.mrf.mxu0
        %764 = vmatprep.mubr.bf16.mxu0 0
        %765 = vmatmul.mubr.bf16.gmra.mxu0 %v696
        %v766 = vpop.f32.mrf.mxu0
        %v767 = vadd.f32 0.0, %v766
        %v768 = vpop.f32.mrf.mxu0
        %v769 = vpop.f32.mrf.mxu0
        %v770 = vadd.f32 0.0, %v769
        %v771 = vpop.f32.mrf.mxu0
        %772 = vmatprep.mubr.bf16.mxu0 0
        %773 = vmatmul.mubr.bf16.gmra.mxu0 %v699
        %v774 = vpop.f32.mrf.mxu0
        %v775 = vadd.f32 0.0, %v774
        %v776 = vpop.f32.mrf.mxu0
        %v777 = vpop.f32.mrf.mxu0
        %v778 = vadd.f32 0.0, %v777
        %v779 = vpop.f32.mrf.mxu0
        %780 = vmatprep.mubr.bf16.mxu0 0
        %781 = vmatmul.mubr.bf16.gmra.mxu0 %v702
        %v782 = vpop.f32.mrf.mxu0
        %v783 = vadd.f32 0.0, %v782
        %v784 = vpop.f32.mrf.mxu0
        %v785 = vpop.f32.mrf.mxu0
        %v786 = vadd.f32 0.0, %v785
        %v787 = vpop.f32.mrf.mxu0
        %788 = vmatprep.mubr.bf16.mxu0 0
        %789 = vmatmul.mubr.bf16.gmra.mxu0 %v705
        %v790 = vpop.f32.mrf.mxu0
        %v791 = vadd.f32 0.0, %v790
        %v792 = vpop.f32.mrf.mxu0
        %v793 = vpop.f32.mrf.mxu0
        %v794 = vadd.f32 0.0, %v793
        %v795 = vpop.f32.mrf.mxu0
        %796 = vmatprep.mubr.bf16.mxu0 0
        %797 = vmatmul.mubr.bf16.gmra.mxu0 %v708
        %v798 = vpop.f32.mrf.mxu0
        %v799 = vadd.f32 0.0, %v798
        %v800 = vpop.f32.mrf.mxu0
        %v801 = vpop.f32.mrf.mxu0
        %v802 = vadd.f32 0.0, %v801
        %v803 = vpop.f32.mrf.mxu0
        %804 = vmatprep.mubr.bf16.mxu0 0
        %805 = vmatmul.mubr.bf16.gmra.mxu0 %v711
        %v806 = vpop.f32.mrf.mxu0
        %v807 = vadd.f32 0.0, %v806
        %v808 = vpop.f32.mrf.mxu0
        %v809 = vpop.f32.mrf.mxu0
        %v810 = vadd.f32 0.0, %v809
        %v811 = vpop.f32.mrf.mxu0
        %812 = vdwg.mxu0
        %v813 = vadd.f32 %v646, %v751
        %v814 = vadd.f32 %v647, %v754
        %v815 = vadd.f32 %v648, %v759
        %v816 = vadd.f32 %v649, %v762
        %v817 = vadd.f32 %v650, %v767
        %v818 = vadd.f32 %v651, %v770
        %v819 = vadd.f32 %v652, %v775
        %v820 = vadd.f32 %v653, %v778
        %v821 = vadd.f32 %v654, %v783
        %v822 = vadd.f32 %v655, %v786
        %v823 = vadd.f32 %v656, %v791
        %v824 = vadd.f32 %v657, %v794
        %v825 = vadd.f32 %v658, %v799
        %v826 = vadd.f32 %v659, %v802
        %v827 = vadd.f32 %v660, %v807
        %v828 = vadd.f32 %v661, %v810
        %v829 = vld [vmem:[%s188 + $0x4] sm:$0xff]
        %v830 = vld [vmem:[%s188 + $0xc] sm:$0xff]
        %v831 = vld [vmem:[%s188 + $0x1c] sm:$0xff]
        %v832 = vld [vmem:[%s188 + $0x24] sm:$0xff]
        %v833 = vld [vmem:[%s188 + $0x34] sm:$0xff]
        %v834 = vld [vmem:[%s188 + $0x3c] sm:$0xff]
        %v835 = vld [vmem:[%s188 + $0x4c] sm:$0xff]
        %v836 = vld [vmem:[%s188 + $0x54] sm:$0xff]
        %v837 = vld [vmem:[%s188 + $0x64] sm:$0xff]
        %v838 = vld [vmem:[%s188 + $0x6c] sm:$0xff]
        %v839 = vld [vmem:[%s188 + $0x7c] sm:$0xff]
        %v840 = vld [vmem:[%s188 + $0x84] sm:$0xff]
        %v841 = vld [vmem:[%s188 + $0x94] sm:$0xff]
        %v842 = vld [vmem:[%s188 + $0x9c] sm:$0xff]
        %v843 = vld [vmem:[%s188 + $0xac] sm:$0xff]
        %v844 = vld [vmem:[%s188 + $0xb4] sm:$0xff]
        %v845 = vpack.c.bf16 %v830, %v829
        %v846 = vpack.c.bf16 %v832, %v831
        %v847 = vpack.c.bf16 %v834, %v833
        %v848 = vpack.c.bf16 %v836, %v835
        %v849 = vpack.c.bf16 %v838, %v837
        %v850 = vpack.c.bf16 %v840, %v839
        %v851 = vpack.c.bf16 %v842, %v841
        %v852 = vpack.c.bf16 %v844, %v843
        %s853 = scalar_lea.vmem %s1, 16
        %v854 = vld [vmem:[%s853] sm:$0x7]
        %v855 = vpack.c.bf16 %v854, %v854
        %v857 = vsel %vm242, %v845, 0
        %v860 = vsel %vm242, %v846, 0
        %v863 = vsel %vm242, %v847, 0
        %v866 = vsel %vm242, %v848, 0
        %v869 = vsel %vm242, %v849, 0
        %v872 = vsel %vm242, %v850, 0
        %v875 = vsel %vm242, %v851, 0
        %v878 = vsel %vm242, %v852, 0
        %v881 = vand.u32 %v855, %v270
        %883 = vmatprep.subr.bf16.mxu0 0
        %884 = vmatpush1.bf16.msra.mxu0 0
        %885 = vmatprep.subr.bf16.mxu0 0
        %886 = vmatpush1.bf16.msra.mxu0 0
        %887 = vmatprep.subr.bf16.mxu0 0
        %888 = vmatpush1.bf16.msra.mxu0 0
        %889 = vmatprep.subr.bf16.mxu0 0
        %890 = vmatpush1.bf16.msra.mxu0 0
        %891 = vmatprep.subr.bf16.mxu0 0
        %892 = vmatpush1.bf16.msra.mxu0 0
        %893 = vmatprep.subr.bf16.mxu0 0
        %894 = vmatpush1.bf16.msra.mxu0 0
        %895 = vmatprep.subr.bf16.mxu0 0
        %896 = vmatpush1.bf16.msra.mxu0 0
        %897 = vmatprep.subr.bf16.mxu0 0
        %898 = vmatpush1.bf16.msra.mxu0 %v881
        %899 = vmatprep.subr.bf16.mxu0 0
        %900 = vmatpush2.bf16.msra.mxu0 0
        %901 = vmatprep.subr.bf16.mxu0 0
        %902 = vmatpush2.bf16.msra.mxu0 0
        %903 = vmatprep.subr.bf16.mxu0 0
        %904 = vmatpush2.bf16.msra.mxu0 0
        %905 = vmatprep.subr.bf16.mxu0 0
        %906 = vmatpush2.bf16.msra.mxu0 0
        %907 = vmatprep.subr.bf16.mxu0 0
        %908 = vmatpush2.bf16.msra.mxu0 0
        %909 = vmatprep.subr.bf16.mxu0 0
        %910 = vmatpush2.bf16.msra.mxu0 0
        %911 = vmatprep.subr.bf16.mxu0 0
        %912 = vmatpush2.bf16.msra.mxu0 0
        %913 = vmatprep.subr.bf16.mxu0 0
        %914 = vmatpush2.bf16.msra.mxu0 0
        %915 = vmatprep.mubr.bf16.mxu0 0
        %916 = vmatmul.mubr.bf16.gmra.mxu0 %v857
        %v917 = vpop.f32.mrf.mxu0
        %v918 = vadd.f32 0.0, %v917
        %v919 = vpop.f32.mrf.mxu0
        %v920 = vpop.f32.mrf.mxu0
        %v921 = vadd.f32 0.0, %v920
        %v922 = vpop.f32.mrf.mxu0
        %923 = vmatprep.mubr.bf16.mxu0 0
        %924 = vmatmul.mubr.bf16.gmra.mxu0 %v860
        %v925 = vpop.f32.mrf.mxu0
        %v926 = vadd.f32 0.0, %v925
        %v927 = vpop.f32.mrf.mxu0
        %v928 = vpop.f32.mrf.mxu0
        %v929 = vadd.f32 0.0, %v928
        %v930 = vpop.f32.mrf.mxu0
        %931 = vmatprep.mubr.bf16.mxu0 0
        %932 = vmatmul.mubr.bf16.gmra.mxu0 %v863
        %v933 = vpop.f32.mrf.mxu0
        %v934 = vadd.f32 0.0, %v933
        %v935 = vpop.f32.mrf.mxu0
        %v936 = vpop.f32.mrf.mxu0
        %v937 = vadd.f32 0.0, %v936
        %v938 = vpop.f32.mrf.mxu0
        %939 = vmatprep.mubr.bf16.mxu0 0
        %940 = vmatmul.mubr.bf16.gmra.mxu0 %v866
        %v941 = vpop.f32.mrf.mxu0
        %v942 = vadd.f32 0.0, %v941
        %v943 = vpop.f32.mrf.mxu0
        %v944 = vpop.f32.mrf.mxu0
        %v945 = vadd.f32 0.0, %v944
        %v946 = vpop.f32.mrf.mxu0
        %947 = vmatprep.mubr.bf16.mxu0 0
        %948 = vmatmul.mubr.bf16.gmra.mxu0 %v869
        %v949 = vpop.f32.mrf.mxu0
        %v950 = vadd.f32 0.0, %v949
        %v951 = vpop.f32.mrf.mxu0
        %v952 = vpop.f32.mrf.mxu0
        %v953 = vadd.f32 0.0, %v952
        %v954 = vpop.f32.mrf.mxu0
        %955 = vmatprep.mubr.bf16.mxu0 0
        %956 = vmatmul.mubr.bf16.gmra.mxu0 %v872
        %v957 = vpop.f32.mrf.mxu0
        %v958 = vadd.f32 0.0, %v957
        %v959 = vpop.f32.mrf.mxu0
        %v960 = vpop.f32.mrf.mxu0
        %v961 = vadd.f32 0.0, %v960
        %v962 = vpop.f32.mrf.mxu0
        %963 = vmatprep.mubr.bf16.mxu0 0
        %964 = vmatmul.mubr.bf16.gmra.mxu0 %v875
        %v965 = vpop.f32.mrf.mxu0
        %v966 = vadd.f32 0.0, %v965
        %v967 = vpop.f32.mrf.mxu0
        %v968 = vpop.f32.mrf.mxu0
        %v969 = vadd.f32 0.0, %v968
        %v970 = vpop.f32.mrf.mxu0
        %971 = vmatprep.mubr.bf16.mxu0 0
        %972 = vmatmul.mubr.bf16.gmra.mxu0 %v878
        %v973 = vpop.f32.mrf.mxu0
        %v974 = vadd.f32 0.0, %v973
        %v975 = vpop.f32.mrf.mxu0
        %v976 = vpop.f32.mrf.mxu0
        %v977 = vadd.f32 0.0, %v976
        %v978 = vpop.f32.mrf.mxu0
        %979 = vdwg.mxu0
        %v980 = vadd.f32 %v813, %v918
        %v981 = vadd.f32 %v814, %v921
        %v982 = vadd.f32 %v815, %v926
        %v983 = vadd.f32 %v816, %v929
        %v984 = vadd.f32 %v817, %v934
        %v985 = vadd.f32 %v818, %v937
        %v986 = vadd.f32 %v819, %v942
        %v987 = vadd.f32 %v820, %v945
        %v988 = vadd.f32 %v821, %v950
        %v989 = vadd.f32 %v822, %v953
        %v990 = vadd.f32 %v823, %v958
        %v991 = vadd.f32 %v824, %v961
        %v992 = vadd.f32 %v825, %v966
        %v993 = vadd.f32 %v826, %v969
        %v994 = vadd.f32 %v827, %v974
        %v995 = vadd.f32 %v828, %v977
        %v996 = vld [vmem:[%s188 + $0x5] sm:$0xff]
        %v997 = vld [vmem:[%s188 + $0xd] sm:$0xff]
        %v998 = vld [vmem:[%s188 + $0x1d] sm:$0xff]
        %v999 = vld [vmem:[%s188 + $0x25] sm:$0xff]
        %v1000 = vld [vmem:[%s188 + $0x35] sm:$0xff]
        %v1001 = vld [vmem:[%s188 + $0x3d] sm:$0xff]
        %v1002 = vld [vmem:[%s188 + $0x4d] sm:$0xff]
        %v1003 = vld [vmem:[%s188 + $0x55] sm:$0xff]
        %v1004 = vld [vmem:[%s188 + $0x65] sm:$0xff]
        %v1005 = vld [vmem:[%s188 + $0x6d] sm:$0xff]
        %v1006 = vld [vmem:[%s188 + $0x7d] sm:$0xff]
        %v1007 = vld [vmem:[%s188 + $0x85] sm:$0xff]
        %v1008 = vld [vmem:[%s188 + $0x95] sm:$0xff]
        %v1009 = vld [vmem:[%s188 + $0x9d] sm:$0xff]
        %v1010 = vld [vmem:[%s188 + $0xad] sm:$0xff]
        %v1011 = vld [vmem:[%s188 + $0xb5] sm:$0xff]
        %v1012 = vpack.c.bf16 %v997, %v996
        %v1013 = vpack.c.bf16 %v999, %v998
        %v1014 = vpack.c.bf16 %v1001, %v1000
        %v1015 = vpack.c.bf16 %v1003, %v1002
        %v1016 = vpack.c.bf16 %v1005, %v1004
        %v1017 = vpack.c.bf16 %v1007, %v1006
        %v1018 = vpack.c.bf16 %v1009, %v1008
        %v1019 = vpack.c.bf16 %v1011, %v1010
        %s1020 = scalar_lea.vmem %s1, 20
        %v1021 = vld [vmem:[%s1020] sm:$0x7]
        %v1022 = vpack.c.bf16 %v1021, %v1021
        %v1024 = vsel %vm242, %v1012, 0
        %v1027 = vsel %vm242, %v1013, 0
        %v1030 = vsel %vm242, %v1014, 0
        %v1033 = vsel %vm242, %v1015, 0
        %v1036 = vsel %vm242, %v1016, 0
        %v1039 = vsel %vm242, %v1017, 0
        %v1042 = vsel %vm242, %v1018, 0
        %v1045 = vsel %vm242, %v1019, 0
        %v1048 = vand.u32 %v1022, %v270
        %1050 = vmatprep.subr.bf16.mxu0 0
        %1051 = vmatpush1.bf16.msra.mxu0 0
        %1052 = vmatprep.subr.bf16.mxu0 0
        %1053 = vmatpush1.bf16.msra.mxu0 0
        %1054 = vmatprep.subr.bf16.mxu0 0
        %1055 = vmatpush1.bf16.msra.mxu0 0
        %1056 = vmatprep.subr.bf16.mxu0 0
        %1057 = vmatpush1.bf16.msra.mxu0 0
        %1058 = vmatprep.subr.bf16.mxu0 0
        %1059 = vmatpush1.bf16.msra.mxu0 0
        %1060 = vmatprep.subr.bf16.mxu0 0
        %1061 = vmatpush1.bf16.msra.mxu0 0
        %1062 = vmatprep.subr.bf16.mxu0 0
        %1063 = vmatpush1.bf16.msra.mxu0 0
        %1064 = vmatprep.subr.bf16.mxu0 0
        %1065 = vmatpush1.bf16.msra.mxu0 %v1048
        %1066 = vmatprep.subr.bf16.mxu0 0
        %1067 = vmatpush2.bf16.msra.mxu0 0
        %1068 = vmatprep.subr.bf16.mxu0 0
        %1069 = vmatpush2.bf16.msra.mxu0 0
        %1070 = vmatprep.subr.bf16.mxu0 0
        %1071 = vmatpush2.bf16.msra.mxu0 0
        %1072 = vmatprep.subr.bf16.mxu0 0
        %1073 = vmatpush2.bf16.msra.mxu0 0
        %1074 = vmatprep.subr.bf16.mxu0 0
        %1075 = vmatpush2.bf16.msra.mxu0 0
        %1076 = vmatprep.subr.bf16.mxu0 0
        %1077 = vmatpush2.bf16.msra.mxu0 0
        %1078 = vmatprep.subr.bf16.mxu0 0
        %1079 = vmatpush2.bf16.msra.mxu0 0
        %1080 = vmatprep.subr.bf16.mxu0 0
        %1081 = vmatpush2.bf16.msra.mxu0 0
        %1082 = vmatprep.mubr.bf16.mxu0 0
        %1083 = vmatmul.mubr.bf16.gmra.mxu0 %v1024
        %v1084 = vpop.f32.mrf.mxu0
        %v1085 = vadd.f32 0.0, %v1084
        %v1086 = vpop.f32.mrf.mxu0
        %v1087 = vpop.f32.mrf.mxu0
        %v1088 = vadd.f32 0.0, %v1087
        %v1089 = vpop.f32.mrf.mxu0
        %1090 = vmatprep.mubr.bf16.mxu0 0
        %1091 = vmatmul.mubr.bf16.gmra.mxu0 %v1027
        %v1092 = vpop.f32.mrf.mxu0
        %v1093 = vadd.f32 0.0, %v1092
        %v1094 = vpop.f32.mrf.mxu0
        %v1095 = vpop.f32.mrf.mxu0
        %v1096 = vadd.f32 0.0, %v1095
        %v1097 = vpop.f32.mrf.mxu0
        %1098 = vmatprep.mubr.bf16.mxu0 0
        %1099 = vmatmul.mubr.bf16.gmra.mxu0 %v1030
        %v1100 = vpop.f32.mrf.mxu0
        %v1101 = vadd.f32 0.0, %v1100
        %v1102 = vpop.f32.mrf.mxu0
        %v1103 = vpop.f32.mrf.mxu0
        %v1104 = vadd.f32 0.0, %v1103
        %v1105 = vpop.f32.mrf.mxu0
        %1106 = vmatprep.mubr.bf16.mxu0 0
        %1107 = vmatmul.mubr.bf16.gmra.mxu0 %v1033
        %v1108 = vpop.f32.mrf.mxu0
        %v1109 = vadd.f32 0.0, %v1108
        %v1110 = vpop.f32.mrf.mxu0
        %v1111 = vpop.f32.mrf.mxu0
        %v1112 = vadd.f32 0.0, %v1111
        %v1113 = vpop.f32.mrf.mxu0
        %1114 = vmatprep.mubr.bf16.mxu0 0
        %1115 = vmatmul.mubr.bf16.gmra.mxu0 %v1036
        %v1116 = vpop.f32.mrf.mxu0
        %v1117 = vadd.f32 0.0, %v1116
        %v1118 = vpop.f32.mrf.mxu0
        %v1119 = vpop.f32.mrf.mxu0
        %v1120 = vadd.f32 0.0, %v1119
        %v1121 = vpop.f32.mrf.mxu0
        %1122 = vmatprep.mubr.bf16.mxu0 0
        %1123 = vmatmul.mubr.bf16.gmra.mxu0 %v1039
        %v1124 = vpop.f32.mrf.mxu0
        %v1125 = vadd.f32 0.0, %v1124
        %v1126 = vpop.f32.mrf.mxu0
        %v1127 = vpop.f32.mrf.mxu0
        %v1128 = vadd.f32 0.0, %v1127
        %v1129 = vpop.f32.mrf.mxu0
        %1130 = vmatprep.mubr.bf16.mxu0 0
        %1131 = vmatmul.mubr.bf16.gmra.mxu0 %v1042
        %v1132 = vpop.f32.mrf.mxu0
        %v1133 = vadd.f32 0.0, %v1132
        %v1134 = vpop.f32.mrf.mxu0
        %v1135 = vpop.f32.mrf.mxu0
        %v1136 = vadd.f32 0.0, %v1135
        %v1137 = vpop.f32.mrf.mxu0
        %1138 = vmatprep.mubr.bf16.mxu0 0
        %1139 = vmatmul.mubr.bf16.gmra.mxu0 %v1045
        %v1140 = vpop.f32.mrf.mxu0
        %v1141 = vadd.f32 0.0, %v1140
        %v1142 = vpop.f32.mrf.mxu0
        %v1143 = vpop.f32.mrf.mxu0
        %v1144 = vadd.f32 0.0, %v1143
        %v1145 = vpop.f32.mrf.mxu0
        %1146 = vdwg.mxu0
        %v1147 = vadd.f32 %v980, %v1085
        %v1148 = vadd.f32 %v981, %v1088
        %v1149 = vadd.f32 %v982, %v1093
        %v1150 = vadd.f32 %v983, %v1096
        %v1151 = vadd.f32 %v984, %v1101
        %v1152 = vadd.f32 %v985, %v1104
        %v1153 = vadd.f32 %v986, %v1109
        %v1154 = vadd.f32 %v987, %v1112
        %v1155 = vadd.f32 %v988, %v1117
        %v1156 = vadd.f32 %v989, %v1120
        %v1157 = vadd.f32 %v990, %v1125
        %v1158 = vadd.f32 %v991, %v1128
        %v1159 = vadd.f32 %v992, %v1133
        %v1160 = vadd.f32 %v993, %v1136
        %v1161 = vadd.f32 %v994, %v1141
        %v1162 = vadd.f32 %v995, %v1144
        %v1163 = vld [vmem:[%s188 + $0x6] sm:$0xff]
        %v1164 = vld [vmem:[%s188 + $0xe] sm:$0xff]
        %v1165 = vld [vmem:[%s188 + $0x1e] sm:$0xff]
        %v1166 = vld [vmem:[%s188 + $0x26] sm:$0xff]
        %v1167 = vld [vmem:[%s188 + $0x36] sm:$0xff]
        %v1168 = vld [vmem:[%s188 + $0x3e] sm:$0xff]
        %v1169 = vld [vmem:[%s188 + $0x4e] sm:$0xff]
        %v1170 = vld [vmem:[%s188 + $0x56] sm:$0xff]
        %v1171 = vld [vmem:[%s188 + $0x66] sm:$0xff]
        %v1172 = vld [vmem:[%s188 + $0x6e] sm:$0xff]
        %v1173 = vld [vmem:[%s188 + $0x7e] sm:$0xff]
        %v1174 = vld [vmem:[%s188 + $0x86] sm:$0xff]
        %v1175 = vld [vmem:[%s188 + $0x96] sm:$0xff]
        %v1176 = vld [vmem:[%s188 + $0x9e] sm:$0xff]
        %v1177 = vld [vmem:[%s188 + $0xae] sm:$0xff]
        %v1178 = vld [vmem:[%s188 + $0xb6] sm:$0xff]
        %v1179 = vpack.c.bf16 %v1164, %v1163
        %v1180 = vpack.c.bf16 %v1166, %v1165
        %v1181 = vpack.c.bf16 %v1168, %v1167
        %v1182 = vpack.c.bf16 %v1170, %v1169
        %v1183 = vpack.c.bf16 %v1172, %v1171
        %v1184 = vpack.c.bf16 %v1174, %v1173
        %v1185 = vpack.c.bf16 %v1176, %v1175
        %v1186 = vpack.c.bf16 %v1178, %v1177
        %s1187 = scalar_lea.vmem %s1, 24
        %v1188 = vld [vmem:[%s1187] sm:$0x7]
        %v1189 = vpack.c.bf16 %v1188, %v1188
        %v1191 = vsel %vm242, %v1179, 0
        %v1194 = vsel %vm242, %v1180, 0
        %v1197 = vsel %vm242, %v1181, 0
        %v1200 = vsel %vm242, %v1182, 0
        %v1203 = vsel %vm242, %v1183, 0
        %v1206 = vsel %vm242, %v1184, 0
        %v1209 = vsel %vm242, %v1185, 0
        %v1212 = vsel %vm242, %v1186, 0
        %v1215 = vand.u32 %v1189, %v270
        %1217 = vmatprep.subr.bf16.mxu0 0
        %1218 = vmatpush1.bf16.msra.mxu0 0
        %1219 = vmatprep.subr.bf16.mxu0 0
        %1220 = vmatpush1.bf16.msra.mxu0 0
        %1221 = vmatprep.subr.bf16.mxu0 0
        %1222 = vmatpush1.bf16.msra.mxu0 0
        %1223 = vmatprep.subr.bf16.mxu0 0
        %1224 = vmatpush1.bf16.msra.mxu0 0
        %1225 = vmatprep.subr.bf16.mxu0 0
        %1226 = vmatpush1.bf16.msra.mxu0 0
        %1227 = vmatprep.subr.bf16.mxu0 0
        %1228 = vmatpush1.bf16.msra.mxu0 0
        %1229 = vmatprep.subr.bf16.mxu0 0
        %1230 = vmatpush1.bf16.msra.mxu0 0
        %1231 = vmatprep.subr.bf16.mxu0 0
        %1232 = vmatpush1.bf16.msra.mxu0 %v1215
        %1233 = vmatprep.subr.bf16.mxu0 0
        %1234 = vmatpush2.bf16.msra.mxu0 0
        %1235 = vmatprep.subr.bf16.mxu0 0
        %1236 = vmatpush2.bf16.msra.mxu0 0
        %1237 = vmatprep.subr.bf16.mxu0 0
        %1238 = vmatpush2.bf16.msra.mxu0 0
        %1239 = vmatprep.subr.bf16.mxu0 0
        %1240 = vmatpush2.bf16.msra.mxu0 0
        %1241 = vmatprep.subr.bf16.mxu0 0
        %1242 = vmatpush2.bf16.msra.mxu0 0
        %1243 = vmatprep.subr.bf16.mxu0 0
        %1244 = vmatpush2.bf16.msra.mxu0 0
        %1245 = vmatprep.subr.bf16.mxu0 0
        %1246 = vmatpush2.bf16.msra.mxu0 0
        %1247 = vmatprep.subr.bf16.mxu0 0
        %1248 = vmatpush2.bf16.msra.mxu0 0
        %1249 = vmatprep.mubr.bf16.mxu0 0
        %1250 = vmatmul.mubr.bf16.gmra.mxu0 %v1191
        %v1251 = vpop.f32.mrf.mxu0
        %v1252 = vadd.f32 0.0, %v1251
        %v1253 = vpop.f32.mrf.mxu0
        %v1254 = vpop.f32.mrf.mxu0
        %v1255 = vadd.f32 0.0, %v1254
        %v1256 = vpop.f32.mrf.mxu0
        %1257 = vmatprep.mubr.bf16.mxu0 0
        %1258 = vmatmul.mubr.bf16.gmra.mxu0 %v1194
        %v1259 = vpop.f32.mrf.mxu0
        %v1260 = vadd.f32 0.0, %v1259
        %v1261 = vpop.f32.mrf.mxu0
        %v1262 = vpop.f32.mrf.mxu0
        %v1263 = vadd.f32 0.0, %v1262
        %v1264 = vpop.f32.mrf.mxu0
        %1265 = vmatprep.mubr.bf16.mxu0 0
        %1266 = vmatmul.mubr.bf16.gmra.mxu0 %v1197
        %v1267 = vpop.f32.mrf.mxu0
        %v1268 = vadd.f32 0.0, %v1267
        %v1269 = vpop.f32.mrf.mxu0
        %v1270 = vpop.f32.mrf.mxu0
        %v1271 = vadd.f32 0.0, %v1270
        %v1272 = vpop.f32.mrf.mxu0
        %1273 = vmatprep.mubr.bf16.mxu0 0
        %1274 = vmatmul.mubr.bf16.gmra.mxu0 %v1200
        %v1275 = vpop.f32.mrf.mxu0
        %v1276 = vadd.f32 0.0, %v1275
        %v1277 = vpop.f32.mrf.mxu0
        %v1278 = vpop.f32.mrf.mxu0
        %v1279 = vadd.f32 0.0, %v1278
        %v1280 = vpop.f32.mrf.mxu0
        %1281 = vmatprep.mubr.bf16.mxu0 0
        %1282 = vmatmul.mubr.bf16.gmra.mxu0 %v1203
        %v1283 = vpop.f32.mrf.mxu0
        %v1284 = vadd.f32 0.0, %v1283
        %v1285 = vpop.f32.mrf.mxu0
        %v1286 = vpop.f32.mrf.mxu0
        %v1287 = vadd.f32 0.0, %v1286
        %v1288 = vpop.f32.mrf.mxu0
        %1289 = vmatprep.mubr.bf16.mxu0 0
        %1290 = vmatmul.mubr.bf16.gmra.mxu0 %v1206
        %v1291 = vpop.f32.mrf.mxu0
        %v1292 = vadd.f32 0.0, %v1291
        %v1293 = vpop.f32.mrf.mxu0
        %v1294 = vpop.f32.mrf.mxu0
        %v1295 = vadd.f32 0.0, %v1294
        %v1296 = vpop.f32.mrf.mxu0
        %1297 = vmatprep.mubr.bf16.mxu0 0
        %1298 = vmatmul.mubr.bf16.gmra.mxu0 %v1209
        %v1299 = vpop.f32.mrf.mxu0
        %v1300 = vadd.f32 0.0, %v1299
        %v1301 = vpop.f32.mrf.mxu0
        %v1302 = vpop.f32.mrf.mxu0
        %v1303 = vadd.f32 0.0, %v1302
        %v1304 = vpop.f32.mrf.mxu0
        %1305 = vmatprep.mubr.bf16.mxu0 0
        %1306 = vmatmul.mubr.bf16.gmra.mxu0 %v1212
        %v1307 = vpop.f32.mrf.mxu0
        %v1308 = vadd.f32 0.0, %v1307
        %v1309 = vpop.f32.mrf.mxu0
        %v1310 = vpop.f32.mrf.mxu0
        %v1311 = vadd.f32 0.0, %v1310
        %v1312 = vpop.f32.mrf.mxu0
        %1313 = vdwg.mxu0
        %v1314 = vadd.f32 %v1147, %v1252
        %v1315 = vadd.f32 %v1148, %v1255
        %v1316 = vadd.f32 %v1149, %v1260
        %v1317 = vadd.f32 %v1150, %v1263
        %v1318 = vadd.f32 %v1151, %v1268
        %v1319 = vadd.f32 %v1152, %v1271
        %v1320 = vadd.f32 %v1153, %v1276
        %v1321 = vadd.f32 %v1154, %v1279
        %v1322 = vadd.f32 %v1155, %v1284
        %v1323 = vadd.f32 %v1156, %v1287
        %v1324 = vadd.f32 %v1157, %v1292
        %v1325 = vadd.f32 %v1158, %v1295
        %v1326 = vadd.f32 %v1159, %v1300
        %v1327 = vadd.f32 %v1160, %v1303
        %v1328 = vadd.f32 %v1161, %v1308
        %v1329 = vadd.f32 %v1162, %v1311
        %s1330 = sadd.s32 %s185, 1
        %s1331 = smul.u32 %s1330, 24
        %s1332 = scalar_lea.vmem %s182, %s1331
        %v1333 = vld [vmem:[%s1332] sm:$0xff]
        %v1334 = vld [vmem:[%s1332 + $0x8] sm:$0xff]
        %v1335 = vld [vmem:[%s1332 + $0x18] sm:$0xff]
        %v1336 = vld [vmem:[%s1332 + $0x20] sm:$0xff]
        %v1337 = vld [vmem:[%s1332 + $0x30] sm:$0xff]
        %v1338 = vld [vmem:[%s1332 + $0x38] sm:$0xff]
        %v1339 = vld [vmem:[%s1332 + $0x48] sm:$0xff]
        %v1340 = vld [vmem:[%s1332 + $0x50] sm:$0xff]
        %v1341 = vld [vmem:[%s1332 + $0x60] sm:$0xff]
        %v1342 = vld [vmem:[%s1332 + $0x68] sm:$0xff]
        %v1343 = vld [vmem:[%s1332 + $0x78] sm:$0xff]
        %v1344 = vld [vmem:[%s1332 + $0x80] sm:$0xff]
        %v1345 = vld [vmem:[%s1332 + $0x90] sm:$0xff]
        %v1346 = vld [vmem:[%s1332 + $0x98] sm:$0xff]
        %v1347 = vld [vmem:[%s1332 + $0xa8] sm:$0xff]
        %v1348 = vld [vmem:[%s1332 + $0xb0] sm:$0xff]
        %v1349 = vpack.c.bf16 %v1334, %v1333
        %v1350 = vpack.c.bf16 %v1336, %v1335
        %v1351 = vpack.c.bf16 %v1338, %v1337
        %v1352 = vpack.c.bf16 %v1340, %v1339
        %v1353 = vpack.c.bf16 %v1342, %v1341
        %v1354 = vpack.c.bf16 %v1344, %v1343
        %v1355 = vpack.c.bf16 %v1346, %v1345
        %v1356 = vpack.c.bf16 %v1348, %v1347
        %s1357 = scalar_lea.vmem %s1, 28
        %v1358 = vld [vmem:[%s1357] sm:$0x7]
        %v1359 = vpack.c.bf16 %v1358, %v1358
        %v1361 = vsel %vm242, %v1349, 0
        %v1364 = vsel %vm242, %v1350, 0
        %v1367 = vsel %vm242, %v1351, 0
        %v1370 = vsel %vm242, %v1352, 0
        %v1373 = vsel %vm242, %v1353, 0
        %v1376 = vsel %vm242, %v1354, 0
        %v1379 = vsel %vm242, %v1355, 0
        %v1382 = vsel %vm242, %v1356, 0
        %v1385 = vand.u32 %v1359, %v270
        %1387 = vmatprep.subr.bf16.mxu0 0
        %1388 = vmatpush1.bf16.msra.mxu0 0
        %1389 = vmatprep.subr.bf16.mxu0 0
        %1390 = vmatpush1.bf16.msra.mxu0 0
        %1391 = vmatprep.subr.bf16.mxu0 0
        %1392 = vmatpush1.bf16.msra.mxu0 0
        %1393 = vmatprep.subr.bf16.mxu0 0
        %1394 = vmatpush1.bf16.msra.mxu0 0
        %1395 = vmatprep.subr.bf16.mxu0 0
        %1396 = vmatpush1.bf16.msra.mxu0 0
        %1397 = vmatprep.subr.bf16.mxu0 0
        %1398 = vmatpush1.bf16.msra.mxu0 0
        %1399 = vmatprep.subr.bf16.mxu0 0
        %1400 = vmatpush1.bf16.msra.mxu0 0
        %1401 = vmatprep.subr.bf16.mxu0 0
        %1402 = vmatpush1.bf16.msra.mxu0 %v1385
        %1403 = vmatprep.subr.bf16.mxu0 0
        %1404 = vmatpush2.bf16.msra.mxu0 0
        %1405 = vmatprep.subr.bf16.mxu0 0
        %1406 = vmatpush2.bf16.msra.mxu0 0
        %1407 = vmatprep.subr.bf16.mxu0 0
        %1408 = vmatpush2.bf16.msra.mxu0 0
        %1409 = vmatprep.subr.bf16.mxu0 0
        %1410 = vmatpush2.bf16.msra.mxu0 0
        %1411 = vmatprep.subr.bf16.mxu0 0
        %1412 = vmatpush2.bf16.msra.mxu0 0
        %1413 = vmatprep.subr.bf16.mxu0 0
        %1414 = vmatpush2.bf16.msra.mxu0 0
        %1415 = vmatprep.subr.bf16.mxu0 0
        %1416 = vmatpush2.bf16.msra.mxu0 0
        %1417 = vmatprep.subr.bf16.mxu0 0
        %1418 = vmatpush2.bf16.msra.mxu0 0
        %1419 = vmatprep.mubr.bf16.mxu0 0
        %1420 = vmatmul.mubr.bf16.gmra.mxu0 %v1361
        %v1421 = vpop.f32.mrf.mxu0
        %v1422 = vadd.f32 0.0, %v1421
        %v1423 = vpop.f32.mrf.mxu0
        %v1424 = vpop.f32.mrf.mxu0
        %v1425 = vadd.f32 0.0, %v1424
        %v1426 = vpop.f32.mrf.mxu0
        %1427 = vmatprep.mubr.bf16.mxu0 0
        %1428 = vmatmul.mubr.bf16.gmra.mxu0 %v1364
        %v1429 = vpop.f32.mrf.mxu0
        %v1430 = vadd.f32 0.0, %v1429
        %v1431 = vpop.f32.mrf.mxu0
        %v1432 = vpop.f32.mrf.mxu0
        %v1433 = vadd.f32 0.0, %v1432
        %v1434 = vpop.f32.mrf.mxu0
        %1435 = vmatprep.mubr.bf16.mxu0 0
        %1436 = vmatmul.mubr.bf16.gmra.mxu0 %v1367
        %v1437 = vpop.f32.mrf.mxu0
        %v1438 = vadd.f32 0.0, %v1437
        %v1439 = vpop.f32.mrf.mxu0
        %v1440 = vpop.f32.mrf.mxu0
        %v1441 = vadd.f32 0.0, %v1440
        %v1442 = vpop.f32.mrf.mxu0
        %1443 = vmatprep.mubr.bf16.mxu0 0
        %1444 = vmatmul.mubr.bf16.gmra.mxu0 %v1370
        %v1445 = vpop.f32.mrf.mxu0
        %v1446 = vadd.f32 0.0, %v1445
        %v1447 = vpop.f32.mrf.mxu0
        %v1448 = vpop.f32.mrf.mxu0
        %v1449 = vadd.f32 0.0, %v1448
        %v1450 = vpop.f32.mrf.mxu0
        %1451 = vmatprep.mubr.bf16.mxu0 0
        %1452 = vmatmul.mubr.bf16.gmra.mxu0 %v1373
        %v1453 = vpop.f32.mrf.mxu0
        %v1454 = vadd.f32 0.0, %v1453
        %v1455 = vpop.f32.mrf.mxu0
        %v1456 = vpop.f32.mrf.mxu0
        %v1457 = vadd.f32 0.0, %v1456
        %v1458 = vpop.f32.mrf.mxu0
        %1459 = vmatprep.mubr.bf16.mxu0 0
        %1460 = vmatmul.mubr.bf16.gmra.mxu0 %v1376
        %v1461 = vpop.f32.mrf.mxu0
        %v1462 = vadd.f32 0.0, %v1461
        %v1463 = vpop.f32.mrf.mxu0
        %v1464 = vpop.f32.mrf.mxu0
        %v1465 = vadd.f32 0.0, %v1464
        %v1466 = vpop.f32.mrf.mxu0
        %1467 = vmatprep.mubr.bf16.mxu0 0
        %1468 = vmatmul.mubr.bf16.gmra.mxu0 %v1379
        %v1469 = vpop.f32.mrf.mxu0
        %v1470 = vadd.f32 0.0, %v1469
        %v1471 = vpop.f32.mrf.mxu0
        %v1472 = vpop.f32.mrf.mxu0
        %v1473 = vadd.f32 0.0, %v1472
        %v1474 = vpop.f32.mrf.mxu0
        %1475 = vmatprep.mubr.bf16.mxu0 0
        %1476 = vmatmul.mubr.bf16.gmra.mxu0 %v1382
        %v1477 = vpop.f32.mrf.mxu0
        %v1478 = vadd.f32 0.0, %v1477
        %v1479 = vpop.f32.mrf.mxu0
        %v1480 = vpop.f32.mrf.mxu0
        %v1481 = vadd.f32 0.0, %v1480
        %v1482 = vpop.f32.mrf.mxu0
        %1483 = vdwg.mxu0
        %v1484 = vadd.f32 %v1314, %v1422
        %v1485 = vadd.f32 %v1315, %v1425
        %v1486 = vadd.f32 %v1316, %v1430
        %v1487 = vadd.f32 %v1317, %v1433
        %v1488 = vadd.f32 %v1318, %v1438
        %v1489 = vadd.f32 %v1319, %v1441
        %v1490 = vadd.f32 %v1320, %v1446
        %v1491 = vadd.f32 %v1321, %v1449
        %v1492 = vadd.f32 %v1322, %v1454
        %v1493 = vadd.f32 %v1323, %v1457
        %v1494 = vadd.f32 %v1324, %v1462
        %v1495 = vadd.f32 %v1325, %v1465
        %v1496 = vadd.f32 %v1326, %v1470
        %v1497 = vadd.f32 %v1327, %v1473
        %v1498 = vadd.f32 %v1328, %v1478
        %v1499 = vadd.f32 %v1329, %v1481
        %v1500 = vld [vmem:[%s1332 + $0x1] sm:$0xff]
        %v1501 = vld [vmem:[%s1332 + $0x9] sm:$0xff]
        %v1502 = vld [vmem:[%s1332 + $0x19] sm:$0xff]
        %v1503 = vld [vmem:[%s1332 + $0x21] sm:$0xff]
        %v1504 = vld [vmem:[%s1332 + $0x31] sm:$0xff]
        %v1505 = vld [vmem:[%s1332 + $0x39] sm:$0xff]
        %v1506 = vld [vmem:[%s1332 + $0x49] sm:$0xff]
        %v1507 = vld [vmem:[%s1332 + $0x51] sm:$0xff]
        %v1508 = vld [vmem:[%s1332 + $0x61] sm:$0xff]
        %v1509 = vld [vmem:[%s1332 + $0x69] sm:$0xff]
        %v1510 = vld [vmem:[%s1332 + $0x79] sm:$0xff]
        %v1511 = vld [vmem:[%s1332 + $0x81] sm:$0xff]
        %v1512 = vld [vmem:[%s1332 + $0x91] sm:$0xff]
        %v1513 = vld [vmem:[%s1332 + $0x99] sm:$0xff]
        %v1514 = vld [vmem:[%s1332 + $0xa9] sm:$0xff]
        %v1515 = vld [vmem:[%s1332 + $0xb1] sm:$0xff]
        %v1516 = vpack.c.bf16 %v1501, %v1500
        %v1517 = vpack.c.bf16 %v1503, %v1502
        %v1518 = vpack.c.bf16 %v1505, %v1504
        %v1519 = vpack.c.bf16 %v1507, %v1506
        %v1520 = vpack.c.bf16 %v1509, %v1508
        %v1521 = vpack.c.bf16 %v1511, %v1510
        %v1522 = vpack.c.bf16 %v1513, %v1512
        %v1523 = vpack.c.bf16 %v1515, %v1514
        %s1524 = scalar_lea.vmem %s1, 32
        %v1525 = vld [vmem:[%s1524] sm:$0x7]
        %v1526 = vpack.c.bf16 %v1525, %v1525
        %v1528 = vsel %vm242, %v1516, 0
        %v1531 = vsel %vm242, %v1517, 0
        %v1534 = vsel %vm242, %v1518, 0
        %v1537 = vsel %vm242, %v1519, 0
        %v1540 = vsel %vm242, %v1520, 0
        %v1543 = vsel %vm242, %v1521, 0
        %v1546 = vsel %vm242, %v1522, 0
        %v1549 = vsel %vm242, %v1523, 0
        %v1552 = vand.u32 %v1526, %v270
        %1554 = vmatprep.subr.bf16.mxu0 0
        %1555 = vmatpush1.bf16.msra.mxu0 0
        %1556 = vmatprep.subr.bf16.mxu0 0
        %1557 = vmatpush1.bf16.msra.mxu0 0
        %1558 = vmatprep.subr.bf16.mxu0 0
        %1559 = vmatpush1.bf16.msra.mxu0 0
        %1560 = vmatprep.subr.bf16.mxu0 0
        %1561 = vmatpush1.bf16.msra.mxu0 0
        %1562 = vmatprep.subr.bf16.mxu0 0
        %1563 = vmatpush1.bf16.msra.mxu0 0
        %1564 = vmatprep.subr.bf16.mxu0 0
        %1565 = vmatpush1.bf16.msra.mxu0 0
        %1566 = vmatprep.subr.bf16.mxu0 0
        %1567 = vmatpush1.bf16.msra.mxu0 0
        %1568 = vmatprep.subr.bf16.mxu0 0
        %1569 = vmatpush1.bf16.msra.mxu0 %v1552
        %1570 = vmatprep.subr.bf16.mxu0 0
        %1571 = vmatpush2.bf16.msra.mxu0 0
        %1572 = vmatprep.subr.bf16.mxu0 0
        %1573 = vmatpush2.bf16.msra.mxu0 0
        %1574 = vmatprep.subr.bf16.mxu0 0
        %1575 = vmatpush2.bf16.msra.mxu0 0
        %1576 = vmatprep.subr.bf16.mxu0 0
        %1577 = vmatpush2.bf16.msra.mxu0 0
        %1578 = vmatprep.subr.bf16.mxu0 0
        %1579 = vmatpush2.bf16.msra.mxu0 0
        %1580 = vmatprep.subr.bf16.mxu0 0
        %1581 = vmatpush2.bf16.msra.mxu0 0
        %1582 = vmatprep.subr.bf16.mxu0 0
        %1583 = vmatpush2.bf16.msra.mxu0 0
        %1584 = vmatprep.subr.bf16.mxu0 0
        %1585 = vmatpush2.bf16.msra.mxu0 0
        %1586 = vmatprep.mubr.bf16.mxu0 0
        %1587 = vmatmul.mubr.bf16.gmra.mxu0 %v1528
        %v1588 = vpop.f32.mrf.mxu0
        %v1589 = vadd.f32 0.0, %v1588
        %v1590 = vpop.f32.mrf.mxu0
        %v1591 = vpop.f32.mrf.mxu0
        %v1592 = vadd.f32 0.0, %v1591
        %v1593 = vpop.f32.mrf.mxu0
        %1594 = vmatprep.mubr.bf16.mxu0 0
        %1595 = vmatmul.mubr.bf16.gmra.mxu0 %v1531
        %v1596 = vpop.f32.mrf.mxu0
        %v1597 = vadd.f32 0.0, %v1596
        %v1598 = vpop.f32.mrf.mxu0
        %v1599 = vpop.f32.mrf.mxu0
        %v1600 = vadd.f32 0.0, %v1599
        %v1601 = vpop.f32.mrf.mxu0
        %1602 = vmatprep.mubr.bf16.mxu0 0
        %1603 = vmatmul.mubr.bf16.gmra.mxu0 %v1534
        %v1604 = vpop.f32.mrf.mxu0
        %v1605 = vadd.f32 0.0, %v1604
        %v1606 = vpop.f32.mrf.mxu0
        %v1607 = vpop.f32.mrf.mxu0
        %v1608 = vadd.f32 0.0, %v1607
        %v1609 = vpop.f32.mrf.mxu0
        %1610 = vmatprep.mubr.bf16.mxu0 0
        %1611 = vmatmul.mubr.bf16.gmra.mxu0 %v1537
        %v1612 = vpop.f32.mrf.mxu0
        %v1613 = vadd.f32 0.0, %v1612
        %v1614 = vpop.f32.mrf.mxu0
        %v1615 = vpop.f32.mrf.mxu0
        %v1616 = vadd.f32 0.0, %v1615
        %v1617 = vpop.f32.mrf.mxu0
        %1618 = vmatprep.mubr.bf16.mxu0 0
        %1619 = vmatmul.mubr.bf16.gmra.mxu0 %v1540
        %v1620 = vpop.f32.mrf.mxu0
        %v1621 = vadd.f32 0.0, %v1620
        %v1622 = vpop.f32.mrf.mxu0
        %v1623 = vpop.f32.mrf.mxu0
        %v1624 = vadd.f32 0.0, %v1623
        %v1625 = vpop.f32.mrf.mxu0
        %1626 = vmatprep.mubr.bf16.mxu0 0
        %1627 = vmatmul.mubr.bf16.gmra.mxu0 %v1543
        %v1628 = vpop.f32.mrf.mxu0
        %v1629 = vadd.f32 0.0, %v1628
        %v1630 = vpop.f32.mrf.mxu0
        %v1631 = vpop.f32.mrf.mxu0
        %v1632 = vadd.f32 0.0, %v1631
        %v1633 = vpop.f32.mrf.mxu0
        %1634 = vmatprep.mubr.bf16.mxu0 0
        %1635 = vmatmul.mubr.bf16.gmra.mxu0 %v1546
        %v1636 = vpop.f32.mrf.mxu0
        %v1637 = vadd.f32 0.0, %v1636
        %v1638 = vpop.f32.mrf.mxu0
        %v1639 = vpop.f32.mrf.mxu0
        %v1640 = vadd.f32 0.0, %v1639
        %v1641 = vpop.f32.mrf.mxu0
        %1642 = vmatprep.mubr.bf16.mxu0 0
        %1643 = vmatmul.mubr.bf16.gmra.mxu0 %v1549
        %v1644 = vpop.f32.mrf.mxu0
        %v1645 = vadd.f32 0.0, %v1644
        %v1646 = vpop.f32.mrf.mxu0
        %v1647 = vpop.f32.mrf.mxu0
        %v1648 = vadd.f32 0.0, %v1647
        %v1649 = vpop.f32.mrf.mxu0
        %1650 = vdwg.mxu0
        %v1651 = vadd.f32 %v1484, %v1589
        %v1652 = vadd.f32 %v1485, %v1592
        %v1653 = vadd.f32 %v1486, %v1597
        %v1654 = vadd.f32 %v1487, %v1600
        %v1655 = vadd.f32 %v1488, %v1605
        %v1656 = vadd.f32 %v1489, %v1608
        %v1657 = vadd.f32 %v1490, %v1613
        %v1658 = vadd.f32 %v1491, %v1616
        %v1659 = vadd.f32 %v1492, %v1621
        %v1660 = vadd.f32 %v1493, %v1624
        %v1661 = vadd.f32 %v1494, %v1629
        %v1662 = vadd.f32 %v1495, %v1632
        %v1663 = vadd.f32 %v1496, %v1637
        %v1664 = vadd.f32 %v1497, %v1640
        %v1665 = vadd.f32 %v1498, %v1645
        %v1666 = vadd.f32 %v1499, %v1648
        %v1667 = vld [vmem:[%s1332 + $0x2] sm:$0xff]
        %v1668 = vld [vmem:[%s1332 + $0xa] sm:$0xff]
        %v1669 = vld [vmem:[%s1332 + $0x1a] sm:$0xff]
        %v1670 = vld [vmem:[%s1332 + $0x22] sm:$0xff]
        %v1671 = vld [vmem:[%s1332 + $0x32] sm:$0xff]
        %v1672 = vld [vmem:[%s1332 + $0x3a] sm:$0xff]
        %v1673 = vld [vmem:[%s1332 + $0x4a] sm:$0xff]
        %v1674 = vld [vmem:[%s1332 + $0x52] sm:$0xff]
        %v1675 = vld [vmem:[%s1332 + $0x62] sm:$0xff]
        %v1676 = vld [vmem:[%s1332 + $0x6a] sm:$0xff]
        %v1677 = vld [vmem:[%s1332 + $0x7a] sm:$0xff]
        %v1678 = vld [vmem:[%s1332 + $0x82] sm:$0xff]
        %v1679 = vld [vmem:[%s1332 + $0x92] sm:$0xff]
        %v1680 = vld [vmem:[%s1332 + $0x9a] sm:$0xff]
        %v1681 = vld [vmem:[%s1332 + $0xaa] sm:$0xff]
        %v1682 = vld [vmem:[%s1332 + $0xb2] sm:$0xff]
        %v1683 = vpack.c.bf16 %v1668, %v1667
        %v1684 = vpack.c.bf16 %v1670, %v1669
        %v1685 = vpack.c.bf16 %v1672, %v1671
        %v1686 = vpack.c.bf16 %v1674, %v1673
        %v1687 = vpack.c.bf16 %v1676, %v1675
        %v1688 = vpack.c.bf16 %v1678, %v1677
        %v1689 = vpack.c.bf16 %v1680, %v1679
        %v1690 = vpack.c.bf16 %v1682, %v1681
        %s1691 = scalar_lea.vmem %s1, 36
        %v1692 = vld [vmem:[%s1691] sm:$0x7]
        %v1693 = vpack.c.bf16 %v1692, %v1692
        %v1695 = vsel %vm242, %v1683, 0
        %v1698 = vsel %vm242, %v1684, 0
        %v1701 = vsel %vm242, %v1685, 0
        %v1704 = vsel %vm242, %v1686, 0
        %v1707 = vsel %vm242, %v1687, 0
        %v1710 = vsel %vm242, %v1688, 0
        %v1713 = vsel %vm242, %v1689, 0
        %v1716 = vsel %vm242, %v1690, 0
        %v1719 = vand.u32 %v1693, %v270
        %1721 = vmatprep.subr.bf16.mxu0 0
        %1722 = vmatpush1.bf16.msra.mxu0 0
        %1723 = vmatprep.subr.bf16.mxu0 0
        %1724 = vmatpush1.bf16.msra.mxu0 0
        %1725 = vmatprep.subr.bf16.mxu0 0
        %1726 = vmatpush1.bf16.msra.mxu0 0
        %1727 = vmatprep.subr.bf16.mxu0 0
        %1728 = vmatpush1.bf16.msra.mxu0 0
        %1729 = vmatprep.subr.bf16.mxu0 0
        %1730 = vmatpush1.bf16.msra.mxu0 0
        %1731 = vmatprep.subr.bf16.mxu0 0
        %1732 = vmatpush1.bf16.msra.mxu0 0
        %1733 = vmatprep.subr.bf16.mxu0 0
        %1734 = vmatpush1.bf16.msra.mxu0 0
        %1735 = vmatprep.subr.bf16.mxu0 0
        %1736 = vmatpush1.bf16.msra.mxu0 %v1719
        %1737 = vmatprep.subr.bf16.mxu0 0
        %1738 = vmatpush2.bf16.msra.mxu0 0
        %1739 = vmatprep.subr.bf16.mxu0 0
        %1740 = vmatpush2.bf16.msra.mxu0 0
        %1741 = vmatprep.subr.bf16.mxu0 0
        %1742 = vmatpush2.bf16.msra.mxu0 0
        %1743 = vmatprep.subr.bf16.mxu0 0
        %1744 = vmatpush2.bf16.msra.mxu0 0
        %1745 = vmatprep.subr.bf16.mxu0 0
        %1746 = vmatpush2.bf16.msra.mxu0 0
        %1747 = vmatprep.subr.bf16.mxu0 0
        %1748 = vmatpush2.bf16.msra.mxu0 0
        %1749 = vmatprep.subr.bf16.mxu0 0
        %1750 = vmatpush2.bf16.msra.mxu0 0
        %1751 = vmatprep.subr.bf16.mxu0 0
        %1752 = vmatpush2.bf16.msra.mxu0 0
        %1753 = vmatprep.mubr.bf16.mxu0 0
        %1754 = vmatmul.mubr.bf16.gmra.mxu0 %v1695
        %v1755 = vpop.f32.mrf.mxu0
        %v1756 = vadd.f32 0.0, %v1755
        %v1757 = vpop.f32.mrf.mxu0
        %v1758 = vpop.f32.mrf.mxu0
        %v1759 = vadd.f32 0.0, %v1758
        %v1760 = vpop.f32.mrf.mxu0
        %1761 = vmatprep.mubr.bf16.mxu0 0
        %1762 = vmatmul.mubr.bf16.gmra.mxu0 %v1698
        %v1763 = vpop.f32.mrf.mxu0
        %v1764 = vadd.f32 0.0, %v1763
        %v1765 = vpop.f32.mrf.mxu0
        %v1766 = vpop.f32.mrf.mxu0
        %v1767 = vadd.f32 0.0, %v1766
        %v1768 = vpop.f32.mrf.mxu0
        %1769 = vmatprep.mubr.bf16.mxu0 0
        %1770 = vmatmul.mubr.bf16.gmra.mxu0 %v1701
        %v1771 = vpop.f32.mrf.mxu0
        %v1772 = vadd.f32 0.0, %v1771
        %v1773 = vpop.f32.mrf.mxu0
        %v1774 = vpop.f32.mrf.mxu0
        %v1775 = vadd.f32 0.0, %v1774
        %v1776 = vpop.f32.mrf.mxu0
        %1777 = vmatprep.mubr.bf16.mxu0 0
        %1778 = vmatmul.mubr.bf16.gmra.mxu0 %v1704
        %v1779 = vpop.f32.mrf.mxu0
        %v1780 = vadd.f32 0.0, %v1779
        %v1781 = vpop.f32.mrf.mxu0
        %v1782 = vpop.f32.mrf.mxu0
        %v1783 = vadd.f32 0.0, %v1782
        %v1784 = vpop.f32.mrf.mxu0
        %1785 = vmatprep.mubr.bf16.mxu0 0
        %1786 = vmatmul.mubr.bf16.gmra.mxu0 %v1707
        %v1787 = vpop.f32.mrf.mxu0
        %v1788 = vadd.f32 0.0, %v1787
        %v1789 = vpop.f32.mrf.mxu0
        %v1790 = vpop.f32.mrf.mxu0
        %v1791 = vadd.f32 0.0, %v1790
        %v1792 = vpop.f32.mrf.mxu0
        %1793 = vmatprep.mubr.bf16.mxu0 0
        %1794 = vmatmul.mubr.bf16.gmra.mxu0 %v1710
        %v1795 = vpop.f32.mrf.mxu0
        %v1796 = vadd.f32 0.0, %v1795
        %v1797 = vpop.f32.mrf.mxu0
        %v1798 = vpop.f32.mrf.mxu0
        %v1799 = vadd.f32 0.0, %v1798
        %v1800 = vpop.f32.mrf.mxu0
        %1801 = vmatprep.mubr.bf16.mxu0 0
        %1802 = vmatmul.mubr.bf16.gmra.mxu0 %v1713
        %v1803 = vpop.f32.mrf.mxu0
        %v1804 = vadd.f32 0.0, %v1803
        %v1805 = vpop.f32.mrf.mxu0
        %v1806 = vpop.f32.mrf.mxu0
        %v1807 = vadd.f32 0.0, %v1806
        %v1808 = vpop.f32.mrf.mxu0
        %1809 = vmatprep.mubr.bf16.mxu0 0
        %1810 = vmatmul.mubr.bf16.gmra.mxu0 %v1716
        %v1811 = vpop.f32.mrf.mxu0
        %v1812 = vadd.f32 0.0, %v1811
        %v1813 = vpop.f32.mrf.mxu0
        %v1814 = vpop.f32.mrf.mxu0
        %v1815 = vadd.f32 0.0, %v1814
        %v1816 = vpop.f32.mrf.mxu0
        %1817 = vdwg.mxu0
        %v1818 = vadd.f32 %v1651, %v1756
        %v1819 = vadd.f32 %v1652, %v1759
        %v1820 = vadd.f32 %v1653, %v1764
        %v1821 = vadd.f32 %v1654, %v1767
        %v1822 = vadd.f32 %v1655, %v1772
        %v1823 = vadd.f32 %v1656, %v1775
        %v1824 = vadd.f32 %v1657, %v1780
        %v1825 = vadd.f32 %v1658, %v1783
        %v1826 = vadd.f32 %v1659, %v1788
        %v1827 = vadd.f32 %v1660, %v1791
        %v1828 = vadd.f32 %v1661, %v1796
        %v1829 = vadd.f32 %v1662, %v1799
        %v1830 = vadd.f32 %v1663, %v1804
        %v1831 = vadd.f32 %v1664, %v1807
        %v1832 = vadd.f32 %v1665, %v1812
        %v1833 = vadd.f32 %v1666, %v1815
        %v1834 = vld [vmem:[%s1332 + $0x3] sm:$0xff]
        %v1835 = vld [vmem:[%s1332 + $0xb] sm:$0xff]
        %v1836 = vld [vmem:[%s1332 + $0x1b] sm:$0xff]
        %v1837 = vld [vmem:[%s1332 + $0x23] sm:$0xff]
        %v1838 = vld [vmem:[%s1332 + $0x33] sm:$0xff]
        %v1839 = vld [vmem:[%s1332 + $0x3b] sm:$0xff]
        %v1840 = vld [vmem:[%s1332 + $0x4b] sm:$0xff]
        %v1841 = vld [vmem:[%s1332 + $0x53] sm:$0xff]
        %v1842 = vld [vmem:[%s1332 + $0x63] sm:$0xff]
        %v1843 = vld [vmem:[%s1332 + $0x6b] sm:$0xff]
        %v1844 = vld [vmem:[%s1332 + $0x7b] sm:$0xff]
        %v1845 = vld [vmem:[%s1332 + $0x83] sm:$0xff]
        %v1846 = vld [vmem:[%s1332 + $0x93] sm:$0xff]
        %v1847 = vld [vmem:[%s1332 + $0x9b] sm:$0xff]
        %v1848 = vld [vmem:[%s1332 + $0xab] sm:$0xff]
        %v1849 = vld [vmem:[%s1332 + $0xb3] sm:$0xff]
        %v1850 = vpack.c.bf16 %v1835, %v1834
        %v1851 = vpack.c.bf16 %v1837, %v1836
        %v1852 = vpack.c.bf16 %v1839, %v1838
        %v1853 = vpack.c.bf16 %v1841, %v1840
        %v1854 = vpack.c.bf16 %v1843, %v1842
        %v1855 = vpack.c.bf16 %v1845, %v1844
        %v1856 = vpack.c.bf16 %v1847, %v1846
        %v1857 = vpack.c.bf16 %v1849, %v1848
        %s1858 = scalar_lea.vmem %s1, 40
        %v1859 = vld [vmem:[%s1858] sm:$0x7]
        %v1860 = vpack.c.bf16 %v1859, %v1859
        %v1862 = vsel %vm242, %v1850, 0
        %v1865 = vsel %vm242, %v1851, 0
        %v1868 = vsel %vm242, %v1852, 0
        %v1871 = vsel %vm242, %v1853, 0
        %v1874 = vsel %vm242, %v1854, 0
        %v1877 = vsel %vm242, %v1855, 0
        %v1880 = vsel %vm242, %v1856, 0
        %v1883 = vsel %vm242, %v1857, 0
        %v1886 = vand.u32 %v1860, %v270
        %1888 = vmatprep.subr.bf16.mxu0 0
        %1889 = vmatpush1.bf16.msra.mxu0 0
        %1890 = vmatprep.subr.bf16.mxu0 0
        %1891 = vmatpush1.bf16.msra.mxu0 0
        %1892 = vmatprep.subr.bf16.mxu0 0
        %1893 = vmatpush1.bf16.msra.mxu0 0
        %1894 = vmatprep.subr.bf16.mxu0 0
        %1895 = vmatpush1.bf16.msra.mxu0 0
        %1896 = vmatprep.subr.bf16.mxu0 0
        %1897 = vmatpush1.bf16.msra.mxu0 0
        %1898 = vmatprep.subr.bf16.mxu0 0
        %1899 = vmatpush1.bf16.msra.mxu0 0
        %1900 = vmatprep.subr.bf16.mxu0 0
        %1901 = vmatpush1.bf16.msra.mxu0 0
        %1902 = vmatprep.subr.bf16.mxu0 0
        %1903 = vmatpush1.bf16.msra.mxu0 %v1886
        %1904 = vmatprep.subr.bf16.mxu0 0
        %1905 = vmatpush2.bf16.msra.mxu0 0
        %1906 = vmatprep.subr.bf16.mxu0 0
        %1907 = vmatpush2.bf16.msra.mxu0 0
        %1908 = vmatprep.subr.bf16.mxu0 0
        %1909 = vmatpush2.bf16.msra.mxu0 0
        %1910 = vmatprep.subr.bf16.mxu0 0
        %1911 = vmatpush2.bf16.msra.mxu0 0
        %1912 = vmatprep.subr.bf16.mxu0 0
        %1913 = vmatpush2.bf16.msra.mxu0 0
        %1914 = vmatprep.subr.bf16.mxu0 0
        %1915 = vmatpush2.bf16.msra.mxu0 0
        %1916 = vmatprep.subr.bf16.mxu0 0
        %1917 = vmatpush2.bf16.msra.mxu0 0
        %1918 = vmatprep.subr.bf16.mxu0 0
        %1919 = vmatpush2.bf16.msra.mxu0 0
        %1920 = vmatprep.mubr.bf16.mxu0 0
        %1921 = vmatmul.mubr.bf16.gmra.mxu0 %v1862
        %v1922 = vpop.f32.mrf.mxu0
        %v1923 = vadd.f32 0.0, %v1922
        %v1924 = vpop.f32.mrf.mxu0
        %v1925 = vpop.f32.mrf.mxu0
        %v1926 = vadd.f32 0.0, %v1925
        %v1927 = vpop.f32.mrf.mxu0
        %1928 = vmatprep.mubr.bf16.mxu0 0
        %1929 = vmatmul.mubr.bf16.gmra.mxu0 %v1865
        %v1930 = vpop.f32.mrf.mxu0
        %v1931 = vadd.f32 0.0, %v1930
        %v1932 = vpop.f32.mrf.mxu0
        %v1933 = vpop.f32.mrf.mxu0
        %v1934 = vadd.f32 0.0, %v1933
        %v1935 = vpop.f32.mrf.mxu0
        %1936 = vmatprep.mubr.bf16.mxu0 0
        %1937 = vmatmul.mubr.bf16.gmra.mxu0 %v1868
        %v1938 = vpop.f32.mrf.mxu0
        %v1939 = vadd.f32 0.0, %v1938
        %v1940 = vpop.f32.mrf.mxu0
        %v1941 = vpop.f32.mrf.mxu0
        %v1942 = vadd.f32 0.0, %v1941
        %v1943 = vpop.f32.mrf.mxu0
        %1944 = vmatprep.mubr.bf16.mxu0 0
        %1945 = vmatmul.mubr.bf16.gmra.mxu0 %v1871
        %v1946 = vpop.f32.mrf.mxu0
        %v1947 = vadd.f32 0.0, %v1946
        %v1948 = vpop.f32.mrf.mxu0
        %v1949 = vpop.f32.mrf.mxu0
        %v1950 = vadd.f32 0.0, %v1949
        %v1951 = vpop.f32.mrf.mxu0
        %1952 = vmatprep.mubr.bf16.mxu0 0
        %1953 = vmatmul.mubr.bf16.gmra.mxu0 %v1874
        %v1954 = vpop.f32.mrf.mxu0
        %v1955 = vadd.f32 0.0, %v1954
        %v1956 = vpop.f32.mrf.mxu0
        %v1957 = vpop.f32.mrf.mxu0
        %v1958 = vadd.f32 0.0, %v1957
        %v1959 = vpop.f32.mrf.mxu0
        %1960 = vmatprep.mubr.bf16.mxu0 0
        %1961 = vmatmul.mubr.bf16.gmra.mxu0 %v1877
        %v1962 = vpop.f32.mrf.mxu0
        %v1963 = vadd.f32 0.0, %v1962
        %v1964 = vpop.f32.mrf.mxu0
        %v1965 = vpop.f32.mrf.mxu0
        %v1966 = vadd.f32 0.0, %v1965
        %v1967 = vpop.f32.mrf.mxu0
        %1968 = vmatprep.mubr.bf16.mxu0 0
        %1969 = vmatmul.mubr.bf16.gmra.mxu0 %v1880
        %v1970 = vpop.f32.mrf.mxu0
        %v1971 = vadd.f32 0.0, %v1970
        %v1972 = vpop.f32.mrf.mxu0
        %v1973 = vpop.f32.mrf.mxu0
        %v1974 = vadd.f32 0.0, %v1973
        %v1975 = vpop.f32.mrf.mxu0
        %1976 = vmatprep.mubr.bf16.mxu0 0
        %1977 = vmatmul.mubr.bf16.gmra.mxu0 %v1883
        %v1978 = vpop.f32.mrf.mxu0
        %v1979 = vadd.f32 0.0, %v1978
        %v1980 = vpop.f32.mrf.mxu0
        %v1981 = vpop.f32.mrf.mxu0
        %v1982 = vadd.f32 0.0, %v1981
        %v1983 = vpop.f32.mrf.mxu0
        %1984 = vdwg.mxu0
        %v1985 = vadd.f32 %v1818, %v1923
        %v1986 = vadd.f32 %v1819, %v1926
        %v1987 = vadd.f32 %v1820, %v1931
        %v1988 = vadd.f32 %v1821, %v1934
        %v1989 = vadd.f32 %v1822, %v1939
        %v1990 = vadd.f32 %v1823, %v1942
        %v1991 = vadd.f32 %v1824, %v1947
        %v1992 = vadd.f32 %v1825, %v1950
        %v1993 = vadd.f32 %v1826, %v1955
        %v1994 = vadd.f32 %v1827, %v1958
        %v1995 = vadd.f32 %v1828, %v1963
        %v1996 = vadd.f32 %v1829, %v1966
        %v1997 = vadd.f32 %v1830, %v1971
        %v1998 = vadd.f32 %v1831, %v1974
        %v1999 = vadd.f32 %v1832, %v1979
        %v2000 = vadd.f32 %v1833, %v1982
        %v2001 = vld [vmem:[%s1332 + $0x4] sm:$0xff]
        %v2002 = vld [vmem:[%s1332 + $0xc] sm:$0xff]
        %v2003 = vld [vmem:[%s1332 + $0x1c] sm:$0xff]
        %v2004 = vld [vmem:[%s1332 + $0x24] sm:$0xff]
        %v2005 = vld [vmem:[%s1332 + $0x34] sm:$0xff]
        %v2006 = vld [vmem:[%s1332 + $0x3c] sm:$0xff]
        %v2007 = vld [vmem:[%s1332 + $0x4c] sm:$0xff]
        %v2008 = vld [vmem:[%s1332 + $0x54] sm:$0xff]
        %v2009 = vld [vmem:[%s1332 + $0x64] sm:$0xff]
        %v2010 = vld [vmem:[%s1332 + $0x6c] sm:$0xff]
        %v2011 = vld [vmem:[%s1332 + $0x7c] sm:$0xff]
        %v2012 = vld [vmem:[%s1332 + $0x84] sm:$0xff]
        %v2013 = vld [vmem:[%s1332 + $0x94] sm:$0xff]
        %v2014 = vld [vmem:[%s1332 + $0x9c] sm:$0xff]
        %v2015 = vld [vmem:[%s1332 + $0xac] sm:$0xff]
        %v2016 = vld [vmem:[%s1332 + $0xb4] sm:$0xff]
        %v2017 = vpack.c.bf16 %v2002, %v2001
        %v2018 = vpack.c.bf16 %v2004, %v2003
        %v2019 = vpack.c.bf16 %v2006, %v2005
        %v2020 = vpack.c.bf16 %v2008, %v2007
        %v2021 = vpack.c.bf16 %v2010, %v2009
        %v2022 = vpack.c.bf16 %v2012, %v2011
        %v2023 = vpack.c.bf16 %v2014, %v2013
        %v2024 = vpack.c.bf16 %v2016, %v2015
        %s2025 = scalar_lea.vmem %s1, 44
        %v2026 = vld [vmem:[%s2025] sm:$0x7]
        %v2027 = vpack.c.bf16 %v2026, %v2026
        %v2029 = vsel %vm242, %v2017, 0
        %v2032 = vsel %vm242, %v2018, 0
        %v2035 = vsel %vm242, %v2019, 0
        %v2038 = vsel %vm242, %v2020, 0
        %v2041 = vsel %vm242, %v2021, 0
        %v2044 = vsel %vm242, %v2022, 0
        %v2047 = vsel %vm242, %v2023, 0
        %v2050 = vsel %vm242, %v2024, 0
        %v2053 = vand.u32 %v2027, %v270
        %2055 = vmatprep.subr.bf16.mxu0 0
        %2056 = vmatpush1.bf16.msra.mxu0 0
        %2057 = vmatprep.subr.bf16.mxu0 0
        %2058 = vmatpush1.bf16.msra.mxu0 0
        %2059 = vmatprep.subr.bf16.mxu0 0
        %2060 = vmatpush1.bf16.msra.mxu0 0
        %2061 = vmatprep.subr.bf16.mxu0 0
        %2062 = vmatpush1.bf16.msra.mxu0 0
        %2063 = vmatprep.subr.bf16.mxu0 0
        %2064 = vmatpush1.bf16.msra.mxu0 0
        %2065 = vmatprep.subr.bf16.mxu0 0
        %2066 = vmatpush1.bf16.msra.mxu0 0
        %2067 = vmatprep.subr.bf16.mxu0 0
        %2068 = vmatpush1.bf16.msra.mxu0 0
        %2069 = vmatprep.subr.bf16.mxu0 0
        %2070 = vmatpush1.bf16.msra.mxu0 %v2053
        %2071 = vmatprep.subr.bf16.mxu0 0
        %2072 = vmatpush2.bf16.msra.mxu0 0
        %2073 = vmatprep.subr.bf16.mxu0 0
        %2074 = vmatpush2.bf16.msra.mxu0 0
        %2075 = vmatprep.subr.bf16.mxu0 0
        %2076 = vmatpush2.bf16.msra.mxu0 0
        %2077 = vmatprep.subr.bf16.mxu0 0
        %2078 = vmatpush2.bf16.msra.mxu0 0
        %2079 = vmatprep.subr.bf16.mxu0 0
        %2080 = vmatpush2.bf16.msra.mxu0 0
        %2081 = vmatprep.subr.bf16.mxu0 0
        %2082 = vmatpush2.bf16.msra.mxu0 0
        %2083 = vmatprep.subr.bf16.mxu0 0
        %2084 = vmatpush2.bf16.msra.mxu0 0
        %2085 = vmatprep.subr.bf16.mxu0 0
        %2086 = vmatpush2.bf16.msra.mxu0 0
        %2087 = vmatprep.mubr.bf16.mxu0 0
        %2088 = vmatmul.mubr.bf16.gmra.mxu0 %v2029
        %v2089 = vpop.f32.mrf.mxu0
        %v2090 = vadd.f32 0.0, %v2089
        %v2091 = vpop.f32.mrf.mxu0
        %v2092 = vpop.f32.mrf.mxu0
        %v2093 = vadd.f32 0.0, %v2092
        %v2094 = vpop.f32.mrf.mxu0
        %2095 = vmatprep.mubr.bf16.mxu0 0
        %2096 = vmatmul.mubr.bf16.gmra.mxu0 %v2032
        %v2097 = vpop.f32.mrf.mxu0
        %v2098 = vadd.f32 0.0, %v2097
        %v2099 = vpop.f32.mrf.mxu0
        %v2100 = vpop.f32.mrf.mxu0
        %v2101 = vadd.f32 0.0, %v2100
        %v2102 = vpop.f32.mrf.mxu0
        %2103 = vmatprep.mubr.bf16.mxu0 0
        %2104 = vmatmul.mubr.bf16.gmra.mxu0 %v2035
        %v2105 = vpop.f32.mrf.mxu0
        %v2106 = vadd.f32 0.0, %v2105
        %v2107 = vpop.f32.mrf.mxu0
        %v2108 = vpop.f32.mrf.mxu0
        %v2109 = vadd.f32 0.0, %v2108
        %v2110 = vpop.f32.mrf.mxu0
        %2111 = vmatprep.mubr.bf16.mxu0 0
        %2112 = vmatmul.mubr.bf16.gmra.mxu0 %v2038
        %v2113 = vpop.f32.mrf.mxu0
        %v2114 = vadd.f32 0.0, %v2113
        %v2115 = vpop.f32.mrf.mxu0
        %v2116 = vpop.f32.mrf.mxu0
        %v2117 = vadd.f32 0.0, %v2116
        %v2118 = vpop.f32.mrf.mxu0
        %2119 = vmatprep.mubr.bf16.mxu0 0
        %2120 = vmatmul.mubr.bf16.gmra.mxu0 %v2041
        %v2121 = vpop.f32.mrf.mxu0
        %v2122 = vadd.f32 0.0, %v2121
        %v2123 = vpop.f32.mrf.mxu0
        %v2124 = vpop.f32.mrf.mxu0
        %v2125 = vadd.f32 0.0, %v2124
        %v2126 = vpop.f32.mrf.mxu0
        %2127 = vmatprep.mubr.bf16.mxu0 0
        %2128 = vmatmul.mubr.bf16.gmra.mxu0 %v2044
        %v2129 = vpop.f32.mrf.mxu0
        %v2130 = vadd.f32 0.0, %v2129
        %v2131 = vpop.f32.mrf.mxu0
        %v2132 = vpop.f32.mrf.mxu0
        %v2133 = vadd.f32 0.0, %v2132
        %v2134 = vpop.f32.mrf.mxu0
        %2135 = vmatprep.mubr.bf16.mxu0 0
        %2136 = vmatmul.mubr.bf16.gmra.mxu0 %v2047
        %v2137 = vpop.f32.mrf.mxu0
        %v2138 = vadd.f32 0.0, %v2137
        %v2139 = vpop.f32.mrf.mxu0
        %v2140 = vpop.f32.mrf.mxu0
        %v2141 = vadd.f32 0.0, %v2140
        %v2142 = vpop.f32.mrf.mxu0
        %2143 = vmatprep.mubr.bf16.mxu0 0
        %2144 = vmatmul.mubr.bf16.gmra.mxu0 %v2050
        %v2145 = vpop.f32.mrf.mxu0
        %v2146 = vadd.f32 0.0, %v2145
        %v2147 = vpop.f32.mrf.mxu0
        %v2148 = vpop.f32.mrf.mxu0
        %v2149 = vadd.f32 0.0, %v2148
        %v2150 = vpop.f32.mrf.mxu0
        %2151 = vdwg.mxu0
        %v2152 = vadd.f32 %v1985, %v2090
        %v2153 = vadd.f32 %v1986, %v2093
        %v2154 = vadd.f32 %v1987, %v2098
        %v2155 = vadd.f32 %v1988, %v2101
        %v2156 = vadd.f32 %v1989, %v2106
        %v2157 = vadd.f32 %v1990, %v2109
        %v2158 = vadd.f32 %v1991, %v2114
        %v2159 = vadd.f32 %v1992, %v2117
        %v2160 = vadd.f32 %v1993, %v2122
        %v2161 = vadd.f32 %v1994, %v2125
        %v2162 = vadd.f32 %v1995, %v2130
        %v2163 = vadd.f32 %v1996, %v2133
        %v2164 = vadd.f32 %v1997, %v2138
        %v2165 = vadd.f32 %v1998, %v2141
        %v2166 = vadd.f32 %v1999, %v2146
        %v2167 = vadd.f32 %v2000, %v2149
        %v2168 = vld [vmem:[%s1332 + $0x5] sm:$0xff]
        %v2169 = vld [vmem:[%s1332 + $0xd] sm:$0xff]
        %v2170 = vld [vmem:[%s1332 + $0x1d] sm:$0xff]
        %v2171 = vld [vmem:[%s1332 + $0x25] sm:$0xff]
        %v2172 = vld [vmem:[%s1332 + $0x35] sm:$0xff]
        %v2173 = vld [vmem:[%s1332 + $0x3d] sm:$0xff]
        %v2174 = vld [vmem:[%s1332 + $0x4d] sm:$0xff]
        %v2175 = vld [vmem:[%s1332 + $0x55] sm:$0xff]
        %v2176 = vld [vmem:[%s1332 + $0x65] sm:$0xff]
        %v2177 = vld [vmem:[%s1332 + $0x6d] sm:$0xff]
        %v2178 = vld [vmem:[%s1332 + $0x7d] sm:$0xff]
        %v2179 = vld [vmem:[%s1332 + $0x85] sm:$0xff]
        %v2180 = vld [vmem:[%s1332 + $0x95] sm:$0xff]
        %v2181 = vld [vmem:[%s1332 + $0x9d] sm:$0xff]
        %v2182 = vld [vmem:[%s1332 + $0xad] sm:$0xff]
        %v2183 = vld [vmem:[%s1332 + $0xb5] sm:$0xff]
        %v2184 = vpack.c.bf16 %v2169, %v2168
        %v2185 = vpack.c.bf16 %v2171, %v2170
        %v2186 = vpack.c.bf16 %v2173, %v2172
        %v2187 = vpack.c.bf16 %v2175, %v2174
        %v2188 = vpack.c.bf16 %v2177, %v2176
        %v2189 = vpack.c.bf16 %v2179, %v2178
        %v2190 = vpack.c.bf16 %v2181, %v2180
        %v2191 = vpack.c.bf16 %v2183, %v2182
        %s2192 = scalar_lea.vmem %s1, 48
        %v2193 = vld [vmem:[%s2192] sm:$0x7]
        %v2194 = vpack.c.bf16 %v2193, %v2193
        %v2196 = vsel %vm242, %v2184, 0
        %v2199 = vsel %vm242, %v2185, 0
        %v2202 = vsel %vm242, %v2186, 0
        %v2205 = vsel %vm242, %v2187, 0
        %v2208 = vsel %vm242, %v2188, 0
        %v2211 = vsel %vm242, %v2189, 0
        %v2214 = vsel %vm242, %v2190, 0
        %v2217 = vsel %vm242, %v2191, 0
        %v2220 = vand.u32 %v2194, %v270
        %2222 = vmatprep.subr.bf16.mxu0 0
        %2223 = vmatpush1.bf16.msra.mxu0 0
        %2224 = vmatprep.subr.bf16.mxu0 0
        %2225 = vmatpush1.bf16.msra.mxu0 0
        %2226 = vmatprep.subr.bf16.mxu0 0
        %2227 = vmatpush1.bf16.msra.mxu0 0
        %2228 = vmatprep.subr.bf16.mxu0 0
        %2229 = vmatpush1.bf16.msra.mxu0 0
        %2230 = vmatprep.subr.bf16.mxu0 0
        %2231 = vmatpush1.bf16.msra.mxu0 0
        %2232 = vmatprep.subr.bf16.mxu0 0
        %2233 = vmatpush1.bf16.msra.mxu0 0
        %2234 = vmatprep.subr.bf16.mxu0 0
        %2235 = vmatpush1.bf16.msra.mxu0 0
        %2236 = vmatprep.subr.bf16.mxu0 0
        %2237 = vmatpush1.bf16.msra.mxu0 %v2220
        %2238 = vmatprep.subr.bf16.mxu0 0
        %2239 = vmatpush2.bf16.msra.mxu0 0
        %2240 = vmatprep.subr.bf16.mxu0 0
        %2241 = vmatpush2.bf16.msra.mxu0 0
        %2242 = vmatprep.subr.bf16.mxu0 0
        %2243 = vmatpush2.bf16.msra.mxu0 0
        %2244 = vmatprep.subr.bf16.mxu0 0
        %2245 = vmatpush2.bf16.msra.mxu0 0
        %2246 = vmatprep.subr.bf16.mxu0 0
        %2247 = vmatpush2.bf16.msra.mxu0 0
        %2248 = vmatprep.subr.bf16.mxu0 0
        %2249 = vmatpush2.bf16.msra.mxu0 0
        %2250 = vmatprep.subr.bf16.mxu0 0
        %2251 = vmatpush2.bf16.msra.mxu0 0
        %2252 = vmatprep.subr.bf16.mxu0 0
        %2253 = vmatpush2.bf16.msra.mxu0 0
        %2254 = vmatprep.mubr.bf16.mxu0 0
        %2255 = vmatmul.mubr.bf16.gmra.mxu0 %v2196
        %v2256 = vpop.f32.mrf.mxu0
        %v2257 = vadd.f32 0.0, %v2256
        %v2258 = vpop.f32.mrf.mxu0
        %v2259 = vpop.f32.mrf.mxu0
        %v2260 = vadd.f32 0.0, %v2259
        %v2261 = vpop.f32.mrf.mxu0
        %2262 = vmatprep.mubr.bf16.mxu0 0
        %2263 = vmatmul.mubr.bf16.gmra.mxu0 %v2199
        %v2264 = vpop.f32.mrf.mxu0
        %v2265 = vadd.f32 0.0, %v2264
        %v2266 = vpop.f32.mrf.mxu0
        %v2267 = vpop.f32.mrf.mxu0
        %v2268 = vadd.f32 0.0, %v2267
        %v2269 = vpop.f32.mrf.mxu0
        %2270 = vmatprep.mubr.bf16.mxu0 0
        %2271 = vmatmul.mubr.bf16.gmra.mxu0 %v2202
        %v2272 = vpop.f32.mrf.mxu0
        %v2273 = vadd.f32 0.0, %v2272
        %v2274 = vpop.f32.mrf.mxu0
        %v2275 = vpop.f32.mrf.mxu0
        %v2276 = vadd.f32 0.0, %v2275
        %v2277 = vpop.f32.mrf.mxu0
        %2278 = vmatprep.mubr.bf16.mxu0 0
        %2279 = vmatmul.mubr.bf16.gmra.mxu0 %v2205
        %v2280 = vpop.f32.mrf.mxu0
        %v2281 = vadd.f32 0.0, %v2280
        %v2282 = vpop.f32.mrf.mxu0
        %v2283 = vpop.f32.mrf.mxu0
        %v2284 = vadd.f32 0.0, %v2283
        %v2285 = vpop.f32.mrf.mxu0
        %2286 = vmatprep.mubr.bf16.mxu0 0
        %2287 = vmatmul.mubr.bf16.gmra.mxu0 %v2208
        %v2288 = vpop.f32.mrf.mxu0
        %v2289 = vadd.f32 0.0, %v2288
        %v2290 = vpop.f32.mrf.mxu0
        %v2291 = vpop.f32.mrf.mxu0
        %v2292 = vadd.f32 0.0, %v2291
        %v2293 = vpop.f32.mrf.mxu0
        %2294 = vmatprep.mubr.bf16.mxu0 0
        %2295 = vmatmul.mubr.bf16.gmra.mxu0 %v2211
        %v2296 = vpop.f32.mrf.mxu0
        %v2297 = vadd.f32 0.0, %v2296
        %v2298 = vpop.f32.mrf.mxu0
        %v2299 = vpop.f32.mrf.mxu0
        %v2300 = vadd.f32 0.0, %v2299
        %v2301 = vpop.f32.mrf.mxu0
        %2302 = vmatprep.mubr.bf16.mxu0 0
        %2303 = vmatmul.mubr.bf16.gmra.mxu0 %v2214
        %v2304 = vpop.f32.mrf.mxu0
        %v2305 = vadd.f32 0.0, %v2304
        %v2306 = vpop.f32.mrf.mxu0
        %v2307 = vpop.f32.mrf.mxu0
        %v2308 = vadd.f32 0.0, %v2307
        %v2309 = vpop.f32.mrf.mxu0
        %2310 = vmatprep.mubr.bf16.mxu0 0
        %2311 = vmatmul.mubr.bf16.gmra.mxu0 %v2217
        %v2312 = vpop.f32.mrf.mxu0
        %v2313 = vadd.f32 0.0, %v2312
        %v2314 = vpop.f32.mrf.mxu0
        %v2315 = vpop.f32.mrf.mxu0
        %v2316 = vadd.f32 0.0, %v2315
        %v2317 = vpop.f32.mrf.mxu0
        %2318 = vdwg.mxu0
        %v2319 = vadd.f32 %v2152, %v2257
        %v2320 = vadd.f32 %v2153, %v2260
        %v2321 = vadd.f32 %v2154, %v2265
        %v2322 = vadd.f32 %v2155, %v2268
        %v2323 = vadd.f32 %v2156, %v2273
        %v2324 = vadd.f32 %v2157, %v2276
        %v2325 = vadd.f32 %v2158, %v2281
        %v2326 = vadd.f32 %v2159, %v2284
        %v2327 = vadd.f32 %v2160, %v2289
        %v2328 = vadd.f32 %v2161, %v2292
        %v2329 = vadd.f32 %v2162, %v2297
        %v2330 = vadd.f32 %v2163, %v2300
        %v2331 = vadd.f32 %v2164, %v2305
        %v2332 = vadd.f32 %v2165, %v2308
        %v2333 = vadd.f32 %v2166, %v2313
        %v2334 = vadd.f32 %v2167, %v2316
        %v2335 = vld [vmem:[%s1332 + $0x6] sm:$0xff]
        %v2336 = vld [vmem:[%s1332 + $0xe] sm:$0xff]
        %v2337 = vld [vmem:[%s1332 + $0x1e] sm:$0xff]
        %v2338 = vld [vmem:[%s1332 + $0x26] sm:$0xff]
        %v2339 = vld [vmem:[%s1332 + $0x36] sm:$0xff]
        %v2340 = vld [vmem:[%s1332 + $0x3e] sm:$0xff]
        %v2341 = vld [vmem:[%s1332 + $0x4e] sm:$0xff]
        %v2342 = vld [vmem:[%s1332 + $0x56] sm:$0xff]
        %v2343 = vld [vmem:[%s1332 + $0x66] sm:$0xff]
        %v2344 = vld [vmem:[%s1332 + $0x6e] sm:$0xff]
        %v2345 = vld [vmem:[%s1332 + $0x7e] sm:$0xff]
        %v2346 = vld [vmem:[%s1332 + $0x86] sm:$0xff]
        %v2347 = vld [vmem:[%s1332 + $0x96] sm:$0xff]
        %v2348 = vld [vmem:[%s1332 + $0x9e] sm:$0xff]
        %v2349 = vld [vmem:[%s1332 + $0xae] sm:$0xff]
        %v2350 = vld [vmem:[%s1332 + $0xb6] sm:$0xff]
        %v2351 = vpack.c.bf16 %v2336, %v2335
        %v2352 = vpack.c.bf16 %v2338, %v2337
        %v2353 = vpack.c.bf16 %v2340, %v2339
        %v2354 = vpack.c.bf16 %v2342, %v2341
        %v2355 = vpack.c.bf16 %v2344, %v2343
        %v2356 = vpack.c.bf16 %v2346, %v2345
        %v2357 = vpack.c.bf16 %v2348, %v2347
        %v2358 = vpack.c.bf16 %v2350, %v2349
        %s2359 = scalar_lea.vmem %s1, 52
        %v2360 = vld [vmem:[%s2359] sm:$0x7]
        %v2361 = vpack.c.bf16 %v2360, %v2360
        %v2363 = vsel %vm242, %v2351, 0
        %v2366 = vsel %vm242, %v2352, 0
        %v2369 = vsel %vm242, %v2353, 0
        %v2372 = vsel %vm242, %v2354, 0
        %v2375 = vsel %vm242, %v2355, 0
        %v2378 = vsel %vm242, %v2356, 0
        %v2381 = vsel %vm242, %v2357, 0
        %v2384 = vsel %vm242, %v2358, 0
        %v2387 = vand.u32 %v2361, %v270
        %2389 = vmatprep.subr.bf16.mxu0 0
        %2390 = vmatpush1.bf16.msra.mxu0 0
        %2391 = vmatprep.subr.bf16.mxu0 0
        %2392 = vmatpush1.bf16.msra.mxu0 0
        %2393 = vmatprep.subr.bf16.mxu0 0
        %2394 = vmatpush1.bf16.msra.mxu0 0
        %2395 = vmatprep.subr.bf16.mxu0 0
        %2396 = vmatpush1.bf16.msra.mxu0 0
        %2397 = vmatprep.subr.bf16.mxu0 0
        %2398 = vmatpush1.bf16.msra.mxu0 0
        %2399 = vmatprep.subr.bf16.mxu0 0
        %2400 = vmatpush1.bf16.msra.mxu0 0
        %2401 = vmatprep.subr.bf16.mxu0 0
        %2402 = vmatpush1.bf16.msra.mxu0 0
        %2403 = vmatprep.subr.bf16.mxu0 0
        %2404 = vmatpush1.bf16.msra.mxu0 %v2387
        %2405 = vmatprep.subr.bf16.mxu0 0
        %2406 = vmatpush2.bf16.msra.mxu0 0
        %2407 = vmatprep.subr.bf16.mxu0 0
        %2408 = vmatpush2.bf16.msra.mxu0 0
        %2409 = vmatprep.subr.bf16.mxu0 0
        %2410 = vmatpush2.bf16.msra.mxu0 0
        %2411 = vmatprep.subr.bf16.mxu0 0
        %2412 = vmatpush2.bf16.msra.mxu0 0
        %2413 = vmatprep.subr.bf16.mxu0 0
        %2414 = vmatpush2.bf16.msra.mxu0 0
        %2415 = vmatprep.subr.bf16.mxu0 0
        %2416 = vmatpush2.bf16.msra.mxu0 0
        %2417 = vmatprep.subr.bf16.mxu0 0
        %2418 = vmatpush2.bf16.msra.mxu0 0
        %2419 = vmatprep.subr.bf16.mxu0 0
        %2420 = vmatpush2.bf16.msra.mxu0 0
        %2421 = vmatprep.mubr.bf16.mxu0 0
        %2422 = vmatmul.mubr.bf16.gmra.mxu0 %v2363
        %v2423 = vpop.f32.mrf.mxu0
        %v2424 = vadd.f32 0.0, %v2423
        %v2425 = vpop.f32.mrf.mxu0
        %v2426 = vpop.f32.mrf.mxu0
        %v2427 = vadd.f32 0.0, %v2426
        %v2428 = vpop.f32.mrf.mxu0
        %2429 = vmatprep.mubr.bf16.mxu0 0
        %2430 = vmatmul.mubr.bf16.gmra.mxu0 %v2366
        %v2431 = vpop.f32.mrf.mxu0
        %v2432 = vadd.f32 0.0, %v2431
        %v2433 = vpop.f32.mrf.mxu0
        %v2434 = vpop.f32.mrf.mxu0
        %v2435 = vadd.f32 0.0, %v2434
        %v2436 = vpop.f32.mrf.mxu0
        %2437 = vmatprep.mubr.bf16.mxu0 0
        %2438 = vmatmul.mubr.bf16.gmra.mxu0 %v2369
        %v2439 = vpop.f32.mrf.mxu0
        %v2440 = vadd.f32 0.0, %v2439
        %v2441 = vpop.f32.mrf.mxu0
        %v2442 = vpop.f32.mrf.mxu0
        %v2443 = vadd.f32 0.0, %v2442
        %v2444 = vpop.f32.mrf.mxu0
        %2445 = vmatprep.mubr.bf16.mxu0 0
        %2446 = vmatmul.mubr.bf16.gmra.mxu0 %v2372
        %v2447 = vpop.f32.mrf.mxu0
        %v2448 = vadd.f32 0.0, %v2447
        %v2449 = vpop.f32.mrf.mxu0
        %v2450 = vpop.f32.mrf.mxu0
        %v2451 = vadd.f32 0.0, %v2450
        %v2452 = vpop.f32.mrf.mxu0
        %2453 = vmatprep.mubr.bf16.mxu0 0
        %2454 = vmatmul.mubr.bf16.gmra.mxu0 %v2375
        %v2455 = vpop.f32.mrf.mxu0
        %v2456 = vadd.f32 0.0, %v2455
        %v2457 = vpop.f32.mrf.mxu0
        %v2458 = vpop.f32.mrf.mxu0
        %v2459 = vadd.f32 0.0, %v2458
        %v2460 = vpop.f32.mrf.mxu0
        %2461 = vmatprep.mubr.bf16.mxu0 0
        %2462 = vmatmul.mubr.bf16.gmra.mxu0 %v2378
        %v2463 = vpop.f32.mrf.mxu0
        %v2464 = vadd.f32 0.0, %v2463
        %v2465 = vpop.f32.mrf.mxu0
        %v2466 = vpop.f32.mrf.mxu0
        %v2467 = vadd.f32 0.0, %v2466
        %v2468 = vpop.f32.mrf.mxu0
        %2469 = vmatprep.mubr.bf16.mxu0 0
        %2470 = vmatmul.mubr.bf16.gmra.mxu0 %v2381
        %v2471 = vpop.f32.mrf.mxu0
        %v2472 = vadd.f32 0.0, %v2471
        %v2473 = vpop.f32.mrf.mxu0
        %v2474 = vpop.f32.mrf.mxu0
        %v2475 = vadd.f32 0.0, %v2474
        %v2476 = vpop.f32.mrf.mxu0
        %2477 = vmatprep.mubr.bf16.mxu0 0
        %2478 = vmatmul.mubr.bf16.gmra.mxu0 %v2384
        %v2479 = vpop.f32.mrf.mxu0
        %v2480 = vadd.f32 0.0, %v2479
        %v2481 = vpop.f32.mrf.mxu0
        %v2482 = vpop.f32.mrf.mxu0
        %v2483 = vadd.f32 0.0, %v2482
        %v2484 = vpop.f32.mrf.mxu0
        %2485 = vdwg.mxu0
        %v2486 = vadd.f32 %v2319, %v2424
        %v2487 = vadd.f32 %v2320, %v2427
        %v2488 = vadd.f32 %v2321, %v2432
        %v2489 = vadd.f32 %v2322, %v2435
        %v2490 = vadd.f32 %v2323, %v2440
        %v2491 = vadd.f32 %v2324, %v2443
        %v2492 = vadd.f32 %v2325, %v2448
        %v2493 = vadd.f32 %v2326, %v2451
        %v2494 = vadd.f32 %v2327, %v2456
        %v2495 = vadd.f32 %v2328, %v2459
        %v2496 = vadd.f32 %v2329, %v2464
        %v2497 = vadd.f32 %v2330, %v2467
        %v2498 = vadd.f32 %v2331, %v2472
        %v2499 = vadd.f32 %v2332, %v2475
        %v2500 = vadd.f32 %v2333, %v2480
        %v2501 = vadd.f32 %v2334, %v2483
        %s2502 = sadd.s32 %s185, 2
        %s2503 = smul.u32 %s2502, 24
        %s2504 = scalar_lea.vmem %s182, %s2503
        %v2505 = vld [vmem:[%s2504] sm:$0xff]
        %v2506 = vld [vmem:[%s2504 + $0x8] sm:$0xff]
        %v2507 = vld [vmem:[%s2504 + $0x18] sm:$0xff]
        %v2508 = vld [vmem:[%s2504 + $0x20] sm:$0xff]
        %v2509 = vld [vmem:[%s2504 + $0x30] sm:$0xff]
        %v2510 = vld [vmem:[%s2504 + $0x38] sm:$0xff]
        %v2511 = vld [vmem:[%s2504 + $0x48] sm:$0xff]
        %v2512 = vld [vmem:[%s2504 + $0x50] sm:$0xff]
        %v2513 = vld [vmem:[%s2504 + $0x60] sm:$0xff]
        %v2514 = vld [vmem:[%s2504 + $0x68] sm:$0xff]
        %v2515 = vld [vmem:[%s2504 + $0x78] sm:$0xff]
        %v2516 = vld [vmem:[%s2504 + $0x80] sm:$0xff]
        %v2517 = vld [vmem:[%s2504 + $0x90] sm:$0xff]
        %v2518 = vld [vmem:[%s2504 + $0x98] sm:$0xff]
        %v2519 = vld [vmem:[%s2504 + $0xa8] sm:$0xff]
        %v2520 = vld [vmem:[%s2504 + $0xb0] sm:$0xff]
        %v2521 = vpack.c.bf16 %v2506, %v2505
        %v2522 = vpack.c.bf16 %v2508, %v2507
        %v2523 = vpack.c.bf16 %v2510, %v2509
        %v2524 = vpack.c.bf16 %v2512, %v2511
        %v2525 = vpack.c.bf16 %v2514, %v2513
        %v2526 = vpack.c.bf16 %v2516, %v2515
        %v2527 = vpack.c.bf16 %v2518, %v2517
        %v2528 = vpack.c.bf16 %v2520, %v2519
        %s2529 = scalar_lea.vmem %s1, 56
        %v2530 = vld [vmem:[%s2529] sm:$0x7]
        %v2531 = vpack.c.bf16 %v2530, %v2530
        %v2533 = vsel %vm242, %v2521, 0
        %v2536 = vsel %vm242, %v2522, 0
        %v2539 = vsel %vm242, %v2523, 0
        %v2542 = vsel %vm242, %v2524, 0
        %v2545 = vsel %vm242, %v2525, 0
        %v2548 = vsel %vm242, %v2526, 0
        %v2551 = vsel %vm242, %v2527, 0
        %v2554 = vsel %vm242, %v2528, 0
        %v2557 = vand.u32 %v2531, %v270
        %2559 = vmatprep.subr.bf16.mxu0 0
        %2560 = vmatpush1.bf16.msra.mxu0 0
        %2561 = vmatprep.subr.bf16.mxu0 0
        %2562 = vmatpush1.bf16.msra.mxu0 0
        %2563 = vmatprep.subr.bf16.mxu0 0
        %2564 = vmatpush1.bf16.msra.mxu0 0
        %2565 = vmatprep.subr.bf16.mxu0 0
        %2566 = vmatpush1.bf16.msra.mxu0 0
        %2567 = vmatprep.subr.bf16.mxu0 0
        %2568 = vmatpush1.bf16.msra.mxu0 0
        %2569 = vmatprep.subr.bf16.mxu0 0
        %2570 = vmatpush1.bf16.msra.mxu0 0
        %2571 = vmatprep.subr.bf16.mxu0 0
        %2572 = vmatpush1.bf16.msra.mxu0 0
        %2573 = vmatprep.subr.bf16.mxu0 0
        %2574 = vmatpush1.bf16.msra.mxu0 %v2557
        %2575 = vmatprep.subr.bf16.mxu0 0
        %2576 = vmatpush2.bf16.msra.mxu0 0
        %2577 = vmatprep.subr.bf16.mxu0 0
        %2578 = vmatpush2.bf16.msra.mxu0 0
        %2579 = vmatprep.subr.bf16.mxu0 0
        %2580 = vmatpush2.bf16.msra.mxu0 0
        %2581 = vmatprep.subr.bf16.mxu0 0
        %2582 = vmatpush2.bf16.msra.mxu0 0
        %2583 = vmatprep.subr.bf16.mxu0 0
        %2584 = vmatpush2.bf16.msra.mxu0 0
        %2585 = vmatprep.subr.bf16.mxu0 0
        %2586 = vmatpush2.bf16.msra.mxu0 0
        %2587 = vmatprep.subr.bf16.mxu0 0
        %2588 = vmatpush2.bf16.msra.mxu0 0
        %2589 = vmatprep.subr.bf16.mxu0 0
        %2590 = vmatpush2.bf16.msra.mxu0 0
        %2591 = vmatprep.mubr.bf16.mxu0 0
        %2592 = vmatmul.mubr.bf16.gmra.mxu0 %v2533
        %v2593 = vpop.f32.mrf.mxu0
        %v2594 = vadd.f32 0.0, %v2593
        %v2595 = vpop.f32.mrf.mxu0
        %v2596 = vpop.f32.mrf.mxu0
        %v2597 = vadd.f32 0.0, %v2596
        %v2598 = vpop.f32.mrf.mxu0
        %2599 = vmatprep.mubr.bf16.mxu0 0
        %2600 = vmatmul.mubr.bf16.gmra.mxu0 %v2536
        %v2601 = vpop.f32.mrf.mxu0
        %v2602 = vadd.f32 0.0, %v2601
        %v2603 = vpop.f32.mrf.mxu0
        %v2604 = vpop.f32.mrf.mxu0
        %v2605 = vadd.f32 0.0, %v2604
        %v2606 = vpop.f32.mrf.mxu0
        %2607 = vmatprep.mubr.bf16.mxu0 0
        %2608 = vmatmul.mubr.bf16.gmra.mxu0 %v2539
        %v2609 = vpop.f32.mrf.mxu0
        %v2610 = vadd.f32 0.0, %v2609
        %v2611 = vpop.f32.mrf.mxu0
        %v2612 = vpop.f32.mrf.mxu0
        %v2613 = vadd.f32 0.0, %v2612
        %v2614 = vpop.f32.mrf.mxu0
        %2615 = vmatprep.mubr.bf16.mxu0 0
        %2616 = vmatmul.mubr.bf16.gmra.mxu0 %v2542
        %v2617 = vpop.f32.mrf.mxu0
        %v2618 = vadd.f32 0.0, %v2617
        %v2619 = vpop.f32.mrf.mxu0
        %v2620 = vpop.f32.mrf.mxu0
        %v2621 = vadd.f32 0.0, %v2620
        %v2622 = vpop.f32.mrf.mxu0
        %2623 = vmatprep.mubr.bf16.mxu0 0
        %2624 = vmatmul.mubr.bf16.gmra.mxu0 %v2545
        %v2625 = vpop.f32.mrf.mxu0
        %v2626 = vadd.f32 0.0, %v2625
        %v2627 = vpop.f32.mrf.mxu0
        %v2628 = vpop.f32.mrf.mxu0
        %v2629 = vadd.f32 0.0, %v2628
        %v2630 = vpop.f32.mrf.mxu0
        %2631 = vmatprep.mubr.bf16.mxu0 0
        %2632 = vmatmul.mubr.bf16.gmra.mxu0 %v2548
        %v2633 = vpop.f32.mrf.mxu0
        %v2634 = vadd.f32 0.0, %v2633
        %v2635 = vpop.f32.mrf.mxu0
        %v2636 = vpop.f32.mrf.mxu0
        %v2637 = vadd.f32 0.0, %v2636
        %v2638 = vpop.f32.mrf.mxu0
        %2639 = vmatprep.mubr.bf16.mxu0 0
        %2640 = vmatmul.mubr.bf16.gmra.mxu0 %v2551
        %v2641 = vpop.f32.mrf.mxu0
        %v2642 = vadd.f32 0.0, %v2641
        %v2643 = vpop.f32.mrf.mxu0
        %v2644 = vpop.f32.mrf.mxu0
        %v2645 = vadd.f32 0.0, %v2644
        %v2646 = vpop.f32.mrf.mxu0
        %2647 = vmatprep.mubr.bf16.mxu0 0
        %2648 = vmatmul.mubr.bf16.gmra.mxu0 %v2554
        %v2649 = vpop.f32.mrf.mxu0
        %v2650 = vadd.f32 0.0, %v2649
        %v2651 = vpop.f32.mrf.mxu0
        %v2652 = vpop.f32.mrf.mxu0
        %v2653 = vadd.f32 0.0, %v2652
        %v2654 = vpop.f32.mrf.mxu0
        %2655 = vdwg.mxu0
        %v2656 = vadd.f32 %v2486, %v2594
        %v2657 = vadd.f32 %v2487, %v2597
        %v2658 = vadd.f32 %v2488, %v2602
        %v2659 = vadd.f32 %v2489, %v2605
        %v2660 = vadd.f32 %v2490, %v2610
        %v2661 = vadd.f32 %v2491, %v2613
        %v2662 = vadd.f32 %v2492, %v2618
        %v2663 = vadd.f32 %v2493, %v2621
        %v2664 = vadd.f32 %v2494, %v2626
        %v2665 = vadd.f32 %v2495, %v2629
        %v2666 = vadd.f32 %v2496, %v2634
        %v2667 = vadd.f32 %v2497, %v2637
        %v2668 = vadd.f32 %v2498, %v2642
        %v2669 = vadd.f32 %v2499, %v2645
        %v2670 = vadd.f32 %v2500, %v2650
        %v2671 = vadd.f32 %v2501, %v2653
        %v2672 = vld [vmem:[%s2504 + $0x1] sm:$0xff]
        %v2673 = vld [vmem:[%s2504 + $0x9] sm:$0xff]
        %v2674 = vld [vmem:[%s2504 + $0x19] sm:$0xff]
        %v2675 = vld [vmem:[%s2504 + $0x21] sm:$0xff]
        %v2676 = vld [vmem:[%s2504 + $0x31] sm:$0xff]
        %v2677 = vld [vmem:[%s2504 + $0x39] sm:$0xff]
        %v2678 = vld [vmem:[%s2504 + $0x49] sm:$0xff]
        %v2679 = vld [vmem:[%s2504 + $0x51] sm:$0xff]
        %v2680 = vld [vmem:[%s2504 + $0x61] sm:$0xff]
        %v2681 = vld [vmem:[%s2504 + $0x69] sm:$0xff]
        %v2682 = vld [vmem:[%s2504 + $0x79] sm:$0xff]
        %v2683 = vld [vmem:[%s2504 + $0x81] sm:$0xff]
        %v2684 = vld [vmem:[%s2504 + $0x91] sm:$0xff]
        %v2685 = vld [vmem:[%s2504 + $0x99] sm:$0xff]
        %v2686 = vld [vmem:[%s2504 + $0xa9] sm:$0xff]
        %v2687 = vld [vmem:[%s2504 + $0xb1] sm:$0xff]
        %v2688 = vpack.c.bf16 %v2673, %v2672
        %v2689 = vpack.c.bf16 %v2675, %v2674
        %v2690 = vpack.c.bf16 %v2677, %v2676
        %v2691 = vpack.c.bf16 %v2679, %v2678
        %v2692 = vpack.c.bf16 %v2681, %v2680
        %v2693 = vpack.c.bf16 %v2683, %v2682
        %v2694 = vpack.c.bf16 %v2685, %v2684
        %v2695 = vpack.c.bf16 %v2687, %v2686
        %s2696 = scalar_lea.vmem %s1, 60
        %v2697 = vld [vmem:[%s2696] sm:$0x7]
        %v2698 = vpack.c.bf16 %v2697, %v2697
        %v2700 = vsel %vm242, %v2688, 0
        %v2703 = vsel %vm242, %v2689, 0
        %v2706 = vsel %vm242, %v2690, 0
        %v2709 = vsel %vm242, %v2691, 0
        %v2712 = vsel %vm242, %v2692, 0
        %v2715 = vsel %vm242, %v2693, 0
        %v2718 = vsel %vm242, %v2694, 0
        %v2721 = vsel %vm242, %v2695, 0
        %v2724 = vand.u32 %v2698, %v270
        %2726 = vmatprep.subr.bf16.mxu0 0
        %2727 = vmatpush1.bf16.msra.mxu0 0
        %2728 = vmatprep.subr.bf16.mxu0 0
        %2729 = vmatpush1.bf16.msra.mxu0 0
        %2730 = vmatprep.subr.bf16.mxu0 0
        %2731 = vmatpush1.bf16.msra.mxu0 0
        %2732 = vmatprep.subr.bf16.mxu0 0
        %2733 = vmatpush1.bf16.msra.mxu0 0
        %2734 = vmatprep.subr.bf16.mxu0 0
        %2735 = vmatpush1.bf16.msra.mxu0 0
        %2736 = vmatprep.subr.bf16.mxu0 0
        %2737 = vmatpush1.bf16.msra.mxu0 0
        %2738 = vmatprep.subr.bf16.mxu0 0
        %2739 = vmatpush1.bf16.msra.mxu0 0
        %2740 = vmatprep.subr.bf16.mxu0 0
        %2741 = vmatpush1.bf16.msra.mxu0 %v2724
        %2742 = vmatprep.subr.bf16.mxu0 0
        %2743 = vmatpush2.bf16.msra.mxu0 0
        %2744 = vmatprep.subr.bf16.mxu0 0
        %2745 = vmatpush2.bf16.msra.mxu0 0
        %2746 = vmatprep.subr.bf16.mxu0 0
        %2747 = vmatpush2.bf16.msra.mxu0 0
        %2748 = vmatprep.subr.bf16.mxu0 0
        %2749 = vmatpush2.bf16.msra.mxu0 0
        %2750 = vmatprep.subr.bf16.mxu0 0
        %2751 = vmatpush2.bf16.msra.mxu0 0
        %2752 = vmatprep.subr.bf16.mxu0 0
        %2753 = vmatpush2.bf16.msra.mxu0 0
        %2754 = vmatprep.subr.bf16.mxu0 0
        %2755 = vmatpush2.bf16.msra.mxu0 0
        %2756 = vmatprep.subr.bf16.mxu0 0
        %2757 = vmatpush2.bf16.msra.mxu0 0
        %2758 = vmatprep.mubr.bf16.mxu0 0
        %2759 = vmatmul.mubr.bf16.gmra.mxu0 %v2700
        %v2760 = vpop.f32.mrf.mxu0
        %v2761 = vadd.f32 0.0, %v2760
        %v2762 = vpop.f32.mrf.mxu0
        %v2763 = vpop.f32.mrf.mxu0
        %v2764 = vadd.f32 0.0, %v2763
        %v2765 = vpop.f32.mrf.mxu0
        %2766 = vmatprep.mubr.bf16.mxu0 0
        %2767 = vmatmul.mubr.bf16.gmra.mxu0 %v2703
        %v2768 = vpop.f32.mrf.mxu0
        %v2769 = vadd.f32 0.0, %v2768
        %v2770 = vpop.f32.mrf.mxu0
        %v2771 = vpop.f32.mrf.mxu0
        %v2772 = vadd.f32 0.0, %v2771
        %v2773 = vpop.f32.mrf.mxu0
        %2774 = vmatprep.mubr.bf16.mxu0 0
        %2775 = vmatmul.mubr.bf16.gmra.mxu0 %v2706
        %v2776 = vpop.f32.mrf.mxu0
        %v2777 = vadd.f32 0.0, %v2776
        %v2778 = vpop.f32.mrf.mxu0
        %v2779 = vpop.f32.mrf.mxu0
        %v2780 = vadd.f32 0.0, %v2779
        %v2781 = vpop.f32.mrf.mxu0
        %2782 = vmatprep.mubr.bf16.mxu0 0
        %2783 = vmatmul.mubr.bf16.gmra.mxu0 %v2709
        %v2784 = vpop.f32.mrf.mxu0
        %v2785 = vadd.f32 0.0, %v2784
        %v2786 = vpop.f32.mrf.mxu0
        %v2787 = vpop.f32.mrf.mxu0
        %v2788 = vadd.f32 0.0, %v2787
        %v2789 = vpop.f32.mrf.mxu0
        %2790 = vmatprep.mubr.bf16.mxu0 0
        %2791 = vmatmul.mubr.bf16.gmra.mxu0 %v2712
        %v2792 = vpop.f32.mrf.mxu0
        %v2793 = vadd.f32 0.0, %v2792
        %v2794 = vpop.f32.mrf.mxu0
        %v2795 = vpop.f32.mrf.mxu0
        %v2796 = vadd.f32 0.0, %v2795
        %v2797 = vpop.f32.mrf.mxu0
        %2798 = vmatprep.mubr.bf16.mxu0 0
        %2799 = vmatmul.mubr.bf16.gmra.mxu0 %v2715
        %v2800 = vpop.f32.mrf.mxu0
        %v2801 = vadd.f32 0.0, %v2800
        %v2802 = vpop.f32.mrf.mxu0
        %v2803 = vpop.f32.mrf.mxu0
        %v2804 = vadd.f32 0.0, %v2803
        %v2805 = vpop.f32.mrf.mxu0
        %2806 = vmatprep.mubr.bf16.mxu0 0
        %2807 = vmatmul.mubr.bf16.gmra.mxu0 %v2718
        %v2808 = vpop.f32.mrf.mxu0
        %v2809 = vadd.f32 0.0, %v2808
        %v2810 = vpop.f32.mrf.mxu0
        %v2811 = vpop.f32.mrf.mxu0
        %v2812 = vadd.f32 0.0, %v2811
        %v2813 = vpop.f32.mrf.mxu0
        %2814 = vmatprep.mubr.bf16.mxu0 0
        %2815 = vmatmul.mubr.bf16.gmra.mxu0 %v2721
        %v2816 = vpop.f32.mrf.mxu0
        %v2817 = vadd.f32 0.0, %v2816
        %v2818 = vpop.f32.mrf.mxu0
        %v2819 = vpop.f32.mrf.mxu0
        %v2820 = vadd.f32 0.0, %v2819
        %v2821 = vpop.f32.mrf.mxu0
        %2822 = vdwg.mxu0
        %v2823 = vadd.f32 %v2656, %v2761
        %v2824 = vadd.f32 %v2657, %v2764
        %v2825 = vadd.f32 %v2658, %v2769
        %v2826 = vadd.f32 %v2659, %v2772
        %v2827 = vadd.f32 %v2660, %v2777
        %v2828 = vadd.f32 %v2661, %v2780
        %v2829 = vadd.f32 %v2662, %v2785
        %v2830 = vadd.f32 %v2663, %v2788
        %v2831 = vadd.f32 %v2664, %v2793
        %v2832 = vadd.f32 %v2665, %v2796
        %v2833 = vadd.f32 %v2666, %v2801
        %v2834 = vadd.f32 %v2667, %v2804
        %v2835 = vadd.f32 %v2668, %v2809
        %v2836 = vadd.f32 %v2669, %v2812
        %v2837 = vadd.f32 %v2670, %v2817
        %v2838 = vadd.f32 %v2671, %v2820
        %v2839 = vld [vmem:[%s2504 + $0x2] sm:$0xff]
        %v2840 = vld [vmem:[%s2504 + $0xa] sm:$0xff]
        %v2841 = vld [vmem:[%s2504 + $0x1a] sm:$0xff]
        %v2842 = vld [vmem:[%s2504 + $0x22] sm:$0xff]
        %v2843 = vld [vmem:[%s2504 + $0x32] sm:$0xff]
        %v2844 = vld [vmem:[%s2504 + $0x3a] sm:$0xff]
        %v2845 = vld [vmem:[%s2504 + $0x4a] sm:$0xff]
        %v2846 = vld [vmem:[%s2504 + $0x52] sm:$0xff]
        %v2847 = vld [vmem:[%s2504 + $0x62] sm:$0xff]
        %v2848 = vld [vmem:[%s2504 + $0x6a] sm:$0xff]
        %v2849 = vld [vmem:[%s2504 + $0x7a] sm:$0xff]
        %v2850 = vld [vmem:[%s2504 + $0x82] sm:$0xff]
        %v2851 = vld [vmem:[%s2504 + $0x92] sm:$0xff]
        %v2852 = vld [vmem:[%s2504 + $0x9a] sm:$0xff]
        %v2853 = vld [vmem:[%s2504 + $0xaa] sm:$0xff]
        %v2854 = vld [vmem:[%s2504 + $0xb2] sm:$0xff]
        %v2855 = vpack.c.bf16 %v2840, %v2839
        %v2856 = vpack.c.bf16 %v2842, %v2841
        %v2857 = vpack.c.bf16 %v2844, %v2843
        %v2858 = vpack.c.bf16 %v2846, %v2845
        %v2859 = vpack.c.bf16 %v2848, %v2847
        %v2860 = vpack.c.bf16 %v2850, %v2849
        %v2861 = vpack.c.bf16 %v2852, %v2851
        %v2862 = vpack.c.bf16 %v2854, %v2853
        %s2863 = scalar_lea.vmem %s1, 64
        %v2864 = vld [vmem:[%s2863] sm:$0x7]
        %v2865 = vpack.c.bf16 %v2864, %v2864
        %v2867 = vsel %vm242, %v2855, 0
        %v2870 = vsel %vm242, %v2856, 0
        %v2873 = vsel %vm242, %v2857, 0
        %v2876 = vsel %vm242, %v2858, 0
        %v2879 = vsel %vm242, %v2859, 0
        %v2882 = vsel %vm242, %v2860, 0
        %v2885 = vsel %vm242, %v2861, 0
        %v2888 = vsel %vm242, %v2862, 0
        %v2891 = vand.u32 %v2865, %v270
        %2893 = vmatprep.subr.bf16.mxu0 0
        %2894 = vmatpush1.bf16.msra.mxu0 0
        %2895 = vmatprep.subr.bf16.mxu0 0
        %2896 = vmatpush1.bf16.msra.mxu0 0
        %2897 = vmatprep.subr.bf16.mxu0 0
        %2898 = vmatpush1.bf16.msra.mxu0 0
        %2899 = vmatprep.subr.bf16.mxu0 0
        %2900 = vmatpush1.bf16.msra.mxu0 0
        %2901 = vmatprep.subr.bf16.mxu0 0
        %2902 = vmatpush1.bf16.msra.mxu0 0
        %2903 = vmatprep.subr.bf16.mxu0 0
        %2904 = vmatpush1.bf16.msra.mxu0 0
        %2905 = vmatprep.subr.bf16.mxu0 0
        %2906 = vmatpush1.bf16.msra.mxu0 0
        %2907 = vmatprep.subr.bf16.mxu0 0
        %2908 = vmatpush1.bf16.msra.mxu0 %v2891
        %2909 = vmatprep.subr.bf16.mxu0 0
        %2910 = vmatpush2.bf16.msra.mxu0 0
        %2911 = vmatprep.subr.bf16.mxu0 0
        %2912 = vmatpush2.bf16.msra.mxu0 0
        %2913 = vmatprep.subr.bf16.mxu0 0
        %2914 = vmatpush2.bf16.msra.mxu0 0
        %2915 = vmatprep.subr.bf16.mxu0 0
        %2916 = vmatpush2.bf16.msra.mxu0 0
        %2917 = vmatprep.subr.bf16.mxu0 0
        %2918 = vmatpush2.bf16.msra.mxu0 0
        %2919 = vmatprep.subr.bf16.mxu0 0
        %2920 = vmatpush2.bf16.msra.mxu0 0
        %2921 = vmatprep.subr.bf16.mxu0 0
        %2922 = vmatpush2.bf16.msra.mxu0 0
        %2923 = vmatprep.subr.bf16.mxu0 0
        %2924 = vmatpush2.bf16.msra.mxu0 0
        %2925 = vmatprep.mubr.bf16.mxu0 0
        %2926 = vmatmul.mubr.bf16.gmra.mxu0 %v2867
        %v2927 = vpop.f32.mrf.mxu0
        %v2928 = vadd.f32 0.0, %v2927
        %v2929 = vpop.f32.mrf.mxu0
        %v2930 = vpop.f32.mrf.mxu0
        %v2931 = vadd.f32 0.0, %v2930
        %v2932 = vpop.f32.mrf.mxu0
        %2933 = vmatprep.mubr.bf16.mxu0 0
        %2934 = vmatmul.mubr.bf16.gmra.mxu0 %v2870
        %v2935 = vpop.f32.mrf.mxu0
        %v2936 = vadd.f32 0.0, %v2935
        %v2937 = vpop.f32.mrf.mxu0
        %v2938 = vpop.f32.mrf.mxu0
        %v2939 = vadd.f32 0.0, %v2938
        %v2940 = vpop.f32.mrf.mxu0
        %2941 = vmatprep.mubr.bf16.mxu0 0
        %2942 = vmatmul.mubr.bf16.gmra.mxu0 %v2873
        %v2943 = vpop.f32.mrf.mxu0
        %v2944 = vadd.f32 0.0, %v2943
        %v2945 = vpop.f32.mrf.mxu0
        %v2946 = vpop.f32.mrf.mxu0
        %v2947 = vadd.f32 0.0, %v2946
        %v2948 = vpop.f32.mrf.mxu0
        %2949 = vmatprep.mubr.bf16.mxu0 0
        %2950 = vmatmul.mubr.bf16.gmra.mxu0 %v2876
        %v2951 = vpop.f32.mrf.mxu0
        %v2952 = vadd.f32 0.0, %v2951
        %v2953 = vpop.f32.mrf.mxu0
        %v2954 = vpop.f32.mrf.mxu0
        %v2955 = vadd.f32 0.0, %v2954
        %v2956 = vpop.f32.mrf.mxu0
        %2957 = vmatprep.mubr.bf16.mxu0 0
        %2958 = vmatmul.mubr.bf16.gmra.mxu0 %v2879
        %v2959 = vpop.f32.mrf.mxu0
        %v2960 = vadd.f32 0.0, %v2959
        %v2961 = vpop.f32.mrf.mxu0
        %v2962 = vpop.f32.mrf.mxu0
        %v2963 = vadd.f32 0.0, %v2962
        %v2964 = vpop.f32.mrf.mxu0
        %2965 = vmatprep.mubr.bf16.mxu0 0
        %2966 = vmatmul.mubr.bf16.gmra.mxu0 %v2882
        %v2967 = vpop.f32.mrf.mxu0
        %v2968 = vadd.f32 0.0, %v2967
        %v2969 = vpop.f32.mrf.mxu0
        %v2970 = vpop.f32.mrf.mxu0
        %v2971 = vadd.f32 0.0, %v2970
        %v2972 = vpop.f32.mrf.mxu0
        %2973 = vmatprep.mubr.bf16.mxu0 0
        %2974 = vmatmul.mubr.bf16.gmra.mxu0 %v2885
        %v2975 = vpop.f32.mrf.mxu0
        %v2976 = vadd.f32 0.0, %v2975
        %v2977 = vpop.f32.mrf.mxu0
        %v2978 = vpop.f32.mrf.mxu0
        %v2979 = vadd.f32 0.0, %v2978
        %v2980 = vpop.f32.mrf.mxu0
        %2981 = vmatprep.mubr.bf16.mxu0 0
        %2982 = vmatmul.mubr.bf16.gmra.mxu0 %v2888
        %v2983 = vpop.f32.mrf.mxu0
        %v2984 = vadd.f32 0.0, %v2983
        %v2985 = vpop.f32.mrf.mxu0
        %v2986 = vpop.f32.mrf.mxu0
        %v2987 = vadd.f32 0.0, %v2986
        %v2988 = vpop.f32.mrf.mxu0
        %2989 = vdwg.mxu0
        %v2990 = vadd.f32 %v2823, %v2928
        %v2991 = vadd.f32 %v2824, %v2931
        %v2992 = vadd.f32 %v2825, %v2936
        %v2993 = vadd.f32 %v2826, %v2939
        %v2994 = vadd.f32 %v2827, %v2944
        %v2995 = vadd.f32 %v2828, %v2947
        %v2996 = vadd.f32 %v2829, %v2952
        %v2997 = vadd.f32 %v2830, %v2955
        %v2998 = vadd.f32 %v2831, %v2960
        %v2999 = vadd.f32 %v2832, %v2963
        %v3000 = vadd.f32 %v2833, %v2968
        %v3001 = vadd.f32 %v2834, %v2971
        %v3002 = vadd.f32 %v2835, %v2976
        %v3003 = vadd.f32 %v2836, %v2979
        %v3004 = vadd.f32 %v2837, %v2984
        %v3005 = vadd.f32 %v2838, %v2987
        %v3006 = vld [vmem:[%s2504 + $0x3] sm:$0xff]
        %v3007 = vld [vmem:[%s2504 + $0xb] sm:$0xff]
        %v3008 = vld [vmem:[%s2504 + $0x1b] sm:$0xff]
        %v3009 = vld [vmem:[%s2504 + $0x23] sm:$0xff]
        %v3010 = vld [vmem:[%s2504 + $0x33] sm:$0xff]
        %v3011 = vld [vmem:[%s2504 + $0x3b] sm:$0xff]
        %v3012 = vld [vmem:[%s2504 + $0x4b] sm:$0xff]
        %v3013 = vld [vmem:[%s2504 + $0x53] sm:$0xff]
        %v3014 = vld [vmem:[%s2504 + $0x63] sm:$0xff]
        %v3015 = vld [vmem:[%s2504 + $0x6b] sm:$0xff]
        %v3016 = vld [vmem:[%s2504 + $0x7b] sm:$0xff]
        %v3017 = vld [vmem:[%s2504 + $0x83] sm:$0xff]
        %v3018 = vld [vmem:[%s2504 + $0x93] sm:$0xff]
        %v3019 = vld [vmem:[%s2504 + $0x9b] sm:$0xff]
        %v3020 = vld [vmem:[%s2504 + $0xab] sm:$0xff]
        %v3021 = vld [vmem:[%s2504 + $0xb3] sm:$0xff]
        %v3022 = vpack.c.bf16 %v3007, %v3006
        %v3023 = vpack.c.bf16 %v3009, %v3008
        %v3024 = vpack.c.bf16 %v3011, %v3010
        %v3025 = vpack.c.bf16 %v3013, %v3012
        %v3026 = vpack.c.bf16 %v3015, %v3014
        %v3027 = vpack.c.bf16 %v3017, %v3016
        %v3028 = vpack.c.bf16 %v3019, %v3018
        %v3029 = vpack.c.bf16 %v3021, %v3020
        %s3030 = scalar_lea.vmem %s1, 68
        %v3031 = vld [vmem:[%s3030] sm:$0x7]
        %v3032 = vpack.c.bf16 %v3031, %v3031
        %v3034 = vsel %vm242, %v3022, 0
        %v3037 = vsel %vm242, %v3023, 0
        %v3040 = vsel %vm242, %v3024, 0
        %v3043 = vsel %vm242, %v3025, 0
        %v3046 = vsel %vm242, %v3026, 0
        %v3049 = vsel %vm242, %v3027, 0
        %v3052 = vsel %vm242, %v3028, 0
        %v3055 = vsel %vm242, %v3029, 0
        %v3058 = vand.u32 %v3032, %v270
        %3060 = vmatprep.subr.bf16.mxu0 0
        %3061 = vmatpush1.bf16.msra.mxu0 0
        %3062 = vmatprep.subr.bf16.mxu0 0
        %3063 = vmatpush1.bf16.msra.mxu0 0
        %3064 = vmatprep.subr.bf16.mxu0 0
        %3065 = vmatpush1.bf16.msra.mxu0 0
        %3066 = vmatprep.subr.bf16.mxu0 0
        %3067 = vmatpush1.bf16.msra.mxu0 0
        %3068 = vmatprep.subr.bf16.mxu0 0
        %3069 = vmatpush1.bf16.msra.mxu0 0
        %3070 = vmatprep.subr.bf16.mxu0 0
        %3071 = vmatpush1.bf16.msra.mxu0 0
        %3072 = vmatprep.subr.bf16.mxu0 0
        %3073 = vmatpush1.bf16.msra.mxu0 0
        %3074 = vmatprep.subr.bf16.mxu0 0
        %3075 = vmatpush1.bf16.msra.mxu0 %v3058
        %3076 = vmatprep.subr.bf16.mxu0 0
        %3077 = vmatpush2.bf16.msra.mxu0 0
        %3078 = vmatprep.subr.bf16.mxu0 0
        %3079 = vmatpush2.bf16.msra.mxu0 0
        %3080 = vmatprep.subr.bf16.mxu0 0
        %3081 = vmatpush2.bf16.msra.mxu0 0
        %3082 = vmatprep.subr.bf16.mxu0 0
        %3083 = vmatpush2.bf16.msra.mxu0 0
        %3084 = vmatprep.subr.bf16.mxu0 0
        %3085 = vmatpush2.bf16.msra.mxu0 0
        %3086 = vmatprep.subr.bf16.mxu0 0
        %3087 = vmatpush2.bf16.msra.mxu0 0
        %3088 = vmatprep.subr.bf16.mxu0 0
        %3089 = vmatpush2.bf16.msra.mxu0 0
        %3090 = vmatprep.subr.bf16.mxu0 0
        %3091 = vmatpush2.bf16.msra.mxu0 0
        %3092 = vmatprep.mubr.bf16.mxu0 0
        %3093 = vmatmul.mubr.bf16.gmra.mxu0 %v3034
        %v3094 = vpop.f32.mrf.mxu0
        %v3095 = vadd.f32 0.0, %v3094
        %v3096 = vpop.f32.mrf.mxu0
        %v3097 = vpop.f32.mrf.mxu0
        %v3098 = vadd.f32 0.0, %v3097
        %v3099 = vpop.f32.mrf.mxu0
        %3100 = vmatprep.mubr.bf16.mxu0 0
        %3101 = vmatmul.mubr.bf16.gmra.mxu0 %v3037
        %v3102 = vpop.f32.mrf.mxu0
        %v3103 = vadd.f32 0.0, %v3102
        %v3104 = vpop.f32.mrf.mxu0
        %v3105 = vpop.f32.mrf.mxu0
        %v3106 = vadd.f32 0.0, %v3105
        %v3107 = vpop.f32.mrf.mxu0
        %3108 = vmatprep.mubr.bf16.mxu0 0
        %3109 = vmatmul.mubr.bf16.gmra.mxu0 %v3040
        %v3110 = vpop.f32.mrf.mxu0
        %v3111 = vadd.f32 0.0, %v3110
        %v3112 = vpop.f32.mrf.mxu0
        %v3113 = vpop.f32.mrf.mxu0
        %v3114 = vadd.f32 0.0, %v3113
        %v3115 = vpop.f32.mrf.mxu0
        %3116 = vmatprep.mubr.bf16.mxu0 0
        %3117 = vmatmul.mubr.bf16.gmra.mxu0 %v3043
        %v3118 = vpop.f32.mrf.mxu0
        %v3119 = vadd.f32 0.0, %v3118
        %v3120 = vpop.f32.mrf.mxu0
        %v3121 = vpop.f32.mrf.mxu0
        %v3122 = vadd.f32 0.0, %v3121
        %v3123 = vpop.f32.mrf.mxu0
        %3124 = vmatprep.mubr.bf16.mxu0 0
        %3125 = vmatmul.mubr.bf16.gmra.mxu0 %v3046
        %v3126 = vpop.f32.mrf.mxu0
        %v3127 = vadd.f32 0.0, %v3126
        %v3128 = vpop.f32.mrf.mxu0
        %v3129 = vpop.f32.mrf.mxu0
        %v3130 = vadd.f32 0.0, %v3129
        %v3131 = vpop.f32.mrf.mxu0
        %3132 = vmatprep.mubr.bf16.mxu0 0
        %3133 = vmatmul.mubr.bf16.gmra.mxu0 %v3049
        %v3134 = vpop.f32.mrf.mxu0
        %v3135 = vadd.f32 0.0, %v3134
        %v3136 = vpop.f32.mrf.mxu0
        %v3137 = vpop.f32.mrf.mxu0
        %v3138 = vadd.f32 0.0, %v3137
        %v3139 = vpop.f32.mrf.mxu0
        %3140 = vmatprep.mubr.bf16.mxu0 0
        %3141 = vmatmul.mubr.bf16.gmra.mxu0 %v3052
        %v3142 = vpop.f32.mrf.mxu0
        %v3143 = vadd.f32 0.0, %v3142
        %v3144 = vpop.f32.mrf.mxu0
        %v3145 = vpop.f32.mrf.mxu0
        %v3146 = vadd.f32 0.0, %v3145
        %v3147 = vpop.f32.mrf.mxu0
        %3148 = vmatprep.mubr.bf16.mxu0 0
        %3149 = vmatmul.mubr.bf16.gmra.mxu0 %v3055
        %v3150 = vpop.f32.mrf.mxu0
        %v3151 = vadd.f32 0.0, %v3150
        %v3152 = vpop.f32.mrf.mxu0
        %v3153 = vpop.f32.mrf.mxu0
        %v3154 = vadd.f32 0.0, %v3153
        %v3155 = vpop.f32.mrf.mxu0
        %3156 = vdwg.mxu0
        %v3157 = vadd.f32 %v2990, %v3095
        %v3158 = vadd.f32 %v2991, %v3098
        %v3159 = vadd.f32 %v2992, %v3103
        %v3160 = vadd.f32 %v2993, %v3106
        %v3161 = vadd.f32 %v2994, %v3111
        %v3162 = vadd.f32 %v2995, %v3114
        %v3163 = vadd.f32 %v2996, %v3119
        %v3164 = vadd.f32 %v2997, %v3122
        %v3165 = vadd.f32 %v2998, %v3127
        %v3166 = vadd.f32 %v2999, %v3130
        %v3167 = vadd.f32 %v3000, %v3135
        %v3168 = vadd.f32 %v3001, %v3138
        %v3169 = vadd.f32 %v3002, %v3143
        %v3170 = vadd.f32 %v3003, %v3146
        %v3171 = vadd.f32 %v3004, %v3151
        %v3172 = vadd.f32 %v3005, %v3154
        %v3173 = vld [vmem:[%s2504 + $0x4] sm:$0xff]
        %v3174 = vld [vmem:[%s2504 + $0xc] sm:$0xff]
        %v3175 = vld [vmem:[%s2504 + $0x1c] sm:$0xff]
        %v3176 = vld [vmem:[%s2504 + $0x24] sm:$0xff]
        %v3177 = vld [vmem:[%s2504 + $0x34] sm:$0xff]
        %v3178 = vld [vmem:[%s2504 + $0x3c] sm:$0xff]
        %v3179 = vld [vmem:[%s2504 + $0x4c] sm:$0xff]
        %v3180 = vld [vmem:[%s2504 + $0x54] sm:$0xff]
        %v3181 = vld [vmem:[%s2504 + $0x64] sm:$0xff]
        %v3182 = vld [vmem:[%s2504 + $0x6c] sm:$0xff]
        %v3183 = vld [vmem:[%s2504 + $0x7c] sm:$0xff]
        %v3184 = vld [vmem:[%s2504 + $0x84] sm:$0xff]
        %v3185 = vld [vmem:[%s2504 + $0x94] sm:$0xff]
        %v3186 = vld [vmem:[%s2504 + $0x9c] sm:$0xff]
        %v3187 = vld [vmem:[%s2504 + $0xac] sm:$0xff]
        %v3188 = vld [vmem:[%s2504 + $0xb4] sm:$0xff]
        %v3189 = vpack.c.bf16 %v3174, %v3173
        %v3190 = vpack.c.bf16 %v3176, %v3175
        %v3191 = vpack.c.bf16 %v3178, %v3177
        %v3192 = vpack.c.bf16 %v3180, %v3179
        %v3193 = vpack.c.bf16 %v3182, %v3181
        %v3194 = vpack.c.bf16 %v3184, %v3183
        %v3195 = vpack.c.bf16 %v3186, %v3185
        %v3196 = vpack.c.bf16 %v3188, %v3187
        %s3197 = scalar_lea.vmem %s1, 72
        %v3198 = vld [vmem:[%s3197] sm:$0x7]
        %v3199 = vpack.c.bf16 %v3198, %v3198
        %v3201 = vsel %vm242, %v3189, 0
        %v3204 = vsel %vm242, %v3190, 0
        %v3207 = vsel %vm242, %v3191, 0
        %v3210 = vsel %vm242, %v3192, 0
        %v3213 = vsel %vm242, %v3193, 0
        %v3216 = vsel %vm242, %v3194, 0
        %v3219 = vsel %vm242, %v3195, 0
        %v3222 = vsel %vm242, %v3196, 0
        %v3225 = vand.u32 %v3199, %v270
        %3227 = vmatprep.subr.bf16.mxu0 0
        %3228 = vmatpush1.bf16.msra.mxu0 0
        %3229 = vmatprep.subr.bf16.mxu0 0
        %3230 = vmatpush1.bf16.msra.mxu0 0
        %3231 = vmatprep.subr.bf16.mxu0 0
        %3232 = vmatpush1.bf16.msra.mxu0 0
        %3233 = vmatprep.subr.bf16.mxu0 0
        %3234 = vmatpush1.bf16.msra.mxu0 0
        %3235 = vmatprep.subr.bf16.mxu0 0
        %3236 = vmatpush1.bf16.msra.mxu0 0
        %3237 = vmatprep.subr.bf16.mxu0 0
        %3238 = vmatpush1.bf16.msra.mxu0 0
        %3239 = vmatprep.subr.bf16.mxu0 0
        %3240 = vmatpush1.bf16.msra.mxu0 0
        %3241 = vmatprep.subr.bf16.mxu0 0
        %3242 = vmatpush1.bf16.msra.mxu0 %v3225
        %3243 = vmatprep.subr.bf16.mxu0 0
        %3244 = vmatpush2.bf16.msra.mxu0 0
        %3245 = vmatprep.subr.bf16.mxu0 0
        %3246 = vmatpush2.bf16.msra.mxu0 0
        %3247 = vmatprep.subr.bf16.mxu0 0
        %3248 = vmatpush2.bf16.msra.mxu0 0
        %3249 = vmatprep.subr.bf16.mxu0 0
        %3250 = vmatpush2.bf16.msra.mxu0 0
        %3251 = vmatprep.subr.bf16.mxu0 0
        %3252 = vmatpush2.bf16.msra.mxu0 0
        %3253 = vmatprep.subr.bf16.mxu0 0
        %3254 = vmatpush2.bf16.msra.mxu0 0
        %3255 = vmatprep.subr.bf16.mxu0 0
        %3256 = vmatpush2.bf16.msra.mxu0 0
        %3257 = vmatprep.subr.bf16.mxu0 0
        %3258 = vmatpush2.bf16.msra.mxu0 0
        %3259 = vmatprep.mubr.bf16.mxu0 0
        %3260 = vmatmul.mubr.bf16.gmra.mxu0 %v3201
        %v3261 = vpop.f32.mrf.mxu0
        %v3262 = vadd.f32 0.0, %v3261
        %v3263 = vpop.f32.mrf.mxu0
        %v3264 = vpop.f32.mrf.mxu0
        %v3265 = vadd.f32 0.0, %v3264
        %v3266 = vpop.f32.mrf.mxu0
        %3267 = vmatprep.mubr.bf16.mxu0 0
        %3268 = vmatmul.mubr.bf16.gmra.mxu0 %v3204
        %v3269 = vpop.f32.mrf.mxu0
        %v3270 = vadd.f32 0.0, %v3269
        %v3271 = vpop.f32.mrf.mxu0
        %v3272 = vpop.f32.mrf.mxu0
        %v3273 = vadd.f32 0.0, %v3272
        %v3274 = vpop.f32.mrf.mxu0
        %3275 = vmatprep.mubr.bf16.mxu0 0
        %3276 = vmatmul.mubr.bf16.gmra.mxu0 %v3207
        %v3277 = vpop.f32.mrf.mxu0
        %v3278 = vadd.f32 0.0, %v3277
        %v3279 = vpop.f32.mrf.mxu0
        %v3280 = vpop.f32.mrf.mxu0
        %v3281 = vadd.f32 0.0, %v3280
        %v3282 = vpop.f32.mrf.mxu0
        %3283 = vmatprep.mubr.bf16.mxu0 0
        %3284 = vmatmul.mubr.bf16.gmra.mxu0 %v3210
        %v3285 = vpop.f32.mrf.mxu0
        %v3286 = vadd.f32 0.0, %v3285
        %v3287 = vpop.f32.mrf.mxu0
        %v3288 = vpop.f32.mrf.mxu0
        %v3289 = vadd.f32 0.0, %v3288
        %v3290 = vpop.f32.mrf.mxu0
        %3291 = vmatprep.mubr.bf16.mxu0 0
        %3292 = vmatmul.mubr.bf16.gmra.mxu0 %v3213
        %v3293 = vpop.f32.mrf.mxu0
        %v3294 = vadd.f32 0.0, %v3293
        %v3295 = vpop.f32.mrf.mxu0
        %v3296 = vpop.f32.mrf.mxu0
        %v3297 = vadd.f32 0.0, %v3296
        %v3298 = vpop.f32.mrf.mxu0
        %3299 = vmatprep.mubr.bf16.mxu0 0
        %3300 = vmatmul.mubr.bf16.gmra.mxu0 %v3216
        %v3301 = vpop.f32.mrf.mxu0
        %v3302 = vadd.f32 0.0, %v3301
        %v3303 = vpop.f32.mrf.mxu0
        %v3304 = vpop.f32.mrf.mxu0
        %v3305 = vadd.f32 0.0, %v3304
        %v3306 = vpop.f32.mrf.mxu0
        %3307 = vmatprep.mubr.bf16.mxu0 0
        %3308 = vmatmul.mubr.bf16.gmra.mxu0 %v3219
        %v3309 = vpop.f32.mrf.mxu0
        %v3310 = vadd.f32 0.0, %v3309
        %v3311 = vpop.f32.mrf.mxu0
        %v3312 = vpop.f32.mrf.mxu0
        %v3313 = vadd.f32 0.0, %v3312
        %v3314 = vpop.f32.mrf.mxu0
        %3315 = vmatprep.mubr.bf16.mxu0 0
        %3316 = vmatmul.mubr.bf16.gmra.mxu0 %v3222
        %v3317 = vpop.f32.mrf.mxu0
        %v3318 = vadd.f32 0.0, %v3317
        %v3319 = vpop.f32.mrf.mxu0
        %v3320 = vpop.f32.mrf.mxu0
        %v3321 = vadd.f32 0.0, %v3320
        %v3322 = vpop.f32.mrf.mxu0
        %3323 = vdwg.mxu0
        %v3324 = vadd.f32 %v3157, %v3262
        %v3325 = vadd.f32 %v3158, %v3265
        %v3326 = vadd.f32 %v3159, %v3270
        %v3327 = vadd.f32 %v3160, %v3273
        %v3328 = vadd.f32 %v3161, %v3278
        %v3329 = vadd.f32 %v3162, %v3281
        %v3330 = vadd.f32 %v3163, %v3286
        %v3331 = vadd.f32 %v3164, %v3289
        %v3332 = vadd.f32 %v3165, %v3294
        %v3333 = vadd.f32 %v3166, %v3297
        %v3334 = vadd.f32 %v3167, %v3302
        %v3335 = vadd.f32 %v3168, %v3305
        %v3336 = vadd.f32 %v3169, %v3310
        %v3337 = vadd.f32 %v3170, %v3313
        %v3338 = vadd.f32 %v3171, %v3318
        %v3339 = vadd.f32 %v3172, %v3321
        %v3340 = vld [vmem:[%s2504 + $0x5] sm:$0xff]
        %v3341 = vld [vmem:[%s2504 + $0xd] sm:$0xff]
        %v3342 = vld [vmem:[%s2504 + $0x1d] sm:$0xff]
        %v3343 = vld [vmem:[%s2504 + $0x25] sm:$0xff]
        %v3344 = vld [vmem:[%s2504 + $0x35] sm:$0xff]
        %v3345 = vld [vmem:[%s2504 + $0x3d] sm:$0xff]
        %v3346 = vld [vmem:[%s2504 + $0x4d] sm:$0xff]
        %v3347 = vld [vmem:[%s2504 + $0x55] sm:$0xff]
        %v3348 = vld [vmem:[%s2504 + $0x65] sm:$0xff]
        %v3349 = vld [vmem:[%s2504 + $0x6d] sm:$0xff]
        %v3350 = vld [vmem:[%s2504 + $0x7d] sm:$0xff]
        %v3351 = vld [vmem:[%s2504 + $0x85] sm:$0xff]
        %v3352 = vld [vmem:[%s2504 + $0x95] sm:$0xff]
        %v3353 = vld [vmem:[%s2504 + $0x9d] sm:$0xff]
        %v3354 = vld [vmem:[%s2504 + $0xad] sm:$0xff]
        %v3355 = vld [vmem:[%s2504 + $0xb5] sm:$0xff]
        %v3356 = vpack.c.bf16 %v3341, %v3340
        %v3357 = vpack.c.bf16 %v3343, %v3342
        %v3358 = vpack.c.bf16 %v3345, %v3344
        %v3359 = vpack.c.bf16 %v3347, %v3346
        %v3360 = vpack.c.bf16 %v3349, %v3348
        %v3361 = vpack.c.bf16 %v3351, %v3350
        %v3362 = vpack.c.bf16 %v3353, %v3352
        %v3363 = vpack.c.bf16 %v3355, %v3354
        %s3364 = scalar_lea.vmem %s1, 76
        %v3365 = vld [vmem:[%s3364] sm:$0x7]
        %v3366 = vpack.c.bf16 %v3365, %v3365
        %v3368 = vsel %vm242, %v3356, 0
        %v3371 = vsel %vm242, %v3357, 0
        %v3374 = vsel %vm242, %v3358, 0
        %v3377 = vsel %vm242, %v3359, 0
        %v3380 = vsel %vm242, %v3360, 0
        %v3383 = vsel %vm242, %v3361, 0
        %v3386 = vsel %vm242, %v3362, 0
        %v3389 = vsel %vm242, %v3363, 0
        %v3392 = vand.u32 %v3366, %v270
        %3394 = vmatprep.subr.bf16.mxu0 0
        %3395 = vmatpush1.bf16.msra.mxu0 0
        %3396 = vmatprep.subr.bf16.mxu0 0
        %3397 = vmatpush1.bf16.msra.mxu0 0
        %3398 = vmatprep.subr.bf16.mxu0 0
        %3399 = vmatpush1.bf16.msra.mxu0 0
        %3400 = vmatprep.subr.bf16.mxu0 0
        %3401 = vmatpush1.bf16.msra.mxu0 0
        %3402 = vmatprep.subr.bf16.mxu0 0
        %3403 = vmatpush1.bf16.msra.mxu0 0
        %3404 = vmatprep.subr.bf16.mxu0 0
        %3405 = vmatpush1.bf16.msra.mxu0 0
        %3406 = vmatprep.subr.bf16.mxu0 0
        %3407 = vmatpush1.bf16.msra.mxu0 0
        %3408 = vmatprep.subr.bf16.mxu0 0
        %3409 = vmatpush1.bf16.msra.mxu0 %v3392
        %3410 = vmatprep.subr.bf16.mxu0 0
        %3411 = vmatpush2.bf16.msra.mxu0 0
        %3412 = vmatprep.subr.bf16.mxu0 0
        %3413 = vmatpush2.bf16.msra.mxu0 0
        %3414 = vmatprep.subr.bf16.mxu0 0
        %3415 = vmatpush2.bf16.msra.mxu0 0
        %3416 = vmatprep.subr.bf16.mxu0 0
        %3417 = vmatpush2.bf16.msra.mxu0 0
        %3418 = vmatprep.subr.bf16.mxu0 0
        %3419 = vmatpush2.bf16.msra.mxu0 0
        %3420 = vmatprep.subr.bf16.mxu0 0
        %3421 = vmatpush2.bf16.msra.mxu0 0
        %3422 = vmatprep.subr.bf16.mxu0 0
        %3423 = vmatpush2.bf16.msra.mxu0 0
        %3424 = vmatprep.subr.bf16.mxu0 0
        %3425 = vmatpush2.bf16.msra.mxu0 0
        %3426 = vmatprep.mubr.bf16.mxu0 0
        %3427 = vmatmul.mubr.bf16.gmra.mxu0 %v3368
        %v3428 = vpop.f32.mrf.mxu0
        %v3429 = vadd.f32 0.0, %v3428
        %v3430 = vpop.f32.mrf.mxu0
        %v3431 = vpop.f32.mrf.mxu0
        %v3432 = vadd.f32 0.0, %v3431
        %v3433 = vpop.f32.mrf.mxu0
        %3434 = vmatprep.mubr.bf16.mxu0 0
        %3435 = vmatmul.mubr.bf16.gmra.mxu0 %v3371
        %v3436 = vpop.f32.mrf.mxu0
        %v3437 = vadd.f32 0.0, %v3436
        %v3438 = vpop.f32.mrf.mxu0
        %v3439 = vpop.f32.mrf.mxu0
        %v3440 = vadd.f32 0.0, %v3439
        %v3441 = vpop.f32.mrf.mxu0
        %3442 = vmatprep.mubr.bf16.mxu0 0
        %3443 = vmatmul.mubr.bf16.gmra.mxu0 %v3374
        %v3444 = vpop.f32.mrf.mxu0
        %v3445 = vadd.f32 0.0, %v3444
        %v3446 = vpop.f32.mrf.mxu0
        %v3447 = vpop.f32.mrf.mxu0
        %v3448 = vadd.f32 0.0, %v3447
        %v3449 = vpop.f32.mrf.mxu0
        %3450 = vmatprep.mubr.bf16.mxu0 0
        %3451 = vmatmul.mubr.bf16.gmra.mxu0 %v3377
        %v3452 = vpop.f32.mrf.mxu0
        %v3453 = vadd.f32 0.0, %v3452
        %v3454 = vpop.f32.mrf.mxu0
        %v3455 = vpop.f32.mrf.mxu0
        %v3456 = vadd.f32 0.0, %v3455
        %v3457 = vpop.f32.mrf.mxu0
        %3458 = vmatprep.mubr.bf16.mxu0 0
        %3459 = vmatmul.mubr.bf16.gmra.mxu0 %v3380
        %v3460 = vpop.f32.mrf.mxu0
        %v3461 = vadd.f32 0.0, %v3460
        %v3462 = vpop.f32.mrf.mxu0
        %v3463 = vpop.f32.mrf.mxu0
        %v3464 = vadd.f32 0.0, %v3463
        %v3465 = vpop.f32.mrf.mxu0
        %3466 = vmatprep.mubr.bf16.mxu0 0
        %3467 = vmatmul.mubr.bf16.gmra.mxu0 %v3383
        %v3468 = vpop.f32.mrf.mxu0
        %v3469 = vadd.f32 0.0, %v3468
        %v3470 = vpop.f32.mrf.mxu0
        %v3471 = vpop.f32.mrf.mxu0
        %v3472 = vadd.f32 0.0, %v3471
        %v3473 = vpop.f32.mrf.mxu0
        %3474 = vmatprep.mubr.bf16.mxu0 0
        %3475 = vmatmul.mubr.bf16.gmra.mxu0 %v3386
        %v3476 = vpop.f32.mrf.mxu0
        %v3477 = vadd.f32 0.0, %v3476
        %v3478 = vpop.f32.mrf.mxu0
        %v3479 = vpop.f32.mrf.mxu0
        %v3480 = vadd.f32 0.0, %v3479
        %v3481 = vpop.f32.mrf.mxu0
        %3482 = vmatprep.mubr.bf16.mxu0 0
        %3483 = vmatmul.mubr.bf16.gmra.mxu0 %v3389
        %v3484 = vpop.f32.mrf.mxu0
        %v3485 = vadd.f32 0.0, %v3484
        %v3486 = vpop.f32.mrf.mxu0
        %v3487 = vpop.f32.mrf.mxu0
        %v3488 = vadd.f32 0.0, %v3487
        %v3489 = vpop.f32.mrf.mxu0
        %3490 = vdwg.mxu0
        %v3491 = vadd.f32 %v3324, %v3429
        %v3492 = vadd.f32 %v3325, %v3432
        %v3493 = vadd.f32 %v3326, %v3437
        %v3494 = vadd.f32 %v3327, %v3440
        %v3495 = vadd.f32 %v3328, %v3445
        %v3496 = vadd.f32 %v3329, %v3448
        %v3497 = vadd.f32 %v3330, %v3453
        %v3498 = vadd.f32 %v3331, %v3456
        %v3499 = vadd.f32 %v3332, %v3461
        %v3500 = vadd.f32 %v3333, %v3464
        %v3501 = vadd.f32 %v3334, %v3469
        %v3502 = vadd.f32 %v3335, %v3472
        %v3503 = vadd.f32 %v3336, %v3477
        %v3504 = vadd.f32 %v3337, %v3480
        %v3505 = vadd.f32 %v3338, %v3485
        %v3506 = vadd.f32 %v3339, %v3488
        %v3507 = vld [vmem:[%s2504 + $0x6] sm:$0xff]
        %v3508 = vld [vmem:[%s2504 + $0xe] sm:$0xff]
        %v3509 = vld [vmem:[%s2504 + $0x1e] sm:$0xff]
        %v3510 = vld [vmem:[%s2504 + $0x26] sm:$0xff]
        %v3511 = vld [vmem:[%s2504 + $0x36] sm:$0xff]
        %v3512 = vld [vmem:[%s2504 + $0x3e] sm:$0xff]
        %v3513 = vld [vmem:[%s2504 + $0x4e] sm:$0xff]
        %v3514 = vld [vmem:[%s2504 + $0x56] sm:$0xff]
        %v3515 = vld [vmem:[%s2504 + $0x66] sm:$0xff]
        %v3516 = vld [vmem:[%s2504 + $0x6e] sm:$0xff]
        %v3517 = vld [vmem:[%s2504 + $0x7e] sm:$0xff]
        %v3518 = vld [vmem:[%s2504 + $0x86] sm:$0xff]
        %v3519 = vld [vmem:[%s2504 + $0x96] sm:$0xff]
        %v3520 = vld [vmem:[%s2504 + $0x9e] sm:$0xff]
        %v3521 = vld [vmem:[%s2504 + $0xae] sm:$0xff]
        %v3522 = vld [vmem:[%s2504 + $0xb6] sm:$0xff]
        %v3523 = vpack.c.bf16 %v3508, %v3507
        %v3524 = vpack.c.bf16 %v3510, %v3509
        %v3525 = vpack.c.bf16 %v3512, %v3511
        %v3526 = vpack.c.bf16 %v3514, %v3513
        %v3527 = vpack.c.bf16 %v3516, %v3515
        %v3528 = vpack.c.bf16 %v3518, %v3517
        %v3529 = vpack.c.bf16 %v3520, %v3519
        %v3530 = vpack.c.bf16 %v3522, %v3521
        %s3531 = scalar_lea.vmem %s1, 80
        %v3532 = vld [vmem:[%s3531] sm:$0x7]
        %v3533 = vpack.c.bf16 %v3532, %v3532
        %v3535 = vsel %vm242, %v3523, 0
        %v3538 = vsel %vm242, %v3524, 0
        %v3541 = vsel %vm242, %v3525, 0
        %v3544 = vsel %vm242, %v3526, 0
        %v3547 = vsel %vm242, %v3527, 0
        %v3550 = vsel %vm242, %v3528, 0
        %v3553 = vsel %vm242, %v3529, 0
        %v3556 = vsel %vm242, %v3530, 0
        %v3559 = vand.u32 %v3533, %v270
        %3561 = vmatprep.subr.bf16.mxu0 0
        %3562 = vmatpush1.bf16.msra.mxu0 0
        %3563 = vmatprep.subr.bf16.mxu0 0
        %3564 = vmatpush1.bf16.msra.mxu0 0
        %3565 = vmatprep.subr.bf16.mxu0 0
        %3566 = vmatpush1.bf16.msra.mxu0 0
        %3567 = vmatprep.subr.bf16.mxu0 0
        %3568 = vmatpush1.bf16.msra.mxu0 0
        %3569 = vmatprep.subr.bf16.mxu0 0
        %3570 = vmatpush1.bf16.msra.mxu0 0
        %3571 = vmatprep.subr.bf16.mxu0 0
        %3572 = vmatpush1.bf16.msra.mxu0 0
        %3573 = vmatprep.subr.bf16.mxu0 0
        %3574 = vmatpush1.bf16.msra.mxu0 0
        %3575 = vmatprep.subr.bf16.mxu0 0
        %3576 = vmatpush1.bf16.msra.mxu0 %v3559
        %3577 = vmatprep.subr.bf16.mxu0 0
        %3578 = vmatpush2.bf16.msra.mxu0 0
        %3579 = vmatprep.subr.bf16.mxu0 0
        %3580 = vmatpush2.bf16.msra.mxu0 0
        %3581 = vmatprep.subr.bf16.mxu0 0
        %3582 = vmatpush2.bf16.msra.mxu0 0
        %3583 = vmatprep.subr.bf16.mxu0 0
        %3584 = vmatpush2.bf16.msra.mxu0 0
        %3585 = vmatprep.subr.bf16.mxu0 0
        %3586 = vmatpush2.bf16.msra.mxu0 0
        %3587 = vmatprep.subr.bf16.mxu0 0
        %3588 = vmatpush2.bf16.msra.mxu0 0
        %3589 = vmatprep.subr.bf16.mxu0 0
        %3590 = vmatpush2.bf16.msra.mxu0 0
        %3591 = vmatprep.subr.bf16.mxu0 0
        %3592 = vmatpush2.bf16.msra.mxu0 0
        %3593 = vmatprep.mubr.bf16.mxu0 0
        %3594 = vmatmul.mubr.bf16.gmra.mxu0 %v3535
        %v3595 = vpop.f32.mrf.mxu0
        %v3596 = vadd.f32 0.0, %v3595
        %v3597 = vpop.f32.mrf.mxu0
        %v3598 = vpop.f32.mrf.mxu0
        %v3599 = vadd.f32 0.0, %v3598
        %v3600 = vpop.f32.mrf.mxu0
        %3601 = vmatprep.mubr.bf16.mxu0 0
        %3602 = vmatmul.mubr.bf16.gmra.mxu0 %v3538
        %v3603 = vpop.f32.mrf.mxu0
        %v3604 = vadd.f32 0.0, %v3603
        %v3605 = vpop.f32.mrf.mxu0
        %v3606 = vpop.f32.mrf.mxu0
        %v3607 = vadd.f32 0.0, %v3606
        %v3608 = vpop.f32.mrf.mxu0
        %3609 = vmatprep.mubr.bf16.mxu0 0
        %3610 = vmatmul.mubr.bf16.gmra.mxu0 %v3541
        %v3611 = vpop.f32.mrf.mxu0
        %v3612 = vadd.f32 0.0, %v3611
        %v3613 = vpop.f32.mrf.mxu0
        %v3614 = vpop.f32.mrf.mxu0
        %v3615 = vadd.f32 0.0, %v3614
        %v3616 = vpop.f32.mrf.mxu0
        %3617 = vmatprep.mubr.bf16.mxu0 0
        %3618 = vmatmul.mubr.bf16.gmra.mxu0 %v3544
        %v3619 = vpop.f32.mrf.mxu0
        %v3620 = vadd.f32 0.0, %v3619
        %v3621 = vpop.f32.mrf.mxu0
        %v3622 = vpop.f32.mrf.mxu0
        %v3623 = vadd.f32 0.0, %v3622
        %v3624 = vpop.f32.mrf.mxu0
        %3625 = vmatprep.mubr.bf16.mxu0 0
        %3626 = vmatmul.mubr.bf16.gmra.mxu0 %v3547
        %v3627 = vpop.f32.mrf.mxu0
        %v3628 = vadd.f32 0.0, %v3627
        %v3629 = vpop.f32.mrf.mxu0
        %v3630 = vpop.f32.mrf.mxu0
        %v3631 = vadd.f32 0.0, %v3630
        %v3632 = vpop.f32.mrf.mxu0
        %3633 = vmatprep.mubr.bf16.mxu0 0
        %3634 = vmatmul.mubr.bf16.gmra.mxu0 %v3550
        %v3635 = vpop.f32.mrf.mxu0
        %v3636 = vadd.f32 0.0, %v3635
        %v3637 = vpop.f32.mrf.mxu0
        %v3638 = vpop.f32.mrf.mxu0
        %v3639 = vadd.f32 0.0, %v3638
        %v3640 = vpop.f32.mrf.mxu0
        %3641 = vmatprep.mubr.bf16.mxu0 0
        %3642 = vmatmul.mubr.bf16.gmra.mxu0 %v3553
        %v3643 = vpop.f32.mrf.mxu0
        %v3644 = vadd.f32 0.0, %v3643
        %v3645 = vpop.f32.mrf.mxu0
        %v3646 = vpop.f32.mrf.mxu0
        %v3647 = vadd.f32 0.0, %v3646
        %v3648 = vpop.f32.mrf.mxu0
        %3649 = vmatprep.mubr.bf16.mxu0 0
        %3650 = vmatmul.mubr.bf16.gmra.mxu0 %v3556
        %v3651 = vpop.f32.mrf.mxu0
        %v3652 = vadd.f32 0.0, %v3651
        %v3653 = vpop.f32.mrf.mxu0
        %v3654 = vpop.f32.mrf.mxu0
        %v3655 = vadd.f32 0.0, %v3654
        %v3656 = vpop.f32.mrf.mxu0
        %3657 = vdwg.mxu0
        %v3658 = vadd.f32 %v3491, %v3596
        %v3659 = vadd.f32 %v3492, %v3599
        %v3660 = vadd.f32 %v3493, %v3604
        %v3661 = vadd.f32 %v3494, %v3607
        %v3662 = vadd.f32 %v3495, %v3612
        %v3663 = vadd.f32 %v3496, %v3615
        %v3664 = vadd.f32 %v3497, %v3620
        %v3665 = vadd.f32 %v3498, %v3623
        %v3666 = vadd.f32 %v3499, %v3628
        %v3667 = vadd.f32 %v3500, %v3631
        %v3668 = vadd.f32 %v3501, %v3636
        %v3669 = vadd.f32 %v3502, %v3639
        %v3670 = vadd.f32 %v3503, %v3644
        %v3671 = vadd.f32 %v3504, %v3647
        %v3672 = vadd.f32 %v3505, %v3652
        %v3673 = vadd.f32 %v3506, %v3655
        %s3674 = sadd.s32 %s185, 3
        %s3675 = smul.u32 %s3674, 24
        %s3676 = scalar_lea.vmem %s182, %s3675
        %v3677 = vld [vmem:[%s3676] sm:$0xff]
        %v3678 = vld [vmem:[%s3676 + $0x8] sm:$0xff]
        %v3679 = vld [vmem:[%s3676 + $0x18] sm:$0xff]
        %v3680 = vld [vmem:[%s3676 + $0x20] sm:$0xff]
        %v3681 = vld [vmem:[%s3676 + $0x30] sm:$0xff]
        %v3682 = vld [vmem:[%s3676 + $0x38] sm:$0xff]
        %v3683 = vld [vmem:[%s3676 + $0x48] sm:$0xff]
        %v3684 = vld [vmem:[%s3676 + $0x50] sm:$0xff]
        %v3685 = vld [vmem:[%s3676 + $0x60] sm:$0xff]
        %v3686 = vld [vmem:[%s3676 + $0x68] sm:$0xff]
        %v3687 = vld [vmem:[%s3676 + $0x78] sm:$0xff]
        %v3688 = vld [vmem:[%s3676 + $0x80] sm:$0xff]
        %v3689 = vld [vmem:[%s3676 + $0x90] sm:$0xff]
        %v3690 = vld [vmem:[%s3676 + $0x98] sm:$0xff]
        %v3691 = vld [vmem:[%s3676 + $0xa8] sm:$0xff]
        %v3692 = vld [vmem:[%s3676 + $0xb0] sm:$0xff]
        %v3693 = vpack.c.bf16 %v3678, %v3677
        %v3694 = vpack.c.bf16 %v3680, %v3679
        %v3695 = vpack.c.bf16 %v3682, %v3681
        %v3696 = vpack.c.bf16 %v3684, %v3683
        %v3697 = vpack.c.bf16 %v3686, %v3685
        %v3698 = vpack.c.bf16 %v3688, %v3687
        %v3699 = vpack.c.bf16 %v3690, %v3689
        %v3700 = vpack.c.bf16 %v3692, %v3691
        %s3701 = scalar_lea.vmem %s1, 84
        %v3702 = vld [vmem:[%s3701] sm:$0x7]
        %v3703 = vpack.c.bf16 %v3702, %v3702
        %v3705 = vsel %vm242, %v3693, 0
        %v3708 = vsel %vm242, %v3694, 0
        %v3711 = vsel %vm242, %v3695, 0
        %v3714 = vsel %vm242, %v3696, 0
        %v3717 = vsel %vm242, %v3697, 0
        %v3720 = vsel %vm242, %v3698, 0
        %v3723 = vsel %vm242, %v3699, 0
        %v3726 = vsel %vm242, %v3700, 0
        %v3729 = vand.u32 %v3703, %v270
        %3731 = vmatprep.subr.bf16.mxu0 0
        %3732 = vmatpush1.bf16.msra.mxu0 0
        %3733 = vmatprep.subr.bf16.mxu0 0
        %3734 = vmatpush1.bf16.msra.mxu0 0
        %3735 = vmatprep.subr.bf16.mxu0 0
        %3736 = vmatpush1.bf16.msra.mxu0 0
        %3737 = vmatprep.subr.bf16.mxu0 0
        %3738 = vmatpush1.bf16.msra.mxu0 0
        %3739 = vmatprep.subr.bf16.mxu0 0
        %3740 = vmatpush1.bf16.msra.mxu0 0
        %3741 = vmatprep.subr.bf16.mxu0 0
        %3742 = vmatpush1.bf16.msra.mxu0 0
        %3743 = vmatprep.subr.bf16.mxu0 0
        %3744 = vmatpush1.bf16.msra.mxu0 0
        %3745 = vmatprep.subr.bf16.mxu0 0
        %3746 = vmatpush1.bf16.msra.mxu0 %v3729
        %3747 = vmatprep.subr.bf16.mxu0 0
        %3748 = vmatpush2.bf16.msra.mxu0 0
        %3749 = vmatprep.subr.bf16.mxu0 0
        %3750 = vmatpush2.bf16.msra.mxu0 0
        %3751 = vmatprep.subr.bf16.mxu0 0
        %3752 = vmatpush2.bf16.msra.mxu0 0
        %3753 = vmatprep.subr.bf16.mxu0 0
        %3754 = vmatpush2.bf16.msra.mxu0 0
        %3755 = vmatprep.subr.bf16.mxu0 0
        %3756 = vmatpush2.bf16.msra.mxu0 0
        %3757 = vmatprep.subr.bf16.mxu0 0
        %3758 = vmatpush2.bf16.msra.mxu0 0
        %3759 = vmatprep.subr.bf16.mxu0 0
        %3760 = vmatpush2.bf16.msra.mxu0 0
        %3761 = vmatprep.subr.bf16.mxu0 0
        %3762 = vmatpush2.bf16.msra.mxu0 0
        %3763 = vmatprep.mubr.bf16.mxu0 0
        %3764 = vmatmul.mubr.bf16.gmra.mxu0 %v3705
        %v3765 = vpop.f32.mrf.mxu0
        %v3766 = vadd.f32 0.0, %v3765
        %v3767 = vpop.f32.mrf.mxu0
        %v3768 = vpop.f32.mrf.mxu0
        %v3769 = vadd.f32 0.0, %v3768
        %v3770 = vpop.f32.mrf.mxu0
        %3771 = vmatprep.mubr.bf16.mxu0 0
        %3772 = vmatmul.mubr.bf16.gmra.mxu0 %v3708
        %v3773 = vpop.f32.mrf.mxu0
        %v3774 = vadd.f32 0.0, %v3773
        %v3775 = vpop.f32.mrf.mxu0
        %v3776 = vpop.f32.mrf.mxu0
        %v3777 = vadd.f32 0.0, %v3776
        %v3778 = vpop.f32.mrf.mxu0
        %3779 = vmatprep.mubr.bf16.mxu0 0
        %3780 = vmatmul.mubr.bf16.gmra.mxu0 %v3711
        %v3781 = vpop.f32.mrf.mxu0
        %v3782 = vadd.f32 0.0, %v3781
        %v3783 = vpop.f32.mrf.mxu0
        %v3784 = vpop.f32.mrf.mxu0
        %v3785 = vadd.f32 0.0, %v3784
        %v3786 = vpop.f32.mrf.mxu0
        %3787 = vmatprep.mubr.bf16.mxu0 0
        %3788 = vmatmul.mubr.bf16.gmra.mxu0 %v3714
        %v3789 = vpop.f32.mrf.mxu0
        %v3790 = vadd.f32 0.0, %v3789
        %v3791 = vpop.f32.mrf.mxu0
        %v3792 = vpop.f32.mrf.mxu0
        %v3793 = vadd.f32 0.0, %v3792
        %v3794 = vpop.f32.mrf.mxu0
        %3795 = vmatprep.mubr.bf16.mxu0 0
        %3796 = vmatmul.mubr.bf16.gmra.mxu0 %v3717
        %v3797 = vpop.f32.mrf.mxu0
        %v3798 = vadd.f32 0.0, %v3797
        %v3799 = vpop.f32.mrf.mxu0
        %v3800 = vpop.f32.mrf.mxu0
        %v3801 = vadd.f32 0.0, %v3800
        %v3802 = vpop.f32.mrf.mxu0
        %3803 = vmatprep.mubr.bf16.mxu0 0
        %3804 = vmatmul.mubr.bf16.gmra.mxu0 %v3720
        %v3805 = vpop.f32.mrf.mxu0
        %v3806 = vadd.f32 0.0, %v3805
        %v3807 = vpop.f32.mrf.mxu0
        %v3808 = vpop.f32.mrf.mxu0
        %v3809 = vadd.f32 0.0, %v3808
        %v3810 = vpop.f32.mrf.mxu0
        %3811 = vmatprep.mubr.bf16.mxu0 0
        %3812 = vmatmul.mubr.bf16.gmra.mxu0 %v3723
        %v3813 = vpop.f32.mrf.mxu0
        %v3814 = vadd.f32 0.0, %v3813
        %v3815 = vpop.f32.mrf.mxu0
        %v3816 = vpop.f32.mrf.mxu0
        %v3817 = vadd.f32 0.0, %v3816
        %v3818 = vpop.f32.mrf.mxu0
        %3819 = vmatprep.mubr.bf16.mxu0 0
        %3820 = vmatmul.mubr.bf16.gmra.mxu0 %v3726
        %v3821 = vpop.f32.mrf.mxu0
        %v3822 = vadd.f32 0.0, %v3821
        %v3823 = vpop.f32.mrf.mxu0
        %v3824 = vpop.f32.mrf.mxu0
        %v3825 = vadd.f32 0.0, %v3824
        %v3826 = vpop.f32.mrf.mxu0
        %3827 = vdwg.mxu0
        %v3828 = vadd.f32 %v3658, %v3766
        %v3829 = vadd.f32 %v3659, %v3769
        %v3830 = vadd.f32 %v3660, %v3774
        %v3831 = vadd.f32 %v3661, %v3777
        %v3832 = vadd.f32 %v3662, %v3782
        %v3833 = vadd.f32 %v3663, %v3785
        %v3834 = vadd.f32 %v3664, %v3790
        %v3835 = vadd.f32 %v3665, %v3793
        %v3836 = vadd.f32 %v3666, %v3798
        %v3837 = vadd.f32 %v3667, %v3801
        %v3838 = vadd.f32 %v3668, %v3806
        %v3839 = vadd.f32 %v3669, %v3809
        %v3840 = vadd.f32 %v3670, %v3814
        %v3841 = vadd.f32 %v3671, %v3817
        %v3842 = vadd.f32 %v3672, %v3822
        %v3843 = vadd.f32 %v3673, %v3825
        %v3844 = vld [vmem:[%s3676 + $0x1] sm:$0xff]
        %v3845 = vld [vmem:[%s3676 + $0x9] sm:$0xff]
        %v3846 = vld [vmem:[%s3676 + $0x19] sm:$0xff]
        %v3847 = vld [vmem:[%s3676 + $0x21] sm:$0xff]
        %v3848 = vld [vmem:[%s3676 + $0x31] sm:$0xff]
        %v3849 = vld [vmem:[%s3676 + $0x39] sm:$0xff]
        %v3850 = vld [vmem:[%s3676 + $0x49] sm:$0xff]
        %v3851 = vld [vmem:[%s3676 + $0x51] sm:$0xff]
        %v3852 = vld [vmem:[%s3676 + $0x61] sm:$0xff]
        %v3853 = vld [vmem:[%s3676 + $0x69] sm:$0xff]
        %v3854 = vld [vmem:[%s3676 + $0x79] sm:$0xff]
        %v3855 = vld [vmem:[%s3676 + $0x81] sm:$0xff]
        %v3856 = vld [vmem:[%s3676 + $0x91] sm:$0xff]
        %v3857 = vld [vmem:[%s3676 + $0x99] sm:$0xff]
        %v3858 = vld [vmem:[%s3676 + $0xa9] sm:$0xff]
        %v3859 = vld [vmem:[%s3676 + $0xb1] sm:$0xff]
        %v3860 = vpack.c.bf16 %v3845, %v3844
        %v3861 = vpack.c.bf16 %v3847, %v3846
        %v3862 = vpack.c.bf16 %v3849, %v3848
        %v3863 = vpack.c.bf16 %v3851, %v3850
        %v3864 = vpack.c.bf16 %v3853, %v3852
        %v3865 = vpack.c.bf16 %v3855, %v3854
        %v3866 = vpack.c.bf16 %v3857, %v3856
        %v3867 = vpack.c.bf16 %v3859, %v3858
        %s3868 = scalar_lea.vmem %s1, 88
        %v3869 = vld [vmem:[%s3868] sm:$0x7]
        %v3870 = vpack.c.bf16 %v3869, %v3869
        %v3872 = vsel %vm242, %v3860, 0
        %v3875 = vsel %vm242, %v3861, 0
        %v3878 = vsel %vm242, %v3862, 0
        %v3881 = vsel %vm242, %v3863, 0
        %v3884 = vsel %vm242, %v3864, 0
        %v3887 = vsel %vm242, %v3865, 0
        %v3890 = vsel %vm242, %v3866, 0
        %v3893 = vsel %vm242, %v3867, 0
        %v3896 = vand.u32 %v3870, %v270
        %3898 = vmatprep.subr.bf16.mxu0 0
        %3899 = vmatpush1.bf16.msra.mxu0 0
        %3900 = vmatprep.subr.bf16.mxu0 0
        %3901 = vmatpush1.bf16.msra.mxu0 0
        %3902 = vmatprep.subr.bf16.mxu0 0
        %3903 = vmatpush1.bf16.msra.mxu0 0
        %3904 = vmatprep.subr.bf16.mxu0 0
        %3905 = vmatpush1.bf16.msra.mxu0 0
        %3906 = vmatprep.subr.bf16.mxu0 0
        %3907 = vmatpush1.bf16.msra.mxu0 0
        %3908 = vmatprep.subr.bf16.mxu0 0
        %3909 = vmatpush1.bf16.msra.mxu0 0
        %3910 = vmatprep.subr.bf16.mxu0 0
        %3911 = vmatpush1.bf16.msra.mxu0 0
        %3912 = vmatprep.subr.bf16.mxu0 0
        %3913 = vmatpush1.bf16.msra.mxu0 %v3896
        %3914 = vmatprep.subr.bf16.mxu0 0
        %3915 = vmatpush2.bf16.msra.mxu0 0
        %3916 = vmatprep.subr.bf16.mxu0 0
        %3917 = vmatpush2.bf16.msra.mxu0 0
        %3918 = vmatprep.subr.bf16.mxu0 0
        %3919 = vmatpush2.bf16.msra.mxu0 0
        %3920 = vmatprep.subr.bf16.mxu0 0
        %3921 = vmatpush2.bf16.msra.mxu0 0
        %3922 = vmatprep.subr.bf16.mxu0 0
        %3923 = vmatpush2.bf16.msra.mxu0 0
        %3924 = vmatprep.subr.bf16.mxu0 0
        %3925 = vmatpush2.bf16.msra.mxu0 0
        %3926 = vmatprep.subr.bf16.mxu0 0
        %3927 = vmatpush2.bf16.msra.mxu0 0
        %3928 = vmatprep.subr.bf16.mxu0 0
        %3929 = vmatpush2.bf16.msra.mxu0 0
        %3930 = vmatprep.mubr.bf16.mxu0 0
        %3931 = vmatmul.mubr.bf16.gmra.mxu0 %v3872
        %v3932 = vpop.f32.mrf.mxu0
        %v3933 = vadd.f32 0.0, %v3932
        %v3934 = vpop.f32.mrf.mxu0
        %v3935 = vpop.f32.mrf.mxu0
        %v3936 = vadd.f32 0.0, %v3935
        %v3937 = vpop.f32.mrf.mxu0
        %3938 = vmatprep.mubr.bf16.mxu0 0
        %3939 = vmatmul.mubr.bf16.gmra.mxu0 %v3875
        %v3940 = vpop.f32.mrf.mxu0
        %v3941 = vadd.f32 0.0, %v3940
        %v3942 = vpop.f32.mrf.mxu0
        %v3943 = vpop.f32.mrf.mxu0
        %v3944 = vadd.f32 0.0, %v3943
        %v3945 = vpop.f32.mrf.mxu0
        %3946 = vmatprep.mubr.bf16.mxu0 0
        %3947 = vmatmul.mubr.bf16.gmra.mxu0 %v3878
        %v3948 = vpop.f32.mrf.mxu0
        %v3949 = vadd.f32 0.0, %v3948
        %v3950 = vpop.f32.mrf.mxu0
        %v3951 = vpop.f32.mrf.mxu0
        %v3952 = vadd.f32 0.0, %v3951
        %v3953 = vpop.f32.mrf.mxu0
        %3954 = vmatprep.mubr.bf16.mxu0 0
        %3955 = vmatmul.mubr.bf16.gmra.mxu0 %v3881
        %v3956 = vpop.f32.mrf.mxu0
        %v3957 = vadd.f32 0.0, %v3956
        %v3958 = vpop.f32.mrf.mxu0
        %v3959 = vpop.f32.mrf.mxu0
        %v3960 = vadd.f32 0.0, %v3959
        %v3961 = vpop.f32.mrf.mxu0
        %3962 = vmatprep.mubr.bf16.mxu0 0
        %3963 = vmatmul.mubr.bf16.gmra.mxu0 %v3884
        %v3964 = vpop.f32.mrf.mxu0
        %v3965 = vadd.f32 0.0, %v3964
        %v3966 = vpop.f32.mrf.mxu0
        %v3967 = vpop.f32.mrf.mxu0
        %v3968 = vadd.f32 0.0, %v3967
        %v3969 = vpop.f32.mrf.mxu0
        %3970 = vmatprep.mubr.bf16.mxu0 0
        %3971 = vmatmul.mubr.bf16.gmra.mxu0 %v3887
        %v3972 = vpop.f32.mrf.mxu0
        %v3973 = vadd.f32 0.0, %v3972
        %v3974 = vpop.f32.mrf.mxu0
        %v3975 = vpop.f32.mrf.mxu0
        %v3976 = vadd.f32 0.0, %v3975
        %v3977 = vpop.f32.mrf.mxu0
        %3978 = vmatprep.mubr.bf16.mxu0 0
        %3979 = vmatmul.mubr.bf16.gmra.mxu0 %v3890
        %v3980 = vpop.f32.mrf.mxu0
        %v3981 = vadd.f32 0.0, %v3980
        %v3982 = vpop.f32.mrf.mxu0
        %v3983 = vpop.f32.mrf.mxu0
        %v3984 = vadd.f32 0.0, %v3983
        %v3985 = vpop.f32.mrf.mxu0
        %3986 = vmatprep.mubr.bf16.mxu0 0
        %3987 = vmatmul.mubr.bf16.gmra.mxu0 %v3893
        %v3988 = vpop.f32.mrf.mxu0
        %v3989 = vadd.f32 0.0, %v3988
        %v3990 = vpop.f32.mrf.mxu0
        %v3991 = vpop.f32.mrf.mxu0
        %v3992 = vadd.f32 0.0, %v3991
        %v3993 = vpop.f32.mrf.mxu0
        %3994 = vdwg.mxu0
        %v3995 = vadd.f32 %v3828, %v3933
        %v3996 = vadd.f32 %v3829, %v3936
        %v3997 = vadd.f32 %v3830, %v3941
        %v3998 = vadd.f32 %v3831, %v3944
        %v3999 = vadd.f32 %v3832, %v3949
        %v4000 = vadd.f32 %v3833, %v3952
        %v4001 = vadd.f32 %v3834, %v3957
        %v4002 = vadd.f32 %v3835, %v3960
        %v4003 = vadd.f32 %v3836, %v3965
        %v4004 = vadd.f32 %v3837, %v3968
        %v4005 = vadd.f32 %v3838, %v3973
        %v4006 = vadd.f32 %v3839, %v3976
        %v4007 = vadd.f32 %v3840, %v3981
        %v4008 = vadd.f32 %v3841, %v3984
        %v4009 = vadd.f32 %v3842, %v3989
        %v4010 = vadd.f32 %v3843, %v3992
        %v4011 = vld [vmem:[%s3676 + $0x2] sm:$0xff]
        %v4012 = vld [vmem:[%s3676 + $0xa] sm:$0xff]
        %v4013 = vld [vmem:[%s3676 + $0x1a] sm:$0xff]
        %v4014 = vld [vmem:[%s3676 + $0x22] sm:$0xff]
        %v4015 = vld [vmem:[%s3676 + $0x32] sm:$0xff]
        %v4016 = vld [vmem:[%s3676 + $0x3a] sm:$0xff]
        %v4017 = vld [vmem:[%s3676 + $0x4a] sm:$0xff]
        %v4018 = vld [vmem:[%s3676 + $0x52] sm:$0xff]
        %v4019 = vld [vmem:[%s3676 + $0x62] sm:$0xff]
        %v4020 = vld [vmem:[%s3676 + $0x6a] sm:$0xff]
        %v4021 = vld [vmem:[%s3676 + $0x7a] sm:$0xff]
        %v4022 = vld [vmem:[%s3676 + $0x82] sm:$0xff]
        %v4023 = vld [vmem:[%s3676 + $0x92] sm:$0xff]
        %v4024 = vld [vmem:[%s3676 + $0x9a] sm:$0xff]
        %v4025 = vld [vmem:[%s3676 + $0xaa] sm:$0xff]
        %v4026 = vld [vmem:[%s3676 + $0xb2] sm:$0xff]
        %v4027 = vpack.c.bf16 %v4012, %v4011
        %v4028 = vpack.c.bf16 %v4014, %v4013
        %v4029 = vpack.c.bf16 %v4016, %v4015
        %v4030 = vpack.c.bf16 %v4018, %v4017
        %v4031 = vpack.c.bf16 %v4020, %v4019
        %v4032 = vpack.c.bf16 %v4022, %v4021
        %v4033 = vpack.c.bf16 %v4024, %v4023
        %v4034 = vpack.c.bf16 %v4026, %v4025
        %s4035 = scalar_lea.vmem %s1, 92
        %v4036 = vld [vmem:[%s4035] sm:$0x7]
        %v4037 = vpack.c.bf16 %v4036, %v4036
        %v4039 = vsel %vm242, %v4027, 0
        %v4042 = vsel %vm242, %v4028, 0
        %v4045 = vsel %vm242, %v4029, 0
        %v4048 = vsel %vm242, %v4030, 0
        %v4051 = vsel %vm242, %v4031, 0
        %v4054 = vsel %vm242, %v4032, 0
        %v4057 = vsel %vm242, %v4033, 0
        %v4060 = vsel %vm242, %v4034, 0
        %v4063 = vand.u32 %v4037, %v270
        %4065 = vmatprep.subr.bf16.mxu0 0
        %4066 = vmatpush1.bf16.msra.mxu0 0
        %4067 = vmatprep.subr.bf16.mxu0 0
        %4068 = vmatpush1.bf16.msra.mxu0 0
        %4069 = vmatprep.subr.bf16.mxu0 0
        %4070 = vmatpush1.bf16.msra.mxu0 0
        %4071 = vmatprep.subr.bf16.mxu0 0
        %4072 = vmatpush1.bf16.msra.mxu0 0
        %4073 = vmatprep.subr.bf16.mxu0 0
        %4074 = vmatpush1.bf16.msra.mxu0 0
        %4075 = vmatprep.subr.bf16.mxu0 0
        %4076 = vmatpush1.bf16.msra.mxu0 0
        %4077 = vmatprep.subr.bf16.mxu0 0
        %4078 = vmatpush1.bf16.msra.mxu0 0
        %4079 = vmatprep.subr.bf16.mxu0 0
        %4080 = vmatpush1.bf16.msra.mxu0 %v4063
        %4081 = vmatprep.subr.bf16.mxu0 0
        %4082 = vmatpush2.bf16.msra.mxu0 0
        %4083 = vmatprep.subr.bf16.mxu0 0
        %4084 = vmatpush2.bf16.msra.mxu0 0
        %4085 = vmatprep.subr.bf16.mxu0 0
        %4086 = vmatpush2.bf16.msra.mxu0 0
        %4087 = vmatprep.subr.bf16.mxu0 0
        %4088 = vmatpush2.bf16.msra.mxu0 0
        %4089 = vmatprep.subr.bf16.mxu0 0
        %4090 = vmatpush2.bf16.msra.mxu0 0
        %4091 = vmatprep.subr.bf16.mxu0 0
        %4092 = vmatpush2.bf16.msra.mxu0 0
        %4093 = vmatprep.subr.bf16.mxu0 0
        %4094 = vmatpush2.bf16.msra.mxu0 0
        %4095 = vmatprep.subr.bf16.mxu0 0
        %4096 = vmatpush2.bf16.msra.mxu0 0
        %4097 = vmatprep.mubr.bf16.mxu0 0
        %4098 = vmatmul.mubr.bf16.gmra.mxu0 %v4039
        %v4099 = vpop.f32.mrf.mxu0
        %v4100 = vadd.f32 0.0, %v4099
        %v4101 = vpop.f32.mrf.mxu0
        %v4102 = vpop.f32.mrf.mxu0
        %v4103 = vadd.f32 0.0, %v4102
        %v4104 = vpop.f32.mrf.mxu0
        %4105 = vmatprep.mubr.bf16.mxu0 0
        %4106 = vmatmul.mubr.bf16.gmra.mxu0 %v4042
        %v4107 = vpop.f32.mrf.mxu0
        %v4108 = vadd.f32 0.0, %v4107
        %v4109 = vpop.f32.mrf.mxu0
        %v4110 = vpop.f32.mrf.mxu0
        %v4111 = vadd.f32 0.0, %v4110
        %v4112 = vpop.f32.mrf.mxu0
        %4113 = vmatprep.mubr.bf16.mxu0 0
        %4114 = vmatmul.mubr.bf16.gmra.mxu0 %v4045
        %v4115 = vpop.f32.mrf.mxu0
        %v4116 = vadd.f32 0.0, %v4115
        %v4117 = vpop.f32.mrf.mxu0
        %v4118 = vpop.f32.mrf.mxu0
        %v4119 = vadd.f32 0.0, %v4118
        %v4120 = vpop.f32.mrf.mxu0
        %4121 = vmatprep.mubr.bf16.mxu0 0
        %4122 = vmatmul.mubr.bf16.gmra.mxu0 %v4048
        %v4123 = vpop.f32.mrf.mxu0
        %v4124 = vadd.f32 0.0, %v4123
        %v4125 = vpop.f32.mrf.mxu0
        %v4126 = vpop.f32.mrf.mxu0
        %v4127 = vadd.f32 0.0, %v4126
        %v4128 = vpop.f32.mrf.mxu0
        %4129 = vmatprep.mubr.bf16.mxu0 0
        %4130 = vmatmul.mubr.bf16.gmra.mxu0 %v4051
        %v4131 = vpop.f32.mrf.mxu0
        %v4132 = vadd.f32 0.0, %v4131
        %v4133 = vpop.f32.mrf.mxu0
        %v4134 = vpop.f32.mrf.mxu0
        %v4135 = vadd.f32 0.0, %v4134
        %v4136 = vpop.f32.mrf.mxu0
        %4137 = vmatprep.mubr.bf16.mxu0 0
        %4138 = vmatmul.mubr.bf16.gmra.mxu0 %v4054
        %v4139 = vpop.f32.mrf.mxu0
        %v4140 = vadd.f32 0.0, %v4139
        %v4141 = vpop.f32.mrf.mxu0
        %v4142 = vpop.f32.mrf.mxu0
        %v4143 = vadd.f32 0.0, %v4142
        %v4144 = vpop.f32.mrf.mxu0
        %4145 = vmatprep.mubr.bf16.mxu0 0
        %4146 = vmatmul.mubr.bf16.gmra.mxu0 %v4057
        %v4147 = vpop.f32.mrf.mxu0
        %v4148 = vadd.f32 0.0, %v4147
        %v4149 = vpop.f32.mrf.mxu0
        %v4150 = vpop.f32.mrf.mxu0
        %v4151 = vadd.f32 0.0, %v4150
        %v4152 = vpop.f32.mrf.mxu0
        %4153 = vmatprep.mubr.bf16.mxu0 0
        %4154 = vmatmul.mubr.bf16.gmra.mxu0 %v4060
        %v4155 = vpop.f32.mrf.mxu0
        %v4156 = vadd.f32 0.0, %v4155
        %v4157 = vpop.f32.mrf.mxu0
        %v4158 = vpop.f32.mrf.mxu0
        %v4159 = vadd.f32 0.0, %v4158
        %v4160 = vpop.f32.mrf.mxu0
        %4161 = vdwg.mxu0
        %v4162 = vadd.f32 %v3995, %v4100
        %v4163 = vadd.f32 %v3996, %v4103
        %v4164 = vadd.f32 %v3997, %v4108
        %v4165 = vadd.f32 %v3998, %v4111
        %v4166 = vadd.f32 %v3999, %v4116
        %v4167 = vadd.f32 %v4000, %v4119
        %v4168 = vadd.f32 %v4001, %v4124
        %v4169 = vadd.f32 %v4002, %v4127
        %v4170 = vadd.f32 %v4003, %v4132
        %v4171 = vadd.f32 %v4004, %v4135
        %v4172 = vadd.f32 %v4005, %v4140
        %v4173 = vadd.f32 %v4006, %v4143
        %v4174 = vadd.f32 %v4007, %v4148
        %v4175 = vadd.f32 %v4008, %v4151
        %v4176 = vadd.f32 %v4009, %v4156
        %v4177 = vadd.f32 %v4010, %v4159
        %v4178 = vld [vmem:[%s3676 + $0x3] sm:$0xff]
        %v4179 = vld [vmem:[%s3676 + $0xb] sm:$0xff]
        %v4180 = vld [vmem:[%s3676 + $0x1b] sm:$0xff]
        %v4181 = vld [vmem:[%s3676 + $0x23] sm:$0xff]
        %v4182 = vld [vmem:[%s3676 + $0x33] sm:$0xff]
        %v4183 = vld [vmem:[%s3676 + $0x3b] sm:$0xff]
        %v4184 = vld [vmem:[%s3676 + $0x4b] sm:$0xff]
        %v4185 = vld [vmem:[%s3676 + $0x53] sm:$0xff]
        %v4186 = vld [vmem:[%s3676 + $0x63] sm:$0xff]
        %v4187 = vld [vmem:[%s3676 + $0x6b] sm:$0xff]
        %v4188 = vld [vmem:[%s3676 + $0x7b] sm:$0xff]
        %v4189 = vld [vmem:[%s3676 + $0x83] sm:$0xff]
        %v4190 = vld [vmem:[%s3676 + $0x93] sm:$0xff]
        %v4191 = vld [vmem:[%s3676 + $0x9b] sm:$0xff]
        %v4192 = vld [vmem:[%s3676 + $0xab] sm:$0xff]
        %v4193 = vld [vmem:[%s3676 + $0xb3] sm:$0xff]
        %v4194 = vpack.c.bf16 %v4179, %v4178
        %v4195 = vpack.c.bf16 %v4181, %v4180
        %v4196 = vpack.c.bf16 %v4183, %v4182
        %v4197 = vpack.c.bf16 %v4185, %v4184
        %v4198 = vpack.c.bf16 %v4187, %v4186
        %v4199 = vpack.c.bf16 %v4189, %v4188
        %v4200 = vpack.c.bf16 %v4191, %v4190
        %v4201 = vpack.c.bf16 %v4193, %v4192
        %s4202 = scalar_lea.vmem %s1, 96
        %v4203 = vld [vmem:[%s4202] sm:$0x7]
        %v4204 = vpack.c.bf16 %v4203, %v4203
        %v4206 = vsel %vm242, %v4194, 0
        %v4209 = vsel %vm242, %v4195, 0
        %v4212 = vsel %vm242, %v4196, 0
        %v4215 = vsel %vm242, %v4197, 0
        %v4218 = vsel %vm242, %v4198, 0
        %v4221 = vsel %vm242, %v4199, 0
        %v4224 = vsel %vm242, %v4200, 0
        %v4227 = vsel %vm242, %v4201, 0
        %v4230 = vand.u32 %v4204, %v270
        %4232 = vmatprep.subr.bf16.mxu0 0
        %4233 = vmatpush1.bf16.msra.mxu0 0
        %4234 = vmatprep.subr.bf16.mxu0 0
        %4235 = vmatpush1.bf16.msra.mxu0 0
        %4236 = vmatprep.subr.bf16.mxu0 0
        %4237 = vmatpush1.bf16.msra.mxu0 0
        %4238 = vmatprep.subr.bf16.mxu0 0
        %4239 = vmatpush1.bf16.msra.mxu0 0
        %4240 = vmatprep.subr.bf16.mxu0 0
        %4241 = vmatpush1.bf16.msra.mxu0 0
        %4242 = vmatprep.subr.bf16.mxu0 0
        %4243 = vmatpush1.bf16.msra.mxu0 0
        %4244 = vmatprep.subr.bf16.mxu0 0
        %4245 = vmatpush1.bf16.msra.mxu0 0
        %4246 = vmatprep.subr.bf16.mxu0 0
        %4247 = vmatpush1.bf16.msra.mxu0 %v4230
        %4248 = vmatprep.subr.bf16.mxu0 0
        %4249 = vmatpush2.bf16.msra.mxu0 0
        %4250 = vmatprep.subr.bf16.mxu0 0
        %4251 = vmatpush2.bf16.msra.mxu0 0
        %4252 = vmatprep.subr.bf16.mxu0 0
        %4253 = vmatpush2.bf16.msra.mxu0 0
        %4254 = vmatprep.subr.bf16.mxu0 0
        %4255 = vmatpush2.bf16.msra.mxu0 0
        %4256 = vmatprep.subr.bf16.mxu0 0
        %4257 = vmatpush2.bf16.msra.mxu0 0
        %4258 = vmatprep.subr.bf16.mxu0 0
        %4259 = vmatpush2.bf16.msra.mxu0 0
        %4260 = vmatprep.subr.bf16.mxu0 0
        %4261 = vmatpush2.bf16.msra.mxu0 0
        %4262 = vmatprep.subr.bf16.mxu0 0
        %4263 = vmatpush2.bf16.msra.mxu0 0
        %4264 = vmatprep.mubr.bf16.mxu0 0
        %4265 = vmatmul.mubr.bf16.gmra.mxu0 %v4206
        %v4266 = vpop.f32.mrf.mxu0
        %v4267 = vadd.f32 0.0, %v4266
        %v4268 = vpop.f32.mrf.mxu0
        %v4269 = vpop.f32.mrf.mxu0
        %v4270 = vadd.f32 0.0, %v4269
        %v4271 = vpop.f32.mrf.mxu0
        %4272 = vmatprep.mubr.bf16.mxu0 0
        %4273 = vmatmul.mubr.bf16.gmra.mxu0 %v4209
        %v4274 = vpop.f32.mrf.mxu0
        %v4275 = vadd.f32 0.0, %v4274
        %v4276 = vpop.f32.mrf.mxu0
        %v4277 = vpop.f32.mrf.mxu0
        %v4278 = vadd.f32 0.0, %v4277
        %v4279 = vpop.f32.mrf.mxu0
        %4280 = vmatprep.mubr.bf16.mxu0 0
        %4281 = vmatmul.mubr.bf16.gmra.mxu0 %v4212
        %v4282 = vpop.f32.mrf.mxu0
        %v4283 = vadd.f32 0.0, %v4282
        %v4284 = vpop.f32.mrf.mxu0
        %v4285 = vpop.f32.mrf.mxu0
        %v4286 = vadd.f32 0.0, %v4285
        %v4287 = vpop.f32.mrf.mxu0
        %4288 = vmatprep.mubr.bf16.mxu0 0
        %4289 = vmatmul.mubr.bf16.gmra.mxu0 %v4215
        %v4290 = vpop.f32.mrf.mxu0
        %v4291 = vadd.f32 0.0, %v4290
        %v4292 = vpop.f32.mrf.mxu0
        %v4293 = vpop.f32.mrf.mxu0
        %v4294 = vadd.f32 0.0, %v4293
        %v4295 = vpop.f32.mrf.mxu0
        %4296 = vmatprep.mubr.bf16.mxu0 0
        %4297 = vmatmul.mubr.bf16.gmra.mxu0 %v4218
        %v4298 = vpop.f32.mrf.mxu0
        %v4299 = vadd.f32 0.0, %v4298
        %v4300 = vpop.f32.mrf.mxu0
        %v4301 = vpop.f32.mrf.mxu0
        %v4302 = vadd.f32 0.0, %v4301
        %v4303 = vpop.f32.mrf.mxu0
        %4304 = vmatprep.mubr.bf16.mxu0 0
        %4305 = vmatmul.mubr.bf16.gmra.mxu0 %v4221
        %v4306 = vpop.f32.mrf.mxu0
        %v4307 = vadd.f32 0.0, %v4306
        %v4308 = vpop.f32.mrf.mxu0
        %v4309 = vpop.f32.mrf.mxu0
        %v4310 = vadd.f32 0.0, %v4309
        %v4311 = vpop.f32.mrf.mxu0
        %4312 = vmatprep.mubr.bf16.mxu0 0
        %4313 = vmatmul.mubr.bf16.gmra.mxu0 %v4224
        %v4314 = vpop.f32.mrf.mxu0
        %v4315 = vadd.f32 0.0, %v4314
        %v4316 = vpop.f32.mrf.mxu0
        %v4317 = vpop.f32.mrf.mxu0
        %v4318 = vadd.f32 0.0, %v4317
        %v4319 = vpop.f32.mrf.mxu0
        %4320 = vmatprep.mubr.bf16.mxu0 0
        %4321 = vmatmul.mubr.bf16.gmra.mxu0 %v4227
        %v4322 = vpop.f32.mrf.mxu0
        %v4323 = vadd.f32 0.0, %v4322
        %v4324 = vpop.f32.mrf.mxu0
        %v4325 = vpop.f32.mrf.mxu0
        %v4326 = vadd.f32 0.0, %v4325
        %v4327 = vpop.f32.mrf.mxu0
        %4328 = vdwg.mxu0
        %v4329 = vadd.f32 %v4162, %v4267
        %v4330 = vadd.f32 %v4163, %v4270
        %v4331 = vadd.f32 %v4164, %v4275
        %v4332 = vadd.f32 %v4165, %v4278
        %v4333 = vadd.f32 %v4166, %v4283
        %v4334 = vadd.f32 %v4167, %v4286
        %v4335 = vadd.f32 %v4168, %v4291
        %v4336 = vadd.f32 %v4169, %v4294
        %v4337 = vadd.f32 %v4170, %v4299
        %v4338 = vadd.f32 %v4171, %v4302
        %v4339 = vadd.f32 %v4172, %v4307
        %v4340 = vadd.f32 %v4173, %v4310
        %v4341 = vadd.f32 %v4174, %v4315
        %v4342 = vadd.f32 %v4175, %v4318
        %v4343 = vadd.f32 %v4176, %v4323
        %v4344 = vadd.f32 %v4177, %v4326
        %v4345 = vld [vmem:[%s3676 + $0x4] sm:$0xff]
        %v4346 = vld [vmem:[%s3676 + $0xc] sm:$0xff]
        %v4347 = vld [vmem:[%s3676 + $0x1c] sm:$0xff]
        %v4348 = vld [vmem:[%s3676 + $0x24] sm:$0xff]
        %v4349 = vld [vmem:[%s3676 + $0x34] sm:$0xff]
        %v4350 = vld [vmem:[%s3676 + $0x3c] sm:$0xff]
        %v4351 = vld [vmem:[%s3676 + $0x4c] sm:$0xff]
        %v4352 = vld [vmem:[%s3676 + $0x54] sm:$0xff]
        %v4353 = vld [vmem:[%s3676 + $0x64] sm:$0xff]
        %v4354 = vld [vmem:[%s3676 + $0x6c] sm:$0xff]
        %v4355 = vld [vmem:[%s3676 + $0x7c] sm:$0xff]
        %v4356 = vld [vmem:[%s3676 + $0x84] sm:$0xff]
        %v4357 = vld [vmem:[%s3676 + $0x94] sm:$0xff]
        %v4358 = vld [vmem:[%s3676 + $0x9c] sm:$0xff]
        %v4359 = vld [vmem:[%s3676 + $0xac] sm:$0xff]
        %v4360 = vld [vmem:[%s3676 + $0xb4] sm:$0xff]
        %v4361 = vpack.c.bf16 %v4346, %v4345
        %v4362 = vpack.c.bf16 %v4348, %v4347
        %v4363 = vpack.c.bf16 %v4350, %v4349
        %v4364 = vpack.c.bf16 %v4352, %v4351
        %v4365 = vpack.c.bf16 %v4354, %v4353
        %v4366 = vpack.c.bf16 %v4356, %v4355
        %v4367 = vpack.c.bf16 %v4358, %v4357
        %v4368 = vpack.c.bf16 %v4360, %v4359
        %s4369 = scalar_lea.vmem %s1, 100
        %v4370 = vld [vmem:[%s4369] sm:$0x7]
        %v4371 = vpack.c.bf16 %v4370, %v4370
        %v4373 = vsel %vm242, %v4361, 0
        %v4376 = vsel %vm242, %v4362, 0
        %v4379 = vsel %vm242, %v4363, 0
        %v4382 = vsel %vm242, %v4364, 0
        %v4385 = vsel %vm242, %v4365, 0
        %v4388 = vsel %vm242, %v4366, 0
        %v4391 = vsel %vm242, %v4367, 0
        %v4394 = vsel %vm242, %v4368, 0
        %v4397 = vand.u32 %v4371, %v270
        %4399 = vmatprep.subr.bf16.mxu0 0
        %4400 = vmatpush1.bf16.msra.mxu0 0
        %4401 = vmatprep.subr.bf16.mxu0 0
        %4402 = vmatpush1.bf16.msra.mxu0 0
        %4403 = vmatprep.subr.bf16.mxu0 0
        %4404 = vmatpush1.bf16.msra.mxu0 0
        %4405 = vmatprep.subr.bf16.mxu0 0
        %4406 = vmatpush1.bf16.msra.mxu0 0
        %4407 = vmatprep.subr.bf16.mxu0 0
        %4408 = vmatpush1.bf16.msra.mxu0 0
        %4409 = vmatprep.subr.bf16.mxu0 0
        %4410 = vmatpush1.bf16.msra.mxu0 0
        %4411 = vmatprep.subr.bf16.mxu0 0
        %4412 = vmatpush1.bf16.msra.mxu0 0
        %4413 = vmatprep.subr.bf16.mxu0 0
        %4414 = vmatpush1.bf16.msra.mxu0 %v4397
        %4415 = vmatprep.subr.bf16.mxu0 0
        %4416 = vmatpush2.bf16.msra.mxu0 0
        %4417 = vmatprep.subr.bf16.mxu0 0
        %4418 = vmatpush2.bf16.msra.mxu0 0
        %4419 = vmatprep.subr.bf16.mxu0 0
        %4420 = vmatpush2.bf16.msra.mxu0 0
        %4421 = vmatprep.subr.bf16.mxu0 0
        %4422 = vmatpush2.bf16.msra.mxu0 0
        %4423 = vmatprep.subr.bf16.mxu0 0
        %4424 = vmatpush2.bf16.msra.mxu0 0
        %4425 = vmatprep.subr.bf16.mxu0 0
        %4426 = vmatpush2.bf16.msra.mxu0 0
        %4427 = vmatprep.subr.bf16.mxu0 0
        %4428 = vmatpush2.bf16.msra.mxu0 0
        %4429 = vmatprep.subr.bf16.mxu0 0
        %4430 = vmatpush2.bf16.msra.mxu0 0
        %4431 = vmatprep.mubr.bf16.mxu0 0
        %4432 = vmatmul.mubr.bf16.gmra.mxu0 %v4373
        %v4433 = vpop.f32.mrf.mxu0
        %v4434 = vadd.f32 0.0, %v4433
        %v4435 = vpop.f32.mrf.mxu0
        %v4436 = vpop.f32.mrf.mxu0
        %v4437 = vadd.f32 0.0, %v4436
        %v4438 = vpop.f32.mrf.mxu0
        %4439 = vmatprep.mubr.bf16.mxu0 0
        %4440 = vmatmul.mubr.bf16.gmra.mxu0 %v4376
        %v4441 = vpop.f32.mrf.mxu0
        %v4442 = vadd.f32 0.0, %v4441
        %v4443 = vpop.f32.mrf.mxu0
        %v4444 = vpop.f32.mrf.mxu0
        %v4445 = vadd.f32 0.0, %v4444
        %v4446 = vpop.f32.mrf.mxu0
        %4447 = vmatprep.mubr.bf16.mxu0 0
        %4448 = vmatmul.mubr.bf16.gmra.mxu0 %v4379
        %v4449 = vpop.f32.mrf.mxu0
        %v4450 = vadd.f32 0.0, %v4449
        %v4451 = vpop.f32.mrf.mxu0
        %v4452 = vpop.f32.mrf.mxu0
        %v4453 = vadd.f32 0.0, %v4452
        %v4454 = vpop.f32.mrf.mxu0
        %4455 = vmatprep.mubr.bf16.mxu0 0
        %4456 = vmatmul.mubr.bf16.gmra.mxu0 %v4382
        %v4457 = vpop.f32.mrf.mxu0
        %v4458 = vadd.f32 0.0, %v4457
        %v4459 = vpop.f32.mrf.mxu0
        %v4460 = vpop.f32.mrf.mxu0
        %v4461 = vadd.f32 0.0, %v4460
        %v4462 = vpop.f32.mrf.mxu0
        %4463 = vmatprep.mubr.bf16.mxu0 0
        %4464 = vmatmul.mubr.bf16.gmra.mxu0 %v4385
        %v4465 = vpop.f32.mrf.mxu0
        %v4466 = vadd.f32 0.0, %v4465
        %v4467 = vpop.f32.mrf.mxu0
        %v4468 = vpop.f32.mrf.mxu0
        %v4469 = vadd.f32 0.0, %v4468
        %v4470 = vpop.f32.mrf.mxu0
        %4471 = vmatprep.mubr.bf16.mxu0 0
        %4472 = vmatmul.mubr.bf16.gmra.mxu0 %v4388
        %v4473 = vpop.f32.mrf.mxu0
        %v4474 = vadd.f32 0.0, %v4473
        %v4475 = vpop.f32.mrf.mxu0
        %v4476 = vpop.f32.mrf.mxu0
        %v4477 = vadd.f32 0.0, %v4476
        %v4478 = vpop.f32.mrf.mxu0
        %4479 = vmatprep.mubr.bf16.mxu0 0
        %4480 = vmatmul.mubr.bf16.gmra.mxu0 %v4391
        %v4481 = vpop.f32.mrf.mxu0
        %v4482 = vadd.f32 0.0, %v4481
        %v4483 = vpop.f32.mrf.mxu0
        %v4484 = vpop.f32.mrf.mxu0
        %v4485 = vadd.f32 0.0, %v4484
        %v4486 = vpop.f32.mrf.mxu0
        %4487 = vmatprep.mubr.bf16.mxu0 0
        %4488 = vmatmul.mubr.bf16.gmra.mxu0 %v4394
        %v4489 = vpop.f32.mrf.mxu0
        %v4490 = vadd.f32 0.0, %v4489
        %v4491 = vpop.f32.mrf.mxu0
        %v4492 = vpop.f32.mrf.mxu0
        %v4493 = vadd.f32 0.0, %v4492
        %v4494 = vpop.f32.mrf.mxu0
        %4495 = vdwg.mxu0
        %v4496 = vadd.f32 %v4329, %v4434
        %v4497 = vadd.f32 %v4330, %v4437
        %v4498 = vadd.f32 %v4331, %v4442
        %v4499 = vadd.f32 %v4332, %v4445
        %v4500 = vadd.f32 %v4333, %v4450
        %v4501 = vadd.f32 %v4334, %v4453
        %v4502 = vadd.f32 %v4335, %v4458
        %v4503 = vadd.f32 %v4336, %v4461
        %v4504 = vadd.f32 %v4337, %v4466
        %v4505 = vadd.f32 %v4338, %v4469
        %v4506 = vadd.f32 %v4339, %v4474
        %v4507 = vadd.f32 %v4340, %v4477
        %v4508 = vadd.f32 %v4341, %v4482
        %v4509 = vadd.f32 %v4342, %v4485
        %v4510 = vadd.f32 %v4343, %v4490
        %v4511 = vadd.f32 %v4344, %v4493
        %v4512 = vld [vmem:[%s3676 + $0x5] sm:$0xff]
        %v4513 = vld [vmem:[%s3676 + $0xd] sm:$0xff]
        %v4514 = vld [vmem:[%s3676 + $0x1d] sm:$0xff]
        %v4515 = vld [vmem:[%s3676 + $0x25] sm:$0xff]
        %v4516 = vld [vmem:[%s3676 + $0x35] sm:$0xff]
        %v4517 = vld [vmem:[%s3676 + $0x3d] sm:$0xff]
        %v4518 = vld [vmem:[%s3676 + $0x4d] sm:$0xff]
        %v4519 = vld [vmem:[%s3676 + $0x55] sm:$0xff]
        %v4520 = vld [vmem:[%s3676 + $0x65] sm:$0xff]
        %v4521 = vld [vmem:[%s3676 + $0x6d] sm:$0xff]
        %v4522 = vld [vmem:[%s3676 + $0x7d] sm:$0xff]
        %v4523 = vld [vmem:[%s3676 + $0x85] sm:$0xff]
        %v4524 = vld [vmem:[%s3676 + $0x95] sm:$0xff]
        %v4525 = vld [vmem:[%s3676 + $0x9d] sm:$0xff]
        %v4526 = vld [vmem:[%s3676 + $0xad] sm:$0xff]
        %v4527 = vld [vmem:[%s3676 + $0xb5] sm:$0xff]
        %v4528 = vpack.c.bf16 %v4513, %v4512
        %v4529 = vpack.c.bf16 %v4515, %v4514
        %v4530 = vpack.c.bf16 %v4517, %v4516
        %v4531 = vpack.c.bf16 %v4519, %v4518
        %v4532 = vpack.c.bf16 %v4521, %v4520
        %v4533 = vpack.c.bf16 %v4523, %v4522
        %v4534 = vpack.c.bf16 %v4525, %v4524
        %v4535 = vpack.c.bf16 %v4527, %v4526
        %s4536 = scalar_lea.vmem %s1, 104
        %v4537 = vld [vmem:[%s4536] sm:$0x7]
        %v4538 = vpack.c.bf16 %v4537, %v4537
        %v4540 = vsel %vm242, %v4528, 0
        %v4543 = vsel %vm242, %v4529, 0
        %v4546 = vsel %vm242, %v4530, 0
        %v4549 = vsel %vm242, %v4531, 0
        %v4552 = vsel %vm242, %v4532, 0
        %v4555 = vsel %vm242, %v4533, 0
        %v4558 = vsel %vm242, %v4534, 0
        %v4561 = vsel %vm242, %v4535, 0
        %v4564 = vand.u32 %v4538, %v270
        %4566 = vmatprep.subr.bf16.mxu0 0
        %4567 = vmatpush1.bf16.msra.mxu0 0
        %4568 = vmatprep.subr.bf16.mxu0 0
        %4569 = vmatpush1.bf16.msra.mxu0 0
        %4570 = vmatprep.subr.bf16.mxu0 0
        %4571 = vmatpush1.bf16.msra.mxu0 0
        %4572 = vmatprep.subr.bf16.mxu0 0
        %4573 = vmatpush1.bf16.msra.mxu0 0
        %4574 = vmatprep.subr.bf16.mxu0 0
        %4575 = vmatpush1.bf16.msra.mxu0 0
        %4576 = vmatprep.subr.bf16.mxu0 0
        %4577 = vmatpush1.bf16.msra.mxu0 0
        %4578 = vmatprep.subr.bf16.mxu0 0
        %4579 = vmatpush1.bf16.msra.mxu0 0
        %4580 = vmatprep.subr.bf16.mxu0 0
        %4581 = vmatpush1.bf16.msra.mxu0 %v4564
        %4582 = vmatprep.subr.bf16.mxu0 0
        %4583 = vmatpush2.bf16.msra.mxu0 0
        %4584 = vmatprep.subr.bf16.mxu0 0
        %4585 = vmatpush2.bf16.msra.mxu0 0
        %4586 = vmatprep.subr.bf16.mxu0 0
        %4587 = vmatpush2.bf16.msra.mxu0 0
        %4588 = vmatprep.subr.bf16.mxu0 0
        %4589 = vmatpush2.bf16.msra.mxu0 0
        %4590 = vmatprep.subr.bf16.mxu0 0
        %4591 = vmatpush2.bf16.msra.mxu0 0
        %4592 = vmatprep.subr.bf16.mxu0 0
        %4593 = vmatpush2.bf16.msra.mxu0 0
        %4594 = vmatprep.subr.bf16.mxu0 0
        %4595 = vmatpush2.bf16.msra.mxu0 0
        %4596 = vmatprep.subr.bf16.mxu0 0
        %4597 = vmatpush2.bf16.msra.mxu0 0
        %4598 = vmatprep.mubr.bf16.mxu0 0
        %4599 = vmatmul.mubr.bf16.gmra.mxu0 %v4540
        %v4600 = vpop.f32.mrf.mxu0
        %v4601 = vadd.f32 0.0, %v4600
        %v4602 = vpop.f32.mrf.mxu0
        %v4603 = vpop.f32.mrf.mxu0
        %v4604 = vadd.f32 0.0, %v4603
        %v4605 = vpop.f32.mrf.mxu0
        %4606 = vmatprep.mubr.bf16.mxu0 0
        %4607 = vmatmul.mubr.bf16.gmra.mxu0 %v4543
        %v4608 = vpop.f32.mrf.mxu0
        %v4609 = vadd.f32 0.0, %v4608
        %v4610 = vpop.f32.mrf.mxu0
        %v4611 = vpop.f32.mrf.mxu0
        %v4612 = vadd.f32 0.0, %v4611
        %v4613 = vpop.f32.mrf.mxu0
        %4614 = vmatprep.mubr.bf16.mxu0 0
        %4615 = vmatmul.mubr.bf16.gmra.mxu0 %v4546
        %v4616 = vpop.f32.mrf.mxu0
        %v4617 = vadd.f32 0.0, %v4616
        %v4618 = vpop.f32.mrf.mxu0
        %v4619 = vpop.f32.mrf.mxu0
        %v4620 = vadd.f32 0.0, %v4619
        %v4621 = vpop.f32.mrf.mxu0
        %4622 = vmatprep.mubr.bf16.mxu0 0
        %4623 = vmatmul.mubr.bf16.gmra.mxu0 %v4549
        %v4624 = vpop.f32.mrf.mxu0
        %v4625 = vadd.f32 0.0, %v4624
        %v4626 = vpop.f32.mrf.mxu0
        %v4627 = vpop.f32.mrf.mxu0
        %v4628 = vadd.f32 0.0, %v4627
        %v4629 = vpop.f32.mrf.mxu0
        %4630 = vmatprep.mubr.bf16.mxu0 0
        %4631 = vmatmul.mubr.bf16.gmra.mxu0 %v4552
        %v4632 = vpop.f32.mrf.mxu0
        %v4633 = vadd.f32 0.0, %v4632
        %v4634 = vpop.f32.mrf.mxu0
        %v4635 = vpop.f32.mrf.mxu0
        %v4636 = vadd.f32 0.0, %v4635
        %v4637 = vpop.f32.mrf.mxu0
        %4638 = vmatprep.mubr.bf16.mxu0 0
        %4639 = vmatmul.mubr.bf16.gmra.mxu0 %v4555
        %v4640 = vpop.f32.mrf.mxu0
        %v4641 = vadd.f32 0.0, %v4640
        %v4642 = vpop.f32.mrf.mxu0
        %v4643 = vpop.f32.mrf.mxu0
        %v4644 = vadd.f32 0.0, %v4643
        %v4645 = vpop.f32.mrf.mxu0
        %4646 = vmatprep.mubr.bf16.mxu0 0
        %4647 = vmatmul.mubr.bf16.gmra.mxu0 %v4558
        %v4648 = vpop.f32.mrf.mxu0
        %v4649 = vadd.f32 0.0, %v4648
        %v4650 = vpop.f32.mrf.mxu0
        %v4651 = vpop.f32.mrf.mxu0
        %v4652 = vadd.f32 0.0, %v4651
        %v4653 = vpop.f32.mrf.mxu0
        %4654 = vmatprep.mubr.bf16.mxu0 0
        %4655 = vmatmul.mubr.bf16.gmra.mxu0 %v4561
        %v4656 = vpop.f32.mrf.mxu0
        %v4657 = vadd.f32 0.0, %v4656
        %v4658 = vpop.f32.mrf.mxu0
        %v4659 = vpop.f32.mrf.mxu0
        %v4660 = vadd.f32 0.0, %v4659
        %v4661 = vpop.f32.mrf.mxu0
        %4662 = vdwg.mxu0
        %v4663 = vadd.f32 %v4496, %v4601
        %v4664 = vadd.f32 %v4497, %v4604
        %v4665 = vadd.f32 %v4498, %v4609
        %v4666 = vadd.f32 %v4499, %v4612
        %v4667 = vadd.f32 %v4500, %v4617
        %v4668 = vadd.f32 %v4501, %v4620
        %v4669 = vadd.f32 %v4502, %v4625
        %v4670 = vadd.f32 %v4503, %v4628
        %v4671 = vadd.f32 %v4504, %v4633
        %v4672 = vadd.f32 %v4505, %v4636
        %v4673 = vadd.f32 %v4506, %v4641
        %v4674 = vadd.f32 %v4507, %v4644
        %v4675 = vadd.f32 %v4508, %v4649
        %v4676 = vadd.f32 %v4509, %v4652
        %v4677 = vadd.f32 %v4510, %v4657
        %v4678 = vadd.f32 %v4511, %v4660
        %v4679 = vld [vmem:[%s3676 + $0x6] sm:$0xff]
        %v4680 = vld [vmem:[%s3676 + $0xe] sm:$0xff]
        %v4681 = vld [vmem:[%s3676 + $0x1e] sm:$0xff]
        %v4682 = vld [vmem:[%s3676 + $0x26] sm:$0xff]
        %v4683 = vld [vmem:[%s3676 + $0x36] sm:$0xff]
        %v4684 = vld [vmem:[%s3676 + $0x3e] sm:$0xff]
        %v4685 = vld [vmem:[%s3676 + $0x4e] sm:$0xff]
        %v4686 = vld [vmem:[%s3676 + $0x56] sm:$0xff]
        %v4687 = vld [vmem:[%s3676 + $0x66] sm:$0xff]
        %v4688 = vld [vmem:[%s3676 + $0x6e] sm:$0xff]
        %v4689 = vld [vmem:[%s3676 + $0x7e] sm:$0xff]
        %v4690 = vld [vmem:[%s3676 + $0x86] sm:$0xff]
        %v4691 = vld [vmem:[%s3676 + $0x96] sm:$0xff]
        %v4692 = vld [vmem:[%s3676 + $0x9e] sm:$0xff]
        %v4693 = vld [vmem:[%s3676 + $0xae] sm:$0xff]
        %v4694 = vld [vmem:[%s3676 + $0xb6] sm:$0xff]
        %v4695 = vpack.c.bf16 %v4680, %v4679
        %v4696 = vpack.c.bf16 %v4682, %v4681
        %v4697 = vpack.c.bf16 %v4684, %v4683
        %v4698 = vpack.c.bf16 %v4686, %v4685
        %v4699 = vpack.c.bf16 %v4688, %v4687
        %v4700 = vpack.c.bf16 %v4690, %v4689
        %v4701 = vpack.c.bf16 %v4692, %v4691
        %v4702 = vpack.c.bf16 %v4694, %v4693
        %s4703 = scalar_lea.vmem %s1, 108
        %v4704 = vld [vmem:[%s4703] sm:$0x7]
        %v4705 = vpack.c.bf16 %v4704, %v4704
        %v4707 = vsel %vm242, %v4695, 0
        %v4710 = vsel %vm242, %v4696, 0
        %v4713 = vsel %vm242, %v4697, 0
        %v4716 = vsel %vm242, %v4698, 0
        %v4719 = vsel %vm242, %v4699, 0
        %v4722 = vsel %vm242, %v4700, 0
        %v4725 = vsel %vm242, %v4701, 0
        %v4728 = vsel %vm242, %v4702, 0
        %v4731 = vand.u32 %v4705, %v270
        %4733 = vmatprep.subr.bf16.mxu0 0
        %4734 = vmatpush1.bf16.msra.mxu0 0
        %4735 = vmatprep.subr.bf16.mxu0 0
        %4736 = vmatpush1.bf16.msra.mxu0 0
        %4737 = vmatprep.subr.bf16.mxu0 0
        %4738 = vmatpush1.bf16.msra.mxu0 0
        %4739 = vmatprep.subr.bf16.mxu0 0
        %4740 = vmatpush1.bf16.msra.mxu0 0
        %4741 = vmatprep.subr.bf16.mxu0 0
        %4742 = vmatpush1.bf16.msra.mxu0 0
        %4743 = vmatprep.subr.bf16.mxu0 0
        %4744 = vmatpush1.bf16.msra.mxu0 0
        %4745 = vmatprep.subr.bf16.mxu0 0
        %4746 = vmatpush1.bf16.msra.mxu0 0
        %4747 = vmatprep.subr.bf16.mxu0 0
        %4748 = vmatpush1.bf16.msra.mxu0 %v4731
        %4749 = vmatprep.subr.bf16.mxu0 0
        %4750 = vmatpush2.bf16.msra.mxu0 0
        %4751 = vmatprep.subr.bf16.mxu0 0
        %4752 = vmatpush2.bf16.msra.mxu0 0
        %4753 = vmatprep.subr.bf16.mxu0 0
        %4754 = vmatpush2.bf16.msra.mxu0 0
        %4755 = vmatprep.subr.bf16.mxu0 0
        %4756 = vmatpush2.bf16.msra.mxu0 0
        %4757 = vmatprep.subr.bf16.mxu0 0
        %4758 = vmatpush2.bf16.msra.mxu0 0
        %4759 = vmatprep.subr.bf16.mxu0 0
        %4760 = vmatpush2.bf16.msra.mxu0 0
        %4761 = vmatprep.subr.bf16.mxu0 0
        %4762 = vmatpush2.bf16.msra.mxu0 0
        %4763 = vmatprep.subr.bf16.mxu0 0
        %4764 = vmatpush2.bf16.msra.mxu0 0
        %4765 = vmatprep.mubr.bf16.mxu0 0
        %4766 = vmatmul.mubr.bf16.gmra.mxu0 %v4707
        %v4767 = vpop.f32.mrf.mxu0
        %v4768 = vadd.f32 0.0, %v4767
        %v4769 = vpop.f32.mrf.mxu0
        %v4770 = vpop.f32.mrf.mxu0
        %v4771 = vadd.f32 0.0, %v4770
        %v4772 = vpop.f32.mrf.mxu0
        %4773 = vmatprep.mubr.bf16.mxu0 0
        %4774 = vmatmul.mubr.bf16.gmra.mxu0 %v4710
        %v4775 = vpop.f32.mrf.mxu0
        %v4776 = vadd.f32 0.0, %v4775
        %v4777 = vpop.f32.mrf.mxu0
        %v4778 = vpop.f32.mrf.mxu0
        %v4779 = vadd.f32 0.0, %v4778
        %v4780 = vpop.f32.mrf.mxu0
        %4781 = vmatprep.mubr.bf16.mxu0 0
        %4782 = vmatmul.mubr.bf16.gmra.mxu0 %v4713
        %v4783 = vpop.f32.mrf.mxu0
        %v4784 = vadd.f32 0.0, %v4783
        %v4785 = vpop.f32.mrf.mxu0
        %v4786 = vpop.f32.mrf.mxu0
        %v4787 = vadd.f32 0.0, %v4786
        %v4788 = vpop.f32.mrf.mxu0
        %4789 = vmatprep.mubr.bf16.mxu0 0
        %4790 = vmatmul.mubr.bf16.gmra.mxu0 %v4716
        %v4791 = vpop.f32.mrf.mxu0
        %v4792 = vadd.f32 0.0, %v4791
        %v4793 = vpop.f32.mrf.mxu0
        %v4794 = vpop.f32.mrf.mxu0
        %v4795 = vadd.f32 0.0, %v4794
        %v4796 = vpop.f32.mrf.mxu0
        %4797 = vmatprep.mubr.bf16.mxu0 0
        %4798 = vmatmul.mubr.bf16.gmra.mxu0 %v4719
        %v4799 = vpop.f32.mrf.mxu0
        %v4800 = vadd.f32 0.0, %v4799
        %v4801 = vpop.f32.mrf.mxu0
        %v4802 = vpop.f32.mrf.mxu0
        %v4803 = vadd.f32 0.0, %v4802
        %v4804 = vpop.f32.mrf.mxu0
        %4805 = vmatprep.mubr.bf16.mxu0 0
        %4806 = vmatmul.mubr.bf16.gmra.mxu0 %v4722
        %v4807 = vpop.f32.mrf.mxu0
        %v4808 = vadd.f32 0.0, %v4807
        %v4809 = vpop.f32.mrf.mxu0
        %v4810 = vpop.f32.mrf.mxu0
        %v4811 = vadd.f32 0.0, %v4810
        %v4812 = vpop.f32.mrf.mxu0
        %4813 = vmatprep.mubr.bf16.mxu0 0
        %4814 = vmatmul.mubr.bf16.gmra.mxu0 %v4725
        %v4815 = vpop.f32.mrf.mxu0
        %v4816 = vadd.f32 0.0, %v4815
        %v4817 = vpop.f32.mrf.mxu0
        %v4818 = vpop.f32.mrf.mxu0
        %v4819 = vadd.f32 0.0, %v4818
        %v4820 = vpop.f32.mrf.mxu0
        %4821 = vmatprep.mubr.bf16.mxu0 0
        %4822 = vmatmul.mubr.bf16.gmra.mxu0 %v4728
        %v4823 = vpop.f32.mrf.mxu0
        %v4824 = vadd.f32 0.0, %v4823
        %v4825 = vpop.f32.mrf.mxu0
        %v4826 = vpop.f32.mrf.mxu0
        %v4827 = vadd.f32 0.0, %v4826
        %v4828 = vpop.f32.mrf.mxu0
        %4829 = vdwg.mxu0
        %v4830 = vadd.f32 %v4663, %v4768
        %v4831 = vadd.f32 %v4664, %v4771
        %v4832 = vadd.f32 %v4665, %v4776
        %v4833 = vadd.f32 %v4666, %v4779
        %v4834 = vadd.f32 %v4667, %v4784
        %v4835 = vadd.f32 %v4668, %v4787
        %v4836 = vadd.f32 %v4669, %v4792
        %v4837 = vadd.f32 %v4670, %v4795
        %v4838 = vadd.f32 %v4671, %v4800
        %v4839 = vadd.f32 %v4672, %v4803
        %v4840 = vadd.f32 %v4673, %v4808
        %v4841 = vadd.f32 %v4674, %v4811
        %v4842 = vadd.f32 %v4675, %v4816
        %v4843 = vadd.f32 %v4676, %v4819
        %v4844 = vadd.f32 %v4677, %v4824
        %v4845 = vadd.f32 %v4678, %v4827
        %s4846 = sadd.s32 %s185, 4
        %s4847 = smul.u32 %s4846, 24
        %s4848 = scalar_lea.vmem %s182, %s4847
        %v4849 = vld [vmem:[%s4848] sm:$0xff]
        %v4850 = vld [vmem:[%s4848 + $0x8] sm:$0xff]
        %v4851 = vld [vmem:[%s4848 + $0x18] sm:$0xff]
        %v4852 = vld [vmem:[%s4848 + $0x20] sm:$0xff]
        %v4853 = vld [vmem:[%s4848 + $0x30] sm:$0xff]
        %v4854 = vld [vmem:[%s4848 + $0x38] sm:$0xff]
        %v4855 = vld [vmem:[%s4848 + $0x48] sm:$0xff]
        %v4856 = vld [vmem:[%s4848 + $0x50] sm:$0xff]
        %v4857 = vld [vmem:[%s4848 + $0x60] sm:$0xff]
        %v4858 = vld [vmem:[%s4848 + $0x68] sm:$0xff]
        %v4859 = vld [vmem:[%s4848 + $0x78] sm:$0xff]
        %v4860 = vld [vmem:[%s4848 + $0x80] sm:$0xff]
        %v4861 = vld [vmem:[%s4848 + $0x90] sm:$0xff]
        %v4862 = vld [vmem:[%s4848 + $0x98] sm:$0xff]
        %v4863 = vld [vmem:[%s4848 + $0xa8] sm:$0xff]
        %v4864 = vld [vmem:[%s4848 + $0xb0] sm:$0xff]
        %v4865 = vpack.c.bf16 %v4850, %v4849
        %v4866 = vpack.c.bf16 %v4852, %v4851
        %v4867 = vpack.c.bf16 %v4854, %v4853
        %v4868 = vpack.c.bf16 %v4856, %v4855
        %v4869 = vpack.c.bf16 %v4858, %v4857
        %v4870 = vpack.c.bf16 %v4860, %v4859
        %v4871 = vpack.c.bf16 %v4862, %v4861
        %v4872 = vpack.c.bf16 %v4864, %v4863
        %s4873 = scalar_lea.vmem %s1, 112
        %v4874 = vld [vmem:[%s4873] sm:$0x7]
        %v4875 = vpack.c.bf16 %v4874, %v4874
        %v4877 = vsel %vm242, %v4865, 0
        %v4880 = vsel %vm242, %v4866, 0
        %v4883 = vsel %vm242, %v4867, 0
        %v4886 = vsel %vm242, %v4868, 0
        %v4889 = vsel %vm242, %v4869, 0
        %v4892 = vsel %vm242, %v4870, 0
        %v4895 = vsel %vm242, %v4871, 0
        %v4898 = vsel %vm242, %v4872, 0
        %v4901 = vand.u32 %v4875, %v270
        %4903 = vmatprep.subr.bf16.mxu0 0
        %4904 = vmatpush1.bf16.msra.mxu0 0
        %4905 = vmatprep.subr.bf16.mxu0 0
        %4906 = vmatpush1.bf16.msra.mxu0 0
        %4907 = vmatprep.subr.bf16.mxu0 0
        %4908 = vmatpush1.bf16.msra.mxu0 0
        %4909 = vmatprep.subr.bf16.mxu0 0
        %4910 = vmatpush1.bf16.msra.mxu0 0
        %4911 = vmatprep.subr.bf16.mxu0 0
        %4912 = vmatpush1.bf16.msra.mxu0 0
        %4913 = vmatprep.subr.bf16.mxu0 0
        %4914 = vmatpush1.bf16.msra.mxu0 0
        %4915 = vmatprep.subr.bf16.mxu0 0
        %4916 = vmatpush1.bf16.msra.mxu0 0
        %4917 = vmatprep.subr.bf16.mxu0 0
        %4918 = vmatpush1.bf16.msra.mxu0 %v4901
        %4919 = vmatprep.subr.bf16.mxu0 0
        %4920 = vmatpush2.bf16.msra.mxu0 0
        %4921 = vmatprep.subr.bf16.mxu0 0
        %4922 = vmatpush2.bf16.msra.mxu0 0
        %4923 = vmatprep.subr.bf16.mxu0 0
        %4924 = vmatpush2.bf16.msra.mxu0 0
        %4925 = vmatprep.subr.bf16.mxu0 0
        %4926 = vmatpush2.bf16.msra.mxu0 0
        %4927 = vmatprep.subr.bf16.mxu0 0
        %4928 = vmatpush2.bf16.msra.mxu0 0
        %4929 = vmatprep.subr.bf16.mxu0 0
        %4930 = vmatpush2.bf16.msra.mxu0 0
        %4931 = vmatprep.subr.bf16.mxu0 0
        %4932 = vmatpush2.bf16.msra.mxu0 0
        %4933 = vmatprep.subr.bf16.mxu0 0
        %4934 = vmatpush2.bf16.msra.mxu0 0
        %4935 = vmatprep.mubr.bf16.mxu0 0
        %4936 = vmatmul.mubr.bf16.gmra.mxu0 %v4877
        %v4937 = vpop.f32.mrf.mxu0
        %v4938 = vadd.f32 0.0, %v4937
        %v4939 = vpop.f32.mrf.mxu0
        %v4940 = vpop.f32.mrf.mxu0
        %v4941 = vadd.f32 0.0, %v4940
        %v4942 = vpop.f32.mrf.mxu0
        %4943 = vmatprep.mubr.bf16.mxu0 0
        %4944 = vmatmul.mubr.bf16.gmra.mxu0 %v4880
        %v4945 = vpop.f32.mrf.mxu0
        %v4946 = vadd.f32 0.0, %v4945
        %v4947 = vpop.f32.mrf.mxu0
        %v4948 = vpop.f32.mrf.mxu0
        %v4949 = vadd.f32 0.0, %v4948
        %v4950 = vpop.f32.mrf.mxu0
        %4951 = vmatprep.mubr.bf16.mxu0 0
        %4952 = vmatmul.mubr.bf16.gmra.mxu0 %v4883
        %v4953 = vpop.f32.mrf.mxu0
        %v4954 = vadd.f32 0.0, %v4953
        %v4955 = vpop.f32.mrf.mxu0
        %v4956 = vpop.f32.mrf.mxu0
        %v4957 = vadd.f32 0.0, %v4956
        %v4958 = vpop.f32.mrf.mxu0
        %4959 = vmatprep.mubr.bf16.mxu0 0
        %4960 = vmatmul.mubr.bf16.gmra.mxu0 %v4886
        %v4961 = vpop.f32.mrf.mxu0
        %v4962 = vadd.f32 0.0, %v4961
        %v4963 = vpop.f32.mrf.mxu0
        %v4964 = vpop.f32.mrf.mxu0
        %v4965 = vadd.f32 0.0, %v4964
        %v4966 = vpop.f32.mrf.mxu0
        %4967 = vmatprep.mubr.bf16.mxu0 0
        %4968 = vmatmul.mubr.bf16.gmra.mxu0 %v4889
        %v4969 = vpop.f32.mrf.mxu0
        %v4970 = vadd.f32 0.0, %v4969
        %v4971 = vpop.f32.mrf.mxu0
        %v4972 = vpop.f32.mrf.mxu0
        %v4973 = vadd.f32 0.0, %v4972
        %v4974 = vpop.f32.mrf.mxu0
        %4975 = vmatprep.mubr.bf16.mxu0 0
        %4976 = vmatmul.mubr.bf16.gmra.mxu0 %v4892
        %v4977 = vpop.f32.mrf.mxu0
        %v4978 = vadd.f32 0.0, %v4977
        %v4979 = vpop.f32.mrf.mxu0
        %v4980 = vpop.f32.mrf.mxu0
        %v4981 = vadd.f32 0.0, %v4980
        %v4982 = vpop.f32.mrf.mxu0
        %4983 = vmatprep.mubr.bf16.mxu0 0
        %4984 = vmatmul.mubr.bf16.gmra.mxu0 %v4895
        %v4985 = vpop.f32.mrf.mxu0
        %v4986 = vadd.f32 0.0, %v4985
        %v4987 = vpop.f32.mrf.mxu0
        %v4988 = vpop.f32.mrf.mxu0
        %v4989 = vadd.f32 0.0, %v4988
        %v4990 = vpop.f32.mrf.mxu0
        %4991 = vmatprep.mubr.bf16.mxu0 0
        %4992 = vmatmul.mubr.bf16.gmra.mxu0 %v4898
        %v4993 = vpop.f32.mrf.mxu0
        %v4994 = vadd.f32 0.0, %v4993
        %v4995 = vpop.f32.mrf.mxu0
        %v4996 = vpop.f32.mrf.mxu0
        %v4997 = vadd.f32 0.0, %v4996
        %v4998 = vpop.f32.mrf.mxu0
        %4999 = vdwg.mxu0
        %v5000 = vadd.f32 %v4830, %v4938
        %v5001 = vadd.f32 %v4831, %v4941
        %v5002 = vadd.f32 %v4832, %v4946
        %v5003 = vadd.f32 %v4833, %v4949
        %v5004 = vadd.f32 %v4834, %v4954
        %v5005 = vadd.f32 %v4835, %v4957
        %v5006 = vadd.f32 %v4836, %v4962
        %v5007 = vadd.f32 %v4837, %v4965
        %v5008 = vadd.f32 %v4838, %v4970
        %v5009 = vadd.f32 %v4839, %v4973
        %v5010 = vadd.f32 %v4840, %v4978
        %v5011 = vadd.f32 %v4841, %v4981
        %v5012 = vadd.f32 %v4842, %v4986
        %v5013 = vadd.f32 %v4843, %v4989
        %v5014 = vadd.f32 %v4844, %v4994
        %v5015 = vadd.f32 %v4845, %v4997
        %v5016 = vld [vmem:[%s4848 + $0x1] sm:$0xff]
        %v5017 = vld [vmem:[%s4848 + $0x9] sm:$0xff]
        %v5018 = vld [vmem:[%s4848 + $0x19] sm:$0xff]
        %v5019 = vld [vmem:[%s4848 + $0x21] sm:$0xff]
        %v5020 = vld [vmem:[%s4848 + $0x31] sm:$0xff]
        %v5021 = vld [vmem:[%s4848 + $0x39] sm:$0xff]
        %v5022 = vld [vmem:[%s4848 + $0x49] sm:$0xff]
        %v5023 = vld [vmem:[%s4848 + $0x51] sm:$0xff]
        %v5024 = vld [vmem:[%s4848 + $0x61] sm:$0xff]
        %v5025 = vld [vmem:[%s4848 + $0x69] sm:$0xff]
        %v5026 = vld [vmem:[%s4848 + $0x79] sm:$0xff]
        %v5027 = vld [vmem:[%s4848 + $0x81] sm:$0xff]
        %v5028 = vld [vmem:[%s4848 + $0x91] sm:$0xff]
        %v5029 = vld [vmem:[%s4848 + $0x99] sm:$0xff]
        %v5030 = vld [vmem:[%s4848 + $0xa9] sm:$0xff]
        %v5031 = vld [vmem:[%s4848 + $0xb1] sm:$0xff]
        %v5032 = vpack.c.bf16 %v5017, %v5016
        %v5033 = vpack.c.bf16 %v5019, %v5018
        %v5034 = vpack.c.bf16 %v5021, %v5020
        %v5035 = vpack.c.bf16 %v5023, %v5022
        %v5036 = vpack.c.bf16 %v5025, %v5024
        %v5037 = vpack.c.bf16 %v5027, %v5026
        %v5038 = vpack.c.bf16 %v5029, %v5028
        %v5039 = vpack.c.bf16 %v5031, %v5030
        %s5040 = scalar_lea.vmem %s1, 116
        %v5041 = vld [vmem:[%s5040] sm:$0x7]
        %v5042 = vpack.c.bf16 %v5041, %v5041
        %v5044 = vsel %vm242, %v5032, 0
        %v5047 = vsel %vm242, %v5033, 0
        %v5050 = vsel %vm242, %v5034, 0
        %v5053 = vsel %vm242, %v5035, 0
        %v5056 = vsel %vm242, %v5036, 0
        %v5059 = vsel %vm242, %v5037, 0
        %v5062 = vsel %vm242, %v5038, 0
        %v5065 = vsel %vm242, %v5039, 0
        %v5068 = vand.u32 %v5042, %v270
        %5070 = vmatprep.subr.bf16.mxu0 0
        %5071 = vmatpush1.bf16.msra.mxu0 0
        %5072 = vmatprep.subr.bf16.mxu0 0
        %5073 = vmatpush1.bf16.msra.mxu0 0
        %5074 = vmatprep.subr.bf16.mxu0 0
        %5075 = vmatpush1.bf16.msra.mxu0 0
        %5076 = vmatprep.subr.bf16.mxu0 0
        %5077 = vmatpush1.bf16.msra.mxu0 0
        %5078 = vmatprep.subr.bf16.mxu0 0
        %5079 = vmatpush1.bf16.msra.mxu0 0
        %5080 = vmatprep.subr.bf16.mxu0 0
        %5081 = vmatpush1.bf16.msra.mxu0 0
        %5082 = vmatprep.subr.bf16.mxu0 0
        %5083 = vmatpush1.bf16.msra.mxu0 0
        %5084 = vmatprep.subr.bf16.mxu0 0
        %5085 = vmatpush1.bf16.msra.mxu0 %v5068
        %5086 = vmatprep.subr.bf16.mxu0 0
        %5087 = vmatpush2.bf16.msra.mxu0 0
        %5088 = vmatprep.subr.bf16.mxu0 0
        %5089 = vmatpush2.bf16.msra.mxu0 0
        %5090 = vmatprep.subr.bf16.mxu0 0
        %5091 = vmatpush2.bf16.msra.mxu0 0
        %5092 = vmatprep.subr.bf16.mxu0 0
        %5093 = vmatpush2.bf16.msra.mxu0 0
        %5094 = vmatprep.subr.bf16.mxu0 0
        %5095 = vmatpush2.bf16.msra.mxu0 0
        %5096 = vmatprep.subr.bf16.mxu0 0
        %5097 = vmatpush2.bf16.msra.mxu0 0
        %5098 = vmatprep.subr.bf16.mxu0 0
        %5099 = vmatpush2.bf16.msra.mxu0 0
        %5100 = vmatprep.subr.bf16.mxu0 0
        %5101 = vmatpush2.bf16.msra.mxu0 0
        %5102 = vmatprep.mubr.bf16.mxu0 0
        %5103 = vmatmul.mubr.bf16.gmra.mxu0 %v5044
        %v5104 = vpop.f32.mrf.mxu0
        %v5105 = vadd.f32 0.0, %v5104
        %v5106 = vpop.f32.mrf.mxu0
        %v5107 = vpop.f32.mrf.mxu0
        %v5108 = vadd.f32 0.0, %v5107
        %v5109 = vpop.f32.mrf.mxu0
        %5110 = vmatprep.mubr.bf16.mxu0 0
        %5111 = vmatmul.mubr.bf16.gmra.mxu0 %v5047
        %v5112 = vpop.f32.mrf.mxu0
        %v5113 = vadd.f32 0.0, %v5112
        %v5114 = vpop.f32.mrf.mxu0
        %v5115 = vpop.f32.mrf.mxu0
        %v5116 = vadd.f32 0.0, %v5115
        %v5117 = vpop.f32.mrf.mxu0
        %5118 = vmatprep.mubr.bf16.mxu0 0
        %5119 = vmatmul.mubr.bf16.gmra.mxu0 %v5050
        %v5120 = vpop.f32.mrf.mxu0
        %v5121 = vadd.f32 0.0, %v5120
        %v5122 = vpop.f32.mrf.mxu0
        %v5123 = vpop.f32.mrf.mxu0
        %v5124 = vadd.f32 0.0, %v5123
        %v5125 = vpop.f32.mrf.mxu0
        %5126 = vmatprep.mubr.bf16.mxu0 0
        %5127 = vmatmul.mubr.bf16.gmra.mxu0 %v5053
        %v5128 = vpop.f32.mrf.mxu0
        %v5129 = vadd.f32 0.0, %v5128
        %v5130 = vpop.f32.mrf.mxu0
        %v5131 = vpop.f32.mrf.mxu0
        %v5132 = vadd.f32 0.0, %v5131
        %v5133 = vpop.f32.mrf.mxu0
        %5134 = vmatprep.mubr.bf16.mxu0 0
        %5135 = vmatmul.mubr.bf16.gmra.mxu0 %v5056
        %v5136 = vpop.f32.mrf.mxu0
        %v5137 = vadd.f32 0.0, %v5136
        %v5138 = vpop.f32.mrf.mxu0
        %v5139 = vpop.f32.mrf.mxu0
        %v5140 = vadd.f32 0.0, %v5139
        %v5141 = vpop.f32.mrf.mxu0
        %5142 = vmatprep.mubr.bf16.mxu0 0
        %5143 = vmatmul.mubr.bf16.gmra.mxu0 %v5059
        %v5144 = vpop.f32.mrf.mxu0
        %v5145 = vadd.f32 0.0, %v5144
        %v5146 = vpop.f32.mrf.mxu0
        %v5147 = vpop.f32.mrf.mxu0
        %v5148 = vadd.f32 0.0, %v5147
        %v5149 = vpop.f32.mrf.mxu0
        %5150 = vmatprep.mubr.bf16.mxu0 0
        %5151 = vmatmul.mubr.bf16.gmra.mxu0 %v5062
        %v5152 = vpop.f32.mrf.mxu0
        %v5153 = vadd.f32 0.0, %v5152
        %v5154 = vpop.f32.mrf.mxu0
        %v5155 = vpop.f32.mrf.mxu0
        %v5156 = vadd.f32 0.0, %v5155
        %v5157 = vpop.f32.mrf.mxu0
        %5158 = vmatprep.mubr.bf16.mxu0 0
        %5159 = vmatmul.mubr.bf16.gmra.mxu0 %v5065
        %v5160 = vpop.f32.mrf.mxu0
        %v5161 = vadd.f32 0.0, %v5160
        %v5162 = vpop.f32.mrf.mxu0
        %v5163 = vpop.f32.mrf.mxu0
        %v5164 = vadd.f32 0.0, %v5163
        %v5165 = vpop.f32.mrf.mxu0
        %5166 = vdwg.mxu0
        %v5167 = vadd.f32 %v5000, %v5105
        %v5168 = vadd.f32 %v5001, %v5108
        %v5169 = vadd.f32 %v5002, %v5113
        %v5170 = vadd.f32 %v5003, %v5116
        %v5171 = vadd.f32 %v5004, %v5121
        %v5172 = vadd.f32 %v5005, %v5124
        %v5173 = vadd.f32 %v5006, %v5129
        %v5174 = vadd.f32 %v5007, %v5132
        %v5175 = vadd.f32 %v5008, %v5137
        %v5176 = vadd.f32 %v5009, %v5140
        %v5177 = vadd.f32 %v5010, %v5145
        %v5178 = vadd.f32 %v5011, %v5148
        %v5179 = vadd.f32 %v5012, %v5153
        %v5180 = vadd.f32 %v5013, %v5156
        %v5181 = vadd.f32 %v5014, %v5161
        %v5182 = vadd.f32 %v5015, %v5164
        %v5183 = vld [vmem:[%s4848 + $0x2] sm:$0xff]
        %v5184 = vld [vmem:[%s4848 + $0xa] sm:$0xff]
        %v5185 = vld [vmem:[%s4848 + $0x1a] sm:$0xff]
        %v5186 = vld [vmem:[%s4848 + $0x22] sm:$0xff]
        %v5187 = vld [vmem:[%s4848 + $0x32] sm:$0xff]
        %v5188 = vld [vmem:[%s4848 + $0x3a] sm:$0xff]
        %v5189 = vld [vmem:[%s4848 + $0x4a] sm:$0xff]
        %v5190 = vld [vmem:[%s4848 + $0x52] sm:$0xff]
        %v5191 = vld [vmem:[%s4848 + $0x62] sm:$0xff]
        %v5192 = vld [vmem:[%s4848 + $0x6a] sm:$0xff]
        %v5193 = vld [vmem:[%s4848 + $0x7a] sm:$0xff]
        %v5194 = vld [vmem:[%s4848 + $0x82] sm:$0xff]
        %v5195 = vld [vmem:[%s4848 + $0x92] sm:$0xff]
        %v5196 = vld [vmem:[%s4848 + $0x9a] sm:$0xff]
        %v5197 = vld [vmem:[%s4848 + $0xaa] sm:$0xff]
        %v5198 = vld [vmem:[%s4848 + $0xb2] sm:$0xff]
        %v5199 = vpack.c.bf16 %v5184, %v5183
        %v5200 = vpack.c.bf16 %v5186, %v5185
        %v5201 = vpack.c.bf16 %v5188, %v5187
        %v5202 = vpack.c.bf16 %v5190, %v5189
        %v5203 = vpack.c.bf16 %v5192, %v5191
        %v5204 = vpack.c.bf16 %v5194, %v5193
        %v5205 = vpack.c.bf16 %v5196, %v5195
        %v5206 = vpack.c.bf16 %v5198, %v5197
        %s5207 = scalar_lea.vmem %s1, 120
        %v5208 = vld [vmem:[%s5207] sm:$0x7]
        %v5209 = vpack.c.bf16 %v5208, %v5208
        %v5211 = vsel %vm242, %v5199, 0
        %v5214 = vsel %vm242, %v5200, 0
        %v5217 = vsel %vm242, %v5201, 0
        %v5220 = vsel %vm242, %v5202, 0
        %v5223 = vsel %vm242, %v5203, 0
        %v5226 = vsel %vm242, %v5204, 0
        %v5229 = vsel %vm242, %v5205, 0
        %v5232 = vsel %vm242, %v5206, 0
        %v5235 = vand.u32 %v5209, %v270
        %5237 = vmatprep.subr.bf16.mxu0 0
        %5238 = vmatpush1.bf16.msra.mxu0 0
        %5239 = vmatprep.subr.bf16.mxu0 0
        %5240 = vmatpush1.bf16.msra.mxu0 0
        %5241 = vmatprep.subr.bf16.mxu0 0
        %5242 = vmatpush1.bf16.msra.mxu0 0
        %5243 = vmatprep.subr.bf16.mxu0 0
        %5244 = vmatpush1.bf16.msra.mxu0 0
        %5245 = vmatprep.subr.bf16.mxu0 0
        %5246 = vmatpush1.bf16.msra.mxu0 0
        %5247 = vmatprep.subr.bf16.mxu0 0
        %5248 = vmatpush1.bf16.msra.mxu0 0
        %5249 = vmatprep.subr.bf16.mxu0 0
        %5250 = vmatpush1.bf16.msra.mxu0 0
        %5251 = vmatprep.subr.bf16.mxu0 0
        %5252 = vmatpush1.bf16.msra.mxu0 %v5235
        %5253 = vmatprep.subr.bf16.mxu0 0
        %5254 = vmatpush2.bf16.msra.mxu0 0
        %5255 = vmatprep.subr.bf16.mxu0 0
        %5256 = vmatpush2.bf16.msra.mxu0 0
        %5257 = vmatprep.subr.bf16.mxu0 0
        %5258 = vmatpush2.bf16.msra.mxu0 0
        %5259 = vmatprep.subr.bf16.mxu0 0
        %5260 = vmatpush2.bf16.msra.mxu0 0
        %5261 = vmatprep.subr.bf16.mxu0 0
        %5262 = vmatpush2.bf16.msra.mxu0 0
        %5263 = vmatprep.subr.bf16.mxu0 0
        %5264 = vmatpush2.bf16.msra.mxu0 0
        %5265 = vmatprep.subr.bf16.mxu0 0
        %5266 = vmatpush2.bf16.msra.mxu0 0
        %5267 = vmatprep.subr.bf16.mxu0 0
        %5268 = vmatpush2.bf16.msra.mxu0 0
        %5269 = vmatprep.mubr.bf16.mxu0 0
        %5270 = vmatmul.mubr.bf16.gmra.mxu0 %v5211
        %v5271 = vpop.f32.mrf.mxu0
        %v5272 = vadd.f32 0.0, %v5271
        %v5273 = vpop.f32.mrf.mxu0
        %v5274 = vpop.f32.mrf.mxu0
        %v5275 = vadd.f32 0.0, %v5274
        %v5276 = vpop.f32.mrf.mxu0
        %5277 = vmatprep.mubr.bf16.mxu0 0
        %5278 = vmatmul.mubr.bf16.gmra.mxu0 %v5214
        %v5279 = vpop.f32.mrf.mxu0
        %v5280 = vadd.f32 0.0, %v5279
        %v5281 = vpop.f32.mrf.mxu0
        %v5282 = vpop.f32.mrf.mxu0
        %v5283 = vadd.f32 0.0, %v5282
        %v5284 = vpop.f32.mrf.mxu0
        %5285 = vmatprep.mubr.bf16.mxu0 0
        %5286 = vmatmul.mubr.bf16.gmra.mxu0 %v5217
        %v5287 = vpop.f32.mrf.mxu0
        %v5288 = vadd.f32 0.0, %v5287
        %v5289 = vpop.f32.mrf.mxu0
        %v5290 = vpop.f32.mrf.mxu0
        %v5291 = vadd.f32 0.0, %v5290
        %v5292 = vpop.f32.mrf.mxu0
        %5293 = vmatprep.mubr.bf16.mxu0 0
        %5294 = vmatmul.mubr.bf16.gmra.mxu0 %v5220
        %v5295 = vpop.f32.mrf.mxu0
        %v5296 = vadd.f32 0.0, %v5295
        %v5297 = vpop.f32.mrf.mxu0
        %v5298 = vpop.f32.mrf.mxu0
        %v5299 = vadd.f32 0.0, %v5298
        %v5300 = vpop.f32.mrf.mxu0
        %5301 = vmatprep.mubr.bf16.mxu0 0
        %5302 = vmatmul.mubr.bf16.gmra.mxu0 %v5223
        %v5303 = vpop.f32.mrf.mxu0
        %v5304 = vadd.f32 0.0, %v5303
        %v5305 = vpop.f32.mrf.mxu0
        %v5306 = vpop.f32.mrf.mxu0
        %v5307 = vadd.f32 0.0, %v5306
        %v5308 = vpop.f32.mrf.mxu0
        %5309 = vmatprep.mubr.bf16.mxu0 0
        %5310 = vmatmul.mubr.bf16.gmra.mxu0 %v5226
        %v5311 = vpop.f32.mrf.mxu0
        %v5312 = vadd.f32 0.0, %v5311
        %v5313 = vpop.f32.mrf.mxu0
        %v5314 = vpop.f32.mrf.mxu0
        %v5315 = vadd.f32 0.0, %v5314
        %v5316 = vpop.f32.mrf.mxu0
        %5317 = vmatprep.mubr.bf16.mxu0 0
        %5318 = vmatmul.mubr.bf16.gmra.mxu0 %v5229
        %v5319 = vpop.f32.mrf.mxu0
        %v5320 = vadd.f32 0.0, %v5319
        %v5321 = vpop.f32.mrf.mxu0
        %v5322 = vpop.f32.mrf.mxu0
        %v5323 = vadd.f32 0.0, %v5322
        %v5324 = vpop.f32.mrf.mxu0
        %5325 = vmatprep.mubr.bf16.mxu0 0
        %5326 = vmatmul.mubr.bf16.gmra.mxu0 %v5232
        %v5327 = vpop.f32.mrf.mxu0
        %v5328 = vadd.f32 0.0, %v5327
        %v5329 = vpop.f32.mrf.mxu0
        %v5330 = vpop.f32.mrf.mxu0
        %v5331 = vadd.f32 0.0, %v5330
        %v5332 = vpop.f32.mrf.mxu0
        %5333 = vdwg.mxu0
        %v5334 = vadd.f32 %v5167, %v5272
        %v5335 = vadd.f32 %v5168, %v5275
        %v5336 = vadd.f32 %v5169, %v5280
        %v5337 = vadd.f32 %v5170, %v5283
        %v5338 = vadd.f32 %v5171, %v5288
        %v5339 = vadd.f32 %v5172, %v5291
        %v5340 = vadd.f32 %v5173, %v5296
        %v5341 = vadd.f32 %v5174, %v5299
        %v5342 = vadd.f32 %v5175, %v5304
        %v5343 = vadd.f32 %v5176, %v5307
        %v5344 = vadd.f32 %v5177, %v5312
        %v5345 = vadd.f32 %v5178, %v5315
        %v5346 = vadd.f32 %v5179, %v5320
        %v5347 = vadd.f32 %v5180, %v5323
        %v5348 = vadd.f32 %v5181, %v5328
        %v5349 = vadd.f32 %v5182, %v5331
        %v5350 = vld [vmem:[%s4848 + $0x3] sm:$0xff]
        %v5351 = vld [vmem:[%s4848 + $0xb] sm:$0xff]
        %v5352 = vld [vmem:[%s4848 + $0x1b] sm:$0xff]
        %v5353 = vld [vmem:[%s4848 + $0x23] sm:$0xff]
        %v5354 = vld [vmem:[%s4848 + $0x33] sm:$0xff]
        %v5355 = vld [vmem:[%s4848 + $0x3b] sm:$0xff]
        %v5356 = vld [vmem:[%s4848 + $0x4b] sm:$0xff]
        %v5357 = vld [vmem:[%s4848 + $0x53] sm:$0xff]
        %v5358 = vld [vmem:[%s4848 + $0x63] sm:$0xff]
        %v5359 = vld [vmem:[%s4848 + $0x6b] sm:$0xff]
        %v5360 = vld [vmem:[%s4848 + $0x7b] sm:$0xff]
        %v5361 = vld [vmem:[%s4848 + $0x83] sm:$0xff]
        %v5362 = vld [vmem:[%s4848 + $0x93] sm:$0xff]
        %v5363 = vld [vmem:[%s4848 + $0x9b] sm:$0xff]
        %v5364 = vld [vmem:[%s4848 + $0xab] sm:$0xff]
        %v5365 = vld [vmem:[%s4848 + $0xb3] sm:$0xff]
        %v5366 = vpack.c.bf16 %v5351, %v5350
        %v5367 = vpack.c.bf16 %v5353, %v5352
        %v5368 = vpack.c.bf16 %v5355, %v5354
        %v5369 = vpack.c.bf16 %v5357, %v5356
        %v5370 = vpack.c.bf16 %v5359, %v5358
        %v5371 = vpack.c.bf16 %v5361, %v5360
        %v5372 = vpack.c.bf16 %v5363, %v5362
        %v5373 = vpack.c.bf16 %v5365, %v5364
        %s5374 = scalar_lea.vmem %s1, 124
        %v5375 = vld [vmem:[%s5374] sm:$0x7]
        %v5376 = vpack.c.bf16 %v5375, %v5375
        %v5378 = vsel %vm242, %v5366, 0
        %v5381 = vsel %vm242, %v5367, 0
        %v5384 = vsel %vm242, %v5368, 0
        %v5387 = vsel %vm242, %v5369, 0
        %v5390 = vsel %vm242, %v5370, 0
        %v5393 = vsel %vm242, %v5371, 0
        %v5396 = vsel %vm242, %v5372, 0
        %v5399 = vsel %vm242, %v5373, 0
        %v5402 = vand.u32 %v5376, %v270
        %5404 = vmatprep.subr.bf16.mxu0 0
        %5405 = vmatpush1.bf16.msra.mxu0 0
        %5406 = vmatprep.subr.bf16.mxu0 0
        %5407 = vmatpush1.bf16.msra.mxu0 0
        %5408 = vmatprep.subr.bf16.mxu0 0
        %5409 = vmatpush1.bf16.msra.mxu0 0
        %5410 = vmatprep.subr.bf16.mxu0 0
        %5411 = vmatpush1.bf16.msra.mxu0 0
        %5412 = vmatprep.subr.bf16.mxu0 0
        %5413 = vmatpush1.bf16.msra.mxu0 0
        %5414 = vmatprep.subr.bf16.mxu0 0
        %5415 = vmatpush1.bf16.msra.mxu0 0
        %5416 = vmatprep.subr.bf16.mxu0 0
        %5417 = vmatpush1.bf16.msra.mxu0 0
        %5418 = vmatprep.subr.bf16.mxu0 0
        %5419 = vmatpush1.bf16.msra.mxu0 %v5402
        %5420 = vmatprep.subr.bf16.mxu0 0
        %5421 = vmatpush2.bf16.msra.mxu0 0
        %5422 = vmatprep.subr.bf16.mxu0 0
        %5423 = vmatpush2.bf16.msra.mxu0 0
        %5424 = vmatprep.subr.bf16.mxu0 0
        %5425 = vmatpush2.bf16.msra.mxu0 0
        %5426 = vmatprep.subr.bf16.mxu0 0
        %5427 = vmatpush2.bf16.msra.mxu0 0
        %5428 = vmatprep.subr.bf16.mxu0 0
        %5429 = vmatpush2.bf16.msra.mxu0 0
        %5430 = vmatprep.subr.bf16.mxu0 0
        %5431 = vmatpush2.bf16.msra.mxu0 0
        %5432 = vmatprep.subr.bf16.mxu0 0
        %5433 = vmatpush2.bf16.msra.mxu0 0
        %5434 = vmatprep.subr.bf16.mxu0 0
        %5435 = vmatpush2.bf16.msra.mxu0 0
        %5436 = vmatprep.mubr.bf16.mxu0 0
        %5437 = vmatmul.mubr.bf16.gmra.mxu0 %v5378
        %v5438 = vpop.f32.mrf.mxu0
        %v5439 = vadd.f32 0.0, %v5438
        %v5440 = vpop.f32.mrf.mxu0
        %v5441 = vpop.f32.mrf.mxu0
        %v5442 = vadd.f32 0.0, %v5441
        %v5443 = vpop.f32.mrf.mxu0
        %5444 = vmatprep.mubr.bf16.mxu0 0
        %5445 = vmatmul.mubr.bf16.gmra.mxu0 %v5381
        %v5446 = vpop.f32.mrf.mxu0
        %v5447 = vadd.f32 0.0, %v5446
        %v5448 = vpop.f32.mrf.mxu0
        %v5449 = vpop.f32.mrf.mxu0
        %v5450 = vadd.f32 0.0, %v5449
        %v5451 = vpop.f32.mrf.mxu0
        %5452 = vmatprep.mubr.bf16.mxu0 0
        %5453 = vmatmul.mubr.bf16.gmra.mxu0 %v5384
        %v5454 = vpop.f32.mrf.mxu0
        %v5455 = vadd.f32 0.0, %v5454
        %v5456 = vpop.f32.mrf.mxu0
        %v5457 = vpop.f32.mrf.mxu0
        %v5458 = vadd.f32 0.0, %v5457
        %v5459 = vpop.f32.mrf.mxu0
        %5460 = vmatprep.mubr.bf16.mxu0 0
        %5461 = vmatmul.mubr.bf16.gmra.mxu0 %v5387
        %v5462 = vpop.f32.mrf.mxu0
        %v5463 = vadd.f32 0.0, %v5462
        %v5464 = vpop.f32.mrf.mxu0
        %v5465 = vpop.f32.mrf.mxu0
        %v5466 = vadd.f32 0.0, %v5465
        %v5467 = vpop.f32.mrf.mxu0
        %5468 = vmatprep.mubr.bf16.mxu0 0
        %5469 = vmatmul.mubr.bf16.gmra.mxu0 %v5390
        %v5470 = vpop.f32.mrf.mxu0
        %v5471 = vadd.f32 0.0, %v5470
        %v5472 = vpop.f32.mrf.mxu0
        %v5473 = vpop.f32.mrf.mxu0
        %v5474 = vadd.f32 0.0, %v5473
        %v5475 = vpop.f32.mrf.mxu0
        %5476 = vmatprep.mubr.bf16.mxu0 0
        %5477 = vmatmul.mubr.bf16.gmra.mxu0 %v5393
        %v5478 = vpop.f32.mrf.mxu0
        %v5479 = vadd.f32 0.0, %v5478
        %v5480 = vpop.f32.mrf.mxu0
        %v5481 = vpop.f32.mrf.mxu0
        %v5482 = vadd.f32 0.0, %v5481
        %v5483 = vpop.f32.mrf.mxu0
        %5484 = vmatprep.mubr.bf16.mxu0 0
        %5485 = vmatmul.mubr.bf16.gmra.mxu0 %v5396
        %v5486 = vpop.f32.mrf.mxu0
        %v5487 = vadd.f32 0.0, %v5486
        %v5488 = vpop.f32.mrf.mxu0
        %v5489 = vpop.f32.mrf.mxu0
        %v5490 = vadd.f32 0.0, %v5489
        %v5491 = vpop.f32.mrf.mxu0
        %5492 = vmatprep.mubr.bf16.mxu0 0
        %5493 = vmatmul.mubr.bf16.gmra.mxu0 %v5399
        %v5494 = vpop.f32.mrf.mxu0
        %v5495 = vadd.f32 0.0, %v5494
        %v5496 = vpop.f32.mrf.mxu0
        %v5497 = vpop.f32.mrf.mxu0
        %v5498 = vadd.f32 0.0, %v5497
        %v5499 = vpop.f32.mrf.mxu0
        %5500 = vdwg.mxu0
        %v5501 = vadd.f32 %v5334, %v5439
        %v5502 = vadd.f32 %v5335, %v5442
        %v5503 = vadd.f32 %v5336, %v5447
        %v5504 = vadd.f32 %v5337, %v5450
        %v5505 = vadd.f32 %v5338, %v5455
        %v5506 = vadd.f32 %v5339, %v5458
        %v5507 = vadd.f32 %v5340, %v5463
        %v5508 = vadd.f32 %v5341, %v5466
        %v5509 = vadd.f32 %v5342, %v5471
        %v5510 = vadd.f32 %v5343, %v5474
        %v5511 = vadd.f32 %v5344, %v5479
        %v5512 = vadd.f32 %v5345, %v5482
        %v5513 = vadd.f32 %v5346, %v5487
        %v5514 = vadd.f32 %v5347, %v5490
        %v5515 = vadd.f32 %v5348, %v5495
        %v5516 = vadd.f32 %v5349, %v5498
        %v5517 = vld [vmem:[%s4848 + $0x4] sm:$0xff]
        %v5518 = vld [vmem:[%s4848 + $0xc] sm:$0xff]
        %v5519 = vld [vmem:[%s4848 + $0x1c] sm:$0xff]
        %v5520 = vld [vmem:[%s4848 + $0x24] sm:$0xff]
        %v5521 = vld [vmem:[%s4848 + $0x34] sm:$0xff]
        %v5522 = vld [vmem:[%s4848 + $0x3c] sm:$0xff]
        %v5523 = vld [vmem:[%s4848 + $0x4c] sm:$0xff]
        %v5524 = vld [vmem:[%s4848 + $0x54] sm:$0xff]
        %v5525 = vld [vmem:[%s4848 + $0x64] sm:$0xff]
        %v5526 = vld [vmem:[%s4848 + $0x6c] sm:$0xff]
        %v5527 = vld [vmem:[%s4848 + $0x7c] sm:$0xff]
        %v5528 = vld [vmem:[%s4848 + $0x84] sm:$0xff]
        %v5529 = vld [vmem:[%s4848 + $0x94] sm:$0xff]
        %v5530 = vld [vmem:[%s4848 + $0x9c] sm:$0xff]
        %v5531 = vld [vmem:[%s4848 + $0xac] sm:$0xff]
        %v5532 = vld [vmem:[%s4848 + $0xb4] sm:$0xff]
        %v5533 = vpack.c.bf16 %v5518, %v5517
        %v5534 = vpack.c.bf16 %v5520, %v5519
        %v5535 = vpack.c.bf16 %v5522, %v5521
        %v5536 = vpack.c.bf16 %v5524, %v5523
        %v5537 = vpack.c.bf16 %v5526, %v5525
        %v5538 = vpack.c.bf16 %v5528, %v5527
        %v5539 = vpack.c.bf16 %v5530, %v5529
        %v5540 = vpack.c.bf16 %v5532, %v5531
        %s5541 = scalar_lea.vmem %s1, 128
        %v5542 = vld [vmem:[%s5541] sm:$0x7]
        %v5543 = vpack.c.bf16 %v5542, %v5542
        %v5545 = vsel %vm242, %v5533, 0
        %v5548 = vsel %vm242, %v5534, 0
        %v5551 = vsel %vm242, %v5535, 0
        %v5554 = vsel %vm242, %v5536, 0
        %v5557 = vsel %vm242, %v5537, 0
        %v5560 = vsel %vm242, %v5538, 0
        %v5563 = vsel %vm242, %v5539, 0
        %v5566 = vsel %vm242, %v5540, 0
        %v5569 = vand.u32 %v5543, %v270
        %5571 = vmatprep.subr.bf16.mxu0 0
        %5572 = vmatpush1.bf16.msra.mxu0 0
        %5573 = vmatprep.subr.bf16.mxu0 0
        %5574 = vmatpush1.bf16.msra.mxu0 0
        %5575 = vmatprep.subr.bf16.mxu0 0
        %5576 = vmatpush1.bf16.msra.mxu0 0
        %5577 = vmatprep.subr.bf16.mxu0 0
        %5578 = vmatpush1.bf16.msra.mxu0 0
        %5579 = vmatprep.subr.bf16.mxu0 0
        %5580 = vmatpush1.bf16.msra.mxu0 0
        %5581 = vmatprep.subr.bf16.mxu0 0
        %5582 = vmatpush1.bf16.msra.mxu0 0
        %5583 = vmatprep.subr.bf16.mxu0 0
        %5584 = vmatpush1.bf16.msra.mxu0 0
        %5585 = vmatprep.subr.bf16.mxu0 0
        %5586 = vmatpush1.bf16.msra.mxu0 %v5569
        %5587 = vmatprep.subr.bf16.mxu0 0
        %5588 = vmatpush2.bf16.msra.mxu0 0
        %5589 = vmatprep.subr.bf16.mxu0 0
        %5590 = vmatpush2.bf16.msra.mxu0 0
        %5591 = vmatprep.subr.bf16.mxu0 0
        %5592 = vmatpush2.bf16.msra.mxu0 0
        %5593 = vmatprep.subr.bf16.mxu0 0
        %5594 = vmatpush2.bf16.msra.mxu0 0
        %5595 = vmatprep.subr.bf16.mxu0 0
        %5596 = vmatpush2.bf16.msra.mxu0 0
        %5597 = vmatprep.subr.bf16.mxu0 0
        %5598 = vmatpush2.bf16.msra.mxu0 0
        %5599 = vmatprep.subr.bf16.mxu0 0
        %5600 = vmatpush2.bf16.msra.mxu0 0
        %5601 = vmatprep.subr.bf16.mxu0 0
        %5602 = vmatpush2.bf16.msra.mxu0 0
        %5603 = vmatprep.mubr.bf16.mxu0 0
        %5604 = vmatmul.mubr.bf16.gmra.mxu0 %v5545
        %v5605 = vpop.f32.mrf.mxu0
        %v5606 = vadd.f32 0.0, %v5605
        %v5607 = vpop.f32.mrf.mxu0
        %v5608 = vpop.f32.mrf.mxu0
        %v5609 = vadd.f32 0.0, %v5608
        %v5610 = vpop.f32.mrf.mxu0
        %5611 = vmatprep.mubr.bf16.mxu0 0
        %5612 = vmatmul.mubr.bf16.gmra.mxu0 %v5548
        %v5613 = vpop.f32.mrf.mxu0
        %v5614 = vadd.f32 0.0, %v5613
        %v5615 = vpop.f32.mrf.mxu0
        %v5616 = vpop.f32.mrf.mxu0
        %v5617 = vadd.f32 0.0, %v5616
        %v5618 = vpop.f32.mrf.mxu0
        %5619 = vmatprep.mubr.bf16.mxu0 0
        %5620 = vmatmul.mubr.bf16.gmra.mxu0 %v5551
        %v5621 = vpop.f32.mrf.mxu0
        %v5622 = vadd.f32 0.0, %v5621
        %v5623 = vpop.f32.mrf.mxu0
        %v5624 = vpop.f32.mrf.mxu0
        %v5625 = vadd.f32 0.0, %v5624
        %v5626 = vpop.f32.mrf.mxu0
        %5627 = vmatprep.mubr.bf16.mxu0 0
        %5628 = vmatmul.mubr.bf16.gmra.mxu0 %v5554
        %v5629 = vpop.f32.mrf.mxu0
        %v5630 = vadd.f32 0.0, %v5629
        %v5631 = vpop.f32.mrf.mxu0
        %v5632 = vpop.f32.mrf.mxu0
        %v5633 = vadd.f32 0.0, %v5632
        %v5634 = vpop.f32.mrf.mxu0
        %5635 = vmatprep.mubr.bf16.mxu0 0
        %5636 = vmatmul.mubr.bf16.gmra.mxu0 %v5557
        %v5637 = vpop.f32.mrf.mxu0
        %v5638 = vadd.f32 0.0, %v5637
        %v5639 = vpop.f32.mrf.mxu0
        %v5640 = vpop.f32.mrf.mxu0
        %v5641 = vadd.f32 0.0, %v5640
        %v5642 = vpop.f32.mrf.mxu0
        %5643 = vmatprep.mubr.bf16.mxu0 0
        %5644 = vmatmul.mubr.bf16.gmra.mxu0 %v5560
        %v5645 = vpop.f32.mrf.mxu0
        %v5646 = vadd.f32 0.0, %v5645
        %v5647 = vpop.f32.mrf.mxu0
        %v5648 = vpop.f32.mrf.mxu0
        %v5649 = vadd.f32 0.0, %v5648
        %v5650 = vpop.f32.mrf.mxu0
        %5651 = vmatprep.mubr.bf16.mxu0 0
        %5652 = vmatmul.mubr.bf16.gmra.mxu0 %v5563
        %v5653 = vpop.f32.mrf.mxu0
        %v5654 = vadd.f32 0.0, %v5653
        %v5655 = vpop.f32.mrf.mxu0
        %v5656 = vpop.f32.mrf.mxu0
        %v5657 = vadd.f32 0.0, %v5656
        %v5658 = vpop.f32.mrf.mxu0
        %5659 = vmatprep.mubr.bf16.mxu0 0
        %5660 = vmatmul.mubr.bf16.gmra.mxu0 %v5566
        %v5661 = vpop.f32.mrf.mxu0
        %v5662 = vadd.f32 0.0, %v5661
        %v5663 = vpop.f32.mrf.mxu0
        %v5664 = vpop.f32.mrf.mxu0
        %v5665 = vadd.f32 0.0, %v5664
        %v5666 = vpop.f32.mrf.mxu0
        %5667 = vdwg.mxu0
        %v5668 = vadd.f32 %v5501, %v5606
        %v5669 = vadd.f32 %v5502, %v5609
        %v5670 = vadd.f32 %v5503, %v5614
        %v5671 = vadd.f32 %v5504, %v5617
        %v5672 = vadd.f32 %v5505, %v5622
        %v5673 = vadd.f32 %v5506, %v5625
        %v5674 = vadd.f32 %v5507, %v5630
        %v5675 = vadd.f32 %v5508, %v5633
        %v5676 = vadd.f32 %v5509, %v5638
        %v5677 = vadd.f32 %v5510, %v5641
        %v5678 = vadd.f32 %v5511, %v5646
        %v5679 = vadd.f32 %v5512, %v5649
        %v5680 = vadd.f32 %v5513, %v5654
        %v5681 = vadd.f32 %v5514, %v5657
        %v5682 = vadd.f32 %v5515, %v5662
        %v5683 = vadd.f32 %v5516, %v5665
        %v5684 = vld [vmem:[%s4848 + $0x5] sm:$0xff]
        %v5685 = vld [vmem:[%s4848 + $0xd] sm:$0xff]
        %v5686 = vld [vmem:[%s4848 + $0x1d] sm:$0xff]
        %v5687 = vld [vmem:[%s4848 + $0x25] sm:$0xff]
        %v5688 = vld [vmem:[%s4848 + $0x35] sm:$0xff]
        %v5689 = vld [vmem:[%s4848 + $0x3d] sm:$0xff]
        %v5690 = vld [vmem:[%s4848 + $0x4d] sm:$0xff]
        %v5691 = vld [vmem:[%s4848 + $0x55] sm:$0xff]
        %v5692 = vld [vmem:[%s4848 + $0x65] sm:$0xff]
        %v5693 = vld [vmem:[%s4848 + $0x6d] sm:$0xff]
        %v5694 = vld [vmem:[%s4848 + $0x7d] sm:$0xff]
        %v5695 = vld [vmem:[%s4848 + $0x85] sm:$0xff]
        %v5696 = vld [vmem:[%s4848 + $0x95] sm:$0xff]
        %v5697 = vld [vmem:[%s4848 + $0x9d] sm:$0xff]
        %v5698 = vld [vmem:[%s4848 + $0xad] sm:$0xff]
        %v5699 = vld [vmem:[%s4848 + $0xb5] sm:$0xff]
        %v5700 = vpack.c.bf16 %v5685, %v5684
        %v5701 = vpack.c.bf16 %v5687, %v5686
        %v5702 = vpack.c.bf16 %v5689, %v5688
        %v5703 = vpack.c.bf16 %v5691, %v5690
        %v5704 = vpack.c.bf16 %v5693, %v5692
        %v5705 = vpack.c.bf16 %v5695, %v5694
        %v5706 = vpack.c.bf16 %v5697, %v5696
        %v5707 = vpack.c.bf16 %v5699, %v5698
        %s5708 = scalar_lea.vmem %s1, 132
        %v5709 = vld [vmem:[%s5708] sm:$0x7]
        %v5710 = vpack.c.bf16 %v5709, %v5709
        %v5712 = vsel %vm242, %v5700, 0
        %v5715 = vsel %vm242, %v5701, 0
        %v5718 = vsel %vm242, %v5702, 0
        %v5721 = vsel %vm242, %v5703, 0
        %v5724 = vsel %vm242, %v5704, 0
        %v5727 = vsel %vm242, %v5705, 0
        %v5730 = vsel %vm242, %v5706, 0
        %v5733 = vsel %vm242, %v5707, 0
        %v5736 = vand.u32 %v5710, %v270
        %5738 = vmatprep.subr.bf16.mxu0 0
        %5739 = vmatpush1.bf16.msra.mxu0 0
        %5740 = vmatprep.subr.bf16.mxu0 0
        %5741 = vmatpush1.bf16.msra.mxu0 0
        %5742 = vmatprep.subr.bf16.mxu0 0
        %5743 = vmatpush1.bf16.msra.mxu0 0
        %5744 = vmatprep.subr.bf16.mxu0 0
        %5745 = vmatpush1.bf16.msra.mxu0 0
        %5746 = vmatprep.subr.bf16.mxu0 0
        %5747 = vmatpush1.bf16.msra.mxu0 0
        %5748 = vmatprep.subr.bf16.mxu0 0
        %5749 = vmatpush1.bf16.msra.mxu0 0
        %5750 = vmatprep.subr.bf16.mxu0 0
        %5751 = vmatpush1.bf16.msra.mxu0 0
        %5752 = vmatprep.subr.bf16.mxu0 0
        %5753 = vmatpush1.bf16.msra.mxu0 %v5736
        %5754 = vmatprep.subr.bf16.mxu0 0
        %5755 = vmatpush2.bf16.msra.mxu0 0
        %5756 = vmatprep.subr.bf16.mxu0 0
        %5757 = vmatpush2.bf16.msra.mxu0 0
        %5758 = vmatprep.subr.bf16.mxu0 0
        %5759 = vmatpush2.bf16.msra.mxu0 0
        %5760 = vmatprep.subr.bf16.mxu0 0
        %5761 = vmatpush2.bf16.msra.mxu0 0
        %5762 = vmatprep.subr.bf16.mxu0 0
        %5763 = vmatpush2.bf16.msra.mxu0 0
        %5764 = vmatprep.subr.bf16.mxu0 0
        %5765 = vmatpush2.bf16.msra.mxu0 0
        %5766 = vmatprep.subr.bf16.mxu0 0
        %5767 = vmatpush2.bf16.msra.mxu0 0
        %5768 = vmatprep.subr.bf16.mxu0 0
        %5769 = vmatpush2.bf16.msra.mxu0 0
        %5770 = vmatprep.mubr.bf16.mxu0 0
        %5771 = vmatmul.mubr.bf16.gmra.mxu0 %v5712
        %v5772 = vpop.f32.mrf.mxu0
        %v5773 = vadd.f32 0.0, %v5772
        %v5774 = vpop.f32.mrf.mxu0
        %v5775 = vpop.f32.mrf.mxu0
        %v5776 = vadd.f32 0.0, %v5775
        %v5777 = vpop.f32.mrf.mxu0
        %5778 = vmatprep.mubr.bf16.mxu0 0
        %5779 = vmatmul.mubr.bf16.gmra.mxu0 %v5715
        %v5780 = vpop.f32.mrf.mxu0
        %v5781 = vadd.f32 0.0, %v5780
        %v5782 = vpop.f32.mrf.mxu0
        %v5783 = vpop.f32.mrf.mxu0
        %v5784 = vadd.f32 0.0, %v5783
        %v5785 = vpop.f32.mrf.mxu0
        %5786 = vmatprep.mubr.bf16.mxu0 0
        %5787 = vmatmul.mubr.bf16.gmra.mxu0 %v5718
        %v5788 = vpop.f32.mrf.mxu0
        %v5789 = vadd.f32 0.0, %v5788
        %v5790 = vpop.f32.mrf.mxu0
        %v5791 = vpop.f32.mrf.mxu0
        %v5792 = vadd.f32 0.0, %v5791
        %v5793 = vpop.f32.mrf.mxu0
        %5794 = vmatprep.mubr.bf16.mxu0 0
        %5795 = vmatmul.mubr.bf16.gmra.mxu0 %v5721
        %v5796 = vpop.f32.mrf.mxu0
        %v5797 = vadd.f32 0.0, %v5796
        %v5798 = vpop.f32.mrf.mxu0
        %v5799 = vpop.f32.mrf.mxu0
        %v5800 = vadd.f32 0.0, %v5799
        %v5801 = vpop.f32.mrf.mxu0
        %5802 = vmatprep.mubr.bf16.mxu0 0
        %5803 = vmatmul.mubr.bf16.gmra.mxu0 %v5724
        %v5804 = vpop.f32.mrf.mxu0
        %v5805 = vadd.f32 0.0, %v5804
        %v5806 = vpop.f32.mrf.mxu0
        %v5807 = vpop.f32.mrf.mxu0
        %v5808 = vadd.f32 0.0, %v5807
        %v5809 = vpop.f32.mrf.mxu0
        %5810 = vmatprep.mubr.bf16.mxu0 0
        %5811 = vmatmul.mubr.bf16.gmra.mxu0 %v5727
        %v5812 = vpop.f32.mrf.mxu0
        %v5813 = vadd.f32 0.0, %v5812
        %v5814 = vpop.f32.mrf.mxu0
        %v5815 = vpop.f32.mrf.mxu0
        %v5816 = vadd.f32 0.0, %v5815
        %v5817 = vpop.f32.mrf.mxu0
        %5818 = vmatprep.mubr.bf16.mxu0 0
        %5819 = vmatmul.mubr.bf16.gmra.mxu0 %v5730
        %v5820 = vpop.f32.mrf.mxu0
        %v5821 = vadd.f32 0.0, %v5820
        %v5822 = vpop.f32.mrf.mxu0
        %v5823 = vpop.f32.mrf.mxu0
        %v5824 = vadd.f32 0.0, %v5823
        %v5825 = vpop.f32.mrf.mxu0
        %5826 = vmatprep.mubr.bf16.mxu0 0
        %5827 = vmatmul.mubr.bf16.gmra.mxu0 %v5733
        %v5828 = vpop.f32.mrf.mxu0
        %v5829 = vadd.f32 0.0, %v5828
        %v5830 = vpop.f32.mrf.mxu0
        %v5831 = vpop.f32.mrf.mxu0
        %v5832 = vadd.f32 0.0, %v5831
        %v5833 = vpop.f32.mrf.mxu0
        %5834 = vdwg.mxu0
        %v5835 = vadd.f32 %v5668, %v5773
        %v5836 = vadd.f32 %v5669, %v5776
        %v5837 = vadd.f32 %v5670, %v5781
        %v5838 = vadd.f32 %v5671, %v5784
        %v5839 = vadd.f32 %v5672, %v5789
        %v5840 = vadd.f32 %v5673, %v5792
        %v5841 = vadd.f32 %v5674, %v5797
        %v5842 = vadd.f32 %v5675, %v5800
        %v5843 = vadd.f32 %v5676, %v5805
        %v5844 = vadd.f32 %v5677, %v5808
        %v5845 = vadd.f32 %v5678, %v5813
        %v5846 = vadd.f32 %v5679, %v5816
        %v5847 = vadd.f32 %v5680, %v5821
        %v5848 = vadd.f32 %v5681, %v5824
        %v5849 = vadd.f32 %v5682, %v5829
        %v5850 = vadd.f32 %v5683, %v5832
        %v5851 = vld [vmem:[%s4848 + $0x6] sm:$0xff]
        %v5852 = vld [vmem:[%s4848 + $0xe] sm:$0xff]
        %v5853 = vld [vmem:[%s4848 + $0x1e] sm:$0xff]
        %v5854 = vld [vmem:[%s4848 + $0x26] sm:$0xff]
        %v5855 = vld [vmem:[%s4848 + $0x36] sm:$0xff]
        %v5856 = vld [vmem:[%s4848 + $0x3e] sm:$0xff]
        %v5857 = vld [vmem:[%s4848 + $0x4e] sm:$0xff]
        %v5858 = vld [vmem:[%s4848 + $0x56] sm:$0xff]
        %v5859 = vld [vmem:[%s4848 + $0x66] sm:$0xff]
        %v5860 = vld [vmem:[%s4848 + $0x6e] sm:$0xff]
        %v5861 = vld [vmem:[%s4848 + $0x7e] sm:$0xff]
        %v5862 = vld [vmem:[%s4848 + $0x86] sm:$0xff]
        %v5863 = vld [vmem:[%s4848 + $0x96] sm:$0xff]
        %v5864 = vld [vmem:[%s4848 + $0x9e] sm:$0xff]
        %v5865 = vld [vmem:[%s4848 + $0xae] sm:$0xff]
        %v5866 = vld [vmem:[%s4848 + $0xb6] sm:$0xff]
        %v5867 = vpack.c.bf16 %v5852, %v5851
        %v5868 = vpack.c.bf16 %v5854, %v5853
        %v5869 = vpack.c.bf16 %v5856, %v5855
        %v5870 = vpack.c.bf16 %v5858, %v5857
        %v5871 = vpack.c.bf16 %v5860, %v5859
        %v5872 = vpack.c.bf16 %v5862, %v5861
        %v5873 = vpack.c.bf16 %v5864, %v5863
        %v5874 = vpack.c.bf16 %v5866, %v5865
        %s5875 = scalar_lea.vmem %s1, 136
        %v5876 = vld [vmem:[%s5875] sm:$0x7]
        %v5877 = vpack.c.bf16 %v5876, %v5876
        %v5879 = vsel %vm242, %v5867, 0
        %v5882 = vsel %vm242, %v5868, 0
        %v5885 = vsel %vm242, %v5869, 0
        %v5888 = vsel %vm242, %v5870, 0
        %v5891 = vsel %vm242, %v5871, 0
        %v5894 = vsel %vm242, %v5872, 0
        %v5897 = vsel %vm242, %v5873, 0
        %v5900 = vsel %vm242, %v5874, 0
        %v5903 = vand.u32 %v5877, %v270
        %5905 = vmatprep.subr.bf16.mxu0 0
        %5906 = vmatpush1.bf16.msra.mxu0 0
        %5907 = vmatprep.subr.bf16.mxu0 0
        %5908 = vmatpush1.bf16.msra.mxu0 0
        %5909 = vmatprep.subr.bf16.mxu0 0
        %5910 = vmatpush1.bf16.msra.mxu0 0
        %5911 = vmatprep.subr.bf16.mxu0 0
        %5912 = vmatpush1.bf16.msra.mxu0 0
        %5913 = vmatprep.subr.bf16.mxu0 0
        %5914 = vmatpush1.bf16.msra.mxu0 0
        %5915 = vmatprep.subr.bf16.mxu0 0
        %5916 = vmatpush1.bf16.msra.mxu0 0
        %5917 = vmatprep.subr.bf16.mxu0 0
        %5918 = vmatpush1.bf16.msra.mxu0 0
        %5919 = vmatprep.subr.bf16.mxu0 0
        %5920 = vmatpush1.bf16.msra.mxu0 %v5903
        %5921 = vmatprep.subr.bf16.mxu0 0
        %5922 = vmatpush2.bf16.msra.mxu0 0
        %5923 = vmatprep.subr.bf16.mxu0 0
        %5924 = vmatpush2.bf16.msra.mxu0 0
        %5925 = vmatprep.subr.bf16.mxu0 0
        %5926 = vmatpush2.bf16.msra.mxu0 0
        %5927 = vmatprep.subr.bf16.mxu0 0
        %5928 = vmatpush2.bf16.msra.mxu0 0
        %5929 = vmatprep.subr.bf16.mxu0 0
        %5930 = vmatpush2.bf16.msra.mxu0 0
        %5931 = vmatprep.subr.bf16.mxu0 0
        %5932 = vmatpush2.bf16.msra.mxu0 0
        %5933 = vmatprep.subr.bf16.mxu0 0
        %5934 = vmatpush2.bf16.msra.mxu0 0
        %5935 = vmatprep.subr.bf16.mxu0 0
        %5936 = vmatpush2.bf16.msra.mxu0 0
        %5937 = vmatprep.mubr.bf16.mxu0 0
        %5938 = vmatmul.mubr.bf16.gmra.mxu0 %v5879
        %v5939 = vpop.f32.mrf.mxu0
        %v5940 = vadd.f32 0.0, %v5939
        %v5941 = vpop.f32.mrf.mxu0
        %v5942 = vpop.f32.mrf.mxu0
        %v5943 = vadd.f32 0.0, %v5942
        %v5944 = vpop.f32.mrf.mxu0
        %5945 = vmatprep.mubr.bf16.mxu0 0
        %5946 = vmatmul.mubr.bf16.gmra.mxu0 %v5882
        %v5947 = vpop.f32.mrf.mxu0
        %v5948 = vadd.f32 0.0, %v5947
        %v5949 = vpop.f32.mrf.mxu0
        %v5950 = vpop.f32.mrf.mxu0
        %v5951 = vadd.f32 0.0, %v5950
        %v5952 = vpop.f32.mrf.mxu0
        %5953 = vmatprep.mubr.bf16.mxu0 0
        %5954 = vmatmul.mubr.bf16.gmra.mxu0 %v5885
        %v5955 = vpop.f32.mrf.mxu0
        %v5956 = vadd.f32 0.0, %v5955
        %v5957 = vpop.f32.mrf.mxu0
        %v5958 = vpop.f32.mrf.mxu0
        %v5959 = vadd.f32 0.0, %v5958
        %v5960 = vpop.f32.mrf.mxu0
        %5961 = vmatprep.mubr.bf16.mxu0 0
        %5962 = vmatmul.mubr.bf16.gmra.mxu0 %v5888
        %v5963 = vpop.f32.mrf.mxu0
        %v5964 = vadd.f32 0.0, %v5963
        %v5965 = vpop.f32.mrf.mxu0
        %v5966 = vpop.f32.mrf.mxu0
        %v5967 = vadd.f32 0.0, %v5966
        %v5968 = vpop.f32.mrf.mxu0
        %5969 = vmatprep.mubr.bf16.mxu0 0
        %5970 = vmatmul.mubr.bf16.gmra.mxu0 %v5891
        %v5971 = vpop.f32.mrf.mxu0
        %v5972 = vadd.f32 0.0, %v5971
        %v5973 = vpop.f32.mrf.mxu0
        %v5974 = vpop.f32.mrf.mxu0
        %v5975 = vadd.f32 0.0, %v5974
        %v5976 = vpop.f32.mrf.mxu0
        %5977 = vmatprep.mubr.bf16.mxu0 0
        %5978 = vmatmul.mubr.bf16.gmra.mxu0 %v5894
        %v5979 = vpop.f32.mrf.mxu0
        %v5980 = vadd.f32 0.0, %v5979
        %v5981 = vpop.f32.mrf.mxu0
        %v5982 = vpop.f32.mrf.mxu0
        %v5983 = vadd.f32 0.0, %v5982
        %v5984 = vpop.f32.mrf.mxu0
        %5985 = vmatprep.mubr.bf16.mxu0 0
        %5986 = vmatmul.mubr.bf16.gmra.mxu0 %v5897
        %v5987 = vpop.f32.mrf.mxu0
        %v5988 = vadd.f32 0.0, %v5987
        %v5989 = vpop.f32.mrf.mxu0
        %v5990 = vpop.f32.mrf.mxu0
        %v5991 = vadd.f32 0.0, %v5990
        %v5992 = vpop.f32.mrf.mxu0
        %5993 = vmatprep.mubr.bf16.mxu0 0
        %5994 = vmatmul.mubr.bf16.gmra.mxu0 %v5900
        %v5995 = vpop.f32.mrf.mxu0
        %v5996 = vadd.f32 0.0, %v5995
        %v5997 = vpop.f32.mrf.mxu0
        %v5998 = vpop.f32.mrf.mxu0
        %v5999 = vadd.f32 0.0, %v5998
        %v6000 = vpop.f32.mrf.mxu0
        %6001 = vdwg.mxu0
        %v6002 = vadd.f32 %v5835, %v5940
        %v6003 = vadd.f32 %v5836, %v5943
        %v6004 = vadd.f32 %v5837, %v5948
        %v6005 = vadd.f32 %v5838, %v5951
        %v6006 = vadd.f32 %v5839, %v5956
        %v6007 = vadd.f32 %v5840, %v5959
        %v6008 = vadd.f32 %v5841, %v5964
        %v6009 = vadd.f32 %v5842, %v5967
        %v6010 = vadd.f32 %v5843, %v5972
        %v6011 = vadd.f32 %v5844, %v5975
        %v6012 = vadd.f32 %v5845, %v5980
        %v6013 = vadd.f32 %v5846, %v5983
        %v6014 = vadd.f32 %v5847, %v5988
        %v6015 = vadd.f32 %v5848, %v5991
        %v6016 = vadd.f32 %v5849, %v5996
        %v6017 = vadd.f32 %v5850, %v5999
        %s6018 = sadd.s32 %s185, 5
        %s6019 = smul.u32 %s6018, 24
        %s6020 = scalar_lea.vmem %s182, %s6019
        %v6021 = vld [vmem:[%s6020] sm:$0xff]
        %v6022 = vld [vmem:[%s6020 + $0x8] sm:$0xff]
        %v6023 = vld [vmem:[%s6020 + $0x18] sm:$0xff]
        %v6024 = vld [vmem:[%s6020 + $0x20] sm:$0xff]
        %v6025 = vld [vmem:[%s6020 + $0x30] sm:$0xff]
        %v6026 = vld [vmem:[%s6020 + $0x38] sm:$0xff]
        %v6027 = vld [vmem:[%s6020 + $0x48] sm:$0xff]
        %v6028 = vld [vmem:[%s6020 + $0x50] sm:$0xff]
        %v6029 = vld [vmem:[%s6020 + $0x60] sm:$0xff]
        %v6030 = vld [vmem:[%s6020 + $0x68] sm:$0xff]
        %v6031 = vld [vmem:[%s6020 + $0x78] sm:$0xff]
        %v6032 = vld [vmem:[%s6020 + $0x80] sm:$0xff]
        %v6033 = vld [vmem:[%s6020 + $0x90] sm:$0xff]
        %v6034 = vld [vmem:[%s6020 + $0x98] sm:$0xff]
        %v6035 = vld [vmem:[%s6020 + $0xa8] sm:$0xff]
        %v6036 = vld [vmem:[%s6020 + $0xb0] sm:$0xff]
        %v6037 = vpack.c.bf16 %v6022, %v6021
        %v6038 = vpack.c.bf16 %v6024, %v6023
        %v6039 = vpack.c.bf16 %v6026, %v6025
        %v6040 = vpack.c.bf16 %v6028, %v6027
        %v6041 = vpack.c.bf16 %v6030, %v6029
        %v6042 = vpack.c.bf16 %v6032, %v6031
        %v6043 = vpack.c.bf16 %v6034, %v6033
        %v6044 = vpack.c.bf16 %v6036, %v6035
        %s6045 = scalar_lea.vmem %s1, 140
        %v6046 = vld [vmem:[%s6045] sm:$0x7]
        %v6047 = vpack.c.bf16 %v6046, %v6046
        %v6049 = vsel %vm242, %v6037, 0
        %v6052 = vsel %vm242, %v6038, 0
        %v6055 = vsel %vm242, %v6039, 0
        %v6058 = vsel %vm242, %v6040, 0
        %v6061 = vsel %vm242, %v6041, 0
        %v6064 = vsel %vm242, %v6042, 0
        %v6067 = vsel %vm242, %v6043, 0
        %v6070 = vsel %vm242, %v6044, 0
        %v6073 = vand.u32 %v6047, %v270
        %6075 = vmatprep.subr.bf16.mxu0 0
        %6076 = vmatpush1.bf16.msra.mxu0 0
        %6077 = vmatprep.subr.bf16.mxu0 0
        %6078 = vmatpush1.bf16.msra.mxu0 0
        %6079 = vmatprep.subr.bf16.mxu0 0
        %6080 = vmatpush1.bf16.msra.mxu0 0
        %6081 = vmatprep.subr.bf16.mxu0 0
        %6082 = vmatpush1.bf16.msra.mxu0 0
        %6083 = vmatprep.subr.bf16.mxu0 0
        %6084 = vmatpush1.bf16.msra.mxu0 0
        %6085 = vmatprep.subr.bf16.mxu0 0
        %6086 = vmatpush1.bf16.msra.mxu0 0
        %6087 = vmatprep.subr.bf16.mxu0 0
        %6088 = vmatpush1.bf16.msra.mxu0 0
        %6089 = vmatprep.subr.bf16.mxu0 0
        %6090 = vmatpush1.bf16.msra.mxu0 %v6073
        %6091 = vmatprep.subr.bf16.mxu0 0
        %6092 = vmatpush2.bf16.msra.mxu0 0
        %6093 = vmatprep.subr.bf16.mxu0 0
        %6094 = vmatpush2.bf16.msra.mxu0 0
        %6095 = vmatprep.subr.bf16.mxu0 0
        %6096 = vmatpush2.bf16.msra.mxu0 0
        %6097 = vmatprep.subr.bf16.mxu0 0
        %6098 = vmatpush2.bf16.msra.mxu0 0
        %6099 = vmatprep.subr.bf16.mxu0 0
        %6100 = vmatpush2.bf16.msra.mxu0 0
        %6101 = vmatprep.subr.bf16.mxu0 0
        %6102 = vmatpush2.bf16.msra.mxu0 0
        %6103 = vmatprep.subr.bf16.mxu0 0
        %6104 = vmatpush2.bf16.msra.mxu0 0
        %6105 = vmatprep.subr.bf16.mxu0 0
        %6106 = vmatpush2.bf16.msra.mxu0 0
        %6107 = vmatprep.mubr.bf16.mxu0 0
        %6108 = vmatmul.mubr.bf16.gmra.mxu0 %v6049
        %v6109 = vpop.f32.mrf.mxu0
        %v6110 = vadd.f32 0.0, %v6109
        %v6111 = vpop.f32.mrf.mxu0
        %v6112 = vpop.f32.mrf.mxu0
        %v6113 = vadd.f32 0.0, %v6112
        %v6114 = vpop.f32.mrf.mxu0
        %6115 = vmatprep.mubr.bf16.mxu0 0
        %6116 = vmatmul.mubr.bf16.gmra.mxu0 %v6052
        %v6117 = vpop.f32.mrf.mxu0
        %v6118 = vadd.f32 0.0, %v6117
        %v6119 = vpop.f32.mrf.mxu0
        %v6120 = vpop.f32.mrf.mxu0
        %v6121 = vadd.f32 0.0, %v6120
        %v6122 = vpop.f32.mrf.mxu0
        %6123 = vmatprep.mubr.bf16.mxu0 0
        %6124 = vmatmul.mubr.bf16.gmra.mxu0 %v6055
        %v6125 = vpop.f32.mrf.mxu0
        %v6126 = vadd.f32 0.0, %v6125
        %v6127 = vpop.f32.mrf.mxu0
        %v6128 = vpop.f32.mrf.mxu0
        %v6129 = vadd.f32 0.0, %v6128
        %v6130 = vpop.f32.mrf.mxu0
        %6131 = vmatprep.mubr.bf16.mxu0 0
        %6132 = vmatmul.mubr.bf16.gmra.mxu0 %v6058
        %v6133 = vpop.f32.mrf.mxu0
        %v6134 = vadd.f32 0.0, %v6133
        %v6135 = vpop.f32.mrf.mxu0
        %v6136 = vpop.f32.mrf.mxu0
        %v6137 = vadd.f32 0.0, %v6136
        %v6138 = vpop.f32.mrf.mxu0
        %6139 = vmatprep.mubr.bf16.mxu0 0
        %6140 = vmatmul.mubr.bf16.gmra.mxu0 %v6061
        %v6141 = vpop.f32.mrf.mxu0
        %v6142 = vadd.f32 0.0, %v6141
        %v6143 = vpop.f32.mrf.mxu0
        %v6144 = vpop.f32.mrf.mxu0
        %v6145 = vadd.f32 0.0, %v6144
        %v6146 = vpop.f32.mrf.mxu0
        %6147 = vmatprep.mubr.bf16.mxu0 0
        %6148 = vmatmul.mubr.bf16.gmra.mxu0 %v6064
        %v6149 = vpop.f32.mrf.mxu0
        %v6150 = vadd.f32 0.0, %v6149
        %v6151 = vpop.f32.mrf.mxu0
        %v6152 = vpop.f32.mrf.mxu0
        %v6153 = vadd.f32 0.0, %v6152
        %v6154 = vpop.f32.mrf.mxu0
        %6155 = vmatprep.mubr.bf16.mxu0 0
        %6156 = vmatmul.mubr.bf16.gmra.mxu0 %v6067
        %v6157 = vpop.f32.mrf.mxu0
        %v6158 = vadd.f32 0.0, %v6157
        %v6159 = vpop.f32.mrf.mxu0
        %v6160 = vpop.f32.mrf.mxu0
        %v6161 = vadd.f32 0.0, %v6160
        %v6162 = vpop.f32.mrf.mxu0
        %6163 = vmatprep.mubr.bf16.mxu0 0
        %6164 = vmatmul.mubr.bf16.gmra.mxu0 %v6070
        %v6165 = vpop.f32.mrf.mxu0
        %v6166 = vadd.f32 0.0, %v6165
        %v6167 = vpop.f32.mrf.mxu0
        %v6168 = vpop.f32.mrf.mxu0
        %v6169 = vadd.f32 0.0, %v6168
        %v6170 = vpop.f32.mrf.mxu0
        %6171 = vdwg.mxu0
        %v6172 = vadd.f32 %v6002, %v6110
        %v6173 = vadd.f32 %v6003, %v6113
        %v6174 = vadd.f32 %v6004, %v6118
        %v6175 = vadd.f32 %v6005, %v6121
        %v6176 = vadd.f32 %v6006, %v6126
        %v6177 = vadd.f32 %v6007, %v6129
        %v6178 = vadd.f32 %v6008, %v6134
        %v6179 = vadd.f32 %v6009, %v6137
        %v6180 = vadd.f32 %v6010, %v6142
        %v6181 = vadd.f32 %v6011, %v6145
        %v6182 = vadd.f32 %v6012, %v6150
        %v6183 = vadd.f32 %v6013, %v6153
        %v6184 = vadd.f32 %v6014, %v6158
        %v6185 = vadd.f32 %v6015, %v6161
        %v6186 = vadd.f32 %v6016, %v6166
        %v6187 = vadd.f32 %v6017, %v6169
        %v6188 = vld [vmem:[%s6020 + $0x1] sm:$0xff]
        %v6189 = vld [vmem:[%s6020 + $0x9] sm:$0xff]
        %v6190 = vld [vmem:[%s6020 + $0x19] sm:$0xff]
        %v6191 = vld [vmem:[%s6020 + $0x21] sm:$0xff]
        %v6192 = vld [vmem:[%s6020 + $0x31] sm:$0xff]
        %v6193 = vld [vmem:[%s6020 + $0x39] sm:$0xff]
        %v6194 = vld [vmem:[%s6020 + $0x49] sm:$0xff]
        %v6195 = vld [vmem:[%s6020 + $0x51] sm:$0xff]
        %v6196 = vld [vmem:[%s6020 + $0x61] sm:$0xff]
        %v6197 = vld [vmem:[%s6020 + $0x69] sm:$0xff]
        %v6198 = vld [vmem:[%s6020 + $0x79] sm:$0xff]
        %v6199 = vld [vmem:[%s6020 + $0x81] sm:$0xff]
        %v6200 = vld [vmem:[%s6020 + $0x91] sm:$0xff]
        %v6201 = vld [vmem:[%s6020 + $0x99] sm:$0xff]
        %v6202 = vld [vmem:[%s6020 + $0xa9] sm:$0xff]
        %v6203 = vld [vmem:[%s6020 + $0xb1] sm:$0xff]
        %v6204 = vpack.c.bf16 %v6189, %v6188
        %v6205 = vpack.c.bf16 %v6191, %v6190
        %v6206 = vpack.c.bf16 %v6193, %v6192
        %v6207 = vpack.c.bf16 %v6195, %v6194
        %v6208 = vpack.c.bf16 %v6197, %v6196
        %v6209 = vpack.c.bf16 %v6199, %v6198
        %v6210 = vpack.c.bf16 %v6201, %v6200
        %v6211 = vpack.c.bf16 %v6203, %v6202
        %s6212 = scalar_lea.vmem %s1, 144
        %v6213 = vld [vmem:[%s6212] sm:$0x7]
        %v6214 = vpack.c.bf16 %v6213, %v6213
        %v6216 = vsel %vm242, %v6204, 0
        %v6219 = vsel %vm242, %v6205, 0
        %v6222 = vsel %vm242, %v6206, 0
        %v6225 = vsel %vm242, %v6207, 0
        %v6228 = vsel %vm242, %v6208, 0
        %v6231 = vsel %vm242, %v6209, 0
        %v6234 = vsel %vm242, %v6210, 0
        %v6237 = vsel %vm242, %v6211, 0
        %v6240 = vand.u32 %v6214, %v270
        %6242 = vmatprep.subr.bf16.mxu0 0
        %6243 = vmatpush1.bf16.msra.mxu0 0
        %6244 = vmatprep.subr.bf16.mxu0 0
        %6245 = vmatpush1.bf16.msra.mxu0 0
        %6246 = vmatprep.subr.bf16.mxu0 0
        %6247 = vmatpush1.bf16.msra.mxu0 0
        %6248 = vmatprep.subr.bf16.mxu0 0
        %6249 = vmatpush1.bf16.msra.mxu0 0
        %6250 = vmatprep.subr.bf16.mxu0 0
        %6251 = vmatpush1.bf16.msra.mxu0 0
        %6252 = vmatprep.subr.bf16.mxu0 0
        %6253 = vmatpush1.bf16.msra.mxu0 0
        %6254 = vmatprep.subr.bf16.mxu0 0
        %6255 = vmatpush1.bf16.msra.mxu0 0
        %6256 = vmatprep.subr.bf16.mxu0 0
        %6257 = vmatpush1.bf16.msra.mxu0 %v6240
        %6258 = vmatprep.subr.bf16.mxu0 0
        %6259 = vmatpush2.bf16.msra.mxu0 0
        %6260 = vmatprep.subr.bf16.mxu0 0
        %6261 = vmatpush2.bf16.msra.mxu0 0
        %6262 = vmatprep.subr.bf16.mxu0 0
        %6263 = vmatpush2.bf16.msra.mxu0 0
        %6264 = vmatprep.subr.bf16.mxu0 0
        %6265 = vmatpush2.bf16.msra.mxu0 0
        %6266 = vmatprep.subr.bf16.mxu0 0
        %6267 = vmatpush2.bf16.msra.mxu0 0
        %6268 = vmatprep.subr.bf16.mxu0 0
        %6269 = vmatpush2.bf16.msra.mxu0 0
        %6270 = vmatprep.subr.bf16.mxu0 0
        %6271 = vmatpush2.bf16.msra.mxu0 0
        %6272 = vmatprep.subr.bf16.mxu0 0
        %6273 = vmatpush2.bf16.msra.mxu0 0
        %6274 = vmatprep.mubr.bf16.mxu0 0
        %6275 = vmatmul.mubr.bf16.gmra.mxu0 %v6216
        %v6276 = vpop.f32.mrf.mxu0
        %v6277 = vadd.f32 0.0, %v6276
        %v6278 = vpop.f32.mrf.mxu0
        %v6279 = vpop.f32.mrf.mxu0
        %v6280 = vadd.f32 0.0, %v6279
        %v6281 = vpop.f32.mrf.mxu0
        %6282 = vmatprep.mubr.bf16.mxu0 0
        %6283 = vmatmul.mubr.bf16.gmra.mxu0 %v6219
        %v6284 = vpop.f32.mrf.mxu0
        %v6285 = vadd.f32 0.0, %v6284
        %v6286 = vpop.f32.mrf.mxu0
        %v6287 = vpop.f32.mrf.mxu0
        %v6288 = vadd.f32 0.0, %v6287
        %v6289 = vpop.f32.mrf.mxu0
        %6290 = vmatprep.mubr.bf16.mxu0 0
        %6291 = vmatmul.mubr.bf16.gmra.mxu0 %v6222
        %v6292 = vpop.f32.mrf.mxu0
        %v6293 = vadd.f32 0.0, %v6292
        %v6294 = vpop.f32.mrf.mxu0
        %v6295 = vpop.f32.mrf.mxu0
        %v6296 = vadd.f32 0.0, %v6295
        %v6297 = vpop.f32.mrf.mxu0
        %6298 = vmatprep.mubr.bf16.mxu0 0
        %6299 = vmatmul.mubr.bf16.gmra.mxu0 %v6225
        %v6300 = vpop.f32.mrf.mxu0
        %v6301 = vadd.f32 0.0, %v6300
        %v6302 = vpop.f32.mrf.mxu0
        %v6303 = vpop.f32.mrf.mxu0
        %v6304 = vadd.f32 0.0, %v6303
        %v6305 = vpop.f32.mrf.mxu0
        %6306 = vmatprep.mubr.bf16.mxu0 0
        %6307 = vmatmul.mubr.bf16.gmra.mxu0 %v6228
        %v6308 = vpop.f32.mrf.mxu0
        %v6309 = vadd.f32 0.0, %v6308
        %v6310 = vpop.f32.mrf.mxu0
        %v6311 = vpop.f32.mrf.mxu0
        %v6312 = vadd.f32 0.0, %v6311
        %v6313 = vpop.f32.mrf.mxu0
        %6314 = vmatprep.mubr.bf16.mxu0 0
        %6315 = vmatmul.mubr.bf16.gmra.mxu0 %v6231
        %v6316 = vpop.f32.mrf.mxu0
        %v6317 = vadd.f32 0.0, %v6316
        %v6318 = vpop.f32.mrf.mxu0
        %v6319 = vpop.f32.mrf.mxu0
        %v6320 = vadd.f32 0.0, %v6319
        %v6321 = vpop.f32.mrf.mxu0
        %6322 = vmatprep.mubr.bf16.mxu0 0
        %6323 = vmatmul.mubr.bf16.gmra.mxu0 %v6234
        %v6324 = vpop.f32.mrf.mxu0
        %v6325 = vadd.f32 0.0, %v6324
        %v6326 = vpop.f32.mrf.mxu0
        %v6327 = vpop.f32.mrf.mxu0
        %v6328 = vadd.f32 0.0, %v6327
        %v6329 = vpop.f32.mrf.mxu0
        %6330 = vmatprep.mubr.bf16.mxu0 0
        %6331 = vmatmul.mubr.bf16.gmra.mxu0 %v6237
        %v6332 = vpop.f32.mrf.mxu0
        %v6333 = vadd.f32 0.0, %v6332
        %v6334 = vpop.f32.mrf.mxu0
        %v6335 = vpop.f32.mrf.mxu0
        %v6336 = vadd.f32 0.0, %v6335
        %v6337 = vpop.f32.mrf.mxu0
        %6338 = vdwg.mxu0
        %v6339 = vadd.f32 %v6172, %v6277
        %v6340 = vadd.f32 %v6173, %v6280
        %v6341 = vadd.f32 %v6174, %v6285
        %v6342 = vadd.f32 %v6175, %v6288
        %v6343 = vadd.f32 %v6176, %v6293
        %v6344 = vadd.f32 %v6177, %v6296
        %v6345 = vadd.f32 %v6178, %v6301
        %v6346 = vadd.f32 %v6179, %v6304
        %v6347 = vadd.f32 %v6180, %v6309
        %v6348 = vadd.f32 %v6181, %v6312
        %v6349 = vadd.f32 %v6182, %v6317
        %v6350 = vadd.f32 %v6183, %v6320
        %v6351 = vadd.f32 %v6184, %v6325
        %v6352 = vadd.f32 %v6185, %v6328
        %v6353 = vadd.f32 %v6186, %v6333
        %v6354 = vadd.f32 %v6187, %v6336
        %v6355 = vld [vmem:[%s6020 + $0x2] sm:$0xff]
        %v6356 = vld [vmem:[%s6020 + $0xa] sm:$0xff]
        %v6357 = vld [vmem:[%s6020 + $0x1a] sm:$0xff]
        %v6358 = vld [vmem:[%s6020 + $0x22] sm:$0xff]
        %v6359 = vld [vmem:[%s6020 + $0x32] sm:$0xff]
        %v6360 = vld [vmem:[%s6020 + $0x3a] sm:$0xff]
        %v6361 = vld [vmem:[%s6020 + $0x4a] sm:$0xff]
        %v6362 = vld [vmem:[%s6020 + $0x52] sm:$0xff]
        %v6363 = vld [vmem:[%s6020 + $0x62] sm:$0xff]
        %v6364 = vld [vmem:[%s6020 + $0x6a] sm:$0xff]
        %v6365 = vld [vmem:[%s6020 + $0x7a] sm:$0xff]
        %v6366 = vld [vmem:[%s6020 + $0x82] sm:$0xff]
        %v6367 = vld [vmem:[%s6020 + $0x92] sm:$0xff]
        %v6368 = vld [vmem:[%s6020 + $0x9a] sm:$0xff]
        %v6369 = vld [vmem:[%s6020 + $0xaa] sm:$0xff]
        %v6370 = vld [vmem:[%s6020 + $0xb2] sm:$0xff]
        %v6371 = vpack.c.bf16 %v6356, %v6355
        %v6372 = vpack.c.bf16 %v6358, %v6357
        %v6373 = vpack.c.bf16 %v6360, %v6359
        %v6374 = vpack.c.bf16 %v6362, %v6361
        %v6375 = vpack.c.bf16 %v6364, %v6363
        %v6376 = vpack.c.bf16 %v6366, %v6365
        %v6377 = vpack.c.bf16 %v6368, %v6367
        %v6378 = vpack.c.bf16 %v6370, %v6369
        %s6379 = scalar_lea.vmem %s1, 148
        %v6380 = vld [vmem:[%s6379] sm:$0x7]
        %v6381 = vpack.c.bf16 %v6380, %v6380
        %v6383 = vsel %vm242, %v6371, 0
        %v6386 = vsel %vm242, %v6372, 0
        %v6389 = vsel %vm242, %v6373, 0
        %v6392 = vsel %vm242, %v6374, 0
        %v6395 = vsel %vm242, %v6375, 0
        %v6398 = vsel %vm242, %v6376, 0
        %v6401 = vsel %vm242, %v6377, 0
        %v6404 = vsel %vm242, %v6378, 0
        %v6407 = vand.u32 %v6381, %v270
        %6409 = vmatprep.subr.bf16.mxu0 0
        %6410 = vmatpush1.bf16.msra.mxu0 0
        %6411 = vmatprep.subr.bf16.mxu0 0
        %6412 = vmatpush1.bf16.msra.mxu0 0
        %6413 = vmatprep.subr.bf16.mxu0 0
        %6414 = vmatpush1.bf16.msra.mxu0 0
        %6415 = vmatprep.subr.bf16.mxu0 0
        %6416 = vmatpush1.bf16.msra.mxu0 0
        %6417 = vmatprep.subr.bf16.mxu0 0
        %6418 = vmatpush1.bf16.msra.mxu0 0
        %6419 = vmatprep.subr.bf16.mxu0 0
        %6420 = vmatpush1.bf16.msra.mxu0 0
        %6421 = vmatprep.subr.bf16.mxu0 0
        %6422 = vmatpush1.bf16.msra.mxu0 0
        %6423 = vmatprep.subr.bf16.mxu0 0
        %6424 = vmatpush1.bf16.msra.mxu0 %v6407
        %6425 = vmatprep.subr.bf16.mxu0 0
        %6426 = vmatpush2.bf16.msra.mxu0 0
        %6427 = vmatprep.subr.bf16.mxu0 0
        %6428 = vmatpush2.bf16.msra.mxu0 0
        %6429 = vmatprep.subr.bf16.mxu0 0
        %6430 = vmatpush2.bf16.msra.mxu0 0
        %6431 = vmatprep.subr.bf16.mxu0 0
        %6432 = vmatpush2.bf16.msra.mxu0 0
        %6433 = vmatprep.subr.bf16.mxu0 0
        %6434 = vmatpush2.bf16.msra.mxu0 0
        %6435 = vmatprep.subr.bf16.mxu0 0
        %6436 = vmatpush2.bf16.msra.mxu0 0
        %6437 = vmatprep.subr.bf16.mxu0 0
        %6438 = vmatpush2.bf16.msra.mxu0 0
        %6439 = vmatprep.subr.bf16.mxu0 0
        %6440 = vmatpush2.bf16.msra.mxu0 0
        %6441 = vmatprep.mubr.bf16.mxu0 0
        %6442 = vmatmul.mubr.bf16.gmra.mxu0 %v6383
        %v6443 = vpop.f32.mrf.mxu0
        %v6444 = vadd.f32 0.0, %v6443
        %v6445 = vpop.f32.mrf.mxu0
        %v6446 = vpop.f32.mrf.mxu0
        %v6447 = vadd.f32 0.0, %v6446
        %v6448 = vpop.f32.mrf.mxu0
        %6449 = vmatprep.mubr.bf16.mxu0 0
        %6450 = vmatmul.mubr.bf16.gmra.mxu0 %v6386
        %v6451 = vpop.f32.mrf.mxu0
        %v6452 = vadd.f32 0.0, %v6451
        %v6453 = vpop.f32.mrf.mxu0
        %v6454 = vpop.f32.mrf.mxu0
        %v6455 = vadd.f32 0.0, %v6454
        %v6456 = vpop.f32.mrf.mxu0
        %6457 = vmatprep.mubr.bf16.mxu0 0
        %6458 = vmatmul.mubr.bf16.gmra.mxu0 %v6389
        %v6459 = vpop.f32.mrf.mxu0
        %v6460 = vadd.f32 0.0, %v6459
        %v6461 = vpop.f32.mrf.mxu0
        %v6462 = vpop.f32.mrf.mxu0
        %v6463 = vadd.f32 0.0, %v6462
        %v6464 = vpop.f32.mrf.mxu0
        %6465 = vmatprep.mubr.bf16.mxu0 0
        %6466 = vmatmul.mubr.bf16.gmra.mxu0 %v6392
        %v6467 = vpop.f32.mrf.mxu0
        %v6468 = vadd.f32 0.0, %v6467
        %v6469 = vpop.f32.mrf.mxu0
        %v6470 = vpop.f32.mrf.mxu0
        %v6471 = vadd.f32 0.0, %v6470
        %v6472 = vpop.f32.mrf.mxu0
        %6473 = vmatprep.mubr.bf16.mxu0 0
        %6474 = vmatmul.mubr.bf16.gmra.mxu0 %v6395
        %v6475 = vpop.f32.mrf.mxu0
        %v6476 = vadd.f32 0.0, %v6475
        %v6477 = vpop.f32.mrf.mxu0
        %v6478 = vpop.f32.mrf.mxu0
        %v6479 = vadd.f32 0.0, %v6478
        %v6480 = vpop.f32.mrf.mxu0
        %6481 = vmatprep.mubr.bf16.mxu0 0
        %6482 = vmatmul.mubr.bf16.gmra.mxu0 %v6398
        %v6483 = vpop.f32.mrf.mxu0
        %v6484 = vadd.f32 0.0, %v6483
        %v6485 = vpop.f32.mrf.mxu0
        %v6486 = vpop.f32.mrf.mxu0
        %v6487 = vadd.f32 0.0, %v6486
        %v6488 = vpop.f32.mrf.mxu0
        %6489 = vmatprep.mubr.bf16.mxu0 0
        %6490 = vmatmul.mubr.bf16.gmra.mxu0 %v6401
        %v6491 = vpop.f32.mrf.mxu0
        %v6492 = vadd.f32 0.0, %v6491
        %v6493 = vpop.f32.mrf.mxu0
        %v6494 = vpop.f32.mrf.mxu0
        %v6495 = vadd.f32 0.0, %v6494
        %v6496 = vpop.f32.mrf.mxu0
        %6497 = vmatprep.mubr.bf16.mxu0 0
        %6498 = vmatmul.mubr.bf16.gmra.mxu0 %v6404
        %v6499 = vpop.f32.mrf.mxu0
        %v6500 = vadd.f32 0.0, %v6499
        %v6501 = vpop.f32.mrf.mxu0
        %v6502 = vpop.f32.mrf.mxu0
        %v6503 = vadd.f32 0.0, %v6502
        %v6504 = vpop.f32.mrf.mxu0
        %6505 = vdwg.mxu0
        %v6506 = vadd.f32 %v6339, %v6444
        %v6507 = vadd.f32 %v6340, %v6447
        %v6508 = vadd.f32 %v6341, %v6452
        %v6509 = vadd.f32 %v6342, %v6455
        %v6510 = vadd.f32 %v6343, %v6460
        %v6511 = vadd.f32 %v6344, %v6463
        %v6512 = vadd.f32 %v6345, %v6468
        %v6513 = vadd.f32 %v6346, %v6471
        %v6514 = vadd.f32 %v6347, %v6476
        %v6515 = vadd.f32 %v6348, %v6479
        %v6516 = vadd.f32 %v6349, %v6484
        %v6517 = vadd.f32 %v6350, %v6487
        %v6518 = vadd.f32 %v6351, %v6492
        %v6519 = vadd.f32 %v6352, %v6495
        %v6520 = vadd.f32 %v6353, %v6500
        %v6521 = vadd.f32 %v6354, %v6503
        %v6522 = vld [vmem:[%s6020 + $0x3] sm:$0xff]
        %v6523 = vld [vmem:[%s6020 + $0xb] sm:$0xff]
        %v6524 = vld [vmem:[%s6020 + $0x1b] sm:$0xff]
        %v6525 = vld [vmem:[%s6020 + $0x23] sm:$0xff]
        %v6526 = vld [vmem:[%s6020 + $0x33] sm:$0xff]
        %v6527 = vld [vmem:[%s6020 + $0x3b] sm:$0xff]
        %v6528 = vld [vmem:[%s6020 + $0x4b] sm:$0xff]
        %v6529 = vld [vmem:[%s6020 + $0x53] sm:$0xff]
        %v6530 = vld [vmem:[%s6020 + $0x63] sm:$0xff]
        %v6531 = vld [vmem:[%s6020 + $0x6b] sm:$0xff]
        %v6532 = vld [vmem:[%s6020 + $0x7b] sm:$0xff]
        %v6533 = vld [vmem:[%s6020 + $0x83] sm:$0xff]
        %v6534 = vld [vmem:[%s6020 + $0x93] sm:$0xff]
        %v6535 = vld [vmem:[%s6020 + $0x9b] sm:$0xff]
        %v6536 = vld [vmem:[%s6020 + $0xab] sm:$0xff]
        %v6537 = vld [vmem:[%s6020 + $0xb3] sm:$0xff]
        %v6538 = vpack.c.bf16 %v6523, %v6522
        %v6539 = vpack.c.bf16 %v6525, %v6524
        %v6540 = vpack.c.bf16 %v6527, %v6526
        %v6541 = vpack.c.bf16 %v6529, %v6528
        %v6542 = vpack.c.bf16 %v6531, %v6530
        %v6543 = vpack.c.bf16 %v6533, %v6532
        %v6544 = vpack.c.bf16 %v6535, %v6534
        %v6545 = vpack.c.bf16 %v6537, %v6536
        %s6546 = scalar_lea.vmem %s1, 152
        %v6547 = vld [vmem:[%s6546] sm:$0x7]
        %v6548 = vpack.c.bf16 %v6547, %v6547
        %v6550 = vsel %vm242, %v6538, 0
        %v6553 = vsel %vm242, %v6539, 0
        %v6556 = vsel %vm242, %v6540, 0
        %v6559 = vsel %vm242, %v6541, 0
        %v6562 = vsel %vm242, %v6542, 0
        %v6565 = vsel %vm242, %v6543, 0
        %v6568 = vsel %vm242, %v6544, 0
        %v6571 = vsel %vm242, %v6545, 0
        %v6574 = vand.u32 %v6548, %v270
        %6576 = vmatprep.subr.bf16.mxu0 0
        %6577 = vmatpush1.bf16.msra.mxu0 0
        %6578 = vmatprep.subr.bf16.mxu0 0
        %6579 = vmatpush1.bf16.msra.mxu0 0
        %6580 = vmatprep.subr.bf16.mxu0 0
        %6581 = vmatpush1.bf16.msra.mxu0 0
        %6582 = vmatprep.subr.bf16.mxu0 0
        %6583 = vmatpush1.bf16.msra.mxu0 0
        %6584 = vmatprep.subr.bf16.mxu0 0
        %6585 = vmatpush1.bf16.msra.mxu0 0
        %6586 = vmatprep.subr.bf16.mxu0 0
        %6587 = vmatpush1.bf16.msra.mxu0 0
        %6588 = vmatprep.subr.bf16.mxu0 0
        %6589 = vmatpush1.bf16.msra.mxu0 0
        %6590 = vmatprep.subr.bf16.mxu0 0
        %6591 = vmatpush1.bf16.msra.mxu0 %v6574
        %6592 = vmatprep.subr.bf16.mxu0 0
        %6593 = vmatpush2.bf16.msra.mxu0 0
        %6594 = vmatprep.subr.bf16.mxu0 0
        %6595 = vmatpush2.bf16.msra.mxu0 0
        %6596 = vmatprep.subr.bf16.mxu0 0
        %6597 = vmatpush2.bf16.msra.mxu0 0
        %6598 = vmatprep.subr.bf16.mxu0 0
        %6599 = vmatpush2.bf16.msra.mxu0 0
        %6600 = vmatprep.subr.bf16.mxu0 0
        %6601 = vmatpush2.bf16.msra.mxu0 0
        %6602 = vmatprep.subr.bf16.mxu0 0
        %6603 = vmatpush2.bf16.msra.mxu0 0
        %6604 = vmatprep.subr.bf16.mxu0 0
        %6605 = vmatpush2.bf16.msra.mxu0 0
        %6606 = vmatprep.subr.bf16.mxu0 0
        %6607 = vmatpush2.bf16.msra.mxu0 0
        %6608 = vmatprep.mubr.bf16.mxu0 0
        %6609 = vmatmul.mubr.bf16.gmra.mxu0 %v6550
        %v6610 = vpop.f32.mrf.mxu0
        %v6611 = vadd.f32 0.0, %v6610
        %v6612 = vpop.f32.mrf.mxu0
        %v6613 = vpop.f32.mrf.mxu0
        %v6614 = vadd.f32 0.0, %v6613
        %v6615 = vpop.f32.mrf.mxu0
        %6616 = vmatprep.mubr.bf16.mxu0 0
        %6617 = vmatmul.mubr.bf16.gmra.mxu0 %v6553
        %v6618 = vpop.f32.mrf.mxu0
        %v6619 = vadd.f32 0.0, %v6618
        %v6620 = vpop.f32.mrf.mxu0
        %v6621 = vpop.f32.mrf.mxu0
        %v6622 = vadd.f32 0.0, %v6621
        %v6623 = vpop.f32.mrf.mxu0
        %6624 = vmatprep.mubr.bf16.mxu0 0
        %6625 = vmatmul.mubr.bf16.gmra.mxu0 %v6556
        %v6626 = vpop.f32.mrf.mxu0
        %v6627 = vadd.f32 0.0, %v6626
        %v6628 = vpop.f32.mrf.mxu0
        %v6629 = vpop.f32.mrf.mxu0
        %v6630 = vadd.f32 0.0, %v6629
        %v6631 = vpop.f32.mrf.mxu0
        %6632 = vmatprep.mubr.bf16.mxu0 0
        %6633 = vmatmul.mubr.bf16.gmra.mxu0 %v6559
        %v6634 = vpop.f32.mrf.mxu0
        %v6635 = vadd.f32 0.0, %v6634
        %v6636 = vpop.f32.mrf.mxu0
        %v6637 = vpop.f32.mrf.mxu0
        %v6638 = vadd.f32 0.0, %v6637
        %v6639 = vpop.f32.mrf.mxu0
        %6640 = vmatprep.mubr.bf16.mxu0 0
        %6641 = vmatmul.mubr.bf16.gmra.mxu0 %v6562
        %v6642 = vpop.f32.mrf.mxu0
        %v6643 = vadd.f32 0.0, %v6642
        %v6644 = vpop.f32.mrf.mxu0
        %v6645 = vpop.f32.mrf.mxu0
        %v6646 = vadd.f32 0.0, %v6645
        %v6647 = vpop.f32.mrf.mxu0
        %6648 = vmatprep.mubr.bf16.mxu0 0
        %6649 = vmatmul.mubr.bf16.gmra.mxu0 %v6565
        %v6650 = vpop.f32.mrf.mxu0
        %v6651 = vadd.f32 0.0, %v6650
        %v6652 = vpop.f32.mrf.mxu0
        %v6653 = vpop.f32.mrf.mxu0
        %v6654 = vadd.f32 0.0, %v6653
        %v6655 = vpop.f32.mrf.mxu0
        %6656 = vmatprep.mubr.bf16.mxu0 0
        %6657 = vmatmul.mubr.bf16.gmra.mxu0 %v6568
        %v6658 = vpop.f32.mrf.mxu0
        %v6659 = vadd.f32 0.0, %v6658
        %v6660 = vpop.f32.mrf.mxu0
        %v6661 = vpop.f32.mrf.mxu0
        %v6662 = vadd.f32 0.0, %v6661
        %v6663 = vpop.f32.mrf.mxu0
        %6664 = vmatprep.mubr.bf16.mxu0 0
        %6665 = vmatmul.mubr.bf16.gmra.mxu0 %v6571
        %v6666 = vpop.f32.mrf.mxu0
        %v6667 = vadd.f32 0.0, %v6666
        %v6668 = vpop.f32.mrf.mxu0
        %v6669 = vpop.f32.mrf.mxu0
        %v6670 = vadd.f32 0.0, %v6669
        %v6671 = vpop.f32.mrf.mxu0
        %6672 = vdwg.mxu0
        %v6673 = vadd.f32 %v6506, %v6611
        %v6674 = vadd.f32 %v6507, %v6614
        %v6675 = vadd.f32 %v6508, %v6619
        %v6676 = vadd.f32 %v6509, %v6622
        %v6677 = vadd.f32 %v6510, %v6627
        %v6678 = vadd.f32 %v6511, %v6630
        %v6679 = vadd.f32 %v6512, %v6635
        %v6680 = vadd.f32 %v6513, %v6638
        %v6681 = vadd.f32 %v6514, %v6643
        %v6682 = vadd.f32 %v6515, %v6646
        %v6683 = vadd.f32 %v6516, %v6651
        %v6684 = vadd.f32 %v6517, %v6654
        %v6685 = vadd.f32 %v6518, %v6659
        %v6686 = vadd.f32 %v6519, %v6662
        %v6687 = vadd.f32 %v6520, %v6667
        %v6688 = vadd.f32 %v6521, %v6670
        %v6689 = vld [vmem:[%s6020 + $0x4] sm:$0xff]
        %v6690 = vld [vmem:[%s6020 + $0xc] sm:$0xff]
        %v6691 = vld [vmem:[%s6020 + $0x1c] sm:$0xff]
        %v6692 = vld [vmem:[%s6020 + $0x24] sm:$0xff]
        %v6693 = vld [vmem:[%s6020 + $0x34] sm:$0xff]
        %v6694 = vld [vmem:[%s6020 + $0x3c] sm:$0xff]
        %v6695 = vld [vmem:[%s6020 + $0x4c] sm:$0xff]
        %v6696 = vld [vmem:[%s6020 + $0x54] sm:$0xff]
        %v6697 = vld [vmem:[%s6020 + $0x64] sm:$0xff]
        %v6698 = vld [vmem:[%s6020 + $0x6c] sm:$0xff]
        %v6699 = vld [vmem:[%s6020 + $0x7c] sm:$0xff]
        %v6700 = vld [vmem:[%s6020 + $0x84] sm:$0xff]
        %v6701 = vld [vmem:[%s6020 + $0x94] sm:$0xff]
        %v6702 = vld [vmem:[%s6020 + $0x9c] sm:$0xff]
        %v6703 = vld [vmem:[%s6020 + $0xac] sm:$0xff]
        %v6704 = vld [vmem:[%s6020 + $0xb4] sm:$0xff]
        %v6705 = vpack.c.bf16 %v6690, %v6689
        %v6706 = vpack.c.bf16 %v6692, %v6691
        %v6707 = vpack.c.bf16 %v6694, %v6693
        %v6708 = vpack.c.bf16 %v6696, %v6695
        %v6709 = vpack.c.bf16 %v6698, %v6697
        %v6710 = vpack.c.bf16 %v6700, %v6699
        %v6711 = vpack.c.bf16 %v6702, %v6701
        %v6712 = vpack.c.bf16 %v6704, %v6703
        %s6713 = scalar_lea.vmem %s1, 156
        %v6714 = vld [vmem:[%s6713] sm:$0x7]
        %v6715 = vpack.c.bf16 %v6714, %v6714
        %v6717 = vsel %vm242, %v6705, 0
        %v6720 = vsel %vm242, %v6706, 0
        %v6723 = vsel %vm242, %v6707, 0
        %v6726 = vsel %vm242, %v6708, 0
        %v6729 = vsel %vm242, %v6709, 0
        %v6732 = vsel %vm242, %v6710, 0
        %v6735 = vsel %vm242, %v6711, 0
        %v6738 = vsel %vm242, %v6712, 0
        %v6741 = vand.u32 %v6715, %v270
        %6743 = vmatprep.subr.bf16.mxu0 0
        %6744 = vmatpush1.bf16.msra.mxu0 0
        %6745 = vmatprep.subr.bf16.mxu0 0
        %6746 = vmatpush1.bf16.msra.mxu0 0
        %6747 = vmatprep.subr.bf16.mxu0 0
        %6748 = vmatpush1.bf16.msra.mxu0 0
        %6749 = vmatprep.subr.bf16.mxu0 0
        %6750 = vmatpush1.bf16.msra.mxu0 0
        %6751 = vmatprep.subr.bf16.mxu0 0
        %6752 = vmatpush1.bf16.msra.mxu0 0
        %6753 = vmatprep.subr.bf16.mxu0 0
        %6754 = vmatpush1.bf16.msra.mxu0 0
        %6755 = vmatprep.subr.bf16.mxu0 0
        %6756 = vmatpush1.bf16.msra.mxu0 0
        %6757 = vmatprep.subr.bf16.mxu0 0
        %6758 = vmatpush1.bf16.msra.mxu0 %v6741
        %6759 = vmatprep.subr.bf16.mxu0 0
        %6760 = vmatpush2.bf16.msra.mxu0 0
        %6761 = vmatprep.subr.bf16.mxu0 0
        %6762 = vmatpush2.bf16.msra.mxu0 0
        %6763 = vmatprep.subr.bf16.mxu0 0
        %6764 = vmatpush2.bf16.msra.mxu0 0
        %6765 = vmatprep.subr.bf16.mxu0 0
        %6766 = vmatpush2.bf16.msra.mxu0 0
        %6767 = vmatprep.subr.bf16.mxu0 0
        %6768 = vmatpush2.bf16.msra.mxu0 0
        %6769 = vmatprep.subr.bf16.mxu0 0
        %6770 = vmatpush2.bf16.msra.mxu0 0
        %6771 = vmatprep.subr.bf16.mxu0 0
        %6772 = vmatpush2.bf16.msra.mxu0 0
        %6773 = vmatprep.subr.bf16.mxu0 0
        %6774 = vmatpush2.bf16.msra.mxu0 0
        %6775 = vmatprep.mubr.bf16.mxu0 0
        %6776 = vmatmul.mubr.bf16.gmra.mxu0 %v6717
        %v6777 = vpop.f32.mrf.mxu0
        %v6778 = vadd.f32 0.0, %v6777
        %v6779 = vpop.f32.mrf.mxu0
        %v6780 = vpop.f32.mrf.mxu0
        %v6781 = vadd.f32 0.0, %v6780
        %v6782 = vpop.f32.mrf.mxu0
        %6783 = vmatprep.mubr.bf16.mxu0 0
        %6784 = vmatmul.mubr.bf16.gmra.mxu0 %v6720
        %v6785 = vpop.f32.mrf.mxu0
        %v6786 = vadd.f32 0.0, %v6785
        %v6787 = vpop.f32.mrf.mxu0
        %v6788 = vpop.f32.mrf.mxu0
        %v6789 = vadd.f32 0.0, %v6788
        %v6790 = vpop.f32.mrf.mxu0
        %6791 = vmatprep.mubr.bf16.mxu0 0
        %6792 = vmatmul.mubr.bf16.gmra.mxu0 %v6723
        %v6793 = vpop.f32.mrf.mxu0
        %v6794 = vadd.f32 0.0, %v6793
        %v6795 = vpop.f32.mrf.mxu0
        %v6796 = vpop.f32.mrf.mxu0
        %v6797 = vadd.f32 0.0, %v6796
        %v6798 = vpop.f32.mrf.mxu0
        %6799 = vmatprep.mubr.bf16.mxu0 0
        %6800 = vmatmul.mubr.bf16.gmra.mxu0 %v6726
        %v6801 = vpop.f32.mrf.mxu0
        %v6802 = vadd.f32 0.0, %v6801
        %v6803 = vpop.f32.mrf.mxu0
        %v6804 = vpop.f32.mrf.mxu0
        %v6805 = vadd.f32 0.0, %v6804
        %v6806 = vpop.f32.mrf.mxu0
        %6807 = vmatprep.mubr.bf16.mxu0 0
        %6808 = vmatmul.mubr.bf16.gmra.mxu0 %v6729
        %v6809 = vpop.f32.mrf.mxu0
        %v6810 = vadd.f32 0.0, %v6809
        %v6811 = vpop.f32.mrf.mxu0
        %v6812 = vpop.f32.mrf.mxu0
        %v6813 = vadd.f32 0.0, %v6812
        %v6814 = vpop.f32.mrf.mxu0
        %6815 = vmatprep.mubr.bf16.mxu0 0
        %6816 = vmatmul.mubr.bf16.gmra.mxu0 %v6732
        %v6817 = vpop.f32.mrf.mxu0
        %v6818 = vadd.f32 0.0, %v6817
        %v6819 = vpop.f32.mrf.mxu0
        %v6820 = vpop.f32.mrf.mxu0
        %v6821 = vadd.f32 0.0, %v6820
        %v6822 = vpop.f32.mrf.mxu0
        %6823 = vmatprep.mubr.bf16.mxu0 0
        %6824 = vmatmul.mubr.bf16.gmra.mxu0 %v6735
        %v6825 = vpop.f32.mrf.mxu0
        %v6826 = vadd.f32 0.0, %v6825
        %v6827 = vpop.f32.mrf.mxu0
        %v6828 = vpop.f32.mrf.mxu0
        %v6829 = vadd.f32 0.0, %v6828
        %v6830 = vpop.f32.mrf.mxu0
        %6831 = vmatprep.mubr.bf16.mxu0 0
        %6832 = vmatmul.mubr.bf16.gmra.mxu0 %v6738
        %v6833 = vpop.f32.mrf.mxu0
        %v6834 = vadd.f32 0.0, %v6833
        %v6835 = vpop.f32.mrf.mxu0
        %v6836 = vpop.f32.mrf.mxu0
        %v6837 = vadd.f32 0.0, %v6836
        %v6838 = vpop.f32.mrf.mxu0
        %6839 = vdwg.mxu0
        %v6840 = vadd.f32 %v6673, %v6778
        %v6841 = vadd.f32 %v6674, %v6781
        %v6842 = vadd.f32 %v6675, %v6786
        %v6843 = vadd.f32 %v6676, %v6789
        %v6844 = vadd.f32 %v6677, %v6794
        %v6845 = vadd.f32 %v6678, %v6797
        %v6846 = vadd.f32 %v6679, %v6802
        %v6847 = vadd.f32 %v6680, %v6805
        %v6848 = vadd.f32 %v6681, %v6810
        %v6849 = vadd.f32 %v6682, %v6813
        %v6850 = vadd.f32 %v6683, %v6818
        %v6851 = vadd.f32 %v6684, %v6821
        %v6852 = vadd.f32 %v6685, %v6826
        %v6853 = vadd.f32 %v6686, %v6829
        %v6854 = vadd.f32 %v6687, %v6834
        %v6855 = vadd.f32 %v6688, %v6837
        %v6856 = vld [vmem:[%s6020 + $0x5] sm:$0xff]
        %v6857 = vld [vmem:[%s6020 + $0xd] sm:$0xff]
        %v6858 = vld [vmem:[%s6020 + $0x1d] sm:$0xff]
        %v6859 = vld [vmem:[%s6020 + $0x25] sm:$0xff]
        %v6860 = vld [vmem:[%s6020 + $0x35] sm:$0xff]
        %v6861 = vld [vmem:[%s6020 + $0x3d] sm:$0xff]
        %v6862 = vld [vmem:[%s6020 + $0x4d] sm:$0xff]
        %v6863 = vld [vmem:[%s6020 + $0x55] sm:$0xff]
        %v6864 = vld [vmem:[%s6020 + $0x65] sm:$0xff]
        %v6865 = vld [vmem:[%s6020 + $0x6d] sm:$0xff]
        %v6866 = vld [vmem:[%s6020 + $0x7d] sm:$0xff]
        %v6867 = vld [vmem:[%s6020 + $0x85] sm:$0xff]
        %v6868 = vld [vmem:[%s6020 + $0x95] sm:$0xff]
        %v6869 = vld [vmem:[%s6020 + $0x9d] sm:$0xff]
        %v6870 = vld [vmem:[%s6020 + $0xad] sm:$0xff]
        %v6871 = vld [vmem:[%s6020 + $0xb5] sm:$0xff]
        %v6872 = vpack.c.bf16 %v6857, %v6856
        %v6873 = vpack.c.bf16 %v6859, %v6858
        %v6874 = vpack.c.bf16 %v6861, %v6860
        %v6875 = vpack.c.bf16 %v6863, %v6862
        %v6876 = vpack.c.bf16 %v6865, %v6864
        %v6877 = vpack.c.bf16 %v6867, %v6866
        %v6878 = vpack.c.bf16 %v6869, %v6868
        %v6879 = vpack.c.bf16 %v6871, %v6870
        %s6880 = scalar_lea.vmem %s1, 160
        %v6881 = vld [vmem:[%s6880] sm:$0x7]
        %v6882 = vpack.c.bf16 %v6881, %v6881
        %v6884 = vsel %vm242, %v6872, 0
        %v6887 = vsel %vm242, %v6873, 0
        %v6890 = vsel %vm242, %v6874, 0
        %v6893 = vsel %vm242, %v6875, 0
        %v6896 = vsel %vm242, %v6876, 0
        %v6899 = vsel %vm242, %v6877, 0
        %v6902 = vsel %vm242, %v6878, 0
        %v6905 = vsel %vm242, %v6879, 0
        %v6908 = vand.u32 %v6882, %v270
        %6910 = vmatprep.subr.bf16.mxu0 0
        %6911 = vmatpush1.bf16.msra.mxu0 0
        %6912 = vmatprep.subr.bf16.mxu0 0
        %6913 = vmatpush1.bf16.msra.mxu0 0
        %6914 = vmatprep.subr.bf16.mxu0 0
        %6915 = vmatpush1.bf16.msra.mxu0 0
        %6916 = vmatprep.subr.bf16.mxu0 0
        %6917 = vmatpush1.bf16.msra.mxu0 0
        %6918 = vmatprep.subr.bf16.mxu0 0
        %6919 = vmatpush1.bf16.msra.mxu0 0
        %6920 = vmatprep.subr.bf16.mxu0 0
        %6921 = vmatpush1.bf16.msra.mxu0 0
        %6922 = vmatprep.subr.bf16.mxu0 0
        %6923 = vmatpush1.bf16.msra.mxu0 0
        %6924 = vmatprep.subr.bf16.mxu0 0
        %6925 = vmatpush1.bf16.msra.mxu0 %v6908
        %6926 = vmatprep.subr.bf16.mxu0 0
        %6927 = vmatpush2.bf16.msra.mxu0 0
        %6928 = vmatprep.subr.bf16.mxu0 0
        %6929 = vmatpush2.bf16.msra.mxu0 0
        %6930 = vmatprep.subr.bf16.mxu0 0
        %6931 = vmatpush2.bf16.msra.mxu0 0
        %6932 = vmatprep.subr.bf16.mxu0 0
        %6933 = vmatpush2.bf16.msra.mxu0 0
        %6934 = vmatprep.subr.bf16.mxu0 0
        %6935 = vmatpush2.bf16.msra.mxu0 0
        %6936 = vmatprep.subr.bf16.mxu0 0
        %6937 = vmatpush2.bf16.msra.mxu0 0
        %6938 = vmatprep.subr.bf16.mxu0 0
        %6939 = vmatpush2.bf16.msra.mxu0 0
        %6940 = vmatprep.subr.bf16.mxu0 0
        %6941 = vmatpush2.bf16.msra.mxu0 0
        %6942 = vmatprep.mubr.bf16.mxu0 0
        %6943 = vmatmul.mubr.bf16.gmra.mxu0 %v6884
        %v6944 = vpop.f32.mrf.mxu0
        %v6945 = vadd.f32 0.0, %v6944
        %v6946 = vpop.f32.mrf.mxu0
        %v6947 = vpop.f32.mrf.mxu0
        %v6948 = vadd.f32 0.0, %v6947
        %v6949 = vpop.f32.mrf.mxu0
        %6950 = vmatprep.mubr.bf16.mxu0 0
        %6951 = vmatmul.mubr.bf16.gmra.mxu0 %v6887
        %v6952 = vpop.f32.mrf.mxu0
        %v6953 = vadd.f32 0.0, %v6952
        %v6954 = vpop.f32.mrf.mxu0
        %v6955 = vpop.f32.mrf.mxu0
        %v6956 = vadd.f32 0.0, %v6955
        %v6957 = vpop.f32.mrf.mxu0
        %6958 = vmatprep.mubr.bf16.mxu0 0
        %6959 = vmatmul.mubr.bf16.gmra.mxu0 %v6890
        %v6960 = vpop.f32.mrf.mxu0
        %v6961 = vadd.f32 0.0, %v6960
        %v6962 = vpop.f32.mrf.mxu0
        %v6963 = vpop.f32.mrf.mxu0
        %v6964 = vadd.f32 0.0, %v6963
        %v6965 = vpop.f32.mrf.mxu0
        %6966 = vmatprep.mubr.bf16.mxu0 0
        %6967 = vmatmul.mubr.bf16.gmra.mxu0 %v6893
        %v6968 = vpop.f32.mrf.mxu0
        %v6969 = vadd.f32 0.0, %v6968
        %v6970 = vpop.f32.mrf.mxu0
        %v6971 = vpop.f32.mrf.mxu0
        %v6972 = vadd.f32 0.0, %v6971
        %v6973 = vpop.f32.mrf.mxu0
        %6974 = vmatprep.mubr.bf16.mxu0 0
        %6975 = vmatmul.mubr.bf16.gmra.mxu0 %v6896
        %v6976 = vpop.f32.mrf.mxu0
        %v6977 = vadd.f32 0.0, %v6976
        %v6978 = vpop.f32.mrf.mxu0
        %v6979 = vpop.f32.mrf.mxu0
        %v6980 = vadd.f32 0.0, %v6979
        %v6981 = vpop.f32.mrf.mxu0
        %6982 = vmatprep.mubr.bf16.mxu0 0
        %6983 = vmatmul.mubr.bf16.gmra.mxu0 %v6899
        %v6984 = vpop.f32.mrf.mxu0
        %v6985 = vadd.f32 0.0, %v6984
        %v6986 = vpop.f32.mrf.mxu0
        %v6987 = vpop.f32.mrf.mxu0
        %v6988 = vadd.f32 0.0, %v6987
        %v6989 = vpop.f32.mrf.mxu0
        %6990 = vmatprep.mubr.bf16.mxu0 0
        %6991 = vmatmul.mubr.bf16.gmra.mxu0 %v6902
        %v6992 = vpop.f32.mrf.mxu0
        %v6993 = vadd.f32 0.0, %v6992
        %v6994 = vpop.f32.mrf.mxu0
        %v6995 = vpop.f32.mrf.mxu0
        %v6996 = vadd.f32 0.0, %v6995
        %v6997 = vpop.f32.mrf.mxu0
        %6998 = vmatprep.mubr.bf16.mxu0 0
        %6999 = vmatmul.mubr.bf16.gmra.mxu0 %v6905
        %v7000 = vpop.f32.mrf.mxu0
        %v7001 = vadd.f32 0.0, %v7000
        %v7002 = vpop.f32.mrf.mxu0
        %v7003 = vpop.f32.mrf.mxu0
        %v7004 = vadd.f32 0.0, %v7003
        %v7005 = vpop.f32.mrf.mxu0
        %7006 = vdwg.mxu0
        %v7007 = vadd.f32 %v6840, %v6945
        %v7008 = vadd.f32 %v6841, %v6948
        %v7009 = vadd.f32 %v6842, %v6953
        %v7010 = vadd.f32 %v6843, %v6956
        %v7011 = vadd.f32 %v6844, %v6961
        %v7012 = vadd.f32 %v6845, %v6964
        %v7013 = vadd.f32 %v6846, %v6969
        %v7014 = vadd.f32 %v6847, %v6972
        %v7015 = vadd.f32 %v6848, %v6977
        %v7016 = vadd.f32 %v6849, %v6980
        %v7017 = vadd.f32 %v6850, %v6985
        %v7018 = vadd.f32 %v6851, %v6988
        %v7019 = vadd.f32 %v6852, %v6993
        %v7020 = vadd.f32 %v6853, %v6996
        %v7021 = vadd.f32 %v6854, %v7001
        %v7022 = vadd.f32 %v6855, %v7004
        %v7023 = vld [vmem:[%s6020 + $0x6] sm:$0xff]
        %v7024 = vld [vmem:[%s6020 + $0xe] sm:$0xff]
        %v7025 = vld [vmem:[%s6020 + $0x1e] sm:$0xff]
        %v7026 = vld [vmem:[%s6020 + $0x26] sm:$0xff]
        %v7027 = vld [vmem:[%s6020 + $0x36] sm:$0xff]
        %v7028 = vld [vmem:[%s6020 + $0x3e] sm:$0xff]
        %v7029 = vld [vmem:[%s6020 + $0x4e] sm:$0xff]
        %v7030 = vld [vmem:[%s6020 + $0x56] sm:$0xff]
        %v7031 = vld [vmem:[%s6020 + $0x66] sm:$0xff]
        %v7032 = vld [vmem:[%s6020 + $0x6e] sm:$0xff]
        %v7033 = vld [vmem:[%s6020 + $0x7e] sm:$0xff]
        %v7034 = vld [vmem:[%s6020 + $0x86] sm:$0xff]
        %v7035 = vld [vmem:[%s6020 + $0x96] sm:$0xff]
        %v7036 = vld [vmem:[%s6020 + $0x9e] sm:$0xff]
        %v7037 = vld [vmem:[%s6020 + $0xae] sm:$0xff]
        %v7038 = vld [vmem:[%s6020 + $0xb6] sm:$0xff]
        %v7039 = vpack.c.bf16 %v7024, %v7023
        %v7040 = vpack.c.bf16 %v7026, %v7025
        %v7041 = vpack.c.bf16 %v7028, %v7027
        %v7042 = vpack.c.bf16 %v7030, %v7029
        %v7043 = vpack.c.bf16 %v7032, %v7031
        %v7044 = vpack.c.bf16 %v7034, %v7033
        %v7045 = vpack.c.bf16 %v7036, %v7035
        %v7046 = vpack.c.bf16 %v7038, %v7037
        %s7047 = scalar_lea.vmem %s1, 164
        %v7048 = vld [vmem:[%s7047] sm:$0x7]
        %v7049 = vpack.c.bf16 %v7048, %v7048
        %v7051 = vsel %vm242, %v7039, 0
        %v7054 = vsel %vm242, %v7040, 0
        %v7057 = vsel %vm242, %v7041, 0
        %v7060 = vsel %vm242, %v7042, 0
        %v7063 = vsel %vm242, %v7043, 0
        %v7066 = vsel %vm242, %v7044, 0
        %v7069 = vsel %vm242, %v7045, 0
        %v7072 = vsel %vm242, %v7046, 0
        %v7075 = vand.u32 %v7049, %v270
        %7077 = vmatprep.subr.bf16.mxu0 0
        %7078 = vmatpush1.bf16.msra.mxu0 0
        %7079 = vmatprep.subr.bf16.mxu0 0
        %7080 = vmatpush1.bf16.msra.mxu0 0
        %7081 = vmatprep.subr.bf16.mxu0 0
        %7082 = vmatpush1.bf16.msra.mxu0 0
        %7083 = vmatprep.subr.bf16.mxu0 0
        %7084 = vmatpush1.bf16.msra.mxu0 0
        %7085 = vmatprep.subr.bf16.mxu0 0
        %7086 = vmatpush1.bf16.msra.mxu0 0
        %7087 = vmatprep.subr.bf16.mxu0 0
        %7088 = vmatpush1.bf16.msra.mxu0 0
        %7089 = vmatprep.subr.bf16.mxu0 0
        %7090 = vmatpush1.bf16.msra.mxu0 0
        %7091 = vmatprep.subr.bf16.mxu0 0
        %7092 = vmatpush1.bf16.msra.mxu0 %v7075
        %7093 = vmatprep.subr.bf16.mxu0 0
        %7094 = vmatpush2.bf16.msra.mxu0 0
        %7095 = vmatprep.subr.bf16.mxu0 0
        %7096 = vmatpush2.bf16.msra.mxu0 0
        %7097 = vmatprep.subr.bf16.mxu0 0
        %7098 = vmatpush2.bf16.msra.mxu0 0
        %7099 = vmatprep.subr.bf16.mxu0 0
        %7100 = vmatpush2.bf16.msra.mxu0 0
        %7101 = vmatprep.subr.bf16.mxu0 0
        %7102 = vmatpush2.bf16.msra.mxu0 0
        %7103 = vmatprep.subr.bf16.mxu0 0
        %7104 = vmatpush2.bf16.msra.mxu0 0
        %7105 = vmatprep.subr.bf16.mxu0 0
        %7106 = vmatpush2.bf16.msra.mxu0 0
        %7107 = vmatprep.subr.bf16.mxu0 0
        %7108 = vmatpush2.bf16.msra.mxu0 0
        %7109 = vmatprep.mubr.bf16.mxu0 0
        %7110 = vmatmul.mubr.bf16.gmra.mxu0 %v7051
        %v7111 = vpop.f32.mrf.mxu0
        %v7112 = vadd.f32 0.0, %v7111
        %v7113 = vpop.f32.mrf.mxu0
        %v7114 = vpop.f32.mrf.mxu0
        %v7115 = vadd.f32 0.0, %v7114
        %v7116 = vpop.f32.mrf.mxu0
        %7117 = vmatprep.mubr.bf16.mxu0 0
        %7118 = vmatmul.mubr.bf16.gmra.mxu0 %v7054
        %v7119 = vpop.f32.mrf.mxu0
        %v7120 = vadd.f32 0.0, %v7119
        %v7121 = vpop.f32.mrf.mxu0
        %v7122 = vpop.f32.mrf.mxu0
        %v7123 = vadd.f32 0.0, %v7122
        %v7124 = vpop.f32.mrf.mxu0
        %7125 = vmatprep.mubr.bf16.mxu0 0
        %7126 = vmatmul.mubr.bf16.gmra.mxu0 %v7057
        %v7127 = vpop.f32.mrf.mxu0
        %v7128 = vadd.f32 0.0, %v7127
        %v7129 = vpop.f32.mrf.mxu0
        %v7130 = vpop.f32.mrf.mxu0
        %v7131 = vadd.f32 0.0, %v7130
        %v7132 = vpop.f32.mrf.mxu0
        %7133 = vmatprep.mubr.bf16.mxu0 0
        %7134 = vmatmul.mubr.bf16.gmra.mxu0 %v7060
        %v7135 = vpop.f32.mrf.mxu0
        %v7136 = vadd.f32 0.0, %v7135
        %v7137 = vpop.f32.mrf.mxu0
        %v7138 = vpop.f32.mrf.mxu0
        %v7139 = vadd.f32 0.0, %v7138
        %v7140 = vpop.f32.mrf.mxu0
        %7141 = vmatprep.mubr.bf16.mxu0 0
        %7142 = vmatmul.mubr.bf16.gmra.mxu0 %v7063
        %v7143 = vpop.f32.mrf.mxu0
        %v7144 = vadd.f32 0.0, %v7143
        %v7145 = vpop.f32.mrf.mxu0
        %v7146 = vpop.f32.mrf.mxu0
        %v7147 = vadd.f32 0.0, %v7146
        %v7148 = vpop.f32.mrf.mxu0
        %7149 = vmatprep.mubr.bf16.mxu0 0
        %7150 = vmatmul.mubr.bf16.gmra.mxu0 %v7066
        %v7151 = vpop.f32.mrf.mxu0
        %v7152 = vadd.f32 0.0, %v7151
        %v7153 = vpop.f32.mrf.mxu0
        %v7154 = vpop.f32.mrf.mxu0
        %v7155 = vadd.f32 0.0, %v7154
        %v7156 = vpop.f32.mrf.mxu0
        %7157 = vmatprep.mubr.bf16.mxu0 0
        %7158 = vmatmul.mubr.bf16.gmra.mxu0 %v7069
        %v7159 = vpop.f32.mrf.mxu0
        %v7160 = vadd.f32 0.0, %v7159
        %v7161 = vpop.f32.mrf.mxu0
        %v7162 = vpop.f32.mrf.mxu0
        %v7163 = vadd.f32 0.0, %v7162
        %v7164 = vpop.f32.mrf.mxu0
        %7165 = vmatprep.mubr.bf16.mxu0 0
        %7166 = vmatmul.mubr.bf16.gmra.mxu0 %v7072
        %v7167 = vpop.f32.mrf.mxu0
        %v7168 = vadd.f32 0.0, %v7167
        %v7169 = vpop.f32.mrf.mxu0
        %v7170 = vpop.f32.mrf.mxu0
        %v7171 = vadd.f32 0.0, %v7170
        %v7172 = vpop.f32.mrf.mxu0
        %7173 = vdwg.mxu0
        %v7174 = vadd.f32 %v7007, %v7112
        %v7175 = vadd.f32 %v7008, %v7115
        %v7176 = vadd.f32 %v7009, %v7120
        %v7177 = vadd.f32 %v7010, %v7123
        %v7178 = vadd.f32 %v7011, %v7128
        %v7179 = vadd.f32 %v7012, %v7131
        %v7180 = vadd.f32 %v7013, %v7136
        %v7181 = vadd.f32 %v7014, %v7139
        %v7182 = vadd.f32 %v7015, %v7144
        %v7183 = vadd.f32 %v7016, %v7147
        %v7184 = vadd.f32 %v7017, %v7152
        %v7185 = vadd.f32 %v7018, %v7155
        %v7186 = vadd.f32 %v7019, %v7160
        %v7187 = vadd.f32 %v7020, %v7163
        %v7188 = vadd.f32 %v7021, %v7168
        %v7189 = vadd.f32 %v7022, %v7171
        %s7190 = sadd.s32 %s185, 6
        %s7191 = smul.u32 %s7190, 24
        %s7192 = scalar_lea.vmem %s182, %s7191
        %v7193 = vld [vmem:[%s7192] sm:$0xff]
        %v7194 = vld [vmem:[%s7192 + $0x8] sm:$0xff]
        %v7195 = vld [vmem:[%s7192 + $0x18] sm:$0xff]
        %v7196 = vld [vmem:[%s7192 + $0x20] sm:$0xff]
        %v7197 = vld [vmem:[%s7192 + $0x30] sm:$0xff]
        %v7198 = vld [vmem:[%s7192 + $0x38] sm:$0xff]
        %v7199 = vld [vmem:[%s7192 + $0x48] sm:$0xff]
        %v7200 = vld [vmem:[%s7192 + $0x50] sm:$0xff]
        %v7201 = vld [vmem:[%s7192 + $0x60] sm:$0xff]
        %v7202 = vld [vmem:[%s7192 + $0x68] sm:$0xff]
        %v7203 = vld [vmem:[%s7192 + $0x78] sm:$0xff]
        %v7204 = vld [vmem:[%s7192 + $0x80] sm:$0xff]
        %v7205 = vld [vmem:[%s7192 + $0x90] sm:$0xff]
        %v7206 = vld [vmem:[%s7192 + $0x98] sm:$0xff]
        %v7207 = vld [vmem:[%s7192 + $0xa8] sm:$0xff]
        %v7208 = vld [vmem:[%s7192 + $0xb0] sm:$0xff]
        %v7209 = vpack.c.bf16 %v7194, %v7193
        %v7210 = vpack.c.bf16 %v7196, %v7195
        %v7211 = vpack.c.bf16 %v7198, %v7197
        %v7212 = vpack.c.bf16 %v7200, %v7199
        %v7213 = vpack.c.bf16 %v7202, %v7201
        %v7214 = vpack.c.bf16 %v7204, %v7203
        %v7215 = vpack.c.bf16 %v7206, %v7205
        %v7216 = vpack.c.bf16 %v7208, %v7207
        %s7217 = scalar_lea.vmem %s1, 168
        %v7218 = vld [vmem:[%s7217] sm:$0x7]
        %v7219 = vpack.c.bf16 %v7218, %v7218
        %v7221 = vsel %vm242, %v7209, 0
        %v7224 = vsel %vm242, %v7210, 0
        %v7227 = vsel %vm242, %v7211, 0
        %v7230 = vsel %vm242, %v7212, 0
        %v7233 = vsel %vm242, %v7213, 0
        %v7236 = vsel %vm242, %v7214, 0
        %v7239 = vsel %vm242, %v7215, 0
        %v7242 = vsel %vm242, %v7216, 0
        %v7245 = vand.u32 %v7219, %v270
        %7247 = vmatprep.subr.bf16.mxu0 0
        %7248 = vmatpush1.bf16.msra.mxu0 0
        %7249 = vmatprep.subr.bf16.mxu0 0
        %7250 = vmatpush1.bf16.msra.mxu0 0
        %7251 = vmatprep.subr.bf16.mxu0 0
        %7252 = vmatpush1.bf16.msra.mxu0 0
        %7253 = vmatprep.subr.bf16.mxu0 0
        %7254 = vmatpush1.bf16.msra.mxu0 0
        %7255 = vmatprep.subr.bf16.mxu0 0
        %7256 = vmatpush1.bf16.msra.mxu0 0
        %7257 = vmatprep.subr.bf16.mxu0 0
        %7258 = vmatpush1.bf16.msra.mxu0 0
        %7259 = vmatprep.subr.bf16.mxu0 0
        %7260 = vmatpush1.bf16.msra.mxu0 0
        %7261 = vmatprep.subr.bf16.mxu0 0
        %7262 = vmatpush1.bf16.msra.mxu0 %v7245
        %7263 = vmatprep.subr.bf16.mxu0 0
        %7264 = vmatpush2.bf16.msra.mxu0 0
        %7265 = vmatprep.subr.bf16.mxu0 0
        %7266 = vmatpush2.bf16.msra.mxu0 0
        %7267 = vmatprep.subr.bf16.mxu0 0
        %7268 = vmatpush2.bf16.msra.mxu0 0
        %7269 = vmatprep.subr.bf16.mxu0 0
        %7270 = vmatpush2.bf16.msra.mxu0 0
        %7271 = vmatprep.subr.bf16.mxu0 0
        %7272 = vmatpush2.bf16.msra.mxu0 0
        %7273 = vmatprep.subr.bf16.mxu0 0
        %7274 = vmatpush2.bf16.msra.mxu0 0
        %7275 = vmatprep.subr.bf16.mxu0 0
        %7276 = vmatpush2.bf16.msra.mxu0 0
        %7277 = vmatprep.subr.bf16.mxu0 0
        %7278 = vmatpush2.bf16.msra.mxu0 0
        %7279 = vmatprep.mubr.bf16.mxu0 0
        %7280 = vmatmul.mubr.bf16.gmra.mxu0 %v7221
        %v7281 = vpop.f32.mrf.mxu0
        %v7282 = vadd.f32 0.0, %v7281
        %v7283 = vpop.f32.mrf.mxu0
        %v7284 = vpop.f32.mrf.mxu0
        %v7285 = vadd.f32 0.0, %v7284
        %v7286 = vpop.f32.mrf.mxu0
        %7287 = vmatprep.mubr.bf16.mxu0 0
        %7288 = vmatmul.mubr.bf16.gmra.mxu0 %v7224
        %v7289 = vpop.f32.mrf.mxu0
        %v7290 = vadd.f32 0.0, %v7289
        %v7291 = vpop.f32.mrf.mxu0
        %v7292 = vpop.f32.mrf.mxu0
        %v7293 = vadd.f32 0.0, %v7292
        %v7294 = vpop.f32.mrf.mxu0
        %7295 = vmatprep.mubr.bf16.mxu0 0
        %7296 = vmatmul.mubr.bf16.gmra.mxu0 %v7227
        %v7297 = vpop.f32.mrf.mxu0
        %v7298 = vadd.f32 0.0, %v7297
        %v7299 = vpop.f32.mrf.mxu0
        %v7300 = vpop.f32.mrf.mxu0
        %v7301 = vadd.f32 0.0, %v7300
        %v7302 = vpop.f32.mrf.mxu0
        %7303 = vmatprep.mubr.bf16.mxu0 0
        %7304 = vmatmul.mubr.bf16.gmra.mxu0 %v7230
        %v7305 = vpop.f32.mrf.mxu0
        %v7306 = vadd.f32 0.0, %v7305
        %v7307 = vpop.f32.mrf.mxu0
        %v7308 = vpop.f32.mrf.mxu0
        %v7309 = vadd.f32 0.0, %v7308
        %v7310 = vpop.f32.mrf.mxu0
        %7311 = vmatprep.mubr.bf16.mxu0 0
        %7312 = vmatmul.mubr.bf16.gmra.mxu0 %v7233
        %v7313 = vpop.f32.mrf.mxu0
        %v7314 = vadd.f32 0.0, %v7313
        %v7315 = vpop.f32.mrf.mxu0
        %v7316 = vpop.f32.mrf.mxu0
        %v7317 = vadd.f32 0.0, %v7316
        %v7318 = vpop.f32.mrf.mxu0
        %7319 = vmatprep.mubr.bf16.mxu0 0
        %7320 = vmatmul.mubr.bf16.gmra.mxu0 %v7236
        %v7321 = vpop.f32.mrf.mxu0
        %v7322 = vadd.f32 0.0, %v7321
        %v7323 = vpop.f32.mrf.mxu0
        %v7324 = vpop.f32.mrf.mxu0
        %v7325 = vadd.f32 0.0, %v7324
        %v7326 = vpop.f32.mrf.mxu0
        %7327 = vmatprep.mubr.bf16.mxu0 0
        %7328 = vmatmul.mubr.bf16.gmra.mxu0 %v7239
        %v7329 = vpop.f32.mrf.mxu0
        %v7330 = vadd.f32 0.0, %v7329
        %v7331 = vpop.f32.mrf.mxu0
        %v7332 = vpop.f32.mrf.mxu0
        %v7333 = vadd.f32 0.0, %v7332
        %v7334 = vpop.f32.mrf.mxu0
        %7335 = vmatprep.mubr.bf16.mxu0 0
        %7336 = vmatmul.mubr.bf16.gmra.mxu0 %v7242
        %v7337 = vpop.f32.mrf.mxu0
        %v7338 = vadd.f32 0.0, %v7337
        %v7339 = vpop.f32.mrf.mxu0
        %v7340 = vpop.f32.mrf.mxu0
        %v7341 = vadd.f32 0.0, %v7340
        %v7342 = vpop.f32.mrf.mxu0
        %7343 = vdwg.mxu0
        %v7344 = vadd.f32 %v7174, %v7282
        %v7345 = vadd.f32 %v7175, %v7285
        %v7346 = vadd.f32 %v7176, %v7290
        %v7347 = vadd.f32 %v7177, %v7293
        %v7348 = vadd.f32 %v7178, %v7298
        %v7349 = vadd.f32 %v7179, %v7301
        %v7350 = vadd.f32 %v7180, %v7306
        %v7351 = vadd.f32 %v7181, %v7309
        %v7352 = vadd.f32 %v7182, %v7314
        %v7353 = vadd.f32 %v7183, %v7317
        %v7354 = vadd.f32 %v7184, %v7322
        %v7355 = vadd.f32 %v7185, %v7325
        %v7356 = vadd.f32 %v7186, %v7330
        %v7357 = vadd.f32 %v7187, %v7333
        %v7358 = vadd.f32 %v7188, %v7338
        %v7359 = vadd.f32 %v7189, %v7341
        %v7360 = vld [vmem:[%s7192 + $0x1] sm:$0xff]
        %v7361 = vld [vmem:[%s7192 + $0x9] sm:$0xff]
        %v7362 = vld [vmem:[%s7192 + $0x19] sm:$0xff]
        %v7363 = vld [vmem:[%s7192 + $0x21] sm:$0xff]
        %v7364 = vld [vmem:[%s7192 + $0x31] sm:$0xff]
        %v7365 = vld [vmem:[%s7192 + $0x39] sm:$0xff]
        %v7366 = vld [vmem:[%s7192 + $0x49] sm:$0xff]
        %v7367 = vld [vmem:[%s7192 + $0x51] sm:$0xff]
        %v7368 = vld [vmem:[%s7192 + $0x61] sm:$0xff]
        %v7369 = vld [vmem:[%s7192 + $0x69] sm:$0xff]
        %v7370 = vld [vmem:[%s7192 + $0x79] sm:$0xff]
        %v7371 = vld [vmem:[%s7192 + $0x81] sm:$0xff]
        %v7372 = vld [vmem:[%s7192 + $0x91] sm:$0xff]
        %v7373 = vld [vmem:[%s7192 + $0x99] sm:$0xff]
        %v7374 = vld [vmem:[%s7192 + $0xa9] sm:$0xff]
        %v7375 = vld [vmem:[%s7192 + $0xb1] sm:$0xff]
        %v7376 = vpack.c.bf16 %v7361, %v7360
        %v7377 = vpack.c.bf16 %v7363, %v7362
        %v7378 = vpack.c.bf16 %v7365, %v7364
        %v7379 = vpack.c.bf16 %v7367, %v7366
        %v7380 = vpack.c.bf16 %v7369, %v7368
        %v7381 = vpack.c.bf16 %v7371, %v7370
        %v7382 = vpack.c.bf16 %v7373, %v7372
        %v7383 = vpack.c.bf16 %v7375, %v7374
        %s7384 = scalar_lea.vmem %s1, 172
        %v7385 = vld [vmem:[%s7384] sm:$0x7]
        %v7386 = vpack.c.bf16 %v7385, %v7385
        %v7388 = vsel %vm242, %v7376, 0
        %v7391 = vsel %vm242, %v7377, 0
        %v7394 = vsel %vm242, %v7378, 0
        %v7397 = vsel %vm242, %v7379, 0
        %v7400 = vsel %vm242, %v7380, 0
        %v7403 = vsel %vm242, %v7381, 0
        %v7406 = vsel %vm242, %v7382, 0
        %v7409 = vsel %vm242, %v7383, 0
        %v7412 = vand.u32 %v7386, %v270
        %7414 = vmatprep.subr.bf16.mxu0 0
        %7415 = vmatpush1.bf16.msra.mxu0 0
        %7416 = vmatprep.subr.bf16.mxu0 0
        %7417 = vmatpush1.bf16.msra.mxu0 0
        %7418 = vmatprep.subr.bf16.mxu0 0
        %7419 = vmatpush1.bf16.msra.mxu0 0
        %7420 = vmatprep.subr.bf16.mxu0 0
        %7421 = vmatpush1.bf16.msra.mxu0 0
        %7422 = vmatprep.subr.bf16.mxu0 0
        %7423 = vmatpush1.bf16.msra.mxu0 0
        %7424 = vmatprep.subr.bf16.mxu0 0
        %7425 = vmatpush1.bf16.msra.mxu0 0
        %7426 = vmatprep.subr.bf16.mxu0 0
        %7427 = vmatpush1.bf16.msra.mxu0 0
        %7428 = vmatprep.subr.bf16.mxu0 0
        %7429 = vmatpush1.bf16.msra.mxu0 %v7412
        %7430 = vmatprep.subr.bf16.mxu0 0
        %7431 = vmatpush2.bf16.msra.mxu0 0
        %7432 = vmatprep.subr.bf16.mxu0 0
        %7433 = vmatpush2.bf16.msra.mxu0 0
        %7434 = vmatprep.subr.bf16.mxu0 0
        %7435 = vmatpush2.bf16.msra.mxu0 0
        %7436 = vmatprep.subr.bf16.mxu0 0
        %7437 = vmatpush2.bf16.msra.mxu0 0
        %7438 = vmatprep.subr.bf16.mxu0 0
        %7439 = vmatpush2.bf16.msra.mxu0 0
        %7440 = vmatprep.subr.bf16.mxu0 0
        %7441 = vmatpush2.bf16.msra.mxu0 0
        %7442 = vmatprep.subr.bf16.mxu0 0
        %7443 = vmatpush2.bf16.msra.mxu0 0
        %7444 = vmatprep.subr.bf16.mxu0 0
        %7445 = vmatpush2.bf16.msra.mxu0 0
        %7446 = vmatprep.mubr.bf16.mxu0 0
        %7447 = vmatmul.mubr.bf16.gmra.mxu0 %v7388
        %v7448 = vpop.f32.mrf.mxu0
        %v7449 = vadd.f32 0.0, %v7448
        %v7450 = vpop.f32.mrf.mxu0
        %v7451 = vpop.f32.mrf.mxu0
        %v7452 = vadd.f32 0.0, %v7451
        %v7453 = vpop.f32.mrf.mxu0
        %7454 = vmatprep.mubr.bf16.mxu0 0
        %7455 = vmatmul.mubr.bf16.gmra.mxu0 %v7391
        %v7456 = vpop.f32.mrf.mxu0
        %v7457 = vadd.f32 0.0, %v7456
        %v7458 = vpop.f32.mrf.mxu0
        %v7459 = vpop.f32.mrf.mxu0
        %v7460 = vadd.f32 0.0, %v7459
        %v7461 = vpop.f32.mrf.mxu0
        %7462 = vmatprep.mubr.bf16.mxu0 0
        %7463 = vmatmul.mubr.bf16.gmra.mxu0 %v7394
        %v7464 = vpop.f32.mrf.mxu0
        %v7465 = vadd.f32 0.0, %v7464
        %v7466 = vpop.f32.mrf.mxu0
        %v7467 = vpop.f32.mrf.mxu0
        %v7468 = vadd.f32 0.0, %v7467
        %v7469 = vpop.f32.mrf.mxu0
        %7470 = vmatprep.mubr.bf16.mxu0 0
        %7471 = vmatmul.mubr.bf16.gmra.mxu0 %v7397
        %v7472 = vpop.f32.mrf.mxu0
        %v7473 = vadd.f32 0.0, %v7472
        %v7474 = vpop.f32.mrf.mxu0
        %v7475 = vpop.f32.mrf.mxu0
        %v7476 = vadd.f32 0.0, %v7475
        %v7477 = vpop.f32.mrf.mxu0
        %7478 = vmatprep.mubr.bf16.mxu0 0
        %7479 = vmatmul.mubr.bf16.gmra.mxu0 %v7400
        %v7480 = vpop.f32.mrf.mxu0
        %v7481 = vadd.f32 0.0, %v7480
        %v7482 = vpop.f32.mrf.mxu0
        %v7483 = vpop.f32.mrf.mxu0
        %v7484 = vadd.f32 0.0, %v7483
        %v7485 = vpop.f32.mrf.mxu0
        %7486 = vmatprep.mubr.bf16.mxu0 0
        %7487 = vmatmul.mubr.bf16.gmra.mxu0 %v7403
        %v7488 = vpop.f32.mrf.mxu0
        %v7489 = vadd.f32 0.0, %v7488
        %v7490 = vpop.f32.mrf.mxu0
        %v7491 = vpop.f32.mrf.mxu0
        %v7492 = vadd.f32 0.0, %v7491
        %v7493 = vpop.f32.mrf.mxu0
        %7494 = vmatprep.mubr.bf16.mxu0 0
        %7495 = vmatmul.mubr.bf16.gmra.mxu0 %v7406
        %v7496 = vpop.f32.mrf.mxu0
        %v7497 = vadd.f32 0.0, %v7496
        %v7498 = vpop.f32.mrf.mxu0
        %v7499 = vpop.f32.mrf.mxu0
        %v7500 = vadd.f32 0.0, %v7499
        %v7501 = vpop.f32.mrf.mxu0
        %7502 = vmatprep.mubr.bf16.mxu0 0
        %7503 = vmatmul.mubr.bf16.gmra.mxu0 %v7409
        %v7504 = vpop.f32.mrf.mxu0
        %v7505 = vadd.f32 0.0, %v7504
        %v7506 = vpop.f32.mrf.mxu0
        %v7507 = vpop.f32.mrf.mxu0
        %v7508 = vadd.f32 0.0, %v7507
        %v7509 = vpop.f32.mrf.mxu0
        %7510 = vdwg.mxu0
        %v7511 = vadd.f32 %v7344, %v7449
        %v7512 = vadd.f32 %v7345, %v7452
        %v7513 = vadd.f32 %v7346, %v7457
        %v7514 = vadd.f32 %v7347, %v7460
        %v7515 = vadd.f32 %v7348, %v7465
        %v7516 = vadd.f32 %v7349, %v7468
        %v7517 = vadd.f32 %v7350, %v7473
        %v7518 = vadd.f32 %v7351, %v7476
        %v7519 = vadd.f32 %v7352, %v7481
        %v7520 = vadd.f32 %v7353, %v7484
        %v7521 = vadd.f32 %v7354, %v7489
        %v7522 = vadd.f32 %v7355, %v7492
        %v7523 = vadd.f32 %v7356, %v7497
        %v7524 = vadd.f32 %v7357, %v7500
        %v7525 = vadd.f32 %v7358, %v7505
        %v7526 = vadd.f32 %v7359, %v7508
        %v7527 = vld [vmem:[%s7192 + $0x2] sm:$0xff]
        %v7528 = vld [vmem:[%s7192 + $0xa] sm:$0xff]
        %v7529 = vld [vmem:[%s7192 + $0x1a] sm:$0xff]
        %v7530 = vld [vmem:[%s7192 + $0x22] sm:$0xff]
        %v7531 = vld [vmem:[%s7192 + $0x32] sm:$0xff]
        %v7532 = vld [vmem:[%s7192 + $0x3a] sm:$0xff]
        %v7533 = vld [vmem:[%s7192 + $0x4a] sm:$0xff]
        %v7534 = vld [vmem:[%s7192 + $0x52] sm:$0xff]
        %v7535 = vld [vmem:[%s7192 + $0x62] sm:$0xff]
        %v7536 = vld [vmem:[%s7192 + $0x6a] sm:$0xff]
        %v7537 = vld [vmem:[%s7192 + $0x7a] sm:$0xff]
        %v7538 = vld [vmem:[%s7192 + $0x82] sm:$0xff]
        %v7539 = vld [vmem:[%s7192 + $0x92] sm:$0xff]
        %v7540 = vld [vmem:[%s7192 + $0x9a] sm:$0xff]
        %v7541 = vld [vmem:[%s7192 + $0xaa] sm:$0xff]
        %v7542 = vld [vmem:[%s7192 + $0xb2] sm:$0xff]
        %v7543 = vpack.c.bf16 %v7528, %v7527
        %v7544 = vpack.c.bf16 %v7530, %v7529
        %v7545 = vpack.c.bf16 %v7532, %v7531
        %v7546 = vpack.c.bf16 %v7534, %v7533
        %v7547 = vpack.c.bf16 %v7536, %v7535
        %v7548 = vpack.c.bf16 %v7538, %v7537
        %v7549 = vpack.c.bf16 %v7540, %v7539
        %v7550 = vpack.c.bf16 %v7542, %v7541
        %s7551 = scalar_lea.vmem %s1, 176
        %v7552 = vld [vmem:[%s7551] sm:$0x7]
        %v7553 = vpack.c.bf16 %v7552, %v7552
        %v7555 = vsel %vm242, %v7543, 0
        %v7558 = vsel %vm242, %v7544, 0
        %v7561 = vsel %vm242, %v7545, 0
        %v7564 = vsel %vm242, %v7546, 0
        %v7567 = vsel %vm242, %v7547, 0
        %v7570 = vsel %vm242, %v7548, 0
        %v7573 = vsel %vm242, %v7549, 0
        %v7576 = vsel %vm242, %v7550, 0
        %v7579 = vand.u32 %v7553, %v270
        %7581 = vmatprep.subr.bf16.mxu0 0
        %7582 = vmatpush1.bf16.msra.mxu0 0
        %7583 = vmatprep.subr.bf16.mxu0 0
        %7584 = vmatpush1.bf16.msra.mxu0 0
        %7585 = vmatprep.subr.bf16.mxu0 0
        %7586 = vmatpush1.bf16.msra.mxu0 0
        %7587 = vmatprep.subr.bf16.mxu0 0
        %7588 = vmatpush1.bf16.msra.mxu0 0
        %7589 = vmatprep.subr.bf16.mxu0 0
        %7590 = vmatpush1.bf16.msra.mxu0 0
        %7591 = vmatprep.subr.bf16.mxu0 0
        %7592 = vmatpush1.bf16.msra.mxu0 0
        %7593 = vmatprep.subr.bf16.mxu0 0
        %7594 = vmatpush1.bf16.msra.mxu0 0
        %7595 = vmatprep.subr.bf16.mxu0 0
        %7596 = vmatpush1.bf16.msra.mxu0 %v7579
        %7597 = vmatprep.subr.bf16.mxu0 0
        %7598 = vmatpush2.bf16.msra.mxu0 0
        %7599 = vmatprep.subr.bf16.mxu0 0
        %7600 = vmatpush2.bf16.msra.mxu0 0
        %7601 = vmatprep.subr.bf16.mxu0 0
        %7602 = vmatpush2.bf16.msra.mxu0 0
        %7603 = vmatprep.subr.bf16.mxu0 0
        %7604 = vmatpush2.bf16.msra.mxu0 0
        %7605 = vmatprep.subr.bf16.mxu0 0
        %7606 = vmatpush2.bf16.msra.mxu0 0
        %7607 = vmatprep.subr.bf16.mxu0 0
        %7608 = vmatpush2.bf16.msra.mxu0 0
        %7609 = vmatprep.subr.bf16.mxu0 0
        %7610 = vmatpush2.bf16.msra.mxu0 0
        %7611 = vmatprep.subr.bf16.mxu0 0
        %7612 = vmatpush2.bf16.msra.mxu0 0
        %7613 = vmatprep.mubr.bf16.mxu0 0
        %7614 = vmatmul.mubr.bf16.gmra.mxu0 %v7555
        %v7615 = vpop.f32.mrf.mxu0
        %v7616 = vadd.f32 0.0, %v7615
        %v7617 = vpop.f32.mrf.mxu0
        %v7618 = vpop.f32.mrf.mxu0
        %v7619 = vadd.f32 0.0, %v7618
        %v7620 = vpop.f32.mrf.mxu0
        %7621 = vmatprep.mubr.bf16.mxu0 0
        %7622 = vmatmul.mubr.bf16.gmra.mxu0 %v7558
        %v7623 = vpop.f32.mrf.mxu0
        %v7624 = vadd.f32 0.0, %v7623
        %v7625 = vpop.f32.mrf.mxu0
        %v7626 = vpop.f32.mrf.mxu0
        %v7627 = vadd.f32 0.0, %v7626
        %v7628 = vpop.f32.mrf.mxu0
        %7629 = vmatprep.mubr.bf16.mxu0 0
        %7630 = vmatmul.mubr.bf16.gmra.mxu0 %v7561
        %v7631 = vpop.f32.mrf.mxu0
        %v7632 = vadd.f32 0.0, %v7631
        %v7633 = vpop.f32.mrf.mxu0
        %v7634 = vpop.f32.mrf.mxu0
        %v7635 = vadd.f32 0.0, %v7634
        %v7636 = vpop.f32.mrf.mxu0
        %7637 = vmatprep.mubr.bf16.mxu0 0
        %7638 = vmatmul.mubr.bf16.gmra.mxu0 %v7564
        %v7639 = vpop.f32.mrf.mxu0
        %v7640 = vadd.f32 0.0, %v7639
        %v7641 = vpop.f32.mrf.mxu0
        %v7642 = vpop.f32.mrf.mxu0
        %v7643 = vadd.f32 0.0, %v7642
        %v7644 = vpop.f32.mrf.mxu0
        %7645 = vmatprep.mubr.bf16.mxu0 0
        %7646 = vmatmul.mubr.bf16.gmra.mxu0 %v7567
        %v7647 = vpop.f32.mrf.mxu0
        %v7648 = vadd.f32 0.0, %v7647
        %v7649 = vpop.f32.mrf.mxu0
        %v7650 = vpop.f32.mrf.mxu0
        %v7651 = vadd.f32 0.0, %v7650
        %v7652 = vpop.f32.mrf.mxu0
        %7653 = vmatprep.mubr.bf16.mxu0 0
        %7654 = vmatmul.mubr.bf16.gmra.mxu0 %v7570
        %v7655 = vpop.f32.mrf.mxu0
        %v7656 = vadd.f32 0.0, %v7655
        %v7657 = vpop.f32.mrf.mxu0
        %v7658 = vpop.f32.mrf.mxu0
        %v7659 = vadd.f32 0.0, %v7658
        %v7660 = vpop.f32.mrf.mxu0
        %7661 = vmatprep.mubr.bf16.mxu0 0
        %7662 = vmatmul.mubr.bf16.gmra.mxu0 %v7573
        %v7663 = vpop.f32.mrf.mxu0
        %v7664 = vadd.f32 0.0, %v7663
        %v7665 = vpop.f32.mrf.mxu0
        %v7666 = vpop.f32.mrf.mxu0
        %v7667 = vadd.f32 0.0, %v7666
        %v7668 = vpop.f32.mrf.mxu0
        %7669 = vmatprep.mubr.bf16.mxu0 0
        %7670 = vmatmul.mubr.bf16.gmra.mxu0 %v7576
        %v7671 = vpop.f32.mrf.mxu0
        %v7672 = vadd.f32 0.0, %v7671
        %v7673 = vpop.f32.mrf.mxu0
        %v7674 = vpop.f32.mrf.mxu0
        %v7675 = vadd.f32 0.0, %v7674
        %v7676 = vpop.f32.mrf.mxu0
        %7677 = vdwg.mxu0
        %v7678 = vadd.f32 %v7511, %v7616
        %v7679 = vadd.f32 %v7512, %v7619
        %v7680 = vadd.f32 %v7513, %v7624
        %v7681 = vadd.f32 %v7514, %v7627
        %v7682 = vadd.f32 %v7515, %v7632
        %v7683 = vadd.f32 %v7516, %v7635
        %v7684 = vadd.f32 %v7517, %v7640
        %v7685 = vadd.f32 %v7518, %v7643
        %v7686 = vadd.f32 %v7519, %v7648
        %v7687 = vadd.f32 %v7520, %v7651
        %v7688 = vadd.f32 %v7521, %v7656
        %v7689 = vadd.f32 %v7522, %v7659
        %v7690 = vadd.f32 %v7523, %v7664
        %v7691 = vadd.f32 %v7524, %v7667
        %v7692 = vadd.f32 %v7525, %v7672
        %v7693 = vadd.f32 %v7526, %v7675
        %v7694 = vld [vmem:[%s7192 + $0x3] sm:$0xff]
        %v7695 = vld [vmem:[%s7192 + $0xb] sm:$0xff]
        %v7696 = vld [vmem:[%s7192 + $0x1b] sm:$0xff]
        %v7697 = vld [vmem:[%s7192 + $0x23] sm:$0xff]
        %v7698 = vld [vmem:[%s7192 + $0x33] sm:$0xff]
        %v7699 = vld [vmem:[%s7192 + $0x3b] sm:$0xff]
        %v7700 = vld [vmem:[%s7192 + $0x4b] sm:$0xff]
        %v7701 = vld [vmem:[%s7192 + $0x53] sm:$0xff]
        %v7702 = vld [vmem:[%s7192 + $0x63] sm:$0xff]
        %v7703 = vld [vmem:[%s7192 + $0x6b] sm:$0xff]
        %v7704 = vld [vmem:[%s7192 + $0x7b] sm:$0xff]
        %v7705 = vld [vmem:[%s7192 + $0x83] sm:$0xff]
        %v7706 = vld [vmem:[%s7192 + $0x93] sm:$0xff]
        %v7707 = vld [vmem:[%s7192 + $0x9b] sm:$0xff]
        %v7708 = vld [vmem:[%s7192 + $0xab] sm:$0xff]
        %v7709 = vld [vmem:[%s7192 + $0xb3] sm:$0xff]
        %v7710 = vpack.c.bf16 %v7695, %v7694
        %v7711 = vpack.c.bf16 %v7697, %v7696
        %v7712 = vpack.c.bf16 %v7699, %v7698
        %v7713 = vpack.c.bf16 %v7701, %v7700
        %v7714 = vpack.c.bf16 %v7703, %v7702
        %v7715 = vpack.c.bf16 %v7705, %v7704
        %v7716 = vpack.c.bf16 %v7707, %v7706
        %v7717 = vpack.c.bf16 %v7709, %v7708
        %s7718 = scalar_lea.vmem %s1, 180
        %v7719 = vld [vmem:[%s7718] sm:$0x7]
        %v7720 = vpack.c.bf16 %v7719, %v7719
        %v7722 = vsel %vm242, %v7710, 0
        %v7725 = vsel %vm242, %v7711, 0
        %v7728 = vsel %vm242, %v7712, 0
        %v7731 = vsel %vm242, %v7713, 0
        %v7734 = vsel %vm242, %v7714, 0
        %v7737 = vsel %vm242, %v7715, 0
        %v7740 = vsel %vm242, %v7716, 0
        %v7743 = vsel %vm242, %v7717, 0
        %v7746 = vand.u32 %v7720, %v270
        %7748 = vmatprep.subr.bf16.mxu0 0
        %7749 = vmatpush1.bf16.msra.mxu0 0
        %7750 = vmatprep.subr.bf16.mxu0 0
        %7751 = vmatpush1.bf16.msra.mxu0 0
        %7752 = vmatprep.subr.bf16.mxu0 0
        %7753 = vmatpush1.bf16.msra.mxu0 0
        %7754 = vmatprep.subr.bf16.mxu0 0
        %7755 = vmatpush1.bf16.msra.mxu0 0
        %7756 = vmatprep.subr.bf16.mxu0 0
        %7757 = vmatpush1.bf16.msra.mxu0 0
        %7758 = vmatprep.subr.bf16.mxu0 0
        %7759 = vmatpush1.bf16.msra.mxu0 0
        %7760 = vmatprep.subr.bf16.mxu0 0
        %7761 = vmatpush1.bf16.msra.mxu0 0
        %7762 = vmatprep.subr.bf16.mxu0 0
        %7763 = vmatpush1.bf16.msra.mxu0 %v7746
        %7764 = vmatprep.subr.bf16.mxu0 0
        %7765 = vmatpush2.bf16.msra.mxu0 0
        %7766 = vmatprep.subr.bf16.mxu0 0
        %7767 = vmatpush2.bf16.msra.mxu0 0
        %7768 = vmatprep.subr.bf16.mxu0 0
        %7769 = vmatpush2.bf16.msra.mxu0 0
        %7770 = vmatprep.subr.bf16.mxu0 0
        %7771 = vmatpush2.bf16.msra.mxu0 0
        %7772 = vmatprep.subr.bf16.mxu0 0
        %7773 = vmatpush2.bf16.msra.mxu0 0
        %7774 = vmatprep.subr.bf16.mxu0 0
        %7775 = vmatpush2.bf16.msra.mxu0 0
        %7776 = vmatprep.subr.bf16.mxu0 0
        %7777 = vmatpush2.bf16.msra.mxu0 0
        %7778 = vmatprep.subr.bf16.mxu0 0
        %7779 = vmatpush2.bf16.msra.mxu0 0
        %7780 = vmatprep.mubr.bf16.mxu0 0
        %7781 = vmatmul.mubr.bf16.gmra.mxu0 %v7722
        %v7782 = vpop.f32.mrf.mxu0
        %v7783 = vadd.f32 0.0, %v7782
        %v7784 = vpop.f32.mrf.mxu0
        %v7785 = vpop.f32.mrf.mxu0
        %v7786 = vadd.f32 0.0, %v7785
        %v7787 = vpop.f32.mrf.mxu0
        %7788 = vmatprep.mubr.bf16.mxu0 0
        %7789 = vmatmul.mubr.bf16.gmra.mxu0 %v7725
        %v7790 = vpop.f32.mrf.mxu0
        %v7791 = vadd.f32 0.0, %v7790
        %v7792 = vpop.f32.mrf.mxu0
        %v7793 = vpop.f32.mrf.mxu0
        %v7794 = vadd.f32 0.0, %v7793
        %v7795 = vpop.f32.mrf.mxu0
        %7796 = vmatprep.mubr.bf16.mxu0 0
        %7797 = vmatmul.mubr.bf16.gmra.mxu0 %v7728
        %v7798 = vpop.f32.mrf.mxu0
        %v7799 = vadd.f32 0.0, %v7798
        %v7800 = vpop.f32.mrf.mxu0
        %v7801 = vpop.f32.mrf.mxu0
        %v7802 = vadd.f32 0.0, %v7801
        %v7803 = vpop.f32.mrf.mxu0
        %7804 = vmatprep.mubr.bf16.mxu0 0
        %7805 = vmatmul.mubr.bf16.gmra.mxu0 %v7731
        %v7806 = vpop.f32.mrf.mxu0
        %v7807 = vadd.f32 0.0, %v7806
        %v7808 = vpop.f32.mrf.mxu0
        %v7809 = vpop.f32.mrf.mxu0
        %v7810 = vadd.f32 0.0, %v7809
        %v7811 = vpop.f32.mrf.mxu0
        %7812 = vmatprep.mubr.bf16.mxu0 0
        %7813 = vmatmul.mubr.bf16.gmra.mxu0 %v7734
        %v7814 = vpop.f32.mrf.mxu0
        %v7815 = vadd.f32 0.0, %v7814
        %v7816 = vpop.f32.mrf.mxu0
        %v7817 = vpop.f32.mrf.mxu0
        %v7818 = vadd.f32 0.0, %v7817
        %v7819 = vpop.f32.mrf.mxu0
        %7820 = vmatprep.mubr.bf16.mxu0 0
        %7821 = vmatmul.mubr.bf16.gmra.mxu0 %v7737
        %v7822 = vpop.f32.mrf.mxu0
        %v7823 = vadd.f32 0.0, %v7822
        %v7824 = vpop.f32.mrf.mxu0
        %v7825 = vpop.f32.mrf.mxu0
        %v7826 = vadd.f32 0.0, %v7825
        %v7827 = vpop.f32.mrf.mxu0
        %7828 = vmatprep.mubr.bf16.mxu0 0
        %7829 = vmatmul.mubr.bf16.gmra.mxu0 %v7740
        %v7830 = vpop.f32.mrf.mxu0
        %v7831 = vadd.f32 0.0, %v7830
        %v7832 = vpop.f32.mrf.mxu0
        %v7833 = vpop.f32.mrf.mxu0
        %v7834 = vadd.f32 0.0, %v7833
        %v7835 = vpop.f32.mrf.mxu0
        %7836 = vmatprep.mubr.bf16.mxu0 0
        %7837 = vmatmul.mubr.bf16.gmra.mxu0 %v7743
        %v7838 = vpop.f32.mrf.mxu0
        %v7839 = vadd.f32 0.0, %v7838
        %v7840 = vpop.f32.mrf.mxu0
        %v7841 = vpop.f32.mrf.mxu0
        %v7842 = vadd.f32 0.0, %v7841
        %v7843 = vpop.f32.mrf.mxu0
        %7844 = vdwg.mxu0
        %v7845 = vadd.f32 %v7678, %v7783
        %v7846 = vadd.f32 %v7679, %v7786
        %v7847 = vadd.f32 %v7680, %v7791
        %v7848 = vadd.f32 %v7681, %v7794
        %v7849 = vadd.f32 %v7682, %v7799
        %v7850 = vadd.f32 %v7683, %v7802
        %v7851 = vadd.f32 %v7684, %v7807
        %v7852 = vadd.f32 %v7685, %v7810
        %v7853 = vadd.f32 %v7686, %v7815
        %v7854 = vadd.f32 %v7687, %v7818
        %v7855 = vadd.f32 %v7688, %v7823
        %v7856 = vadd.f32 %v7689, %v7826
        %v7857 = vadd.f32 %v7690, %v7831
        %v7858 = vadd.f32 %v7691, %v7834
        %v7859 = vadd.f32 %v7692, %v7839
        %v7860 = vadd.f32 %v7693, %v7842
        %v7861 = vld [vmem:[%s7192 + $0x4] sm:$0xff]
        %v7862 = vld [vmem:[%s7192 + $0xc] sm:$0xff]
        %v7863 = vld [vmem:[%s7192 + $0x1c] sm:$0xff]
        %v7864 = vld [vmem:[%s7192 + $0x24] sm:$0xff]
        %v7865 = vld [vmem:[%s7192 + $0x34] sm:$0xff]
        %v7866 = vld [vmem:[%s7192 + $0x3c] sm:$0xff]
        %v7867 = vld [vmem:[%s7192 + $0x4c] sm:$0xff]
        %v7868 = vld [vmem:[%s7192 + $0x54] sm:$0xff]
        %v7869 = vld [vmem:[%s7192 + $0x64] sm:$0xff]
        %v7870 = vld [vmem:[%s7192 + $0x6c] sm:$0xff]
        %v7871 = vld [vmem:[%s7192 + $0x7c] sm:$0xff]
        %v7872 = vld [vmem:[%s7192 + $0x84] sm:$0xff]
        %v7873 = vld [vmem:[%s7192 + $0x94] sm:$0xff]
        %v7874 = vld [vmem:[%s7192 + $0x9c] sm:$0xff]
        %v7875 = vld [vmem:[%s7192 + $0xac] sm:$0xff]
        %v7876 = vld [vmem:[%s7192 + $0xb4] sm:$0xff]
        %v7877 = vpack.c.bf16 %v7862, %v7861
        %v7878 = vpack.c.bf16 %v7864, %v7863
        %v7879 = vpack.c.bf16 %v7866, %v7865
        %v7880 = vpack.c.bf16 %v7868, %v7867
        %v7881 = vpack.c.bf16 %v7870, %v7869
        %v7882 = vpack.c.bf16 %v7872, %v7871
        %v7883 = vpack.c.bf16 %v7874, %v7873
        %v7884 = vpack.c.bf16 %v7876, %v7875
        %s7885 = scalar_lea.vmem %s1, 184
        %v7886 = vld [vmem:[%s7885] sm:$0x7]
        %v7887 = vpack.c.bf16 %v7886, %v7886
        %v7889 = vsel %vm242, %v7877, 0
        %v7892 = vsel %vm242, %v7878, 0
        %v7895 = vsel %vm242, %v7879, 0
        %v7898 = vsel %vm242, %v7880, 0
        %v7901 = vsel %vm242, %v7881, 0
        %v7904 = vsel %vm242, %v7882, 0
        %v7907 = vsel %vm242, %v7883, 0
        %v7910 = vsel %vm242, %v7884, 0
        %v7913 = vand.u32 %v7887, %v270
        %7915 = vmatprep.subr.bf16.mxu0 0
        %7916 = vmatpush1.bf16.msra.mxu0 0
        %7917 = vmatprep.subr.bf16.mxu0 0
        %7918 = vmatpush1.bf16.msra.mxu0 0
        %7919 = vmatprep.subr.bf16.mxu0 0
        %7920 = vmatpush1.bf16.msra.mxu0 0
        %7921 = vmatprep.subr.bf16.mxu0 0
        %7922 = vmatpush1.bf16.msra.mxu0 0
        %7923 = vmatprep.subr.bf16.mxu0 0
        %7924 = vmatpush1.bf16.msra.mxu0 0
        %7925 = vmatprep.subr.bf16.mxu0 0
        %7926 = vmatpush1.bf16.msra.mxu0 0
        %7927 = vmatprep.subr.bf16.mxu0 0
        %7928 = vmatpush1.bf16.msra.mxu0 0
        %7929 = vmatprep.subr.bf16.mxu0 0
        %7930 = vmatpush1.bf16.msra.mxu0 %v7913
        %7931 = vmatprep.subr.bf16.mxu0 0
        %7932 = vmatpush2.bf16.msra.mxu0 0
        %7933 = vmatprep.subr.bf16.mxu0 0
        %7934 = vmatpush2.bf16.msra.mxu0 0
        %7935 = vmatprep.subr.bf16.mxu0 0
        %7936 = vmatpush2.bf16.msra.mxu0 0
        %7937 = vmatprep.subr.bf16.mxu0 0
        %7938 = vmatpush2.bf16.msra.mxu0 0
        %7939 = vmatprep.subr.bf16.mxu0 0
        %7940 = vmatpush2.bf16.msra.mxu0 0
        %7941 = vmatprep.subr.bf16.mxu0 0
        %7942 = vmatpush2.bf16.msra.mxu0 0
        %7943 = vmatprep.subr.bf16.mxu0 0
        %7944 = vmatpush2.bf16.msra.mxu0 0
        %7945 = vmatprep.subr.bf16.mxu0 0
        %7946 = vmatpush2.bf16.msra.mxu0 0
        %7947 = vmatprep.mubr.bf16.mxu0 0
        %7948 = vmatmul.mubr.bf16.gmra.mxu0 %v7889
        %v7949 = vpop.f32.mrf.mxu0
        %v7950 = vadd.f32 0.0, %v7949
        %v7951 = vpop.f32.mrf.mxu0
        %v7952 = vpop.f32.mrf.mxu0
        %v7953 = vadd.f32 0.0, %v7952
        %v7954 = vpop.f32.mrf.mxu0
        %7955 = vmatprep.mubr.bf16.mxu0 0
        %7956 = vmatmul.mubr.bf16.gmra.mxu0 %v7892
        %v7957 = vpop.f32.mrf.mxu0
        %v7958 = vadd.f32 0.0, %v7957
        %v7959 = vpop.f32.mrf.mxu0
        %v7960 = vpop.f32.mrf.mxu0
        %v7961 = vadd.f32 0.0, %v7960
        %v7962 = vpop.f32.mrf.mxu0
        %7963 = vmatprep.mubr.bf16.mxu0 0
        %7964 = vmatmul.mubr.bf16.gmra.mxu0 %v7895
        %v7965 = vpop.f32.mrf.mxu0
        %v7966 = vadd.f32 0.0, %v7965
        %v7967 = vpop.f32.mrf.mxu0
        %v7968 = vpop.f32.mrf.mxu0
        %v7969 = vadd.f32 0.0, %v7968
        %v7970 = vpop.f32.mrf.mxu0
        %7971 = vmatprep.mubr.bf16.mxu0 0
        %7972 = vmatmul.mubr.bf16.gmra.mxu0 %v7898
        %v7973 = vpop.f32.mrf.mxu0
        %v7974 = vadd.f32 0.0, %v7973
        %v7975 = vpop.f32.mrf.mxu0
        %v7976 = vpop.f32.mrf.mxu0
        %v7977 = vadd.f32 0.0, %v7976
        %v7978 = vpop.f32.mrf.mxu0
        %7979 = vmatprep.mubr.bf16.mxu0 0
        %7980 = vmatmul.mubr.bf16.gmra.mxu0 %v7901
        %v7981 = vpop.f32.mrf.mxu0
        %v7982 = vadd.f32 0.0, %v7981
        %v7983 = vpop.f32.mrf.mxu0
        %v7984 = vpop.f32.mrf.mxu0
        %v7985 = vadd.f32 0.0, %v7984
        %v7986 = vpop.f32.mrf.mxu0
        %7987 = vmatprep.mubr.bf16.mxu0 0
        %7988 = vmatmul.mubr.bf16.gmra.mxu0 %v7904
        %v7989 = vpop.f32.mrf.mxu0
        %v7990 = vadd.f32 0.0, %v7989
        %v7991 = vpop.f32.mrf.mxu0
        %v7992 = vpop.f32.mrf.mxu0
        %v7993 = vadd.f32 0.0, %v7992
        %v7994 = vpop.f32.mrf.mxu0
        %7995 = vmatprep.mubr.bf16.mxu0 0
        %7996 = vmatmul.mubr.bf16.gmra.mxu0 %v7907
        %v7997 = vpop.f32.mrf.mxu0
        %v7998 = vadd.f32 0.0, %v7997
        %v7999 = vpop.f32.mrf.mxu0
        %v8000 = vpop.f32.mrf.mxu0
        %v8001 = vadd.f32 0.0, %v8000
        %v8002 = vpop.f32.mrf.mxu0
        %8003 = vmatprep.mubr.bf16.mxu0 0
        %8004 = vmatmul.mubr.bf16.gmra.mxu0 %v7910
        %v8005 = vpop.f32.mrf.mxu0
        %v8006 = vadd.f32 0.0, %v8005
        %v8007 = vpop.f32.mrf.mxu0
        %v8008 = vpop.f32.mrf.mxu0
        %v8009 = vadd.f32 0.0, %v8008
        %v8010 = vpop.f32.mrf.mxu0
        %8011 = vdwg.mxu0
        %v8012 = vadd.f32 %v7845, %v7950
        %v8013 = vadd.f32 %v7846, %v7953
        %v8014 = vadd.f32 %v7847, %v7958
        %v8015 = vadd.f32 %v7848, %v7961
        %v8016 = vadd.f32 %v7849, %v7966
        %v8017 = vadd.f32 %v7850, %v7969
        %v8018 = vadd.f32 %v7851, %v7974
        %v8019 = vadd.f32 %v7852, %v7977
        %v8020 = vadd.f32 %v7853, %v7982
        %v8021 = vadd.f32 %v7854, %v7985
        %v8022 = vadd.f32 %v7855, %v7990
        %v8023 = vadd.f32 %v7856, %v7993
        %v8024 = vadd.f32 %v7857, %v7998
        %v8025 = vadd.f32 %v7858, %v8001
        %v8026 = vadd.f32 %v7859, %v8006
        %v8027 = vadd.f32 %v7860, %v8009
        %v8028 = vld [vmem:[%s7192 + $0x5] sm:$0xff]
        %v8029 = vld [vmem:[%s7192 + $0xd] sm:$0xff]
        %v8030 = vld [vmem:[%s7192 + $0x1d] sm:$0xff]
        %v8031 = vld [vmem:[%s7192 + $0x25] sm:$0xff]
        %v8032 = vld [vmem:[%s7192 + $0x35] sm:$0xff]
        %v8033 = vld [vmem:[%s7192 + $0x3d] sm:$0xff]
        %v8034 = vld [vmem:[%s7192 + $0x4d] sm:$0xff]
        %v8035 = vld [vmem:[%s7192 + $0x55] sm:$0xff]
        %v8036 = vld [vmem:[%s7192 + $0x65] sm:$0xff]
        %v8037 = vld [vmem:[%s7192 + $0x6d] sm:$0xff]
        %v8038 = vld [vmem:[%s7192 + $0x7d] sm:$0xff]
        %v8039 = vld [vmem:[%s7192 + $0x85] sm:$0xff]
        %v8040 = vld [vmem:[%s7192 + $0x95] sm:$0xff]
        %v8041 = vld [vmem:[%s7192 + $0x9d] sm:$0xff]
        %v8042 = vld [vmem:[%s7192 + $0xad] sm:$0xff]
        %v8043 = vld [vmem:[%s7192 + $0xb5] sm:$0xff]
        %v8044 = vpack.c.bf16 %v8029, %v8028
        %v8045 = vpack.c.bf16 %v8031, %v8030
        %v8046 = vpack.c.bf16 %v8033, %v8032
        %v8047 = vpack.c.bf16 %v8035, %v8034
        %v8048 = vpack.c.bf16 %v8037, %v8036
        %v8049 = vpack.c.bf16 %v8039, %v8038
        %v8050 = vpack.c.bf16 %v8041, %v8040
        %v8051 = vpack.c.bf16 %v8043, %v8042
        %s8052 = scalar_lea.vmem %s1, 188
        %v8053 = vld [vmem:[%s8052] sm:$0x7]
        %v8054 = vpack.c.bf16 %v8053, %v8053
        %v8056 = vsel %vm242, %v8044, 0
        %v8059 = vsel %vm242, %v8045, 0
        %v8062 = vsel %vm242, %v8046, 0
        %v8065 = vsel %vm242, %v8047, 0
        %v8068 = vsel %vm242, %v8048, 0
        %v8071 = vsel %vm242, %v8049, 0
        %v8074 = vsel %vm242, %v8050, 0
        %v8077 = vsel %vm242, %v8051, 0
        %v8080 = vand.u32 %v8054, %v270
        %8082 = vmatprep.subr.bf16.mxu0 0
        %8083 = vmatpush1.bf16.msra.mxu0 0
        %8084 = vmatprep.subr.bf16.mxu0 0
        %8085 = vmatpush1.bf16.msra.mxu0 0
        %8086 = vmatprep.subr.bf16.mxu0 0
        %8087 = vmatpush1.bf16.msra.mxu0 0
        %8088 = vmatprep.subr.bf16.mxu0 0
        %8089 = vmatpush1.bf16.msra.mxu0 0
        %8090 = vmatprep.subr.bf16.mxu0 0
        %8091 = vmatpush1.bf16.msra.mxu0 0
        %8092 = vmatprep.subr.bf16.mxu0 0
        %8093 = vmatpush1.bf16.msra.mxu0 0
        %8094 = vmatprep.subr.bf16.mxu0 0
        %8095 = vmatpush1.bf16.msra.mxu0 0
        %8096 = vmatprep.subr.bf16.mxu0 0
        %8097 = vmatpush1.bf16.msra.mxu0 %v8080
        %8098 = vmatprep.subr.bf16.mxu0 0
        %8099 = vmatpush2.bf16.msra.mxu0 0
        %8100 = vmatprep.subr.bf16.mxu0 0
        %8101 = vmatpush2.bf16.msra.mxu0 0
        %8102 = vmatprep.subr.bf16.mxu0 0
        %8103 = vmatpush2.bf16.msra.mxu0 0
        %8104 = vmatprep.subr.bf16.mxu0 0
        %8105 = vmatpush2.bf16.msra.mxu0 0
        %8106 = vmatprep.subr.bf16.mxu0 0
        %8107 = vmatpush2.bf16.msra.mxu0 0
        %8108 = vmatprep.subr.bf16.mxu0 0
        %8109 = vmatpush2.bf16.msra.mxu0 0
        %8110 = vmatprep.subr.bf16.mxu0 0
        %8111 = vmatpush2.bf16.msra.mxu0 0
        %8112 = vmatprep.subr.bf16.mxu0 0
        %8113 = vmatpush2.bf16.msra.mxu0 0
        %8114 = vmatprep.mubr.bf16.mxu0 0
        %8115 = vmatmul.mubr.bf16.gmra.mxu0 %v8056
        %v8116 = vpop.f32.mrf.mxu0
        %v8117 = vadd.f32 0.0, %v8116
        %v8118 = vpop.f32.mrf.mxu0
        %v8119 = vpop.f32.mrf.mxu0
        %v8120 = vadd.f32 0.0, %v8119
        %v8121 = vpop.f32.mrf.mxu0
        %8122 = vmatprep.mubr.bf16.mxu0 0
        %8123 = vmatmul.mubr.bf16.gmra.mxu0 %v8059
        %v8124 = vpop.f32.mrf.mxu0
        %v8125 = vadd.f32 0.0, %v8124
        %v8126 = vpop.f32.mrf.mxu0
        %v8127 = vpop.f32.mrf.mxu0
        %v8128 = vadd.f32 0.0, %v8127
        %v8129 = vpop.f32.mrf.mxu0
        %8130 = vmatprep.mubr.bf16.mxu0 0
        %8131 = vmatmul.mubr.bf16.gmra.mxu0 %v8062
        %v8132 = vpop.f32.mrf.mxu0
        %v8133 = vadd.f32 0.0, %v8132
        %v8134 = vpop.f32.mrf.mxu0
        %v8135 = vpop.f32.mrf.mxu0
        %v8136 = vadd.f32 0.0, %v8135
        %v8137 = vpop.f32.mrf.mxu0
        %8138 = vmatprep.mubr.bf16.mxu0 0
        %8139 = vmatmul.mubr.bf16.gmra.mxu0 %v8065
        %v8140 = vpop.f32.mrf.mxu0
        %v8141 = vadd.f32 0.0, %v8140
        %v8142 = vpop.f32.mrf.mxu0
        %v8143 = vpop.f32.mrf.mxu0
        %v8144 = vadd.f32 0.0, %v8143
        %v8145 = vpop.f32.mrf.mxu0
        %8146 = vmatprep.mubr.bf16.mxu0 0
        %8147 = vmatmul.mubr.bf16.gmra.mxu0 %v8068
        %v8148 = vpop.f32.mrf.mxu0
        %v8149 = vadd.f32 0.0, %v8148
        %v8150 = vpop.f32.mrf.mxu0
        %v8151 = vpop.f32.mrf.mxu0
        %v8152 = vadd.f32 0.0, %v8151
        %v8153 = vpop.f32.mrf.mxu0
        %8154 = vmatprep.mubr.bf16.mxu0 0
        %8155 = vmatmul.mubr.bf16.gmra.mxu0 %v8071
        %v8156 = vpop.f32.mrf.mxu0
        %v8157 = vadd.f32 0.0, %v8156
        %v8158 = vpop.f32.mrf.mxu0
        %v8159 = vpop.f32.mrf.mxu0
        %v8160 = vadd.f32 0.0, %v8159
        %v8161 = vpop.f32.mrf.mxu0
        %8162 = vmatprep.mubr.bf16.mxu0 0
        %8163 = vmatmul.mubr.bf16.gmra.mxu0 %v8074
        %v8164 = vpop.f32.mrf.mxu0
        %v8165 = vadd.f32 0.0, %v8164
        %v8166 = vpop.f32.mrf.mxu0
        %v8167 = vpop.f32.mrf.mxu0
        %v8168 = vadd.f32 0.0, %v8167
        %v8169 = vpop.f32.mrf.mxu0
        %8170 = vmatprep.mubr.bf16.mxu0 0
        %8171 = vmatmul.mubr.bf16.gmra.mxu0 %v8077
        %v8172 = vpop.f32.mrf.mxu0
        %v8173 = vadd.f32 0.0, %v8172
        %v8174 = vpop.f32.mrf.mxu0
        %v8175 = vpop.f32.mrf.mxu0
        %v8176 = vadd.f32 0.0, %v8175
        %v8177 = vpop.f32.mrf.mxu0
        %8178 = vdwg.mxu0
        %v8179 = vadd.f32 %v8012, %v8117
        %v8180 = vadd.f32 %v8013, %v8120
        %v8181 = vadd.f32 %v8014, %v8125
        %v8182 = vadd.f32 %v8015, %v8128
        %v8183 = vadd.f32 %v8016, %v8133
        %v8184 = vadd.f32 %v8017, %v8136
        %v8185 = vadd.f32 %v8018, %v8141
        %v8186 = vadd.f32 %v8019, %v8144
        %v8187 = vadd.f32 %v8020, %v8149
        %v8188 = vadd.f32 %v8021, %v8152
        %v8189 = vadd.f32 %v8022, %v8157
        %v8190 = vadd.f32 %v8023, %v8160
        %v8191 = vadd.f32 %v8024, %v8165
        %v8192 = vadd.f32 %v8025, %v8168
        %v8193 = vadd.f32 %v8026, %v8173
        %v8194 = vadd.f32 %v8027, %v8176
        %v8195 = vld [vmem:[%s7192 + $0x6] sm:$0xff]
        %v8196 = vld [vmem:[%s7192 + $0xe] sm:$0xff]
        %v8197 = vld [vmem:[%s7192 + $0x1e] sm:$0xff]
        %v8198 = vld [vmem:[%s7192 + $0x26] sm:$0xff]
        %v8199 = vld [vmem:[%s7192 + $0x36] sm:$0xff]
        %v8200 = vld [vmem:[%s7192 + $0x3e] sm:$0xff]
        %v8201 = vld [vmem:[%s7192 + $0x4e] sm:$0xff]
        %v8202 = vld [vmem:[%s7192 + $0x56] sm:$0xff]
        %v8203 = vld [vmem:[%s7192 + $0x66] sm:$0xff]
        %v8204 = vld [vmem:[%s7192 + $0x6e] sm:$0xff]
        %v8205 = vld [vmem:[%s7192 + $0x7e] sm:$0xff]
        %v8206 = vld [vmem:[%s7192 + $0x86] sm:$0xff]
        %v8207 = vld [vmem:[%s7192 + $0x96] sm:$0xff]
        %v8208 = vld [vmem:[%s7192 + $0x9e] sm:$0xff]
        %v8209 = vld [vmem:[%s7192 + $0xae] sm:$0xff]
        %v8210 = vld [vmem:[%s7192 + $0xb6] sm:$0xff]
        %v8211 = vpack.c.bf16 %v8196, %v8195
        %v8212 = vpack.c.bf16 %v8198, %v8197
        %v8213 = vpack.c.bf16 %v8200, %v8199
        %v8214 = vpack.c.bf16 %v8202, %v8201
        %v8215 = vpack.c.bf16 %v8204, %v8203
        %v8216 = vpack.c.bf16 %v8206, %v8205
        %v8217 = vpack.c.bf16 %v8208, %v8207
        %v8218 = vpack.c.bf16 %v8210, %v8209
        %s8219 = scalar_lea.vmem %s1, 192
        %v8220 = vld [vmem:[%s8219] sm:$0x7]
        %v8221 = vpack.c.bf16 %v8220, %v8220
        %v8223 = vsel %vm242, %v8211, 0
        %v8226 = vsel %vm242, %v8212, 0
        %v8229 = vsel %vm242, %v8213, 0
        %v8232 = vsel %vm242, %v8214, 0
        %v8235 = vsel %vm242, %v8215, 0
        %v8238 = vsel %vm242, %v8216, 0
        %v8241 = vsel %vm242, %v8217, 0
        %v8244 = vsel %vm242, %v8218, 0
        %v8247 = vand.u32 %v8221, %v270
        %8249 = vmatprep.subr.bf16.mxu0 0
        %8250 = vmatpush1.bf16.msra.mxu0 0
        %8251 = vmatprep.subr.bf16.mxu0 0
        %8252 = vmatpush1.bf16.msra.mxu0 0
        %8253 = vmatprep.subr.bf16.mxu0 0
        %8254 = vmatpush1.bf16.msra.mxu0 0
        %8255 = vmatprep.subr.bf16.mxu0 0
        %8256 = vmatpush1.bf16.msra.mxu0 0
        %8257 = vmatprep.subr.bf16.mxu0 0
        %8258 = vmatpush1.bf16.msra.mxu0 0
        %8259 = vmatprep.subr.bf16.mxu0 0
        %8260 = vmatpush1.bf16.msra.mxu0 0
        %8261 = vmatprep.subr.bf16.mxu0 0
        %8262 = vmatpush1.bf16.msra.mxu0 0
        %8263 = vmatprep.subr.bf16.mxu0 0
        %8264 = vmatpush1.bf16.msra.mxu0 %v8247
        %8265 = vmatprep.subr.bf16.mxu0 0
        %8266 = vmatpush2.bf16.msra.mxu0 0
        %8267 = vmatprep.subr.bf16.mxu0 0
        %8268 = vmatpush2.bf16.msra.mxu0 0
        %8269 = vmatprep.subr.bf16.mxu0 0
        %8270 = vmatpush2.bf16.msra.mxu0 0
        %8271 = vmatprep.subr.bf16.mxu0 0
        %8272 = vmatpush2.bf16.msra.mxu0 0
        %8273 = vmatprep.subr.bf16.mxu0 0
        %8274 = vmatpush2.bf16.msra.mxu0 0
        %8275 = vmatprep.subr.bf16.mxu0 0
        %8276 = vmatpush2.bf16.msra.mxu0 0
        %8277 = vmatprep.subr.bf16.mxu0 0
        %8278 = vmatpush2.bf16.msra.mxu0 0
        %8279 = vmatprep.subr.bf16.mxu0 0
        %8280 = vmatpush2.bf16.msra.mxu0 0
        %8281 = vmatprep.mubr.bf16.mxu0 0
        %8282 = vmatmul.mubr.bf16.gmra.mxu0 %v8223
        %v8283 = vpop.f32.mrf.mxu0
        %v8284 = vadd.f32 0.0, %v8283
        %v8285 = vpop.f32.mrf.mxu0
        %v8286 = vpop.f32.mrf.mxu0
        %v8287 = vadd.f32 0.0, %v8286
        %v8288 = vpop.f32.mrf.mxu0
        %8289 = vmatprep.mubr.bf16.mxu0 0
        %8290 = vmatmul.mubr.bf16.gmra.mxu0 %v8226
        %v8291 = vpop.f32.mrf.mxu0
        %v8292 = vadd.f32 0.0, %v8291
        %v8293 = vpop.f32.mrf.mxu0
        %v8294 = vpop.f32.mrf.mxu0
        %v8295 = vadd.f32 0.0, %v8294
        %v8296 = vpop.f32.mrf.mxu0
        %8297 = vmatprep.mubr.bf16.mxu0 0
        %8298 = vmatmul.mubr.bf16.gmra.mxu0 %v8229
        %v8299 = vpop.f32.mrf.mxu0
        %v8300 = vadd.f32 0.0, %v8299
        %v8301 = vpop.f32.mrf.mxu0
        %v8302 = vpop.f32.mrf.mxu0
        %v8303 = vadd.f32 0.0, %v8302
        %v8304 = vpop.f32.mrf.mxu0
        %8305 = vmatprep.mubr.bf16.mxu0 0
        %8306 = vmatmul.mubr.bf16.gmra.mxu0 %v8232
        %v8307 = vpop.f32.mrf.mxu0
        %v8308 = vadd.f32 0.0, %v8307
        %v8309 = vpop.f32.mrf.mxu0
        %v8310 = vpop.f32.mrf.mxu0
        %v8311 = vadd.f32 0.0, %v8310
        %v8312 = vpop.f32.mrf.mxu0
        %8313 = vmatprep.mubr.bf16.mxu0 0
        %8314 = vmatmul.mubr.bf16.gmra.mxu0 %v8235
        %v8315 = vpop.f32.mrf.mxu0
        %v8316 = vadd.f32 0.0, %v8315
        %v8317 = vpop.f32.mrf.mxu0
        %v8318 = vpop.f32.mrf.mxu0
        %v8319 = vadd.f32 0.0, %v8318
        %v8320 = vpop.f32.mrf.mxu0
        %8321 = vmatprep.mubr.bf16.mxu0 0
        %8322 = vmatmul.mubr.bf16.gmra.mxu0 %v8238
        %v8323 = vpop.f32.mrf.mxu0
        %v8324 = vadd.f32 0.0, %v8323
        %v8325 = vpop.f32.mrf.mxu0
        %v8326 = vpop.f32.mrf.mxu0
        %v8327 = vadd.f32 0.0, %v8326
        %v8328 = vpop.f32.mrf.mxu0
        %8329 = vmatprep.mubr.bf16.mxu0 0
        %8330 = vmatmul.mubr.bf16.gmra.mxu0 %v8241
        %v8331 = vpop.f32.mrf.mxu0
        %v8332 = vadd.f32 0.0, %v8331
        %v8333 = vpop.f32.mrf.mxu0
        %v8334 = vpop.f32.mrf.mxu0
        %v8335 = vadd.f32 0.0, %v8334
        %v8336 = vpop.f32.mrf.mxu0
        %8337 = vmatprep.mubr.bf16.mxu0 0
        %8338 = vmatmul.mubr.bf16.gmra.mxu0 %v8244
        %v8339 = vpop.f32.mrf.mxu0
        %v8340 = vadd.f32 0.0, %v8339
        %v8341 = vpop.f32.mrf.mxu0
        %v8342 = vpop.f32.mrf.mxu0
        %v8343 = vadd.f32 0.0, %v8342
        %v8344 = vpop.f32.mrf.mxu0
        %8345 = vdwg.mxu0
        %v8346 = vadd.f32 %v8179, %v8284
        %v8347 = vadd.f32 %v8180, %v8287
        %v8348 = vadd.f32 %v8181, %v8292
        %v8349 = vadd.f32 %v8182, %v8295
        %v8350 = vadd.f32 %v8183, %v8300
        %v8351 = vadd.f32 %v8184, %v8303
        %v8352 = vadd.f32 %v8185, %v8308
        %v8353 = vadd.f32 %v8186, %v8311
        %v8354 = vadd.f32 %v8187, %v8316
        %v8355 = vadd.f32 %v8188, %v8319
        %v8356 = vadd.f32 %v8189, %v8324
        %v8357 = vadd.f32 %v8190, %v8327
        %v8358 = vadd.f32 %v8191, %v8332
        %v8359 = vadd.f32 %v8192, %v8335
        %v8360 = vadd.f32 %v8193, %v8340
        %v8361 = vadd.f32 %v8194, %v8343
        %v8363 = vlaneseq
        %v8364 = vshrl.u32 %v8363, 7
        %v8365 = vsub.s32 0, %v8364
        %v8366 = vrot.slane %v186, %v8365
        %v8368 = vadd.f32 %v8346, %v8366
        %v8369 = vadd.f32 %v8347, %v8366
        %v8370 = vadd.f32 %v8348, %v8366
        %v8371 = vadd.f32 %v8349, %v8366
        %v8372 = vadd.f32 %v8350, %v8366
        %v8373 = vadd.f32 %v8351, %v8366
        %v8374 = vadd.f32 %v8352, %v8366
        %v8375 = vadd.f32 %v8353, %v8366
        %v8376 = vadd.f32 %v8354, %v8366
        %v8377 = vadd.f32 %v8355, %v8366
        %v8378 = vadd.f32 %v8356, %v8366
        %v8379 = vadd.f32 %v8357, %v8366
        %v8380 = vadd.f32 %v8358, %v8366
        %v8381 = vadd.f32 %v8359, %v8366
        %v8382 = vadd.f32 %v8360, %v8366
        %v8383 = vadd.f32 %v8361, %v8366
        %v8384 = vmax.f32 %v8368, 0.0
        %v8385 = vmax.f32 %v8369, 0.0
        %v8386 = vmax.f32 %v8370, 0.0
        %v8387 = vmax.f32 %v8371, 0.0
        %v8388 = vmax.f32 %v8372, 0.0
        %v8389 = vmax.f32 %v8373, 0.0
        %v8390 = vmax.f32 %v8374, 0.0
        %v8391 = vmax.f32 %v8375, 0.0
        %v8392 = vmax.f32 %v8376, 0.0
        %v8393 = vmax.f32 %v8377, 0.0
        %v8394 = vmax.f32 %v8378, 0.0
        %v8395 = vmax.f32 %v8379, 0.0
        %v8396 = vmax.f32 %v8380, 0.0
        %v8397 = vmax.f32 %v8381, 0.0
        %v8398 = vmax.f32 %v8382, 0.0
        %v8399 = vmax.f32 %v8383, 0.0
        %vm8400 = vcmask 130048
        %8401 = vst.msk [vmem:[%s177] sm:$0xff] %vm8400, %v8384
        %8402 = vst.msk [vmem:[%s177 + $0x8] sm:$0xff] %vm8400, %v8385
        %8403 = vst.msk [vmem:[%s177 + $0x10] sm:$0xff] %vm8400, %v8386
        %8404 = vst.msk [vmem:[%s177 + $0x18] sm:$0xff] %vm8400, %v8387
        %8405 = vst.msk [vmem:[%s177 + $0x20] sm:$0xff] %vm8400, %v8388
        %8406 = vst.msk [vmem:[%s177 + $0x28] sm:$0xff] %vm8400, %v8389
        %8407 = vst.msk [vmem:[%s177 + $0x30] sm:$0xff] %vm8400, %v8390
        %8408 = vst.msk [vmem:[%s177 + $0x38] sm:$0xff] %vm8400, %v8391
        %8409 = vst.msk [vmem:[%s177 + $0x40] sm:$0xff] %vm8400, %v8392
        %8410 = vst.msk [vmem:[%s177 + $0x48] sm:$0xff] %vm8400, %v8393
        %8411 = vst.msk [vmem:[%s177 + $0x50] sm:$0xff] %vm8400, %v8394
        %8412 = vst.msk [vmem:[%s177 + $0x58] sm:$0xff] %vm8400, %v8395
        %8413 = vst.msk [vmem:[%s177 + $0x60] sm:$0xff] %vm8400, %v8396
        %8414 = vst.msk [vmem:[%s177 + $0x68] sm:$0xff] %vm8400, %v8397
        %8415 = vst.msk [vmem:[%s177 + $0x70] sm:$0xff] %vm8400, %v8398
        %8416 = vst.msk [vmem:[%s177 + $0x78] sm:$0xff] %vm8400, %v8399
        %s8417 = sand.u32 %s107, 1
        %s8418 = scalar_lea.sflag [#allocation3], %s8417
        %s8419 = sand.u32 %s107, 1
        %s8420 = smul.addr %s8419, 128
        %s8421 = scalar_lea.vmem [#allocation2], %s8420
        // Predicated region
        $region33: #{tpu_custom_call.1} parent=31 // pred_check
          %p8422 = pneg %p117
        $region34: #{tpu_custom_call.1} parent=31 // pred_check_branch
          %8424 = sbr.rel (%p8422) target = $region36
        $region35: #{tpu_custom_call.1} parent=31 // pred_region
          %s8425 = smul.u32 8, %s22
          %s8427 = ssub.s32 2048, 2048
          %8428 = vsyncadd %s8418, %s8427
          %s8429 = smul.addr %s8425, 2
          %s8430 = smul.addr %s21, 32
          %s8431 = sadd.s32 %s8429, %s8430
          %s8432 = smul.addr %s8431, 128
          %s8433 = scalar_lea.hbm %s3, %s8432
          %s8434 = sshll.u32 %s8421, 4
          %s8435 = int_to_ptr.vmem [resolvable:$true] %s8434
          %8440 = dma.vmem_to_hbm [thread:$0]  %s8435, 2048, %s8433, %s8418, 128, 128, 8
        $region36: #{tpu_custom_call.1} parent=31 // pred_fallthru
          _
      $region32: #{tpu_custom_call.1} parent=5 // pred_fallthru
        _
      %p8441 = scmp.le.s32.totalorder 2, %s12
      // Predicated region
      $region37: #{tpu_custom_call.1} parent=5 // pred_check
        %p8442 = pneg %p8441
      $region38: #{tpu_custom_call.1} parent=5 // pred_check_branch
        %8444 = sbr.rel (%p8442) target = $region40
      $region39: #{tpu_custom_call.1} parent=5 // pred_region
        %s8445 = ssub.s32 %s12, 2
        // Predicated region
        $region41: #{tpu_custom_call.1} parent=39 // pred_check
          %p8446 = pneg %p123
        $region42: #{tpu_custom_call.1} parent=39 // pred_check_branch
          %8448 = sbr.rel (%p8446) target = $region44
        $region43: #{tpu_custom_call.1} parent=39 // pred_region
          %s8449 = sand.u32 %s108, 1
          %s8450 = scalar_lea.sflag [#allocation3], %s8449
          %s8451 = sand.u32 %s108, 1
          %s8452 = smul.addr %s8451, 128
          %s8453 = scalar_lea.vmem [#allocation2], %s8452
          %8454 = dma.done %s8450, 2048
        $region44: #{tpu_custom_call.1} parent=39 // pred_fallthru
          _
      $region40: #{tpu_custom_call.1} parent=5 // pred_fallthru
        _
    $region6: #{tpu_custom_call.1} parent=1 // loop_footer
      %s16 = sadd.s32 1, %s12
    $region7: #{tpu_custom_call.1} parent=1 // loop_footer_branch
      %11 = sbr.rel target = $region3
    $region8: #{tpu_custom_call.1} parent=1 // loop_exit
      _
    %8455 = vsyncpa [#allocation3], 1
    %s8456 = scalar_lea.sflag [#allocation3], 1
    %8457 = vsyncpa %s8456, 1

</llo_original>
